<compile_context>
chip_gen: v6e
topology: v6e:2x2x1
jax: 0.10.0
libtpu: 0.0.40
codegen_flags: <defaults>
</compile_context>

<pallas_src>
import functools

import jax
import jax.numpy as jnp
from jax import lax
from jax.experimental import pallas as pl
from jax.experimental.pallas import tpu as pltpu


# (fan_in, fan_out) per Linear layer, PyTorch order.
_LAYER_DIMS = [(2, 4), (4, 4), (4, 4), (4, 4), (4, 4), (4, 4), (4, 4), (4, 1)]
_N_LAYERS = len(_LAYER_DIMS)
_N_PARAMS = sum(fi * fo + fo for fi, fo in _LAYER_DIMS)  # 137 scalars


def _mlp_kernel(params_ref, x_ref, o_ref, *, n_chunks, cr):
    """params_ref: SMEM (137,) f32 flat table [W1 row-major, b1, W2, b2, ...].
    x_ref: VMEM (2, tr, 128) — per-input-channel batch planes.
    o_ref: VMEM (tr, 128)    — output-channel batch plane.
    """

    def chunk_body(c, carry):
        r0 = pl.multiple_of(c * cr, cr)
        # Full-vreg (cr, 128) plane per feature channel.
        h = [x_ref[k, pl.ds(r0, cr), :] for k in range(_LAYER_DIMS[0][0])]
        off = 0
        for l, (fi, fo) in enumerate(_LAYER_DIMS):
            nxt = []
            for o in range(fo):
                acc = params_ref[off + o * fi] * h[0]          # scalar splat * plane
                for k in range(1, fi):
                    acc = acc + params_ref[off + o * fi + k] * h[k]
                acc = acc + params_ref[off + fo * fi + o]      # bias splat
                if l < _N_LAYERS - 1:                          # ReLU on all but last layer
                    acc = jnp.maximum(acc, 0.0)
                nxt.append(acc)
            h = nxt
            off += fo * fi + fo
        o_ref[pl.ds(r0, cr), :] = h[0].astype(o_ref.dtype)
        return carry

    lax.fori_loop(0, n_chunks, chunk_body, 0, unroll=True)


def nn_hoch_forward(x, params, *, tb=8192, cr=16):
    """x: (B, 2) float32. params: dict W1..W8 (out,in) / b1..b8 (out,). -> (B, 1)."""
    B, F = x.shape
    assert F == _LAYER_DIMS[0][0]
    assert tb % (8 * 128) == 0, "tile must be a whole number of (8,128) planes"

    tr = tb // 128                                   # rows per grid step
    cr = min(cr, tr)
    assert tr % cr == 0 and cr % 8 == 0
    n_chunks = tr // cr

    rows_pad = ((B + tb - 1) // tb) * tr             # pad batch to whole tiles
    n_tiles = rows_pad // tr
    B_pad = rows_pad * 128

    # (2, rows_pad, 128): per-channel 2-D batch planes (lane-dense, full sublanes).
    x_t = jnp.pad(x.T, ((0, 0), (0, B_pad - B))).reshape(F, rows_pad, 128)

    # One flat SMEM scalar table with every weight / bias.
    flat = []
    for l in range(1, _N_LAYERS + 1):
        flat.append(params[f"W{l}"].reshape(-1))
        flat.append(params[f"b{l}"].reshape(-1))
    p_flat = jnp.concatenate(flat).astype(jnp.float32)
    assert p_flat.shape == (_N_PARAMS,)

    kernel = functools.partial(_mlp_kernel, n_chunks=n_chunks, cr=cr)

    out = pl.pallas_call(
        kernel,
        out_shape=jax.ShapeDtypeStruct((rows_pad, 128), jnp.float32),
        grid=(n_tiles,),
        in_specs=[
            pl.BlockSpec(memory_space=pltpu.MemorySpace.SMEM),   # scalar param table
            pl.BlockSpec((F, tr, 128), lambda i: (0, i, 0)),     # x tile (full-vreg planes)
        ],
        out_specs=pl.BlockSpec((tr, 128), lambda i: (i, 0)),     # lane-dense output slab
        compiler_params=pltpu.CompilerParams(
            dimension_semantics=("parallel",),
        ),
    )(p_flat, x_t)

    return out.reshape(B_pad)[:B].reshape(B, 1)


def init_params(key):
    """Mirror nn.Linear init: weight (out,in), bias (out,), U(-1/sqrt(in), 1/sqrt(in))."""
    keys = jax.random.split(key, 2 * _N_LAYERS)
    params = {}
    for l, (fan_in, fan_out) in enumerate(_LAYER_DIMS, start=1):
        bound = fan_in ** -0.5
        kw, kb = keys[2 * (l - 1)], keys[2 * (l - 1) + 1]
        params[f"W{l}"] = jax.random.uniform(kw, (fan_out, fan_in), jnp.float32, -bound, bound)
        params[f"b{l}"] = jax.random.uniform(kb, (fan_out,), jnp.float32, -bound, bound)
    return params


def reference_forward(x, params):
    h = x
    for l in range(1, _N_LAYERS + 1):
        h = h @ params[f"W{l}"].T + params[f"b{l}"]
        if l < _N_LAYERS:
            h = jnp.maximum(h, 0.0)
    return h


if __name__ == "__main__":
    key = jax.random.PRNGKey(0)
    kx, kp = jax.random.split(key)
    B = 16384                    # 2 balanced tiles at tb=8192 -> both v7x cores busy
    x = jax.random.normal(kx, (B, 2), jnp.float32)
    params = init_params(kp)

    out = jax.block_until_ready(nn_hoch_forward(x, params, tb=8192, cr=16))
    ref = reference_forward(x, params)

    assert out.shape == (B, 1)
    assert jnp.allclose(out, ref, atol=1e-5, rtol=1e-5), "mismatch vs reference"
    print("KERNEL_OK")
</pallas_src>

<mosaic_0001>
module attributes {stable_mosaic.version = 11 : i64} {
  func.func @_mlp_kernel(%arg0: i32, %arg1: memref<137xf32, #tpu.memory_space<smem>>, %arg2: memref<2x64x128xf32, #tpu.memory_space<vmem>>, %arg3: memref<64x128xf32, #tpu.memory_space<vmem>>) attributes {dimension_semantics = [#tpu.dimension_semantics<parallel>], iteration_bounds = array<i64: 2>, scalar_prefetch = 0 : i64, scratch_operands = 0 : i64, tpu.core_type = #tpu.core_type<tc>, window_params = [{transform_indices = @transform_0, window_bounds = array<i64: 137>}, {transform_indices = @transform_1, window_bounds = array<i64: 2, 64, 128>}, {transform_indices = @transform_2, window_bounds = array<i64: 64, 128>}]} {
    %c0_i32 = arith.constant 0 : i32
    %c16_i32 = arith.constant 16 : i32
    %0 = arith.muli %c0_i32, %c16_i32 : i32
    %1 = tpu.assume_multiple %0, 16 : i32
    %c0 = arith.constant 0 : index
    %2 = arith.index_cast %1 : i32 to index
    %c0_0 = arith.constant 0 : index
    %3 = vector.load %arg2[%c0, %2, %c0_0] : memref<2x64x128xf32, #tpu.memory_space<vmem>>, vector<1x16x128xf32>
    %4 = vector.shape_cast %3 : vector<1x16x128xf32> to vector<16x128xf32>
    %c1 = arith.constant 1 : index
    %5 = arith.index_cast %1 : i32 to index
    %c0_1 = arith.constant 0 : index
    %6 = vector.load %arg2[%c1, %5, %c0_1] : memref<2x64x128xf32, #tpu.memory_space<vmem>>, vector<1x16x128xf32>
    %7 = vector.shape_cast %6 : vector<1x16x128xf32> to vector<16x128xf32>
    %c0_2 = arith.constant 0 : index
    %8 = memref.load %arg1[%c0_2] : memref<137xf32, #tpu.memory_space<smem>>
    %9 = vector.broadcast %8 : f32 to vector<16x128xf32>
    %10 = arith.mulf %9, %4 : vector<16x128xf32>
    %c1_3 = arith.constant 1 : index
    %11 = memref.load %arg1[%c1_3] : memref<137xf32, #tpu.memory_space<smem>>
    %12 = vector.broadcast %11 : f32 to vector<16x128xf32>
    %13 = arith.mulf %12, %7 : vector<16x128xf32>
    %14 = arith.addf %10, %13 : vector<16x128xf32>
    %c8 = arith.constant 8 : index
    %15 = memref.load %arg1[%c8] : memref<137xf32, #tpu.memory_space<smem>>
    %16 = vector.broadcast %15 : f32 to vector<16x128xf32>
    %17 = arith.addf %14, %16 : vector<16x128xf32>
    %cst = arith.constant 0.000000e+00 : f32
    %18 = vector.broadcast %cst : f32 to vector<16x128xf32>
    %19 = arith.maximumf %17, %18 : vector<16x128xf32>
    %c2 = arith.constant 2 : index
    %20 = memref.load %arg1[%c2] : memref<137xf32, #tpu.memory_space<smem>>
    %21 = vector.broadcast %20 : f32 to vector<16x128xf32>
    %22 = arith.mulf %21, %4 : vector<16x128xf32>
    %c3 = arith.constant 3 : index
    %23 = memref.load %arg1[%c3] : memref<137xf32, #tpu.memory_space<smem>>
    %24 = vector.broadcast %23 : f32 to vector<16x128xf32>
    %25 = arith.mulf %24, %7 : vector<16x128xf32>
    %26 = arith.addf %22, %25 : vector<16x128xf32>
    %c9 = arith.constant 9 : index
    %27 = memref.load %arg1[%c9] : memref<137xf32, #tpu.memory_space<smem>>
    %28 = vector.broadcast %27 : f32 to vector<16x128xf32>
    %29 = arith.addf %26, %28 : vector<16x128xf32>
    %cst_4 = arith.constant 0.000000e+00 : f32
    %30 = vector.broadcast %cst_4 : f32 to vector<16x128xf32>
    %31 = arith.maximumf %29, %30 : vector<16x128xf32>
    %c4 = arith.constant 4 : index
    %32 = memref.load %arg1[%c4] : memref<137xf32, #tpu.memory_space<smem>>
    %33 = vector.broadcast %32 : f32 to vector<16x128xf32>
    %34 = arith.mulf %33, %4 : vector<16x128xf32>
    %c5 = arith.constant 5 : index
    %35 = memref.load %arg1[%c5] : memref<137xf32, #tpu.memory_space<smem>>
    %36 = vector.broadcast %35 : f32 to vector<16x128xf32>
    %37 = arith.mulf %36, %7 : vector<16x128xf32>
    %38 = arith.addf %34, %37 : vector<16x128xf32>
    %c10 = arith.constant 10 : index
    %39 = memref.load %arg1[%c10] : memref<137xf32, #tpu.memory_space<smem>>
    %40 = vector.broadcast %39 : f32 to vector<16x128xf32>
    %41 = arith.addf %38, %40 : vector<16x128xf32>
    %cst_5 = arith.constant 0.000000e+00 : f32
    %42 = vector.broadcast %cst_5 : f32 to vector<16x128xf32>
    %43 = arith.maximumf %41, %42 : vector<16x128xf32>
    %c6 = arith.constant 6 : index
    %44 = memref.load %arg1[%c6] : memref<137xf32, #tpu.memory_space<smem>>
    %45 = vector.broadcast %44 : f32 to vector<16x128xf32>
    %46 = arith.mulf %45, %4 : vector<16x128xf32>
    %c7 = arith.constant 7 : index
    %47 = memref.load %arg1[%c7] : memref<137xf32, #tpu.memory_space<smem>>
    %48 = vector.broadcast %47 : f32 to vector<16x128xf32>
    %49 = arith.mulf %48, %7 : vector<16x128xf32>
    %50 = arith.addf %46, %49 : vector<16x128xf32>
    %c11 = arith.constant 11 : index
    %51 = memref.load %arg1[%c11] : memref<137xf32, #tpu.memory_space<smem>>
    %52 = vector.broadcast %51 : f32 to vector<16x128xf32>
    %53 = arith.addf %50, %52 : vector<16x128xf32>
    %cst_6 = arith.constant 0.000000e+00 : f32
    %54 = vector.broadcast %cst_6 : f32 to vector<16x128xf32>
    %55 = arith.maximumf %53, %54 : vector<16x128xf32>
    %c12 = arith.constant 12 : index
    %56 = memref.load %arg1[%c12] : memref<137xf32, #tpu.memory_space<smem>>
    %57 = vector.broadcast %56 : f32 to vector<16x128xf32>
    %58 = arith.mulf %57, %19 : vector<16x128xf32>
    %c13 = arith.constant 13 : index
    %59 = memref.load %arg1[%c13] : memref<137xf32, #tpu.memory_space<smem>>
    %60 = vector.broadcast %59 : f32 to vector<16x128xf32>
    %61 = arith.mulf %60, %31 : vector<16x128xf32>
    %62 = arith.addf %58, %61 : vector<16x128xf32>
    %c14 = arith.constant 14 : index
    %63 = memref.load %arg1[%c14] : memref<137xf32, #tpu.memory_space<smem>>
    %64 = vector.broadcast %63 : f32 to vector<16x128xf32>
    %65 = arith.mulf %64, %43 : vector<16x128xf32>
    %66 = arith.addf %62, %65 : vector<16x128xf32>
    %c15 = arith.constant 15 : index
    %67 = memref.load %arg1[%c15] : memref<137xf32, #tpu.memory_space<smem>>
    %68 = vector.broadcast %67 : f32 to vector<16x128xf32>
    %69 = arith.mulf %68, %55 : vector<16x128xf32>
    %70 = arith.addf %66, %69 : vector<16x128xf32>
    %c28 = arith.constant 28 : index
    %71 = memref.load %arg1[%c28] : memref<137xf32, #tpu.memory_space<smem>>
    %72 = vector.broadcast %71 : f32 to vector<16x128xf32>
    %73 = arith.addf %70, %72 : vector<16x128xf32>
    %cst_7 = arith.constant 0.000000e+00 : f32
    %74 = vector.broadcast %cst_7 : f32 to vector<16x128xf32>
    %75 = arith.maximumf %73, %74 : vector<16x128xf32>
    %c16 = arith.constant 16 : index
    %76 = memref.load %arg1[%c16] : memref<137xf32, #tpu.memory_space<smem>>
    %77 = vector.broadcast %76 : f32 to vector<16x128xf32>
    %78 = arith.mulf %77, %19 : vector<16x128xf32>
    %c17 = arith.constant 17 : index
    %79 = memref.load %arg1[%c17] : memref<137xf32, #tpu.memory_space<smem>>
    %80 = vector.broadcast %79 : f32 to vector<16x128xf32>
    %81 = arith.mulf %80, %31 : vector<16x128xf32>
    %82 = arith.addf %78, %81 : vector<16x128xf32>
    %c18 = arith.constant 18 : index
    %83 = memref.load %arg1[%c18] : memref<137xf32, #tpu.memory_space<smem>>
    %84 = vector.broadcast %83 : f32 to vector<16x128xf32>
    %85 = arith.mulf %84, %43 : vector<16x128xf32>
    %86 = arith.addf %82, %85 : vector<16x128xf32>
    %c19 = arith.constant 19 : index
    %87 = memref.load %arg1[%c19] : memref<137xf32, #tpu.memory_space<smem>>
    %88 = vector.broadcast %87 : f32 to vector<16x128xf32>
    %89 = arith.mulf %88, %55 : vector<16x128xf32>
    %90 = arith.addf %86, %89 : vector<16x128xf32>
    %c29 = arith.constant 29 : index
    %91 = memref.load %arg1[%c29] : memref<137xf32, #tpu.memory_space<smem>>
    %92 = vector.broadcast %91 : f32 to vector<16x128xf32>
    %93 = arith.addf %90, %92 : vector<16x128xf32>
    %cst_8 = arith.constant 0.000000e+00 : f32
    %94 = vector.broadcast %cst_8 : f32 to vector<16x128xf32>
    %95 = arith.maximumf %93, %94 : vector<16x128xf32>
    %c20 = arith.constant 20 : index
    %96 = memref.load %arg1[%c20] : memref<137xf32, #tpu.memory_space<smem>>
    %97 = vector.broadcast %96 : f32 to vector<16x128xf32>
    %98 = arith.mulf %97, %19 : vector<16x128xf32>
    %c21 = arith.constant 21 : index
    %99 = memref.load %arg1[%c21] : memref<137xf32, #tpu.memory_space<smem>>
    %100 = vector.broadcast %99 : f32 to vector<16x128xf32>
    %101 = arith.mulf %100, %31 : vector<16x128xf32>
    %102 = arith.addf %98, %101 : vector<16x128xf32>
    %c22 = arith.constant 22 : index
    %103 = memref.load %arg1[%c22] : memref<137xf32, #tpu.memory_space<smem>>
    %104 = vector.broadcast %103 : f32 to vector<16x128xf32>
    %105 = arith.mulf %104, %43 : vector<16x128xf32>
    %106 = arith.addf %102, %105 : vector<16x128xf32>
    %c23 = arith.constant 23 : index
    %107 = memref.load %arg1[%c23] : memref<137xf32, #tpu.memory_space<smem>>
    %108 = vector.broadcast %107 : f32 to vector<16x128xf32>
    %109 = arith.mulf %108, %55 : vector<16x128xf32>
    %110 = arith.addf %106, %109 : vector<16x128xf32>
    %c30 = arith.constant 30 : index
    %111 = memref.load %arg1[%c30] : memref<137xf32, #tpu.memory_space<smem>>
    %112 = vector.broadcast %111 : f32 to vector<16x128xf32>
    %113 = arith.addf %110, %112 : vector<16x128xf32>
    %cst_9 = arith.constant 0.000000e+00 : f32
    %114 = vector.broadcast %cst_9 : f32 to vector<16x128xf32>
    %115 = arith.maximumf %113, %114 : vector<16x128xf32>
    %c24 = arith.constant 24 : index
    %116 = memref.load %arg1[%c24] : memref<137xf32, #tpu.memory_space<smem>>
    %117 = vector.broadcast %116 : f32 to vector<16x128xf32>
    %118 = arith.mulf %117, %19 : vector<16x128xf32>
    %c25 = arith.constant 25 : index
    %119 = memref.load %arg1[%c25] : memref<137xf32, #tpu.memory_space<smem>>
    %120 = vector.broadcast %119 : f32 to vector<16x128xf32>
    %121 = arith.mulf %120, %31 : vector<16x128xf32>
    %122 = arith.addf %118, %121 : vector<16x128xf32>
    %c26 = arith.constant 26 : index
    %123 = memref.load %arg1[%c26] : memref<137xf32, #tpu.memory_space<smem>>
    %124 = vector.broadcast %123 : f32 to vector<16x128xf32>
    %125 = arith.mulf %124, %43 : vector<16x128xf32>
    %126 = arith.addf %122, %125 : vector<16x128xf32>
    %c27 = arith.constant 27 : index
    %127 = memref.load %arg1[%c27] : memref<137xf32, #tpu.memory_space<smem>>
    %128 = vector.broadcast %127 : f32 to vector<16x128xf32>
    %129 = arith.mulf %128, %55 : vector<16x128xf32>
    %130 = arith.addf %126, %129 : vector<16x128xf32>
    %c31 = arith.constant 31 : index
    %131 = memref.load %arg1[%c31] : memref<137xf32, #tpu.memory_space<smem>>
    %132 = vector.broadcast %131 : f32 to vector<16x128xf32>
    %133 = arith.addf %130, %132 : vector<16x128xf32>
    %cst_10 = arith.constant 0.000000e+00 : f32
    %134 = vector.broadcast %cst_10 : f32 to vector<16x128xf32>
    %135 = arith.maximumf %133, %134 : vector<16x128xf32>
    %c32 = arith.constant 32 : index
    %136 = memref.load %arg1[%c32] : memref<137xf32, #tpu.memory_space<smem>>
    %137 = vector.broadcast %136 : f32 to vector<16x128xf32>
    %138 = arith.mulf %137, %75 : vector<16x128xf32>
    %c33 = arith.constant 33 : index
    %139 = memref.load %arg1[%c33] : memref<137xf32, #tpu.memory_space<smem>>
    %140 = vector.broadcast %139 : f32 to vector<16x128xf32>
    %141 = arith.mulf %140, %95 : vector<16x128xf32>
    %142 = arith.addf %138, %141 : vector<16x128xf32>
    %c34 = arith.constant 34 : index
    %143 = memref.load %arg1[%c34] : memref<137xf32, #tpu.memory_space<smem>>
    %144 = vector.broadcast %143 : f32 to vector<16x128xf32>
    %145 = arith.mulf %144, %115 : vector<16x128xf32>
    %146 = arith.addf %142, %145 : vector<16x128xf32>
    %c35 = arith.constant 35 : index
    %147 = memref.load %arg1[%c35] : memref<137xf32, #tpu.memory_space<smem>>
    %148 = vector.broadcast %147 : f32 to vector<16x128xf32>
    %149 = arith.mulf %148, %135 : vector<16x128xf32>
    %150 = arith.addf %146, %149 : vector<16x128xf32>
    %c48 = arith.constant 48 : index
    %151 = memref.load %arg1[%c48] : memref<137xf32, #tpu.memory_space<smem>>
    %152 = vector.broadcast %151 : f32 to vector<16x128xf32>
    %153 = arith.addf %150, %152 : vector<16x128xf32>
    %cst_11 = arith.constant 0.000000e+00 : f32
    %154 = vector.broadcast %cst_11 : f32 to vector<16x128xf32>
    %155 = arith.maximumf %153, %154 : vector<16x128xf32>
    %c36 = arith.constant 36 : index
    %156 = memref.load %arg1[%c36] : memref<137xf32, #tpu.memory_space<smem>>
    %157 = vector.broadcast %156 : f32 to vector<16x128xf32>
    %158 = arith.mulf %157, %75 : vector<16x128xf32>
    %c37 = arith.constant 37 : index
    %159 = memref.load %arg1[%c37] : memref<137xf32, #tpu.memory_space<smem>>
    %160 = vector.broadcast %159 : f32 to vector<16x128xf32>
    %161 = arith.mulf %160, %95 : vector<16x128xf32>
    %162 = arith.addf %158, %161 : vector<16x128xf32>
    %c38 = arith.constant 38 : index
    %163 = memref.load %arg1[%c38] : memref<137xf32, #tpu.memory_space<smem>>
    %164 = vector.broadcast %163 : f32 to vector<16x128xf32>
    %165 = arith.mulf %164, %115 : vector<16x128xf32>
    %166 = arith.addf %162, %165 : vector<16x128xf32>
    %c39 = arith.constant 39 : index
    %167 = memref.load %arg1[%c39] : memref<137xf32, #tpu.memory_space<smem>>
    %168 = vector.broadcast %167 : f32 to vector<16x128xf32>
    %169 = arith.mulf %168, %135 : vector<16x128xf32>
    %170 = arith.addf %166, %169 : vector<16x128xf32>
    %c49 = arith.constant 49 : index
    %171 = memref.load %arg1[%c49] : memref<137xf32, #tpu.memory_space<smem>>
    %172 = vector.broadcast %171 : f32 to vector<16x128xf32>
    %173 = arith.addf %170, %172 : vector<16x128xf32>
    %cst_12 = arith.constant 0.000000e+00 : f32
    %174 = vector.broadcast %cst_12 : f32 to vector<16x128xf32>
    %175 = arith.maximumf %173, %174 : vector<16x128xf32>
    %c40 = arith.constant 40 : index
    %176 = memref.load %arg1[%c40] : memref<137xf32, #tpu.memory_space<smem>>
    %177 = vector.broadcast %176 : f32 to vector<16x128xf32>
    %178 = arith.mulf %177, %75 : vector<16x128xf32>
    %c41 = arith.constant 41 : index
    %179 = memref.load %arg1[%c41] : memref<137xf32, #tpu.memory_space<smem>>
    %180 = vector.broadcast %179 : f32 to vector<16x128xf32>
    %181 = arith.mulf %180, %95 : vector<16x128xf32>
    %182 = arith.addf %178, %181 : vector<16x128xf32>
    %c42 = arith.constant 42 : index
    %183 = memref.load %arg1[%c42] : memref<137xf32, #tpu.memory_space<smem>>
    %184 = vector.broadcast %183 : f32 to vector<16x128xf32>
    %185 = arith.mulf %184, %115 : vector<16x128xf32>
    %186 = arith.addf %182, %185 : vector<16x128xf32>
    %c43 = arith.constant 43 : index
    %187 = memref.load %arg1[%c43] : memref<137xf32, #tpu.memory_space<smem>>
    %188 = vector.broadcast %187 : f32 to vector<16x128xf32>
    %189 = arith.mulf %188, %135 : vector<16x128xf32>
    %190 = arith.addf %186, %189 : vector<16x128xf32>
    %c50 = arith.constant 50 : index
    %191 = memref.load %arg1[%c50] : memref<137xf32, #tpu.memory_space<smem>>
    %192 = vector.broadcast %191 : f32 to vector<16x128xf32>
    %193 = arith.addf %190, %192 : vector<16x128xf32>
    %cst_13 = arith.constant 0.000000e+00 : f32
    %194 = vector.broadcast %cst_13 : f32 to vector<16x128xf32>
    %195 = arith.maximumf %193, %194 : vector<16x128xf32>
    %c44 = arith.constant 44 : index
    %196 = memref.load %arg1[%c44] : memref<137xf32, #tpu.memory_space<smem>>
    %197 = vector.broadcast %196 : f32 to vector<16x128xf32>
    %198 = arith.mulf %197, %75 : vector<16x128xf32>
    %c45 = arith.constant 45 : index
    %199 = memref.load %arg1[%c45] : memref<137xf32, #tpu.memory_space<smem>>
    %200 = vector.broadcast %199 : f32 to vector<16x128xf32>
    %201 = arith.mulf %200, %95 : vector<16x128xf32>
    %202 = arith.addf %198, %201 : vector<16x128xf32>
    %c46 = arith.constant 46 : index
    %203 = memref.load %arg1[%c46] : memref<137xf32, #tpu.memory_space<smem>>
    %204 = vector.broadcast %203 : f32 to vector<16x128xf32>
    %205 = arith.mulf %204, %115 : vector<16x128xf32>
    %206 = arith.addf %202, %205 : vector<16x128xf32>
    %c47 = arith.constant 47 : index
    %207 = memref.load %arg1[%c47] : memref<137xf32, #tpu.memory_space<smem>>
    %208 = vector.broadcast %207 : f32 to vector<16x128xf32>
    %209 = arith.mulf %208, %135 : vector<16x128xf32>
    %210 = arith.addf %206, %209 : vector<16x128xf32>
    %c51 = arith.constant 51 : index
    %211 = memref.load %arg1[%c51] : memref<137xf32, #tpu.memory_space<smem>>
    %212 = vector.broadcast %211 : f32 to vector<16x128xf32>
    %213 = arith.addf %210, %212 : vector<16x128xf32>
    %cst_14 = arith.constant 0.000000e+00 : f32
    %214 = vector.broadcast %cst_14 : f32 to vector<16x128xf32>
    %215 = arith.maximumf %213, %214 : vector<16x128xf32>
    %c52 = arith.constant 52 : index
    %216 = memref.load %arg1[%c52] : memref<137xf32, #tpu.memory_space<smem>>
    %217 = vector.broadcast %216 : f32 to vector<16x128xf32>
    %218 = arith.mulf %217, %155 : vector<16x128xf32>
    %c53 = arith.constant 53 : index
    %219 = memref.load %arg1[%c53] : memref<137xf32, #tpu.memory_space<smem>>
    %220 = vector.broadcast %219 : f32 to vector<16x128xf32>
    %221 = arith.mulf %220, %175 : vector<16x128xf32>
    %222 = arith.addf %218, %221 : vector<16x128xf32>
    %c54 = arith.constant 54 : index
    %223 = memref.load %arg1[%c54] : memref<137xf32, #tpu.memory_space<smem>>
    %224 = vector.broadcast %223 : f32 to vector<16x128xf32>
    %225 = arith.mulf %224, %195 : vector<16x128xf32>
    %226 = arith.addf %222, %225 : vector<16x128xf32>
    %c55 = arith.constant 55 : index
    %227 = memref.load %arg1[%c55] : memref<137xf32, #tpu.memory_space<smem>>
    %228 = vector.broadcast %227 : f32 to vector<16x128xf32>
    %229 = arith.mulf %228, %215 : vector<16x128xf32>
    %230 = arith.addf %226, %229 : vector<16x128xf32>
    %c68 = arith.constant 68 : index
    %231 = memref.load %arg1[%c68] : memref<137xf32, #tpu.memory_space<smem>>
    %232 = vector.broadcast %231 : f32 to vector<16x128xf32>
    %233 = arith.addf %230, %232 : vector<16x128xf32>
    %cst_15 = arith.constant 0.000000e+00 : f32
    %234 = vector.broadcast %cst_15 : f32 to vector<16x128xf32>
    %235 = arith.maximumf %233, %234 : vector<16x128xf32>
    %c56 = arith.constant 56 : index
    %236 = memref.load %arg1[%c56] : memref<137xf32, #tpu.memory_space<smem>>
    %237 = vector.broadcast %236 : f32 to vector<16x128xf32>
    %238 = arith.mulf %237, %155 : vector<16x128xf32>
    %c57 = arith.constant 57 : index
    %239 = memref.load %arg1[%c57] : memref<137xf32, #tpu.memory_space<smem>>
    %240 = vector.broadcast %239 : f32 to vector<16x128xf32>
    %241 = arith.mulf %240, %175 : vector<16x128xf32>
    %242 = arith.addf %238, %241 : vector<16x128xf32>
    %c58 = arith.constant 58 : index
    %243 = memref.load %arg1[%c58] : memref<137xf32, #tpu.memory_space<smem>>
    %244 = vector.broadcast %243 : f32 to vector<16x128xf32>
    %245 = arith.mulf %244, %195 : vector<16x128xf32>
    %246 = arith.addf %242, %245 : vector<16x128xf32>
    %c59 = arith.constant 59 : index
    %247 = memref.load %arg1[%c59] : memref<137xf32, #tpu.memory_space<smem>>
    %248 = vector.broadcast %247 : f32 to vector<16x128xf32>
    %249 = arith.mulf %248, %215 : vector<16x128xf32>
    %250 = arith.addf %246, %249 : vector<16x128xf32>
    %c69 = arith.constant 69 : index
    %251 = memref.load %arg1[%c69] : memref<137xf32, #tpu.memory_space<smem>>
    %252 = vector.broadcast %251 : f32 to vector<16x128xf32>
    %253 = arith.addf %250, %252 : vector<16x128xf32>
    %cst_16 = arith.constant 0.000000e+00 : f32
    %254 = vector.broadcast %cst_16 : f32 to vector<16x128xf32>
    %255 = arith.maximumf %253, %254 : vector<16x128xf32>
    %c60 = arith.constant 60 : index
    %256 = memref.load %arg1[%c60] : memref<137xf32, #tpu.memory_space<smem>>
    %257 = vector.broadcast %256 : f32 to vector<16x128xf32>
    %258 = arith.mulf %257, %155 : vector<16x128xf32>
    %c61 = arith.constant 61 : index
    %259 = memref.load %arg1[%c61] : memref<137xf32, #tpu.memory_space<smem>>
    %260 = vector.broadcast %259 : f32 to vector<16x128xf32>
    %261 = arith.mulf %260, %175 : vector<16x128xf32>
    %262 = arith.addf %258, %261 : vector<16x128xf32>
    %c62 = arith.constant 62 : index
    %263 = memref.load %arg1[%c62] : memref<137xf32, #tpu.memory_space<smem>>
    %264 = vector.broadcast %263 : f32 to vector<16x128xf32>
    %265 = arith.mulf %264, %195 : vector<16x128xf32>
    %266 = arith.addf %262, %265 : vector<16x128xf32>
    %c63 = arith.constant 63 : index
    %267 = memref.load %arg1[%c63] : memref<137xf32, #tpu.memory_space<smem>>
    %268 = vector.broadcast %267 : f32 to vector<16x128xf32>
    %269 = arith.mulf %268, %215 : vector<16x128xf32>
    %270 = arith.addf %266, %269 : vector<16x128xf32>
    %c70 = arith.constant 70 : index
    %271 = memref.load %arg1[%c70] : memref<137xf32, #tpu.memory_space<smem>>
    %272 = vector.broadcast %271 : f32 to vector<16x128xf32>
    %273 = arith.addf %270, %272 : vector<16x128xf32>
    %cst_17 = arith.constant 0.000000e+00 : f32
    %274 = vector.broadcast %cst_17 : f32 to vector<16x128xf32>
    %275 = arith.maximumf %273, %274 : vector<16x128xf32>
    %c64 = arith.constant 64 : index
    %276 = memref.load %arg1[%c64] : memref<137xf32, #tpu.memory_space<smem>>
    %277 = vector.broadcast %276 : f32 to vector<16x128xf32>
    %278 = arith.mulf %277, %155 : vector<16x128xf32>
    %c65 = arith.constant 65 : index
    %279 = memref.load %arg1[%c65] : memref<137xf32, #tpu.memory_space<smem>>
    %280 = vector.broadcast %279 : f32 to vector<16x128xf32>
    %281 = arith.mulf %280, %175 : vector<16x128xf32>
    %282 = arith.addf %278, %281 : vector<16x128xf32>
    %c66 = arith.constant 66 : index
    %283 = memref.load %arg1[%c66] : memref<137xf32, #tpu.memory_space<smem>>
    %284 = vector.broadcast %283 : f32 to vector<16x128xf32>
    %285 = arith.mulf %284, %195 : vector<16x128xf32>
    %286 = arith.addf %282, %285 : vector<16x128xf32>
    %c67 = arith.constant 67 : index
    %287 = memref.load %arg1[%c67] : memref<137xf32, #tpu.memory_space<smem>>
    %288 = vector.broadcast %287 : f32 to vector<16x128xf32>
    %289 = arith.mulf %288, %215 : vector<16x128xf32>
    %290 = arith.addf %286, %289 : vector<16x128xf32>
    %c71 = arith.constant 71 : index
    %291 = memref.load %arg1[%c71] : memref<137xf32, #tpu.memory_space<smem>>
    %292 = vector.broadcast %291 : f32 to vector<16x128xf32>
    %293 = arith.addf %290, %292 : vector<16x128xf32>
    %cst_18 = arith.constant 0.000000e+00 : f32
    %294 = vector.broadcast %cst_18 : f32 to vector<16x128xf32>
    %295 = arith.maximumf %293, %294 : vector<16x128xf32>
    %c72 = arith.constant 72 : index
    %296 = memref.load %arg1[%c72] : memref<137xf32, #tpu.memory_space<smem>>
    %297 = vector.broadcast %296 : f32 to vector<16x128xf32>
    %298 = arith.mulf %297, %235 : vector<16x128xf32>
    %c73 = arith.constant 73 : index
    %299 = memref.load %arg1[%c73] : memref<137xf32, #tpu.memory_space<smem>>
    %300 = vector.broadcast %299 : f32 to vector<16x128xf32>
    %301 = arith.mulf %300, %255 : vector<16x128xf32>
    %302 = arith.addf %298, %301 : vector<16x128xf32>
    %c74 = arith.constant 74 : index
    %303 = memref.load %arg1[%c74] : memref<137xf32, #tpu.memory_space<smem>>
    %304 = vector.broadcast %303 : f32 to vector<16x128xf32>
    %305 = arith.mulf %304, %275 : vector<16x128xf32>
    %306 = arith.addf %302, %305 : vector<16x128xf32>
    %c75 = arith.constant 75 : index
    %307 = memref.load %arg1[%c75] : memref<137xf32, #tpu.memory_space<smem>>
    %308 = vector.broadcast %307 : f32 to vector<16x128xf32>
    %309 = arith.mulf %308, %295 : vector<16x128xf32>
    %310 = arith.addf %306, %309 : vector<16x128xf32>
    %c88 = arith.constant 88 : index
    %311 = memref.load %arg1[%c88] : memref<137xf32, #tpu.memory_space<smem>>
    %312 = vector.broadcast %311 : f32 to vector<16x128xf32>
    %313 = arith.addf %310, %312 : vector<16x128xf32>
    %cst_19 = arith.constant 0.000000e+00 : f32
    %314 = vector.broadcast %cst_19 : f32 to vector<16x128xf32>
    %315 = arith.maximumf %313, %314 : vector<16x128xf32>
    %c76 = arith.constant 76 : index
    %316 = memref.load %arg1[%c76] : memref<137xf32, #tpu.memory_space<smem>>
    %317 = vector.broadcast %316 : f32 to vector<16x128xf32>
    %318 = arith.mulf %317, %235 : vector<16x128xf32>
    %c77 = arith.constant 77 : index
    %319 = memref.load %arg1[%c77] : memref<137xf32, #tpu.memory_space<smem>>
    %320 = vector.broadcast %319 : f32 to vector<16x128xf32>
    %321 = arith.mulf %320, %255 : vector<16x128xf32>
    %322 = arith.addf %318, %321 : vector<16x128xf32>
    %c78 = arith.constant 78 : index
    %323 = memref.load %arg1[%c78] : memref<137xf32, #tpu.memory_space<smem>>
    %324 = vector.broadcast %323 : f32 to vector<16x128xf32>
    %325 = arith.mulf %324, %275 : vector<16x128xf32>
    %326 = arith.addf %322, %325 : vector<16x128xf32>
    %c79 = arith.constant 79 : index
    %327 = memref.load %arg1[%c79] : memref<137xf32, #tpu.memory_space<smem>>
    %328 = vector.broadcast %327 : f32 to vector<16x128xf32>
    %329 = arith.mulf %328, %295 : vector<16x128xf32>
    %330 = arith.addf %326, %329 : vector<16x128xf32>
    %c89 = arith.constant 89 : index
    %331 = memref.load %arg1[%c89] : memref<137xf32, #tpu.memory_space<smem>>
    %332 = vector.broadcast %331 : f32 to vector<16x128xf32>
    %333 = arith.addf %330, %332 : vector<16x128xf32>
    %cst_20 = arith.constant 0.000000e+00 : f32
    %334 = vector.broadcast %cst_20 : f32 to vector<16x128xf32>
    %335 = arith.maximumf %333, %334 : vector<16x128xf32>
    %c80 = arith.constant 80 : index
    %336 = memref.load %arg1[%c80] : memref<137xf32, #tpu.memory_space<smem>>
    %337 = vector.broadcast %336 : f32 to vector<16x128xf32>
    %338 = arith.mulf %337, %235 : vector<16x128xf32>
    %c81 = arith.constant 81 : index
    %339 = memref.load %arg1[%c81] : memref<137xf32, #tpu.memory_space<smem>>
    %340 = vector.broadcast %339 : f32 to vector<16x128xf32>
    %341 = arith.mulf %340, %255 : vector<16x128xf32>
    %342 = arith.addf %338, %341 : vector<16x128xf32>
    %c82 = arith.constant 82 : index
    %343 = memref.load %arg1[%c82] : memref<137xf32, #tpu.memory_space<smem>>
    %344 = vector.broadcast %343 : f32 to vector<16x128xf32>
    %345 = arith.mulf %344, %275 : vector<16x128xf32>
    %346 = arith.addf %342, %345 : vector<16x128xf32>
    %c83 = arith.constant 83 : index
    %347 = memref.load %arg1[%c83] : memref<137xf32, #tpu.memory_space<smem>>
    %348 = vector.broadcast %347 : f32 to vector<16x128xf32>
    %349 = arith.mulf %348, %295 : vector<16x128xf32>
    %350 = arith.addf %346, %349 : vector<16x128xf32>
    %c90 = arith.constant 90 : index
    %351 = memref.load %arg1[%c90] : memref<137xf32, #tpu.memory_space<smem>>
    %352 = vector.broadcast %351 : f32 to vector<16x128xf32>
    %353 = arith.addf %350, %352 : vector<16x128xf32>
    %cst_21 = arith.constant 0.000000e+00 : f32
    %354 = vector.broadcast %cst_21 : f32 to vector<16x128xf32>
    %355 = arith.maximumf %353, %354 : vector<16x128xf32>
    %c84 = arith.constant 84 : index
    %356 = memref.load %arg1[%c84] : memref<137xf32, #tpu.memory_space<smem>>
    %357 = vector.broadcast %356 : f32 to vector<16x128xf32>
    %358 = arith.mulf %357, %235 : vector<16x128xf32>
    %c85 = arith.constant 85 : index
    %359 = memref.load %arg1[%c85] : memref<137xf32, #tpu.memory_space<smem>>
    %360 = vector.broadcast %359 : f32 to vector<16x128xf32>
    %361 = arith.mulf %360, %255 : vector<16x128xf32>
    %362 = arith.addf %358, %361 : vector<16x128xf32>
    %c86 = arith.constant 86 : index
    %363 = memref.load %arg1[%c86] : memref<137xf32, #tpu.memory_space<smem>>
    %364 = vector.broadcast %363 : f32 to vector<16x128xf32>
    %365 = arith.mulf %364, %275 : vector<16x128xf32>
    %366 = arith.addf %362, %365 : vector<16x128xf32>
    %c87 = arith.constant 87 : index
    %367 = memref.load %arg1[%c87] : memref<137xf32, #tpu.memory_space<smem>>
    %368 = vector.broadcast %367 : f32 to vector<16x128xf32>
    %369 = arith.mulf %368, %295 : vector<16x128xf32>
    %370 = arith.addf %366, %369 : vector<16x128xf32>
    %c91 = arith.constant 91 : index
    %371 = memref.load %arg1[%c91] : memref<137xf32, #tpu.memory_space<smem>>
    %372 = vector.broadcast %371 : f32 to vector<16x128xf32>
    %373 = arith.addf %370, %372 : vector<16x128xf32>
    %cst_22 = arith.constant 0.000000e+00 : f32
    %374 = vector.broadcast %cst_22 : f32 to vector<16x128xf32>
    %375 = arith.maximumf %373, %374 : vector<16x128xf32>
    %c92 = arith.constant 92 : index
    %376 = memref.load %arg1[%c92] : memref<137xf32, #tpu.memory_space<smem>>
    %377 = vector.broadcast %376 : f32 to vector<16x128xf32>
    %378 = arith.mulf %377, %315 : vector<16x128xf32>
    %c93 = arith.constant 93 : index
    %379 = memref.load %arg1[%c93] : memref<137xf32, #tpu.memory_space<smem>>
    %380 = vector.broadcast %379 : f32 to vector<16x128xf32>
    %381 = arith.mulf %380, %335 : vector<16x128xf32>
    %382 = arith.addf %378, %381 : vector<16x128xf32>
    %c94 = arith.constant 94 : index
    %383 = memref.load %arg1[%c94] : memref<137xf32, #tpu.memory_space<smem>>
    %384 = vector.broadcast %383 : f32 to vector<16x128xf32>
    %385 = arith.mulf %384, %355 : vector<16x128xf32>
    %386 = arith.addf %382, %385 : vector<16x128xf32>
    %c95 = arith.constant 95 : index
    %387 = memref.load %arg1[%c95] : memref<137xf32, #tpu.memory_space<smem>>
    %388 = vector.broadcast %387 : f32 to vector<16x128xf32>
    %389 = arith.mulf %388, %375 : vector<16x128xf32>
    %390 = arith.addf %386, %389 : vector<16x128xf32>
    %c108 = arith.constant 108 : index
    %391 = memref.load %arg1[%c108] : memref<137xf32, #tpu.memory_space<smem>>
    %392 = vector.broadcast %391 : f32 to vector<16x128xf32>
    %393 = arith.addf %390, %392 : vector<16x128xf32>
    %cst_23 = arith.constant 0.000000e+00 : f32
    %394 = vector.broadcast %cst_23 : f32 to vector<16x128xf32>
    %395 = arith.maximumf %393, %394 : vector<16x128xf32>
    %c96 = arith.constant 96 : index
    %396 = memref.load %arg1[%c96] : memref<137xf32, #tpu.memory_space<smem>>
    %397 = vector.broadcast %396 : f32 to vector<16x128xf32>
    %398 = arith.mulf %397, %315 : vector<16x128xf32>
    %c97 = arith.constant 97 : index
    %399 = memref.load %arg1[%c97] : memref<137xf32, #tpu.memory_space<smem>>
    %400 = vector.broadcast %399 : f32 to vector<16x128xf32>
    %401 = arith.mulf %400, %335 : vector<16x128xf32>
    %402 = arith.addf %398, %401 : vector<16x128xf32>
    %c98 = arith.constant 98 : index
    %403 = memref.load %arg1[%c98] : memref<137xf32, #tpu.memory_space<smem>>
    %404 = vector.broadcast %403 : f32 to vector<16x128xf32>
    %405 = arith.mulf %404, %355 : vector<16x128xf32>
    %406 = arith.addf %402, %405 : vector<16x128xf32>
    %c99 = arith.constant 99 : index
    %407 = memref.load %arg1[%c99] : memref<137xf32, #tpu.memory_space<smem>>
    %408 = vector.broadcast %407 : f32 to vector<16x128xf32>
    %409 = arith.mulf %408, %375 : vector<16x128xf32>
    %410 = arith.addf %406, %409 : vector<16x128xf32>
    %c109 = arith.constant 109 : index
    %411 = memref.load %arg1[%c109] : memref<137xf32, #tpu.memory_space<smem>>
    %412 = vector.broadcast %411 : f32 to vector<16x128xf32>
    %413 = arith.addf %410, %412 : vector<16x128xf32>
    %cst_24 = arith.constant 0.000000e+00 : f32
    %414 = vector.broadcast %cst_24 : f32 to vector<16x128xf32>
    %415 = arith.maximumf %413, %414 : vector<16x128xf32>
    %c100 = arith.constant 100 : index
    %416 = memref.load %arg1[%c100] : memref<137xf32, #tpu.memory_space<smem>>
    %417 = vector.broadcast %416 : f32 to vector<16x128xf32>
    %418 = arith.mulf %417, %315 : vector<16x128xf32>
    %c101 = arith.constant 101 : index
    %419 = memref.load %arg1[%c101] : memref<137xf32, #tpu.memory_space<smem>>
    %420 = vector.broadcast %419 : f32 to vector<16x128xf32>
    %421 = arith.mulf %420, %335 : vector<16x128xf32>
    %422 = arith.addf %418, %421 : vector<16x128xf32>
    %c102 = arith.constant 102 : index
    %423 = memref.load %arg1[%c102] : memref<137xf32, #tpu.memory_space<smem>>
    %424 = vector.broadcast %423 : f32 to vector<16x128xf32>
    %425 = arith.mulf %424, %355 : vector<16x128xf32>
    %426 = arith.addf %422, %425 : vector<16x128xf32>
    %c103 = arith.constant 103 : index
    %427 = memref.load %arg1[%c103] : memref<137xf32, #tpu.memory_space<smem>>
    %428 = vector.broadcast %427 : f32 to vector<16x128xf32>
    %429 = arith.mulf %428, %375 : vector<16x128xf32>
    %430 = arith.addf %426, %429 : vector<16x128xf32>
    %c110 = arith.constant 110 : index
    %431 = memref.load %arg1[%c110] : memref<137xf32, #tpu.memory_space<smem>>
    %432 = vector.broadcast %431 : f32 to vector<16x128xf32>
    %433 = arith.addf %430, %432 : vector<16x128xf32>
    %cst_25 = arith.constant 0.000000e+00 : f32
    %434 = vector.broadcast %cst_25 : f32 to vector<16x128xf32>
    %435 = arith.maximumf %433, %434 : vector<16x128xf32>
    %c104 = arith.constant 104 : index
    %436 = memref.load %arg1[%c104] : memref<137xf32, #tpu.memory_space<smem>>
    %437 = vector.broadcast %436 : f32 to vector<16x128xf32>
    %438 = arith.mulf %437, %315 : vector<16x128xf32>
    %c105 = arith.constant 105 : index
    %439 = memref.load %arg1[%c105] : memref<137xf32, #tpu.memory_space<smem>>
    %440 = vector.broadcast %439 : f32 to vector<16x128xf32>
    %441 = arith.mulf %440, %335 : vector<16x128xf32>
    %442 = arith.addf %438, %441 : vector<16x128xf32>
    %c106 = arith.constant 106 : index
    %443 = memref.load %arg1[%c106] : memref<137xf32, #tpu.memory_space<smem>>
    %444 = vector.broadcast %443 : f32 to vector<16x128xf32>
    %445 = arith.mulf %444, %355 : vector<16x128xf32>
    %446 = arith.addf %442, %445 : vector<16x128xf32>
    %c107 = arith.constant 107 : index
    %447 = memref.load %arg1[%c107] : memref<137xf32, #tpu.memory_space<smem>>
    %448 = vector.broadcast %447 : f32 to vector<16x128xf32>
    %449 = arith.mulf %448, %375 : vector<16x128xf32>
    %450 = arith.addf %446, %449 : vector<16x128xf32>
    %c111 = arith.constant 111 : index
    %451 = memref.load %arg1[%c111] : memref<137xf32, #tpu.memory_space<smem>>
    %452 = vector.broadcast %451 : f32 to vector<16x128xf32>
    %453 = arith.addf %450, %452 : vector<16x128xf32>
    %cst_26 = arith.constant 0.000000e+00 : f32
    %454 = vector.broadcast %cst_26 : f32 to vector<16x128xf32>
    %455 = arith.maximumf %453, %454 : vector<16x128xf32>
    %c112 = arith.constant 112 : index
    %456 = memref.load %arg1[%c112] : memref<137xf32, #tpu.memory_space<smem>>
    %457 = vector.broadcast %456 : f32 to vector<16x128xf32>
    %458 = arith.mulf %457, %395 : vector<16x128xf32>
    %c113 = arith.constant 113 : index
    %459 = memref.load %arg1[%c113] : memref<137xf32, #tpu.memory_space<smem>>
    %460 = vector.broadcast %459 : f32 to vector<16x128xf32>
    %461 = arith.mulf %460, %415 : vector<16x128xf32>
    %462 = arith.addf %458, %461 : vector<16x128xf32>
    %c114 = arith.constant 114 : index
    %463 = memref.load %arg1[%c114] : memref<137xf32, #tpu.memory_space<smem>>
    %464 = vector.broadcast %463 : f32 to vector<16x128xf32>
    %465 = arith.mulf %464, %435 : vector<16x128xf32>
    %466 = arith.addf %462, %465 : vector<16x128xf32>
    %c115 = arith.constant 115 : index
    %467 = memref.load %arg1[%c115] : memref<137xf32, #tpu.memory_space<smem>>
    %468 = vector.broadcast %467 : f32 to vector<16x128xf32>
    %469 = arith.mulf %468, %455 : vector<16x128xf32>
    %470 = arith.addf %466, %469 : vector<16x128xf32>
    %c128 = arith.constant 128 : index
    %471 = memref.load %arg1[%c128] : memref<137xf32, #tpu.memory_space<smem>>
    %472 = vector.broadcast %471 : f32 to vector<16x128xf32>
    %473 = arith.addf %470, %472 : vector<16x128xf32>
    %cst_27 = arith.constant 0.000000e+00 : f32
    %474 = vector.broadcast %cst_27 : f32 to vector<16x128xf32>
    %475 = arith.maximumf %473, %474 : vector<16x128xf32>
    %c116 = arith.constant 116 : index
    %476 = memref.load %arg1[%c116] : memref<137xf32, #tpu.memory_space<smem>>
    %477 = vector.broadcast %476 : f32 to vector<16x128xf32>
    %478 = arith.mulf %477, %395 : vector<16x128xf32>
    %c117 = arith.constant 117 : index
    %479 = memref.load %arg1[%c117] : memref<137xf32, #tpu.memory_space<smem>>
    %480 = vector.broadcast %479 : f32 to vector<16x128xf32>
    %481 = arith.mulf %480, %415 : vector<16x128xf32>
    %482 = arith.addf %478, %481 : vector<16x128xf32>
    %c118 = arith.constant 118 : index
    %483 = memref.load %arg1[%c118] : memref<137xf32, #tpu.memory_space<smem>>
    %484 = vector.broadcast %483 : f32 to vector<16x128xf32>
    %485 = arith.mulf %484, %435 : vector<16x128xf32>
    %486 = arith.addf %482, %485 : vector<16x128xf32>
    %c119 = arith.constant 119 : index
    %487 = memref.load %arg1[%c119] : memref<137xf32, #tpu.memory_space<smem>>
    %488 = vector.broadcast %487 : f32 to vector<16x128xf32>
    %489 = arith.mulf %488, %455 : vector<16x128xf32>
    %490 = arith.addf %486, %489 : vector<16x128xf32>
    %c129 = arith.constant 129 : index
    %491 = memref.load %arg1[%c129] : memref<137xf32, #tpu.memory_space<smem>>
    %492 = vector.broadcast %491 : f32 to vector<16x128xf32>
    %493 = arith.addf %490, %492 : vector<16x128xf32>
    %cst_28 = arith.constant 0.000000e+00 : f32
    %494 = vector.broadcast %cst_28 : f32 to vector<16x128xf32>
    %495 = arith.maximumf %493, %494 : vector<16x128xf32>
    %c120 = arith.constant 120 : index
    %496 = memref.load %arg1[%c120] : memref<137xf32, #tpu.memory_space<smem>>
    %497 = vector.broadcast %496 : f32 to vector<16x128xf32>
    %498 = arith.mulf %497, %395 : vector<16x128xf32>
    %c121 = arith.constant 121 : index
    %499 = memref.load %arg1[%c121] : memref<137xf32, #tpu.memory_space<smem>>
    %500 = vector.broadcast %499 : f32 to vector<16x128xf32>
    %501 = arith.mulf %500, %415 : vector<16x128xf32>
    %502 = arith.addf %498, %501 : vector<16x128xf32>
    %c122 = arith.constant 122 : index
    %503 = memref.load %arg1[%c122] : memref<137xf32, #tpu.memory_space<smem>>
    %504 = vector.broadcast %503 : f32 to vector<16x128xf32>
    %505 = arith.mulf %504, %435 : vector<16x128xf32>
    %506 = arith.addf %502, %505 : vector<16x128xf32>
    %c123 = arith.constant 123 : index
    %507 = memref.load %arg1[%c123] : memref<137xf32, #tpu.memory_space<smem>>
    %508 = vector.broadcast %507 : f32 to vector<16x128xf32>
    %509 = arith.mulf %508, %455 : vector<16x128xf32>
    %510 = arith.addf %506, %509 : vector<16x128xf32>
    %c130 = arith.constant 130 : index
    %511 = memref.load %arg1[%c130] : memref<137xf32, #tpu.memory_space<smem>>
    %512 = vector.broadcast %511 : f32 to vector<16x128xf32>
    %513 = arith.addf %510, %512 : vector<16x128xf32>
    %cst_29 = arith.constant 0.000000e+00 : f32
    %514 = vector.broadcast %cst_29 : f32 to vector<16x128xf32>
    %515 = arith.maximumf %513, %514 : vector<16x128xf32>
    %c124 = arith.constant 124 : index
    %516 = memref.load %arg1[%c124] : memref<137xf32, #tpu.memory_space<smem>>
    %517 = vector.broadcast %516 : f32 to vector<16x128xf32>
    %518 = arith.mulf %517, %395 : vector<16x128xf32>
    %c125 = arith.constant 125 : index
    %519 = memref.load %arg1[%c125] : memref<137xf32, #tpu.memory_space<smem>>
    %520 = vector.broadcast %519 : f32 to vector<16x128xf32>
    %521 = arith.mulf %520, %415 : vector<16x128xf32>
    %522 = arith.addf %518, %521 : vector<16x128xf32>
    %c126 = arith.constant 126 : index
    %523 = memref.load %arg1[%c126] : memref<137xf32, #tpu.memory_space<smem>>
    %524 = vector.broadcast %523 : f32 to vector<16x128xf32>
    %525 = arith.mulf %524, %435 : vector<16x128xf32>
    %526 = arith.addf %522, %525 : vector<16x128xf32>
    %c127 = arith.constant 127 : index
    %527 = memref.load %arg1[%c127] : memref<137xf32, #tpu.memory_space<smem>>
    %528 = vector.broadcast %527 : f32 to vector<16x128xf32>
    %529 = arith.mulf %528, %455 : vector<16x128xf32>
    %530 = arith.addf %526, %529 : vector<16x128xf32>
    %c131 = arith.constant 131 : index
    %531 = memref.load %arg1[%c131] : memref<137xf32, #tpu.memory_space<smem>>
    %532 = vector.broadcast %531 : f32 to vector<16x128xf32>
    %533 = arith.addf %530, %532 : vector<16x128xf32>
    %cst_30 = arith.constant 0.000000e+00 : f32
    %534 = vector.broadcast %cst_30 : f32 to vector<16x128xf32>
    %535 = arith.maximumf %533, %534 : vector<16x128xf32>
    %c132 = arith.constant 132 : index
    %536 = memref.load %arg1[%c132] : memref<137xf32, #tpu.memory_space<smem>>
    %537 = vector.broadcast %536 : f32 to vector<16x128xf32>
    %538 = arith.mulf %537, %475 : vector<16x128xf32>
    %c133 = arith.constant 133 : index
    %539 = memref.load %arg1[%c133] : memref<137xf32, #tpu.memory_space<smem>>
    %540 = vector.broadcast %539 : f32 to vector<16x128xf32>
    %541 = arith.mulf %540, %495 : vector<16x128xf32>
    %542 = arith.addf %538, %541 : vector<16x128xf32>
    %c134 = arith.constant 134 : index
    %543 = memref.load %arg1[%c134] : memref<137xf32, #tpu.memory_space<smem>>
    %544 = vector.broadcast %543 : f32 to vector<16x128xf32>
    %545 = arith.mulf %544, %515 : vector<16x128xf32>
    %546 = arith.addf %542, %545 : vector<16x128xf32>
    %c135 = arith.constant 135 : index
    %547 = memref.load %arg1[%c135] : memref<137xf32, #tpu.memory_space<smem>>
    %548 = vector.broadcast %547 : f32 to vector<16x128xf32>
    %549 = arith.mulf %548, %535 : vector<16x128xf32>
    %550 = arith.addf %546, %549 : vector<16x128xf32>
    %c136 = arith.constant 136 : index
    %551 = memref.load %arg1[%c136] : memref<137xf32, #tpu.memory_space<smem>>
    %552 = vector.broadcast %551 : f32 to vector<16x128xf32>
    %553 = arith.addf %550, %552 : vector<16x128xf32>
    %554 = arith.index_cast %1 : i32 to index
    %c0_31 = arith.constant 0 : index
    %555 = vector.load %arg3[%554, %c0_31] : memref<64x128xf32, #tpu.memory_space<vmem>>, vector<16x128xf32>
    tpu.vector_store %arg3[%554, %c0_31], %553 {strides = array<i32>} : memref<64x128xf32, #tpu.memory_space<vmem>>, vector<16x128xf32>,
    %c1_i32 = arith.constant 1 : i32
    %c16_i32_32 = arith.constant 16 : i32
    %556 = arith.muli %c1_i32, %c16_i32_32 : i32
    %557 = tpu.assume_multiple %556, 16 : i32
    %c0_33 = arith.constant 0 : index
    %558 = arith.index_cast %557 : i32 to index
    %c0_34 = arith.constant 0 : index
    %559 = vector.load %arg2[%c0_33, %558, %c0_34] : memref<2x64x128xf32, #tpu.memory_space<vmem>>, vector<1x16x128xf32>
    %560 = vector.shape_cast %559 : vector<1x16x128xf32> to vector<16x128xf32>
    %c1_35 = arith.constant 1 : index
    %561 = arith.index_cast %557 : i32 to index
    %c0_36 = arith.constant 0 : index
    %562 = vector.load %arg2[%c1_35, %561, %c0_36] : memref<2x64x128xf32, #tpu.memory_space<vmem>>, vector<1x16x128xf32>
    %563 = vector.shape_cast %562 : vector<1x16x128xf32> to vector<16x128xf32>
    %c0_37 = arith.constant 0 : index
    %564 = memref.load %arg1[%c0_37] : memref<137xf32, #tpu.memory_space<smem>>
    %565 = vector.broadcast %564 : f32 to vector<16x128xf32>
    %566 = arith.mulf %565, %560 : vector<16x128xf32>
    %c1_38 = arith.constant 1 : index
    %567 = memref.load %arg1[%c1_38] : memref<137xf32, #tpu.memory_space<smem>>
    %568 = vector.broadcast %567 : f32 to vector<16x128xf32>
    %569 = arith.mulf %568, %563 : vector<16x128xf32>
    %570 = arith.addf %566, %569 : vector<16x128xf32>
    %c8_39 = arith.constant 8 : index
    %571 = memref.load %arg1[%c8_39] : memref<137xf32, #tpu.memory_space<smem>>
    %572 = vector.broadcast %571 : f32 to vector<16x128xf32>
    %573 = arith.addf %570, %572 : vector<16x128xf32>
    %cst_40 = arith.constant 0.000000e+00 : f32
    %574 = vector.broadcast %cst_40 : f32 to vector<16x128xf32>
    %575 = arith.maximumf %573, %574 : vector<16x128xf32>
    %c2_41 = arith.constant 2 : index
    %576 = memref.load %arg1[%c2_41] : memref<137xf32, #tpu.memory_space<smem>>
    %577 = vector.broadcast %576 : f32 to vector<16x128xf32>
    %578 = arith.mulf %577, %560 : vector<16x128xf32>
    %c3_42 = arith.constant 3 : index
    %579 = memref.load %arg1[%c3_42] : memref<137xf32, #tpu.memory_space<smem>>
    %580 = vector.broadcast %579 : f32 to vector<16x128xf32>
    %581 = arith.mulf %580, %563 : vector<16x128xf32>
    %582 = arith.addf %578, %581 : vector<16x128xf32>
    %c9_43 = arith.constant 9 : index
    %583 = memref.load %arg1[%c9_43] : memref<137xf32, #tpu.memory_space<smem>>
    %584 = vector.broadcast %583 : f32 to vector<16x128xf32>
    %585 = arith.addf %582, %584 : vector<16x128xf32>
    %cst_44 = arith.constant 0.000000e+00 : f32
    %586 = vector.broadcast %cst_44 : f32 to vector<16x128xf32>
    %587 = arith.maximumf %585, %586 : vector<16x128xf32>
    %c4_45 = arith.constant 4 : index
    %588 = memref.load %arg1[%c4_45] : memref<137xf32, #tpu.memory_space<smem>>
    %589 = vector.broadcast %588 : f32 to vector<16x128xf32>
    %590 = arith.mulf %589, %560 : vector<16x128xf32>
    %c5_46 = arith.constant 5 : index
    %591 = memref.load %arg1[%c5_46] : memref<137xf32, #tpu.memory_space<smem>>
    %592 = vector.broadcast %591 : f32 to vector<16x128xf32>
    %593 = arith.mulf %592, %563 : vector<16x128xf32>
    %594 = arith.addf %590, %593 : vector<16x128xf32>
    %c10_47 = arith.constant 10 : index
    %595 = memref.load %arg1[%c10_47] : memref<137xf32, #tpu.memory_space<smem>>
    %596 = vector.broadcast %595 : f32 to vector<16x128xf32>
    %597 = arith.addf %594, %596 : vector<16x128xf32>
    %cst_48 = arith.constant 0.000000e+00 : f32
    %598 = vector.broadcast %cst_48 : f32 to vector<16x128xf32>
    %599 = arith.maximumf %597, %598 : vector<16x128xf32>
    %c6_49 = arith.constant 6 : index
    %600 = memref.load %arg1[%c6_49] : memref<137xf32, #tpu.memory_space<smem>>
    %601 = vector.broadcast %600 : f32 to vector<16x128xf32>
    %602 = arith.mulf %601, %560 : vector<16x128xf32>
    %c7_50 = arith.constant 7 : index
    %603 = memref.load %arg1[%c7_50] : memref<137xf32, #tpu.memory_space<smem>>
    %604 = vector.broadcast %603 : f32 to vector<16x128xf32>
    %605 = arith.mulf %604, %563 : vector<16x128xf32>
    %606 = arith.addf %602, %605 : vector<16x128xf32>
    %c11_51 = arith.constant 11 : index
    %607 = memref.load %arg1[%c11_51] : memref<137xf32, #tpu.memory_space<smem>>
    %608 = vector.broadcast %607 : f32 to vector<16x128xf32>
    %609 = arith.addf %606, %608 : vector<16x128xf32>
    %cst_52 = arith.constant 0.000000e+00 : f32
    %610 = vector.broadcast %cst_52 : f32 to vector<16x128xf32>
    %611 = arith.maximumf %609, %610 : vector<16x128xf32>
    %c12_53 = arith.constant 12 : index
    %612 = memref.load %arg1[%c12_53] : memref<137xf32, #tpu.memory_space<smem>>
    %613 = vector.broadcast %612 : f32 to vector<16x128xf32>
    %614 = arith.mulf %613, %575 : vector<16x128xf32>
    %c13_54 = arith.constant 13 : index
    %615 = memref.load %arg1[%c13_54] : memref<137xf32, #tpu.memory_space<smem>>
    %616 = vector.broadcast %615 : f32 to vector<16x128xf32>
    %617 = arith.mulf %616, %587 : vector<16x128xf32>
    %618 = arith.addf %614, %617 : vector<16x128xf32>
    %c14_55 = arith.constant 14 : index
    %619 = memref.load %arg1[%c14_55] : memref<137xf32, #tpu.memory_space<smem>>
    %620 = vector.broadcast %619 : f32 to vector<16x128xf32>
    %621 = arith.mulf %620, %599 : vector<16x128xf32>
    %622 = arith.addf %618, %621 : vector<16x128xf32>
    %c15_56 = arith.constant 15 : index
    %623 = memref.load %arg1[%c15_56] : memref<137xf32, #tpu.memory_space<smem>>
    %624 = vector.broadcast %623 : f32 to vector<16x128xf32>
    %625 = arith.mulf %624, %611 : vector<16x128xf32>
    %626 = arith.addf %622, %625 : vector<16x128xf32>
    %c28_57 = arith.constant 28 : index
    %627 = memref.load %arg1[%c28_57] : memref<137xf32, #tpu.memory_space<smem>>
    %628 = vector.broadcast %627 : f32 to vector<16x128xf32>
    %629 = arith.addf %626, %628 : vector<16x128xf32>
    %cst_58 = arith.constant 0.000000e+00 : f32
    %630 = vector.broadcast %cst_58 : f32 to vector<16x128xf32>
    %631 = arith.maximumf %629, %630 : vector<16x128xf32>
    %c16_59 = arith.constant 16 : index
    %632 = memref.load %arg1[%c16_59] : memref<137xf32, #tpu.memory_space<smem>>
    %633 = vector.broadcast %632 : f32 to vector<16x128xf32>
    %634 = arith.mulf %633, %575 : vector<16x128xf32>
    %c17_60 = arith.constant 17 : index
    %635 = memref.load %arg1[%c17_60] : memref<137xf32, #tpu.memory_space<smem>>
    %636 = vector.broadcast %635 : f32 to vector<16x128xf32>
    %637 = arith.mulf %636, %587 : vector<16x128xf32>
    %638 = arith.addf %634, %637 : vector<16x128xf32>
    %c18_61 = arith.constant 18 : index
    %639 = memref.load %arg1[%c18_61] : memref<137xf32, #tpu.memory_space<smem>>
    %640 = vector.broadcast %639 : f32 to vector<16x128xf32>
    %641 = arith.mulf %640, %599 : vector<16x128xf32>
    %642 = arith.addf %638, %641 : vector<16x128xf32>
    %c19_62 = arith.constant 19 : index
    %643 = memref.load %arg1[%c19_62] : memref<137xf32, #tpu.memory_space<smem>>
    %644 = vector.broadcast %643 : f32 to vector<16x128xf32>
    %645 = arith.mulf %644, %611 : vector<16x128xf32>
    %646 = arith.addf %642, %645 : vector<16x128xf32>
    %c29_63 = arith.constant 29 : index
    %647 = memref.load %arg1[%c29_63] : memref<137xf32, #tpu.memory_space<smem>>
    %648 = vector.broadcast %647 : f32 to vector<16x128xf32>
    %649 = arith.addf %646, %648 : vector<16x128xf32>
    %cst_64 = arith.constant 0.000000e+00 : f32
    %650 = vector.broadcast %cst_64 : f32 to vector<16x128xf32>
    %651 = arith.maximumf %649, %650 : vector<16x128xf32>
    %c20_65 = arith.constant 20 : index
    %652 = memref.load %arg1[%c20_65] : memref<137xf32, #tpu.memory_space<smem>>
    %653 = vector.broadcast %652 : f32 to vector<16x128xf32>
    %654 = arith.mulf %653, %575 : vector<16x128xf32>
    %c21_66 = arith.constant 21 : index
    %655 = memref.load %arg1[%c21_66] : memref<137xf32, #tpu.memory_space<smem>>
    %656 = vector.broadcast %655 : f32 to vector<16x128xf32>
    %657 = arith.mulf %656, %587 : vector<16x128xf32>
    %658 = arith.addf %654, %657 : vector<16x128xf32>
    %c22_67 = arith.constant 22 : index
    %659 = memref.load %arg1[%c22_67] : memref<137xf32, #tpu.memory_space<smem>>
    %660 = vector.broadcast %659 : f32 to vector<16x128xf32>
    %661 = arith.mulf %660, %599 : vector<16x128xf32>
    %662 = arith.addf %658, %661 : vector<16x128xf32>
    %c23_68 = arith.constant 23 : index
    %663 = memref.load %arg1[%c23_68] : memref<137xf32, #tpu.memory_space<smem>>
    %664 = vector.broadcast %663 : f32 to vector<16x128xf32>
    %665 = arith.mulf %664, %611 : vector<16x128xf32>
    %666 = arith.addf %662, %665 : vector<16x128xf32>
    %c30_69 = arith.constant 30 : index
    %667 = memref.load %arg1[%c30_69] : memref<137xf32, #tpu.memory_space<smem>>
    %668 = vector.broadcast %667 : f32 to vector<16x128xf32>
    %669 = arith.addf %666, %668 : vector<16x128xf32>
    %cst_70 = arith.constant 0.000000e+00 : f32
    %670 = vector.broadcast %cst_70 : f32 to vector<16x128xf32>
    %671 = arith.maximumf %669, %670 : vector<16x128xf32>
    %c24_71 = arith.constant 24 : index
    %672 = memref.load %arg1[%c24_71] : memref<137xf32, #tpu.memory_space<smem>>
    %673 = vector.broadcast %672 : f32 to vector<16x128xf32>
    %674 = arith.mulf %673, %575 : vector<16x128xf32>
    %c25_72 = arith.constant 25 : index
    %675 = memref.load %arg1[%c25_72] : memref<137xf32, #tpu.memory_space<smem>>
    %676 = vector.broadcast %675 : f32 to vector<16x128xf32>
    %677 = arith.mulf %676, %587 : vector<16x128xf32>
    %678 = arith.addf %674, %677 : vector<16x128xf32>
    %c26_73 = arith.constant 26 : index
    %679 = memref.load %arg1[%c26_73] : memref<137xf32, #tpu.memory_space<smem>>
    %680 = vector.broadcast %679 : f32 to vector<16x128xf32>
    %681 = arith.mulf %680, %599 : vector<16x128xf32>
    %682 = arith.addf %678, %681 : vector<16x128xf32>
    %c27_74 = arith.constant 27 : index
    %683 = memref.load %arg1[%c27_74] : memref<137xf32, #tpu.memory_space<smem>>
    %684 = vector.broadcast %683 : f32 to vector<16x128xf32>
    %685 = arith.mulf %684, %611 : vector<16x128xf32>
    %686 = arith.addf %682, %685 : vector<16x128xf32>
    %c31_75 = arith.constant 31 : index
    %687 = memref.load %arg1[%c31_75] : memref<137xf32, #tpu.memory_space<smem>>
    %688 = vector.broadcast %687 : f32 to vector<16x128xf32>
    %689 = arith.addf %686, %688 : vector<16x128xf32>
    %cst_76 = arith.constant 0.000000e+00 : f32
    %690 = vector.broadcast %cst_76 : f32 to vector<16x128xf32>
    %691 = arith.maximumf %689, %690 : vector<16x128xf32>
    %c32_77 = arith.constant 32 : index
    %692 = memref.load %arg1[%c32_77] : memref<137xf32, #tpu.memory_space<smem>>
    %693 = vector.broadcast %692 : f32 to vector<16x128xf32>
    %694 = arith.mulf %693, %631 : vector<16x128xf32>
    %c33_78 = arith.constant 33 : index
    %695 = memref.load %arg1[%c33_78] : memref<137xf32, #tpu.memory_space<smem>>
    %696 = vector.broadcast %695 : f32 to vector<16x128xf32>
    %697 = arith.mulf %696, %651 : vector<16x128xf32>
    %698 = arith.addf %694, %697 : vector<16x128xf32>
    %c34_79 = arith.constant 34 : index
    %699 = memref.load %arg1[%c34_79] : memref<137xf32, #tpu.memory_space<smem>>
    %700 = vector.broadcast %699 : f32 to vector<16x128xf32>
    %701 = arith.mulf %700, %671 : vector<16x128xf32>
    %702 = arith.addf %698, %701 : vector<16x128xf32>
    %c35_80 = arith.constant 35 : index
    %703 = memref.load %arg1[%c35_80] : memref<137xf32, #tpu.memory_space<smem>>
    %704 = vector.broadcast %703 : f32 to vector<16x128xf32>
    %705 = arith.mulf %704, %691 : vector<16x128xf32>
    %706 = arith.addf %702, %705 : vector<16x128xf32>
    %c48_81 = arith.constant 48 : index
    %707 = memref.load %arg1[%c48_81] : memref<137xf32, #tpu.memory_space<smem>>
    %708 = vector.broadcast %707 : f32 to vector<16x128xf32>
    %709 = arith.addf %706, %708 : vector<16x128xf32>
    %cst_82 = arith.constant 0.000000e+00 : f32
    %710 = vector.broadcast %cst_82 : f32 to vector<16x128xf32>
    %711 = arith.maximumf %709, %710 : vector<16x128xf32>
    %c36_83 = arith.constant 36 : index
    %712 = memref.load %arg1[%c36_83] : memref<137xf32, #tpu.memory_space<smem>>
    %713 = vector.broadcast %712 : f32 to vector<16x128xf32>
    %714 = arith.mulf %713, %631 : vector<16x128xf32>
    %c37_84 = arith.constant 37 : index
    %715 = memref.load %arg1[%c37_84] : memref<137xf32, #tpu.memory_space<smem>>
    %716 = vector.broadcast %715 : f32 to vector<16x128xf32>
    %717 = arith.mulf %716, %651 : vector<16x128xf32>
    %718 = arith.addf %714, %717 : vector<16x128xf32>
    %c38_85 = arith.constant 38 : index
    %719 = memref.load %arg1[%c38_85] : memref<137xf32, #tpu.memory_space<smem>>
    %720 = vector.broadcast %719 : f32 to vector<16x128xf32>
    %721 = arith.mulf %720, %671 : vector<16x128xf32>
    %722 = arith.addf %718, %721 : vector<16x128xf32>
    %c39_86 = arith.constant 39 : index
    %723 = memref.load %arg1[%c39_86] : memref<137xf32, #tpu.memory_space<smem>>
    %724 = vector.broadcast %723 : f32 to vector<16x128xf32>
    %725 = arith.mulf %724, %691 : vector<16x128xf32>
    %726 = arith.addf %722, %725 : vector<16x128xf32>
    %c49_87 = arith.constant 49 : index
    %727 = memref.load %arg1[%c49_87] : memref<137xf32, #tpu.memory_space<smem>>
    %728 = vector.broadcast %727 : f32 to vector<16x128xf32>
    %729 = arith.addf %726, %728 : vector<16x128xf32>
    %cst_88 = arith.constant 0.000000e+00 : f32
    %730 = vector.broadcast %cst_88 : f32 to vector<16x128xf32>
    %731 = arith.maximumf %729, %730 : vector<16x128xf32>
    %c40_89 = arith.constant 40 : index
    %732 = memref.load %arg1[%c40_89] : memref<137xf32, #tpu.memory_space<smem>>
    %733 = vector.broadcast %732 : f32 to vector<16x128xf32>
    %734 = arith.mulf %733, %631 : vector<16x128xf32>
    %c41_90 = arith.constant 41 : index
    %735 = memref.load %arg1[%c41_90] : memref<137xf32, #tpu.memory_space<smem>>
    %736 = vector.broadcast %735 : f32 to vector<16x128xf32>
    %737 = arith.mulf %736, %651 : vector<16x128xf32>
    %738 = arith.addf %734, %737 : vector<16x128xf32>
    %c42_91 = arith.constant 42 : index
    %739 = memref.load %arg1[%c42_91] : memref<137xf32, #tpu.memory_space<smem>>
    %740 = vector.broadcast %739 : f32 to vector<16x128xf32>
    %741 = arith.mulf %740, %671 : vector<16x128xf32>
    %742 = arith.addf %738, %741 : vector<16x128xf32>
    %c43_92 = arith.constant 43 : index
    %743 = memref.load %arg1[%c43_92] : memref<137xf32, #tpu.memory_space<smem>>
    %744 = vector.broadcast %743 : f32 to vector<16x128xf32>
    %745 = arith.mulf %744, %691 : vector<16x128xf32>
    %746 = arith.addf %742, %745 : vector<16x128xf32>
    %c50_93 = arith.constant 50 : index
    %747 = memref.load %arg1[%c50_93] : memref<137xf32, #tpu.memory_space<smem>>
    %748 = vector.broadcast %747 : f32 to vector<16x128xf32>
    %749 = arith.addf %746, %748 : vector<16x128xf32>
    %cst_94 = arith.constant 0.000000e+00 : f32
    %750 = vector.broadcast %cst_94 : f32 to vector<16x128xf32>
    %751 = arith.maximumf %749, %750 : vector<16x128xf32>
    %c44_95 = arith.constant 44 : index
    %752 = memref.load %arg1[%c44_95] : memref<137xf32, #tpu.memory_space<smem>>
    %753 = vector.broadcast %752 : f32 to vector<16x128xf32>
    %754 = arith.mulf %753, %631 : vector<16x128xf32>
    %c45_96 = arith.constant 45 : index
    %755 = memref.load %arg1[%c45_96] : memref<137xf32, #tpu.memory_space<smem>>
    %756 = vector.broadcast %755 : f32 to vector<16x128xf32>
    %757 = arith.mulf %756, %651 : vector<16x128xf32>
    %758 = arith.addf %754, %757 : vector<16x128xf32>
    %c46_97 = arith.constant 46 : index
    %759 = memref.load %arg1[%c46_97] : memref<137xf32, #tpu.memory_space<smem>>
    %760 = vector.broadcast %759 : f32 to vector<16x128xf32>
    %761 = arith.mulf %760, %671 : vector<16x128xf32>
    %762 = arith.addf %758, %761 : vector<16x128xf32>
    %c47_98 = arith.constant 47 : index
    %763 = memref.load %arg1[%c47_98] : memref<137xf32, #tpu.memory_space<smem>>
    %764 = vector.broadcast %763 : f32 to vector<16x128xf32>
    %765 = arith.mulf %764, %691 : vector<16x128xf32>
    %766 = arith.addf %762, %765 : vector<16x128xf32>
    %c51_99 = arith.constant 51 : index
    %767 = memref.load %arg1[%c51_99] : memref<137xf32, #tpu.memory_space<smem>>
    %768 = vector.broadcast %767 : f32 to vector<16x128xf32>
    %769 = arith.addf %766, %768 : vector<16x128xf32>
    %cst_100 = arith.constant 0.000000e+00 : f32
    %770 = vector.broadcast %cst_100 : f32 to vector<16x128xf32>
    %771 = arith.maximumf %769, %770 : vector<16x128xf32>
    %c52_101 = arith.constant 52 : index
    %772 = memref.load %arg1[%c52_101] : memref<137xf32, #tpu.memory_space<smem>>
    %773 = vector.broadcast %772 : f32 to vector<16x128xf32>
    %774 = arith.mulf %773, %711 : vector<16x128xf32>
    %c53_102 = arith.constant 53 : index
    %775 = memref.load %arg1[%c53_102] : memref<137xf32, #tpu.memory_space<smem>>
    %776 = vector.broadcast %775 : f32 to vector<16x128xf32>
    %777 = arith.mulf %776, %731 : vector<16x128xf32>
    %778 = arith.addf %774, %777 : vector<16x128xf32>
    %c54_103 = arith.constant 54 : index
    %779 = memref.load %arg1[%c54_103] : memref<137xf32, #tpu.memory_space<smem>>
    %780 = vector.broadcast %779 : f32 to vector<16x128xf32>
    %781 = arith.mulf %780, %751 : vector<16x128xf32>
    %782 = arith.addf %778, %781 : vector<16x128xf32>
    %c55_104 = arith.constant 55 : index
    %783 = memref.load %arg1[%c55_104] : memref<137xf32, #tpu.memory_space<smem>>
    %784 = vector.broadcast %783 : f32 to vector<16x128xf32>
    %785 = arith.mulf %784, %771 : vector<16x128xf32>
    %786 = arith.addf %782, %785 : vector<16x128xf32>
    %c68_105 = arith.constant 68 : index
    %787 = memref.load %arg1[%c68_105] : memref<137xf32, #tpu.memory_space<smem>>
    %788 = vector.broadcast %787 : f32 to vector<16x128xf32>
    %789 = arith.addf %786, %788 : vector<16x128xf32>
    %cst_106 = arith.constant 0.000000e+00 : f32
    %790 = vector.broadcast %cst_106 : f32 to vector<16x128xf32>
    %791 = arith.maximumf %789, %790 : vector<16x128xf32>
    %c56_107 = arith.constant 56 : index
    %792 = memref.load %arg1[%c56_107] : memref<137xf32, #tpu.memory_space<smem>>
    %793 = vector.broadcast %792 : f32 to vector<16x128xf32>
    %794 = arith.mulf %793, %711 : vector<16x128xf32>
    %c57_108 = arith.constant 57 : index
    %795 = memref.load %arg1[%c57_108] : memref<137xf32, #tpu.memory_space<smem>>
    %796 = vector.broadcast %795 : f32 to vector<16x128xf32>
    %797 = arith.mulf %796, %731 : vector<16x128xf32>
    %798 = arith.addf %794, %797 : vector<16x128xf32>
    %c58_109 = arith.constant 58 : index
    %799 = memref.load %arg1[%c58_109] : memref<137xf32, #tpu.memory_space<smem>>
    %800 = vector.broadcast %799 : f32 to vector<16x128xf32>
    %801 = arith.mulf %800, %751 : vector<16x128xf32>
    %802 = arith.addf %798, %801 : vector<16x128xf32>
    %c59_110 = arith.constant 59 : index
    %803 = memref.load %arg1[%c59_110] : memref<137xf32, #tpu.memory_space<smem>>
    %804 = vector.broadcast %803 : f32 to vector<16x128xf32>
    %805 = arith.mulf %804, %771 : vector<16x128xf32>
    %806 = arith.addf %802, %805 : vector<16x128xf32>
    %c69_111 = arith.constant 69 : index
    %807 = memref.load %arg1[%c69_111] : memref<137xf32, #tpu.memory_space<smem>>
    %808 = vector.broadcast %807 : f32 to vector<16x128xf32>
    %809 = arith.addf %806, %808 : vector<16x128xf32>
    %cst_112 = arith.constant 0.000000e+00 : f32
    %810 = vector.broadcast %cst_112 : f32 to vector<16x128xf32>
    %811 = arith.maximumf %809, %810 : vector<16x128xf32>
    %c60_113 = arith.constant 60 : index
    %812 = memref.load %arg1[%c60_113] : memref<137xf32, #tpu.memory_space<smem>>
    %813 = vector.broadcast %812 : f32 to vector<16x128xf32>
    %814 = arith.mulf %813, %711 : vector<16x128xf32>
    %c61_114 = arith.constant 61 : index
    %815 = memref.load %arg1[%c61_114] : memref<137xf32, #tpu.memory_space<smem>>
    %816 = vector.broadcast %815 : f32 to vector<16x128xf32>
    %817 = arith.mulf %816, %731 : vector<16x128xf32>
    %818 = arith.addf %814, %817 : vector<16x128xf32>
    %c62_115 = arith.constant 62 : index
    %819 = memref.load %arg1[%c62_115] : memref<137xf32, #tpu.memory_space<smem>>
    %820 = vector.broadcast %819 : f32 to vector<16x128xf32>
    %821 = arith.mulf %820, %751 : vector<16x128xf32>
    %822 = arith.addf %818, %821 : vector<16x128xf32>
    %c63_116 = arith.constant 63 : index
    %823 = memref.load %arg1[%c63_116] : memref<137xf32, #tpu.memory_space<smem>>
    %824 = vector.broadcast %823 : f32 to vector<16x128xf32>
    %825 = arith.mulf %824, %771 : vector<16x128xf32>
    %826 = arith.addf %822, %825 : vector<16x128xf32>
    %c70_117 = arith.constant 70 : index
    %827 = memref.load %arg1[%c70_117] : memref<137xf32, #tpu.memory_space<smem>>
    %828 = vector.broadcast %827 : f32 to vector<16x128xf32>
    %829 = arith.addf %826, %828 : vector<16x128xf32>
    %cst_118 = arith.constant 0.000000e+00 : f32
    %830 = vector.broadcast %cst_118 : f32 to vector<16x128xf32>
    %831 = arith.maximumf %829, %830 : vector<16x128xf32>
    %c64_119 = arith.constant 64 : index
    %832 = memref.load %arg1[%c64_119] : memref<137xf32, #tpu.memory_space<smem>>
    %833 = vector.broadcast %832 : f32 to vector<16x128xf32>
    %834 = arith.mulf %833, %711 : vector<16x128xf32>
    %c65_120 = arith.constant 65 : index
    %835 = memref.load %arg1[%c65_120] : memref<137xf32, #tpu.memory_space<smem>>
    %836 = vector.broadcast %835 : f32 to vector<16x128xf32>
    %837 = arith.mulf %836, %731 : vector<16x128xf32>
    %838 = arith.addf %834, %837 : vector<16x128xf32>
    %c66_121 = arith.constant 66 : index
    %839 = memref.load %arg1[%c66_121] : memref<137xf32, #tpu.memory_space<smem>>
    %840 = vector.broadcast %839 : f32 to vector<16x128xf32>
    %841 = arith.mulf %840, %751 : vector<16x128xf32>
    %842 = arith.addf %838, %841 : vector<16x128xf32>
    %c67_122 = arith.constant 67 : index
    %843 = memref.load %arg1[%c67_122] : memref<137xf32, #tpu.memory_space<smem>>
    %844 = vector.broadcast %843 : f32 to vector<16x128xf32>
    %845 = arith.mulf %844, %771 : vector<16x128xf32>
    %846 = arith.addf %842, %845 : vector<16x128xf32>
    %c71_123 = arith.constant 71 : index
    %847 = memref.load %arg1[%c71_123] : memref<137xf32, #tpu.memory_space<smem>>
    %848 = vector.broadcast %847 : f32 to vector<16x128xf32>
    %849 = arith.addf %846, %848 : vector<16x128xf32>
    %cst_124 = arith.constant 0.000000e+00 : f32
    %850 = vector.broadcast %cst_124 : f32 to vector<16x128xf32>
    %851 = arith.maximumf %849, %850 : vector<16x128xf32>
    %c72_125 = arith.constant 72 : index
    %852 = memref.load %arg1[%c72_125] : memref<137xf32, #tpu.memory_space<smem>>
    %853 = vector.broadcast %852 : f32 to vector<16x128xf32>
    %854 = arith.mulf %853, %791 : vector<16x128xf32>
    %c73_126 = arith.constant 73 : index
    %855 = memref.load %arg1[%c73_126] : memref<137xf32, #tpu.memory_space<smem>>
    %856 = vector.broadcast %855 : f32 to vector<16x128xf32>
    %857 = arith.mulf %856, %811 : vector<16x128xf32>
    %858 = arith.addf %854, %857 : vector<16x128xf32>
    %c74_127 = arith.constant 74 : index
    %859 = memref.load %arg1[%c74_127] : memref<137xf32, #tpu.memory_space<smem>>
    %860 = vector.broadcast %859 : f32 to vector<16x128xf32>
    %861 = arith.mulf %860, %831 : vector<16x128xf32>
    %862 = arith.addf %858, %861 : vector<16x128xf32>
    %c75_128 = arith.constant 75 : index
    %863 = memref.load %arg1[%c75_128] : memref<137xf32, #tpu.memory_space<smem>>
    %864 = vector.broadcast %863 : f32 to vector<16x128xf32>
    %865 = arith.mulf %864, %851 : vector<16x128xf32>
    %866 = arith.addf %862, %865 : vector<16x128xf32>
    %c88_129 = arith.constant 88 : index
    %867 = memref.load %arg1[%c88_129] : memref<137xf32, #tpu.memory_space<smem>>
    %868 = vector.broadcast %867 : f32 to vector<16x128xf32>
    %869 = arith.addf %866, %868 : vector<16x128xf32>
    %cst_130 = arith.constant 0.000000e+00 : f32
    %870 = vector.broadcast %cst_130 : f32 to vector<16x128xf32>
    %871 = arith.maximumf %869, %870 : vector<16x128xf32>
    %c76_131 = arith.constant 76 : index
    %872 = memref.load %arg1[%c76_131] : memref<137xf32, #tpu.memory_space<smem>>
    %873 = vector.broadcast %872 : f32 to vector<16x128xf32>
    %874 = arith.mulf %873, %791 : vector<16x128xf32>
    %c77_132 = arith.constant 77 : index
    %875 = memref.load %arg1[%c77_132] : memref<137xf32, #tpu.memory_space<smem>>
    %876 = vector.broadcast %875 : f32 to vector<16x128xf32>
    %877 = arith.mulf %876, %811 : vector<16x128xf32>
    %878 = arith.addf %874, %877 : vector<16x128xf32>
    %c78_133 = arith.constant 78 : index
    %879 = memref.load %arg1[%c78_133] : memref<137xf32, #tpu.memory_space<smem>>
    %880 = vector.broadcast %879 : f32 to vector<16x128xf32>
    %881 = arith.mulf %880, %831 : vector<16x128xf32>
    %882 = arith.addf %878, %881 : vector<16x128xf32>
    %c79_134 = arith.constant 79 : index
    %883 = memref.load %arg1[%c79_134] : memref<137xf32, #tpu.memory_space<smem>>
    %884 = vector.broadcast %883 : f32 to vector<16x128xf32>
    %885 = arith.mulf %884, %851 : vector<16x128xf32>
    %886 = arith.addf %882, %885 : vector<16x128xf32>
    %c89_135 = arith.constant 89 : index
    %887 = memref.load %arg1[%c89_135] : memref<137xf32, #tpu.memory_space<smem>>
    %888 = vector.broadcast %887 : f32 to vector<16x128xf32>
    %889 = arith.addf %886, %888 : vector<16x128xf32>
    %cst_136 = arith.constant 0.000000e+00 : f32
    %890 = vector.broadcast %cst_136 : f32 to vector<16x128xf32>
    %891 = arith.maximumf %889, %890 : vector<16x128xf32>
    %c80_137 = arith.constant 80 : index
    %892 = memref.load %arg1[%c80_137] : memref<137xf32, #tpu.memory_space<smem>>
    %893 = vector.broadcast %892 : f32 to vector<16x128xf32>
    %894 = arith.mulf %893, %791 : vector<16x128xf32>
    %c81_138 = arith.constant 81 : index
    %895 = memref.load %arg1[%c81_138] : memref<137xf32, #tpu.memory_space<smem>>
    %896 = vector.broadcast %895 : f32 to vector<16x128xf32>
    %897 = arith.mulf %896, %811 : vector<16x128xf32>
    %898 = arith.addf %894, %897 : vector<16x128xf32>
    %c82_139 = arith.constant 82 : index
    %899 = memref.load %arg1[%c82_139] : memref<137xf32, #tpu.memory_space<smem>>
    %900 = vector.broadcast %899 : f32 to vector<16x128xf32>
    %901 = arith.mulf %900, %831 : vector<16x128xf32>
    %902 = arith.addf %898, %901 : vector<16x128xf32>
    %c83_140 = arith.constant 83 : index
    %903 = memref.load %arg1[%c83_140] : memref<137xf32, #tpu.memory_space<smem>>
    %904 = vector.broadcast %903 : f32 to vector<16x128xf32>
    %905 = arith.mulf %904, %851 : vector<16x128xf32>
    %906 = arith.addf %902, %905 : vector<16x128xf32>
    %c90_141 = arith.constant 90 : index
    %907 = memref.load %arg1[%c90_141] : memref<137xf32, #tpu.memory_space<smem>>
    %908 = vector.broadcast %907 : f32 to vector<16x128xf32>
    %909 = arith.addf %906, %908 : vector<16x128xf32>
    %cst_142 = arith.constant 0.000000e+00 : f32
    %910 = vector.broadcast %cst_142 : f32 to vector<16x128xf32>
    %911 = arith.maximumf %909, %910 : vector<16x128xf32>
    %c84_143 = arith.constant 84 : index
    %912 = memref.load %arg1[%c84_143] : memref<137xf32, #tpu.memory_space<smem>>
    %913 = vector.broadcast %912 : f32 to vector<16x128xf32>
    %914 = arith.mulf %913, %791 : vector<16x128xf32>
    %c85_144 = arith.constant 85 : index
    %915 = memref.load %arg1[%c85_144] : memref<137xf32, #tpu.memory_space<smem>>
    %916 = vector.broadcast %915 : f32 to vector<16x128xf32>
    %917 = arith.mulf %916, %811 : vector<16x128xf32>
    %918 = arith.addf %914, %917 : vector<16x128xf32>
    %c86_145 = arith.constant 86 : index
    %919 = memref.load %arg1[%c86_145] : memref<137xf32, #tpu.memory_space<smem>>
    %920 = vector.broadcast %919 : f32 to vector<16x128xf32>
    %921 = arith.mulf %920, %831 : vector<16x128xf32>
    %922 = arith.addf %918, %921 : vector<16x128xf32>
    %c87_146 = arith.constant 87 : index
    %923 = memref.load %arg1[%c87_146] : memref<137xf32, #tpu.memory_space<smem>>
    %924 = vector.broadcast %923 : f32 to vector<16x128xf32>
    %925 = arith.mulf %924, %851 : vector<16x128xf32>
    %926 = arith.addf %922, %925 : vector<16x128xf32>
    %c91_147 = arith.constant 91 : index
    %927 = memref.load %arg1[%c91_147] : memref<137xf32, #tpu.memory_space<smem>>
    %928 = vector.broadcast %927 : f32 to vector<16x128xf32>
    %929 = arith.addf %926, %928 : vector<16x128xf32>
    %cst_148 = arith.constant 0.000000e+00 : f32
    %930 = vector.broadcast %cst_148 : f32 to vector<16x128xf32>
    %931 = arith.maximumf %929, %930 : vector<16x128xf32>
    %c92_149 = arith.constant 92 : index
    %932 = memref.load %arg1[%c92_149] : memref<137xf32, #tpu.memory_space<smem>>
    %933 = vector.broadcast %932 : f32 to vector<16x128xf32>
    %934 = arith.mulf %933, %871 : vector<16x128xf32>
    %c93_150 = arith.constant 93 : index
    %935 = memref.load %arg1[%c93_150] : memref<137xf32, #tpu.memory_space<smem>>
    %936 = vector.broadcast %935 : f32 to vector<16x128xf32>
    %937 = arith.mulf %936, %891 : vector<16x128xf32>
    %938 = arith.addf %934, %937 : vector<16x128xf32>
    %c94_151 = arith.constant 94 : index
    %939 = memref.load %arg1[%c94_151] : memref<137xf32, #tpu.memory_space<smem>>
    %940 = vector.broadcast %939 : f32 to vector<16x128xf32>
    %941 = arith.mulf %940, %911 : vector<16x128xf32>
    %942 = arith.addf %938, %941 : vector<16x128xf32>
    %c95_152 = arith.constant 95 : index
    %943 = memref.load %arg1[%c95_152] : memref<137xf32, #tpu.memory_space<smem>>
    %944 = vector.broadcast %943 : f32 to vector<16x128xf32>
    %945 = arith.mulf %944, %931 : vector<16x128xf32>
    %946 = arith.addf %942, %945 : vector<16x128xf32>
    %c108_153 = arith.constant 108 : index
    %947 = memref.load %arg1[%c108_153] : memref<137xf32, #tpu.memory_space<smem>>
    %948 = vector.broadcast %947 : f32 to vector<16x128xf32>
    %949 = arith.addf %946, %948 : vector<16x128xf32>
    %cst_154 = arith.constant 0.000000e+00 : f32
    %950 = vector.broadcast %cst_154 : f32 to vector<16x128xf32>
    %951 = arith.maximumf %949, %950 : vector<16x128xf32>
    %c96_155 = arith.constant 96 : index
    %952 = memref.load %arg1[%c96_155] : memref<137xf32, #tpu.memory_space<smem>>
    %953 = vector.broadcast %952 : f32 to vector<16x128xf32>
    %954 = arith.mulf %953, %871 : vector<16x128xf32>
    %c97_156 = arith.constant 97 : index
    %955 = memref.load %arg1[%c97_156] : memref<137xf32, #tpu.memory_space<smem>>
    %956 = vector.broadcast %955 : f32 to vector<16x128xf32>
    %957 = arith.mulf %956, %891 : vector<16x128xf32>
    %958 = arith.addf %954, %957 : vector<16x128xf32>
    %c98_157 = arith.constant 98 : index
    %959 = memref.load %arg1[%c98_157] : memref<137xf32, #tpu.memory_space<smem>>
    %960 = vector.broadcast %959 : f32 to vector<16x128xf32>
    %961 = arith.mulf %960, %911 : vector<16x128xf32>
    %962 = arith.addf %958, %961 : vector<16x128xf32>
    %c99_158 = arith.constant 99 : index
    %963 = memref.load %arg1[%c99_158] : memref<137xf32, #tpu.memory_space<smem>>
    %964 = vector.broadcast %963 : f32 to vector<16x128xf32>
    %965 = arith.mulf %964, %931 : vector<16x128xf32>
    %966 = arith.addf %962, %965 : vector<16x128xf32>
    %c109_159 = arith.constant 109 : index
    %967 = memref.load %arg1[%c109_159] : memref<137xf32, #tpu.memory_space<smem>>
    %968 = vector.broadcast %967 : f32 to vector<16x128xf32>
    %969 = arith.addf %966, %968 : vector<16x128xf32>
    %cst_160 = arith.constant 0.000000e+00 : f32
    %970 = vector.broadcast %cst_160 : f32 to vector<16x128xf32>
    %971 = arith.maximumf %969, %970 : vector<16x128xf32>
    %c100_161 = arith.constant 100 : index
    %972 = memref.load %arg1[%c100_161] : memref<137xf32, #tpu.memory_space<smem>>
    %973 = vector.broadcast %972 : f32 to vector<16x128xf32>
    %974 = arith.mulf %973, %871 : vector<16x128xf32>
    %c101_162 = arith.constant 101 : index
    %975 = memref.load %arg1[%c101_162] : memref<137xf32, #tpu.memory_space<smem>>
    %976 = vector.broadcast %975 : f32 to vector<16x128xf32>
    %977 = arith.mulf %976, %891 : vector<16x128xf32>
    %978 = arith.addf %974, %977 : vector<16x128xf32>
    %c102_163 = arith.constant 102 : index
    %979 = memref.load %arg1[%c102_163] : memref<137xf32, #tpu.memory_space<smem>>
    %980 = vector.broadcast %979 : f32 to vector<16x128xf32>
    %981 = arith.mulf %980, %911 : vector<16x128xf32>
    %982 = arith.addf %978, %981 : vector<16x128xf32>
    %c103_164 = arith.constant 103 : index
    %983 = memref.load %arg1[%c103_164] : memref<137xf32, #tpu.memory_space<smem>>
    %984 = vector.broadcast %983 : f32 to vector<16x128xf32>
    %985 = arith.mulf %984, %931 : vector<16x128xf32>
    %986 = arith.addf %982, %985 : vector<16x128xf32>
    %c110_165 = arith.constant 110 : index
    %987 = memref.load %arg1[%c110_165] : memref<137xf32, #tpu.memory_space<smem>>
    %988 = vector.broadcast %987 : f32 to vector<16x128xf32>
    %989 = arith.addf %986, %988 : vector<16x128xf32>
    %cst_166 = arith.constant 0.000000e+00 : f32
    %990 = vector.broadcast %cst_166 : f32 to vector<16x128xf32>
    %991 = arith.maximumf %989, %990 : vector<16x128xf32>
    %c104_167 = arith.constant 104 : index
    %992 = memref.load %arg1[%c104_167] : memref<137xf32, #tpu.memory_space<smem>>
    %993 = vector.broadcast %992 : f32 to vector<16x128xf32>
    %994 = arith.mulf %993, %871 : vector<16x128xf32>
    %c105_168 = arith.constant 105 : index
    %995 = memref.load %arg1[%c105_168] : memref<137xf32, #tpu.memory_space<smem>>
    %996 = vector.broadcast %995 : f32 to vector<16x128xf32>
    %997 = arith.mulf %996, %891 : vector<16x128xf32>
    %998 = arith.addf %994, %997 : vector<16x128xf32>
    %c106_169 = arith.constant 106 : index
    %999 = memref.load %arg1[%c106_169] : memref<137xf32, #tpu.memory_space<smem>>
    %1000 = vector.broadcast %999 : f32 to vector<16x128xf32>
    %1001 = arith.mulf %1000, %911 : vector<16x128xf32>
    %1002 = arith.addf %998, %1001 : vector<16x128xf32>
    %c107_170 = arith.constant 107 : index
    %1003 = memref.load %arg1[%c107_170] : memref<137xf32, #tpu.memory_space<smem>>
    %1004 = vector.broadcast %1003 : f32 to vector<16x128xf32>
    %1005 = arith.mulf %1004, %931 : vector<16x128xf32>
    %1006 = arith.addf %1002, %1005 : vector<16x128xf32>
    %c111_171 = arith.constant 111 : index
    %1007 = memref.load %arg1[%c111_171] : memref<137xf32, #tpu.memory_space<smem>>
    %1008 = vector.broadcast %1007 : f32 to vector<16x128xf32>
    %1009 = arith.addf %1006, %1008 : vector<16x128xf32>
    %cst_172 = arith.constant 0.000000e+00 : f32
    %1010 = vector.broadcast %cst_172 : f32 to vector<16x128xf32>
    %1011 = arith.maximumf %1009, %1010 : vector<16x128xf32>
    %c112_173 = arith.constant 112 : index
    %1012 = memref.load %arg1[%c112_173] : memref<137xf32, #tpu.memory_space<smem>>
    %1013 = vector.broadcast %1012 : f32 to vector<16x128xf32>
    %1014 = arith.mulf %1013, %951 : vector<16x128xf32>
    %c113_174 = arith.constant 113 : index
    %1015 = memref.load %arg1[%c113_174] : memref<137xf32, #tpu.memory_space<smem>>
    %1016 = vector.broadcast %1015 : f32 to vector<16x128xf32>
    %1017 = arith.mulf %1016, %971 : vector<16x128xf32>
    %1018 = arith.addf %1014, %1017 : vector<16x128xf32>
    %c114_175 = arith.constant 114 : index
    %1019 = memref.load %arg1[%c114_175] : memref<137xf32, #tpu.memory_space<smem>>
    %1020 = vector.broadcast %1019 : f32 to vector<16x128xf32>
    %1021 = arith.mulf %1020, %991 : vector<16x128xf32>
    %1022 = arith.addf %1018, %1021 : vector<16x128xf32>
    %c115_176 = arith.constant 115 : index
    %1023 = memref.load %arg1[%c115_176] : memref<137xf32, #tpu.memory_space<smem>>
    %1024 = vector.broadcast %1023 : f32 to vector<16x128xf32>
    %1025 = arith.mulf %1024, %1011 : vector<16x128xf32>
    %1026 = arith.addf %1022, %1025 : vector<16x128xf32>
    %c128_177 = arith.constant 128 : index
    %1027 = memref.load %arg1[%c128_177] : memref<137xf32, #tpu.memory_space<smem>>
    %1028 = vector.broadcast %1027 : f32 to vector<16x128xf32>
    %1029 = arith.addf %1026, %1028 : vector<16x128xf32>
    %cst_178 = arith.constant 0.000000e+00 : f32
    %1030 = vector.broadcast %cst_178 : f32 to vector<16x128xf32>
    %1031 = arith.maximumf %1029, %1030 : vector<16x128xf32>
    %c116_179 = arith.constant 116 : index
    %1032 = memref.load %arg1[%c116_179] : memref<137xf32, #tpu.memory_space<smem>>
    %1033 = vector.broadcast %1032 : f32 to vector<16x128xf32>
    %1034 = arith.mulf %1033, %951 : vector<16x128xf32>
    %c117_180 = arith.constant 117 : index
    %1035 = memref.load %arg1[%c117_180] : memref<137xf32, #tpu.memory_space<smem>>
    %1036 = vector.broadcast %1035 : f32 to vector<16x128xf32>
    %1037 = arith.mulf %1036, %971 : vector<16x128xf32>
    %1038 = arith.addf %1034, %1037 : vector<16x128xf32>
    %c118_181 = arith.constant 118 : index
    %1039 = memref.load %arg1[%c118_181] : memref<137xf32, #tpu.memory_space<smem>>
    %1040 = vector.broadcast %1039 : f32 to vector<16x128xf32>
    %1041 = arith.mulf %1040, %991 : vector<16x128xf32>
    %1042 = arith.addf %1038, %1041 : vector<16x128xf32>
    %c119_182 = arith.constant 119 : index
    %1043 = memref.load %arg1[%c119_182] : memref<137xf32, #tpu.memory_space<smem>>
    %1044 = vector.broadcast %1043 : f32 to vector<16x128xf32>
    %1045 = arith.mulf %1044, %1011 : vector<16x128xf32>
    %1046 = arith.addf %1042, %1045 : vector<16x128xf32>
    %c129_183 = arith.constant 129 : index
    %1047 = memref.load %arg1[%c129_183] : memref<137xf32, #tpu.memory_space<smem>>
    %1048 = vector.broadcast %1047 : f32 to vector<16x128xf32>
    %1049 = arith.addf %1046, %1048 : vector<16x128xf32>
    %cst_184 = arith.constant 0.000000e+00 : f32
    %1050 = vector.broadcast %cst_184 : f32 to vector<16x128xf32>
    %1051 = arith.maximumf %1049, %1050 : vector<16x128xf32>
    %c120_185 = arith.constant 120 : index
    %1052 = memref.load %arg1[%c120_185] : memref<137xf32, #tpu.memory_space<smem>>
    %1053 = vector.broadcast %1052 : f32 to vector<16x128xf32>
    %1054 = arith.mulf %1053, %951 : vector<16x128xf32>
    %c121_186 = arith.constant 121 : index
    %1055 = memref.load %arg1[%c121_186] : memref<137xf32, #tpu.memory_space<smem>>
    %1056 = vector.broadcast %1055 : f32 to vector<16x128xf32>
    %1057 = arith.mulf %1056, %971 : vector<16x128xf32>
    %1058 = arith.addf %1054, %1057 : vector<16x128xf32>
    %c122_187 = arith.constant 122 : index
    %1059 = memref.load %arg1[%c122_187] : memref<137xf32, #tpu.memory_space<smem>>
    %1060 = vector.broadcast %1059 : f32 to vector<16x128xf32>
    %1061 = arith.mulf %1060, %991 : vector<16x128xf32>
    %1062 = arith.addf %1058, %1061 : vector<16x128xf32>
    %c123_188 = arith.constant 123 : index
    %1063 = memref.load %arg1[%c123_188] : memref<137xf32, #tpu.memory_space<smem>>
    %1064 = vector.broadcast %1063 : f32 to vector<16x128xf32>
    %1065 = arith.mulf %1064, %1011 : vector<16x128xf32>
    %1066 = arith.addf %1062, %1065 : vector<16x128xf32>
    %c130_189 = arith.constant 130 : index
    %1067 = memref.load %arg1[%c130_189] : memref<137xf32, #tpu.memory_space<smem>>
    %1068 = vector.broadcast %1067 : f32 to vector<16x128xf32>
    %1069 = arith.addf %1066, %1068 : vector<16x128xf32>
    %cst_190 = arith.constant 0.000000e+00 : f32
    %1070 = vector.broadcast %cst_190 : f32 to vector<16x128xf32>
    %1071 = arith.maximumf %1069, %1070 : vector<16x128xf32>
    %c124_191 = arith.constant 124 : index
    %1072 = memref.load %arg1[%c124_191] : memref<137xf32, #tpu.memory_space<smem>>
    %1073 = vector.broadcast %1072 : f32 to vector<16x128xf32>
    %1074 = arith.mulf %1073, %951 : vector<16x128xf32>
    %c125_192 = arith.constant 125 : index
    %1075 = memref.load %arg1[%c125_192] : memref<137xf32, #tpu.memory_space<smem>>
    %1076 = vector.broadcast %1075 : f32 to vector<16x128xf32>
    %1077 = arith.mulf %1076, %971 : vector<16x128xf32>
    %1078 = arith.addf %1074, %1077 : vector<16x128xf32>
    %c126_193 = arith.constant 126 : index
    %1079 = memref.load %arg1[%c126_193] : memref<137xf32, #tpu.memory_space<smem>>
    %1080 = vector.broadcast %1079 : f32 to vector<16x128xf32>
    %1081 = arith.mulf %1080, %991 : vector<16x128xf32>
    %1082 = arith.addf %1078, %1081 : vector<16x128xf32>
    %c127_194 = arith.constant 127 : index
    %1083 = memref.load %arg1[%c127_194] : memref<137xf32, #tpu.memory_space<smem>>
    %1084 = vector.broadcast %1083 : f32 to vector<16x128xf32>
    %1085 = arith.mulf %1084, %1011 : vector<16x128xf32>
    %1086 = arith.addf %1082, %1085 : vector<16x128xf32>
    %c131_195 = arith.constant 131 : index
    %1087 = memref.load %arg1[%c131_195] : memref<137xf32, #tpu.memory_space<smem>>
    %1088 = vector.broadcast %1087 : f32 to vector<16x128xf32>
    %1089 = arith.addf %1086, %1088 : vector<16x128xf32>
    %cst_196 = arith.constant 0.000000e+00 : f32
    %1090 = vector.broadcast %cst_196 : f32 to vector<16x128xf32>
    %1091 = arith.maximumf %1089, %1090 : vector<16x128xf32>
    %c132_197 = arith.constant 132 : index
    %1092 = memref.load %arg1[%c132_197] : memref<137xf32, #tpu.memory_space<smem>>
    %1093 = vector.broadcast %1092 : f32 to vector<16x128xf32>
    %1094 = arith.mulf %1093, %1031 : vector<16x128xf32>
    %c133_198 = arith.constant 133 : index
    %1095 = memref.load %arg1[%c133_198] : memref<137xf32, #tpu.memory_space<smem>>
    %1096 = vector.broadcast %1095 : f32 to vector<16x128xf32>
    %1097 = arith.mulf %1096, %1051 : vector<16x128xf32>
    %1098 = arith.addf %1094, %1097 : vector<16x128xf32>
    %c134_199 = arith.constant 134 : index
    %1099 = memref.load %arg1[%c134_199] : memref<137xf32, #tpu.memory_space<smem>>
    %1100 = vector.broadcast %1099 : f32 to vector<16x128xf32>
    %1101 = arith.mulf %1100, %1071 : vector<16x128xf32>
    %1102 = arith.addf %1098, %1101 : vector<16x128xf32>
    %c135_200 = arith.constant 135 : index
    %1103 = memref.load %arg1[%c135_200] : memref<137xf32, #tpu.memory_space<smem>>
    %1104 = vector.broadcast %1103 : f32 to vector<16x128xf32>
    %1105 = arith.mulf %1104, %1091 : vector<16x128xf32>
    %1106 = arith.addf %1102, %1105 : vector<16x128xf32>
    %c136_201 = arith.constant 136 : index
    %1107 = memref.load %arg1[%c136_201] : memref<137xf32, #tpu.memory_space<smem>>
    %1108 = vector.broadcast %1107 : f32 to vector<16x128xf32>
    %1109 = arith.addf %1106, %1108 : vector<16x128xf32>
    %1110 = arith.index_cast %557 : i32 to index
    %c0_202 = arith.constant 0 : index
    %1111 = vector.load %arg3[%1110, %c0_202] : memref<64x128xf32, #tpu.memory_space<vmem>>, vector<16x128xf32>
    tpu.vector_store %arg3[%1110, %c0_202], %1109 {strides = array<i32>} : memref<64x128xf32, #tpu.memory_space<vmem>>, vector<16x128xf32>,
    %c2_i32 = arith.constant 2 : i32
    %c16_i32_203 = arith.constant 16 : i32
    %1112 = arith.muli %c2_i32, %c16_i32_203 : i32
    %1113 = tpu.assume_multiple %1112, 16 : i32
    %c0_204 = arith.constant 0 : index
    %1114 = arith.index_cast %1113 : i32 to index
    %c0_205 = arith.constant 0 : index
    %1115 = vector.load %arg2[%c0_204, %1114, %c0_205] : memref<2x64x128xf32, #tpu.memory_space<vmem>>, vector<1x16x128xf32>
    %1116 = vector.shape_cast %1115 : vector<1x16x128xf32> to vector<16x128xf32>
    %c1_206 = arith.constant 1 : index
    %1117 = arith.index_cast %1113 : i32 to index
    %c0_207 = arith.constant 0 : index
    %1118 = vector.load %arg2[%c1_206, %1117, %c0_207] : memref<2x64x128xf32, #tpu.memory_space<vmem>>, vector<1x16x128xf32>
    %1119 = vector.shape_cast %1118 : vector<1x16x128xf32> to vector<16x128xf32>
    %c0_208 = arith.constant 0 : index
    %1120 = memref.load %arg1[%c0_208] : memref<137xf32, #tpu.memory_space<smem>>
    %1121 = vector.broadcast %1120 : f32 to vector<16x128xf32>
    %1122 = arith.mulf %1121, %1116 : vector<16x128xf32>
    %c1_209 = arith.constant 1 : index
    %1123 = memref.load %arg1[%c1_209] : memref<137xf32, #tpu.memory_space<smem>>
    %1124 = vector.broadcast %1123 : f32 to vector<16x128xf32>
    %1125 = arith.mulf %1124, %1119 : vector<16x128xf32>
    %1126 = arith.addf %1122, %1125 : vector<16x128xf32>
    %c8_210 = arith.constant 8 : index
    %1127 = memref.load %arg1[%c8_210] : memref<137xf32, #tpu.memory_space<smem>>
    %1128 = vector.broadcast %1127 : f32 to vector<16x128xf32>
    %1129 = arith.addf %1126, %1128 : vector<16x128xf32>
    %cst_211 = arith.constant 0.000000e+00 : f32
    %1130 = vector.broadcast %cst_211 : f32 to vector<16x128xf32>
    %1131 = arith.maximumf %1129, %1130 : vector<16x128xf32>
    %c2_212 = arith.constant 2 : index
    %1132 = memref.load %arg1[%c2_212] : memref<137xf32, #tpu.memory_space<smem>>
    %1133 = vector.broadcast %1132 : f32 to vector<16x128xf32>
    %1134 = arith.mulf %1133, %1116 : vector<16x128xf32>
    %c3_213 = arith.constant 3 : index
    %1135 = memref.load %arg1[%c3_213] : memref<137xf32, #tpu.memory_space<smem>>
    %1136 = vector.broadcast %1135 : f32 to vector<16x128xf32>
    %1137 = arith.mulf %1136, %1119 : vector<16x128xf32>
    %1138 = arith.addf %1134, %1137 : vector<16x128xf32>
    %c9_214 = arith.constant 9 : index
    %1139 = memref.load %arg1[%c9_214] : memref<137xf32, #tpu.memory_space<smem>>
    %1140 = vector.broadcast %1139 : f32 to vector<16x128xf32>
    %1141 = arith.addf %1138, %1140 : vector<16x128xf32>
    %cst_215 = arith.constant 0.000000e+00 : f32
    %1142 = vector.broadcast %cst_215 : f32 to vector<16x128xf32>
    %1143 = arith.maximumf %1141, %1142 : vector<16x128xf32>
    %c4_216 = arith.constant 4 : index
    %1144 = memref.load %arg1[%c4_216] : memref<137xf32, #tpu.memory_space<smem>>
    %1145 = vector.broadcast %1144 : f32 to vector<16x128xf32>
    %1146 = arith.mulf %1145, %1116 : vector<16x128xf32>
    %c5_217 = arith.constant 5 : index
    %1147 = memref.load %arg1[%c5_217] : memref<137xf32, #tpu.memory_space<smem>>
    %1148 = vector.broadcast %1147 : f32 to vector<16x128xf32>
    %1149 = arith.mulf %1148, %1119 : vector<16x128xf32>
    %1150 = arith.addf %1146, %1149 : vector<16x128xf32>
    %c10_218 = arith.constant 10 : index
    %1151 = memref.load %arg1[%c10_218] : memref<137xf32, #tpu.memory_space<smem>>
    %1152 = vector.broadcast %1151 : f32 to vector<16x128xf32>
    %1153 = arith.addf %1150, %1152 : vector<16x128xf32>
    %cst_219 = arith.constant 0.000000e+00 : f32
    %1154 = vector.broadcast %cst_219 : f32 to vector<16x128xf32>
    %1155 = arith.maximumf %1153, %1154 : vector<16x128xf32>
    %c6_220 = arith.constant 6 : index
    %1156 = memref.load %arg1[%c6_220] : memref<137xf32, #tpu.memory_space<smem>>
    %1157 = vector.broadcast %1156 : f32 to vector<16x128xf32>
    %1158 = arith.mulf %1157, %1116 : vector<16x128xf32>
    %c7_221 = arith.constant 7 : index
    %1159 = memref.load %arg1[%c7_221] : memref<137xf32, #tpu.memory_space<smem>>
    %1160 = vector.broadcast %1159 : f32 to vector<16x128xf32>
    %1161 = arith.mulf %1160, %1119 : vector<16x128xf32>
    %1162 = arith.addf %1158, %1161 : vector<16x128xf32>
    %c11_222 = arith.constant 11 : index
    %1163 = memref.load %arg1[%c11_222] : memref<137xf32, #tpu.memory_space<smem>>
    %1164 = vector.broadcast %1163 : f32 to vector<16x128xf32>
    %1165 = arith.addf %1162, %1164 : vector<16x128xf32>
    %cst_223 = arith.constant 0.000000e+00 : f32
    %1166 = vector.broadcast %cst_223 : f32 to vector<16x128xf32>
    %1167 = arith.maximumf %1165, %1166 : vector<16x128xf32>
    %c12_224 = arith.constant 12 : index
    %1168 = memref.load %arg1[%c12_224] : memref<137xf32, #tpu.memory_space<smem>>
    %1169 = vector.broadcast %1168 : f32 to vector<16x128xf32>
    %1170 = arith.mulf %1169, %1131 : vector<16x128xf32>
    %c13_225 = arith.constant 13 : index
    %1171 = memref.load %arg1[%c13_225] : memref<137xf32, #tpu.memory_space<smem>>
    %1172 = vector.broadcast %1171 : f32 to vector<16x128xf32>
    %1173 = arith.mulf %1172, %1143 : vector<16x128xf32>
    %1174 = arith.addf %1170, %1173 : vector<16x128xf32>
    %c14_226 = arith.constant 14 : index
    %1175 = memref.load %arg1[%c14_226] : memref<137xf32, #tpu.memory_space<smem>>
    %1176 = vector.broadcast %1175 : f32 to vector<16x128xf32>
    %1177 = arith.mulf %1176, %1155 : vector<16x128xf32>
    %1178 = arith.addf %1174, %1177 : vector<16x128xf32>
    %c15_227 = arith.constant 15 : index
    %1179 = memref.load %arg1[%c15_227] : memref<137xf32, #tpu.memory_space<smem>>
    %1180 = vector.broadcast %1179 : f32 to vector<16x128xf32>
    %1181 = arith.mulf %1180, %1167 : vector<16x128xf32>
    %1182 = arith.addf %1178, %1181 : vector<16x128xf32>
    %c28_228 = arith.constant 28 : index
    %1183 = memref.load %arg1[%c28_228] : memref<137xf32, #tpu.memory_space<smem>>
    %1184 = vector.broadcast %1183 : f32 to vector<16x128xf32>
    %1185 = arith.addf %1182, %1184 : vector<16x128xf32>
    %cst_229 = arith.constant 0.000000e+00 : f32
    %1186 = vector.broadcast %cst_229 : f32 to vector<16x128xf32>
    %1187 = arith.maximumf %1185, %1186 : vector<16x128xf32>
    %c16_230 = arith.constant 16 : index
    %1188 = memref.load %arg1[%c16_230] : memref<137xf32, #tpu.memory_space<smem>>
    %1189 = vector.broadcast %1188 : f32 to vector<16x128xf32>
    %1190 = arith.mulf %1189, %1131 : vector<16x128xf32>
    %c17_231 = arith.constant 17 : index
    %1191 = memref.load %arg1[%c17_231] : memref<137xf32, #tpu.memory_space<smem>>
    %1192 = vector.broadcast %1191 : f32 to vector<16x128xf32>
    %1193 = arith.mulf %1192, %1143 : vector<16x128xf32>
    %1194 = arith.addf %1190, %1193 : vector<16x128xf32>
    %c18_232 = arith.constant 18 : index
    %1195 = memref.load %arg1[%c18_232] : memref<137xf32, #tpu.memory_space<smem>>
    %1196 = vector.broadcast %1195 : f32 to vector<16x128xf32>
    %1197 = arith.mulf %1196, %1155 : vector<16x128xf32>
    %1198 = arith.addf %1194, %1197 : vector<16x128xf32>
    %c19_233 = arith.constant 19 : index
    %1199 = memref.load %arg1[%c19_233] : memref<137xf32, #tpu.memory_space<smem>>
    %1200 = vector.broadcast %1199 : f32 to vector<16x128xf32>
    %1201 = arith.mulf %1200, %1167 : vector<16x128xf32>
    %1202 = arith.addf %1198, %1201 : vector<16x128xf32>
    %c29_234 = arith.constant 29 : index
    %1203 = memref.load %arg1[%c29_234] : memref<137xf32, #tpu.memory_space<smem>>
    %1204 = vector.broadcast %1203 : f32 to vector<16x128xf32>
    %1205 = arith.addf %1202, %1204 : vector<16x128xf32>
    %cst_235 = arith.constant 0.000000e+00 : f32
    %1206 = vector.broadcast %cst_235 : f32 to vector<16x128xf32>
    %1207 = arith.maximumf %1205, %1206 : vector<16x128xf32>
    %c20_236 = arith.constant 20 : index
    %1208 = memref.load %arg1[%c20_236] : memref<137xf32, #tpu.memory_space<smem>>
    %1209 = vector.broadcast %1208 : f32 to vector<16x128xf32>
    %1210 = arith.mulf %1209, %1131 : vector<16x128xf32>
    %c21_237 = arith.constant 21 : index
    %1211 = memref.load %arg1[%c21_237] : memref<137xf32, #tpu.memory_space<smem>>
    %1212 = vector.broadcast %1211 : f32 to vector<16x128xf32>
    %1213 = arith.mulf %1212, %1143 : vector<16x128xf32>
    %1214 = arith.addf %1210, %1213 : vector<16x128xf32>
    %c22_238 = arith.constant 22 : index
    %1215 = memref.load %arg1[%c22_238] : memref<137xf32, #tpu.memory_space<smem>>
    %1216 = vector.broadcast %1215 : f32 to vector<16x128xf32>
    %1217 = arith.mulf %1216, %1155 : vector<16x128xf32>
    %1218 = arith.addf %1214, %1217 : vector<16x128xf32>
    %c23_239 = arith.constant 23 : index
    %1219 = memref.load %arg1[%c23_239] : memref<137xf32, #tpu.memory_space<smem>>
    %1220 = vector.broadcast %1219 : f32 to vector<16x128xf32>
    %1221 = arith.mulf %1220, %1167 : vector<16x128xf32>
    %1222 = arith.addf %1218, %1221 : vector<16x128xf32>
    %c30_240 = arith.constant 30 : index
    %1223 = memref.load %arg1[%c30_240] : memref<137xf32, #tpu.memory_space<smem>>
    %1224 = vector.broadcast %1223 : f32 to vector<16x128xf32>
    %1225 = arith.addf %1222, %1224 : vector<16x128xf32>
    %cst_241 = arith.constant 0.000000e+00 : f32
    %1226 = vector.broadcast %cst_241 : f32 to vector<16x128xf32>
    %1227 = arith.maximumf %1225, %1226 : vector<16x128xf32>
    %c24_242 = arith.constant 24 : index
    %1228 = memref.load %arg1[%c24_242] : memref<137xf32, #tpu.memory_space<smem>>
    %1229 = vector.broadcast %1228 : f32 to vector<16x128xf32>
    %1230 = arith.mulf %1229, %1131 : vector<16x128xf32>
    %c25_243 = arith.constant 25 : index
    %1231 = memref.load %arg1[%c25_243] : memref<137xf32, #tpu.memory_space<smem>>
    %1232 = vector.broadcast %1231 : f32 to vector<16x128xf32>
    %1233 = arith.mulf %1232, %1143 : vector<16x128xf32>
    %1234 = arith.addf %1230, %1233 : vector<16x128xf32>
    %c26_244 = arith.constant 26 : index
    %1235 = memref.load %arg1[%c26_244] : memref<137xf32, #tpu.memory_space<smem>>
    %1236 = vector.broadcast %1235 : f32 to vector<16x128xf32>
    %1237 = arith.mulf %1236, %1155 : vector<16x128xf32>
    %1238 = arith.addf %1234, %1237 : vector<16x128xf32>
    %c27_245 = arith.constant 27 : index
    %1239 = memref.load %arg1[%c27_245] : memref<137xf32, #tpu.memory_space<smem>>
    %1240 = vector.broadcast %1239 : f32 to vector<16x128xf32>
    %1241 = arith.mulf %1240, %1167 : vector<16x128xf32>
    %1242 = arith.addf %1238, %1241 : vector<16x128xf32>
    %c31_246 = arith.constant 31 : index
    %1243 = memref.load %arg1[%c31_246] : memref<137xf32, #tpu.memory_space<smem>>
    %1244 = vector.broadcast %1243 : f32 to vector<16x128xf32>
    %1245 = arith.addf %1242, %1244 : vector<16x128xf32>
    %cst_247 = arith.constant 0.000000e+00 : f32
    %1246 = vector.broadcast %cst_247 : f32 to vector<16x128xf32>
    %1247 = arith.maximumf %1245, %1246 : vector<16x128xf32>
    %c32_248 = arith.constant 32 : index
    %1248 = memref.load %arg1[%c32_248] : memref<137xf32, #tpu.memory_space<smem>>
    %1249 = vector.broadcast %1248 : f32 to vector<16x128xf32>
    %1250 = arith.mulf %1249, %1187 : vector<16x128xf32>
    %c33_249 = arith.constant 33 : index
    %1251 = memref.load %arg1[%c33_249] : memref<137xf32, #tpu.memory_space<smem>>
    %1252 = vector.broadcast %1251 : f32 to vector<16x128xf32>
    %1253 = arith.mulf %1252, %1207 : vector<16x128xf32>
    %1254 = arith.addf %1250, %1253 : vector<16x128xf32>
    %c34_250 = arith.constant 34 : index
    %1255 = memref.load %arg1[%c34_250] : memref<137xf32, #tpu.memory_space<smem>>
    %1256 = vector.broadcast %1255 : f32 to vector<16x128xf32>
    %1257 = arith.mulf %1256, %1227 : vector<16x128xf32>
    %1258 = arith.addf %1254, %1257 : vector<16x128xf32>
    %c35_251 = arith.constant 35 : index
    %1259 = memref.load %arg1[%c35_251] : memref<137xf32, #tpu.memory_space<smem>>
    %1260 = vector.broadcast %1259 : f32 to vector<16x128xf32>
    %1261 = arith.mulf %1260, %1247 : vector<16x128xf32>
    %1262 = arith.addf %1258, %1261 : vector<16x128xf32>
    %c48_252 = arith.constant 48 : index
    %1263 = memref.load %arg1[%c48_252] : memref<137xf32, #tpu.memory_space<smem>>
    %1264 = vector.broadcast %1263 : f32 to vector<16x128xf32>
    %1265 = arith.addf %1262, %1264 : vector<16x128xf32>
    %cst_253 = arith.constant 0.000000e+00 : f32
    %1266 = vector.broadcast %cst_253 : f32 to vector<16x128xf32>
    %1267 = arith.maximumf %1265, %1266 : vector<16x128xf32>
    %c36_254 = arith.constant 36 : index
    %1268 = memref.load %arg1[%c36_254] : memref<137xf32, #tpu.memory_space<smem>>
    %1269 = vector.broadcast %1268 : f32 to vector<16x128xf32>
    %1270 = arith.mulf %1269, %1187 : vector<16x128xf32>
    %c37_255 = arith.constant 37 : index
    %1271 = memref.load %arg1[%c37_255] : memref<137xf32, #tpu.memory_space<smem>>
    %1272 = vector.broadcast %1271 : f32 to vector<16x128xf32>
    %1273 = arith.mulf %1272, %1207 : vector<16x128xf32>
    %1274 = arith.addf %1270, %1273 : vector<16x128xf32>
    %c38_256 = arith.constant 38 : index
    %1275 = memref.load %arg1[%c38_256] : memref<137xf32, #tpu.memory_space<smem>>
    %1276 = vector.broadcast %1275 : f32 to vector<16x128xf32>
    %1277 = arith.mulf %1276, %1227 : vector<16x128xf32>
    %1278 = arith.addf %1274, %1277 : vector<16x128xf32>
    %c39_257 = arith.constant 39 : index
    %1279 = memref.load %arg1[%c39_257] : memref<137xf32, #tpu.memory_space<smem>>
    %1280 = vector.broadcast %1279 : f32 to vector<16x128xf32>
    %1281 = arith.mulf %1280, %1247 : vector<16x128xf32>
    %1282 = arith.addf %1278, %1281 : vector<16x128xf32>
    %c49_258 = arith.constant 49 : index
    %1283 = memref.load %arg1[%c49_258] : memref<137xf32, #tpu.memory_space<smem>>
    %1284 = vector.broadcast %1283 : f32 to vector<16x128xf32>
    %1285 = arith.addf %1282, %1284 : vector<16x128xf32>
    %cst_259 = arith.constant 0.000000e+00 : f32
    %1286 = vector.broadcast %cst_259 : f32 to vector<16x128xf32>
    %1287 = arith.maximumf %1285, %1286 : vector<16x128xf32>
    %c40_260 = arith.constant 40 : index
    %1288 = memref.load %arg1[%c40_260] : memref<137xf32, #tpu.memory_space<smem>>
    %1289 = vector.broadcast %1288 : f32 to vector<16x128xf32>
    %1290 = arith.mulf %1289, %1187 : vector<16x128xf32>
    %c41_261 = arith.constant 41 : index
    %1291 = memref.load %arg1[%c41_261] : memref<137xf32, #tpu.memory_space<smem>>
    %1292 = vector.broadcast %1291 : f32 to vector<16x128xf32>
    %1293 = arith.mulf %1292, %1207 : vector<16x128xf32>
    %1294 = arith.addf %1290, %1293 : vector<16x128xf32>
    %c42_262 = arith.constant 42 : index
    %1295 = memref.load %arg1[%c42_262] : memref<137xf32, #tpu.memory_space<smem>>
    %1296 = vector.broadcast %1295 : f32 to vector<16x128xf32>
    %1297 = arith.mulf %1296, %1227 : vector<16x128xf32>
    %1298 = arith.addf %1294, %1297 : vector<16x128xf32>
    %c43_263 = arith.constant 43 : index
    %1299 = memref.load %arg1[%c43_263] : memref<137xf32, #tpu.memory_space<smem>>
    %1300 = vector.broadcast %1299 : f32 to vector<16x128xf32>
    %1301 = arith.mulf %1300, %1247 : vector<16x128xf32>
    %1302 = arith.addf %1298, %1301 : vector<16x128xf32>
    %c50_264 = arith.constant 50 : index
    %1303 = memref.load %arg1[%c50_264] : memref<137xf32, #tpu.memory_space<smem>>
    %1304 = vector.broadcast %1303 : f32 to vector<16x128xf32>
    %1305 = arith.addf %1302, %1304 : vector<16x128xf32>
    %cst_265 = arith.constant 0.000000e+00 : f32
    %1306 = vector.broadcast %cst_265 : f32 to vector<16x128xf32>
    %1307 = arith.maximumf %1305, %1306 : vector<16x128xf32>
    %c44_266 = arith.constant 44 : index
    %1308 = memref.load %arg1[%c44_266] : memref<137xf32, #tpu.memory_space<smem>>
    %1309 = vector.broadcast %1308 : f32 to vector<16x128xf32>
    %1310 = arith.mulf %1309, %1187 : vector<16x128xf32>
    %c45_267 = arith.constant 45 : index
    %1311 = memref.load %arg1[%c45_267] : memref<137xf32, #tpu.memory_space<smem>>
    %1312 = vector.broadcast %1311 : f32 to vector<16x128xf32>
    %1313 = arith.mulf %1312, %1207 : vector<16x128xf32>
    %1314 = arith.addf %1310, %1313 : vector<16x128xf32>
    %c46_268 = arith.constant 46 : index
    %1315 = memref.load %arg1[%c46_268] : memref<137xf32, #tpu.memory_space<smem>>
    %1316 = vector.broadcast %1315 : f32 to vector<16x128xf32>
    %1317 = arith.mulf %1316, %1227 : vector<16x128xf32>
    %1318 = arith.addf %1314, %1317 : vector<16x128xf32>
    %c47_269 = arith.constant 47 : index
    %1319 = memref.load %arg1[%c47_269] : memref<137xf32, #tpu.memory_space<smem>>
    %1320 = vector.broadcast %1319 : f32 to vector<16x128xf32>
    %1321 = arith.mulf %1320, %1247 : vector<16x128xf32>
    %1322 = arith.addf %1318, %1321 : vector<16x128xf32>
    %c51_270 = arith.constant 51 : index
    %1323 = memref.load %arg1[%c51_270] : memref<137xf32, #tpu.memory_space<smem>>
    %1324 = vector.broadcast %1323 : f32 to vector<16x128xf32>
    %1325 = arith.addf %1322, %1324 : vector<16x128xf32>
    %cst_271 = arith.constant 0.000000e+00 : f32
    %1326 = vector.broadcast %cst_271 : f32 to vector<16x128xf32>
    %1327 = arith.maximumf %1325, %1326 : vector<16x128xf32>
    %c52_272 = arith.constant 52 : index
    %1328 = memref.load %arg1[%c52_272] : memref<137xf32, #tpu.memory_space<smem>>
    %1329 = vector.broadcast %1328 : f32 to vector<16x128xf32>
    %1330 = arith.mulf %1329, %1267 : vector<16x128xf32>
    %c53_273 = arith.constant 53 : index
    %1331 = memref.load %arg1[%c53_273] : memref<137xf32, #tpu.memory_space<smem>>
    %1332 = vector.broadcast %1331 : f32 to vector<16x128xf32>
    %1333 = arith.mulf %1332, %1287 : vector<16x128xf32>
    %1334 = arith.addf %1330, %1333 : vector<16x128xf32>
    %c54_274 = arith.constant 54 : index
    %1335 = memref.load %arg1[%c54_274] : memref<137xf32, #tpu.memory_space<smem>>
    %1336 = vector.broadcast %1335 : f32 to vector<16x128xf32>
    %1337 = arith.mulf %1336, %1307 : vector<16x128xf32>
    %1338 = arith.addf %1334, %1337 : vector<16x128xf32>
    %c55_275 = arith.constant 55 : index
    %1339 = memref.load %arg1[%c55_275] : memref<137xf32, #tpu.memory_space<smem>>
    %1340 = vector.broadcast %1339 : f32 to vector<16x128xf32>
    %1341 = arith.mulf %1340, %1327 : vector<16x128xf32>
    %1342 = arith.addf %1338, %1341 : vector<16x128xf32>
    %c68_276 = arith.constant 68 : index
    %1343 = memref.load %arg1[%c68_276] : memref<137xf32, #tpu.memory_space<smem>>
    %1344 = vector.broadcast %1343 : f32 to vector<16x128xf32>
    %1345 = arith.addf %1342, %1344 : vector<16x128xf32>
    %cst_277 = arith.constant 0.000000e+00 : f32
    %1346 = vector.broadcast %cst_277 : f32 to vector<16x128xf32>
    %1347 = arith.maximumf %1345, %1346 : vector<16x128xf32>
    %c56_278 = arith.constant 56 : index
    %1348 = memref.load %arg1[%c56_278] : memref<137xf32, #tpu.memory_space<smem>>
    %1349 = vector.broadcast %1348 : f32 to vector<16x128xf32>
    %1350 = arith.mulf %1349, %1267 : vector<16x128xf32>
    %c57_279 = arith.constant 57 : index
    %1351 = memref.load %arg1[%c57_279] : memref<137xf32, #tpu.memory_space<smem>>
    %1352 = vector.broadcast %1351 : f32 to vector<16x128xf32>
    %1353 = arith.mulf %1352, %1287 : vector<16x128xf32>
    %1354 = arith.addf %1350, %1353 : vector<16x128xf32>
    %c58_280 = arith.constant 58 : index
    %1355 = memref.load %arg1[%c58_280] : memref<137xf32, #tpu.memory_space<smem>>
    %1356 = vector.broadcast %1355 : f32 to vector<16x128xf32>
    %1357 = arith.mulf %1356, %1307 : vector<16x128xf32>
    %1358 = arith.addf %1354, %1357 : vector<16x128xf32>
    %c59_281 = arith.constant 59 : index
    %1359 = memref.load %arg1[%c59_281] : memref<137xf32, #tpu.memory_space<smem>>
    %1360 = vector.broadcast %1359 : f32 to vector<16x128xf32>
    %1361 = arith.mulf %1360, %1327 : vector<16x128xf32>
    %1362 = arith.addf %1358, %1361 : vector<16x128xf32>
    %c69_282 = arith.constant 69 : index
    %1363 = memref.load %arg1[%c69_282] : memref<137xf32, #tpu.memory_space<smem>>
    %1364 = vector.broadcast %1363 : f32 to vector<16x128xf32>
    %1365 = arith.addf %1362, %1364 : vector<16x128xf32>
    %cst_283 = arith.constant 0.000000e+00 : f32
    %1366 = vector.broadcast %cst_283 : f32 to vector<16x128xf32>
    %1367 = arith.maximumf %1365, %1366 : vector<16x128xf32>
    %c60_284 = arith.constant 60 : index
    %1368 = memref.load %arg1[%c60_284] : memref<137xf32, #tpu.memory_space<smem>>
    %1369 = vector.broadcast %1368 : f32 to vector<16x128xf32>
    %1370 = arith.mulf %1369, %1267 : vector<16x128xf32>
    %c61_285 = arith.constant 61 : index
    %1371 = memref.load %arg1[%c61_285] : memref<137xf32, #tpu.memory_space<smem>>
    %1372 = vector.broadcast %1371 : f32 to vector<16x128xf32>
    %1373 = arith.mulf %1372, %1287 : vector<16x128xf32>
    %1374 = arith.addf %1370, %1373 : vector<16x128xf32>
    %c62_286 = arith.constant 62 : index
    %1375 = memref.load %arg1[%c62_286] : memref<137xf32, #tpu.memory_space<smem>>
    %1376 = vector.broadcast %1375 : f32 to vector<16x128xf32>
    %1377 = arith.mulf %1376, %1307 : vector<16x128xf32>
    %1378 = arith.addf %1374, %1377 : vector<16x128xf32>
    %c63_287 = arith.constant 63 : index
    %1379 = memref.load %arg1[%c63_287] : memref<137xf32, #tpu.memory_space<smem>>
    %1380 = vector.broadcast %1379 : f32 to vector<16x128xf32>
    %1381 = arith.mulf %1380, %1327 : vector<16x128xf32>
    %1382 = arith.addf %1378, %1381 : vector<16x128xf32>
    %c70_288 = arith.constant 70 : index
    %1383 = memref.load %arg1[%c70_288] : memref<137xf32, #tpu.memory_space<smem>>
    %1384 = vector.broadcast %1383 : f32 to vector<16x128xf32>
    %1385 = arith.addf %1382, %1384 : vector<16x128xf32>
    %cst_289 = arith.constant 0.000000e+00 : f32
    %1386 = vector.broadcast %cst_289 : f32 to vector<16x128xf32>
    %1387 = arith.maximumf %1385, %1386 : vector<16x128xf32>
    %c64_290 = arith.constant 64 : index
    %1388 = memref.load %arg1[%c64_290] : memref<137xf32, #tpu.memory_space<smem>>
    %1389 = vector.broadcast %1388 : f32 to vector<16x128xf32>
    %1390 = arith.mulf %1389, %1267 : vector<16x128xf32>
    %c65_291 = arith.constant 65 : index
    %1391 = memref.load %arg1[%c65_291] : memref<137xf32, #tpu.memory_space<smem>>
    %1392 = vector.broadcast %1391 : f32 to vector<16x128xf32>
    %1393 = arith.mulf %1392, %1287 : vector<16x128xf32>
    %1394 = arith.addf %1390, %1393 : vector<16x128xf32>
    %c66_292 = arith.constant 66 : index
    %1395 = memref.load %arg1[%c66_292] : memref<137xf32, #tpu.memory_space<smem>>
    %1396 = vector.broadcast %1395 : f32 to vector<16x128xf32>
    %1397 = arith.mulf %1396, %1307 : vector<16x128xf32>
    %1398 = arith.addf %1394, %1397 : vector<16x128xf32>
    %c67_293 = arith.constant 67 : index
    %1399 = memref.load %arg1[%c67_293] : memref<137xf32, #tpu.memory_space<smem>>
    %1400 = vector.broadcast %1399 : f32 to vector<16x128xf32>
    %1401 = arith.mulf %1400, %1327 : vector<16x128xf32>
    %1402 = arith.addf %1398, %1401 : vector<16x128xf32>
    %c71_294 = arith.constant 71 : index
    %1403 = memref.load %arg1[%c71_294] : memref<137xf32, #tpu.memory_space<smem>>
    %1404 = vector.broadcast %1403 : f32 to vector<16x128xf32>
    %1405 = arith.addf %1402, %1404 : vector<16x128xf32>
    %cst_295 = arith.constant 0.000000e+00 : f32
    %1406 = vector.broadcast %cst_295 : f32 to vector<16x128xf32>
    %1407 = arith.maximumf %1405, %1406 : vector<16x128xf32>
    %c72_296 = arith.constant 72 : index
    %1408 = memref.load %arg1[%c72_296] : memref<137xf32, #tpu.memory_space<smem>>
    %1409 = vector.broadcast %1408 : f32 to vector<16x128xf32>
    %1410 = arith.mulf %1409, %1347 : vector<16x128xf32>
    %c73_297 = arith.constant 73 : index
    %1411 = memref.load %arg1[%c73_297] : memref<137xf32, #tpu.memory_space<smem>>
    %1412 = vector.broadcast %1411 : f32 to vector<16x128xf32>
    %1413 = arith.mulf %1412, %1367 : vector<16x128xf32>
    %1414 = arith.addf %1410, %1413 : vector<16x128xf32>
    %c74_298 = arith.constant 74 : index
    %1415 = memref.load %arg1[%c74_298] : memref<137xf32, #tpu.memory_space<smem>>
    %1416 = vector.broadcast %1415 : f32 to vector<16x128xf32>
    %1417 = arith.mulf %1416, %1387 : vector<16x128xf32>
    %1418 = arith.addf %1414, %1417 : vector<16x128xf32>
    %c75_299 = arith.constant 75 : index
    %1419 = memref.load %arg1[%c75_299] : memref<137xf32, #tpu.memory_space<smem>>
    %1420 = vector.broadcast %1419 : f32 to vector<16x128xf32>
    %1421 = arith.mulf %1420, %1407 : vector<16x128xf32>
    %1422 = arith.addf %1418, %1421 : vector<16x128xf32>
    %c88_300 = arith.constant 88 : index
    %1423 = memref.load %arg1[%c88_300] : memref<137xf32, #tpu.memory_space<smem>>
    %1424 = vector.broadcast %1423 : f32 to vector<16x128xf32>
    %1425 = arith.addf %1422, %1424 : vector<16x128xf32>
    %cst_301 = arith.constant 0.000000e+00 : f32
    %1426 = vector.broadcast %cst_301 : f32 to vector<16x128xf32>
    %1427 = arith.maximumf %1425, %1426 : vector<16x128xf32>
    %c76_302 = arith.constant 76 : index
    %1428 = memref.load %arg1[%c76_302] : memref<137xf32, #tpu.memory_space<smem>>
    %1429 = vector.broadcast %1428 : f32 to vector<16x128xf32>
    %1430 = arith.mulf %1429, %1347 : vector<16x128xf32>
    %c77_303 = arith.constant 77 : index
    %1431 = memref.load %arg1[%c77_303] : memref<137xf32, #tpu.memory_space<smem>>
    %1432 = vector.broadcast %1431 : f32 to vector<16x128xf32>
    %1433 = arith.mulf %1432, %1367 : vector<16x128xf32>
    %1434 = arith.addf %1430, %1433 : vector<16x128xf32>
    %c78_304 = arith.constant 78 : index
    %1435 = memref.load %arg1[%c78_304] : memref<137xf32, #tpu.memory_space<smem>>
    %1436 = vector.broadcast %1435 : f32 to vector<16x128xf32>
    %1437 = arith.mulf %1436, %1387 : vector<16x128xf32>
    %1438 = arith.addf %1434, %1437 : vector<16x128xf32>
    %c79_305 = arith.constant 79 : index
    %1439 = memref.load %arg1[%c79_305] : memref<137xf32, #tpu.memory_space<smem>>
    %1440 = vector.broadcast %1439 : f32 to vector<16x128xf32>
    %1441 = arith.mulf %1440, %1407 : vector<16x128xf32>
    %1442 = arith.addf %1438, %1441 : vector<16x128xf32>
    %c89_306 = arith.constant 89 : index
    %1443 = memref.load %arg1[%c89_306] : memref<137xf32, #tpu.memory_space<smem>>
    %1444 = vector.broadcast %1443 : f32 to vector<16x128xf32>
    %1445 = arith.addf %1442, %1444 : vector<16x128xf32>
    %cst_307 = arith.constant 0.000000e+00 : f32
    %1446 = vector.broadcast %cst_307 : f32 to vector<16x128xf32>
    %1447 = arith.maximumf %1445, %1446 : vector<16x128xf32>
    %c80_308 = arith.constant 80 : index
    %1448 = memref.load %arg1[%c80_308] : memref<137xf32, #tpu.memory_space<smem>>
    %1449 = vector.broadcast %1448 : f32 to vector<16x128xf32>
    %1450 = arith.mulf %1449, %1347 : vector<16x128xf32>
    %c81_309 = arith.constant 81 : index
    %1451 = memref.load %arg1[%c81_309] : memref<137xf32, #tpu.memory_space<smem>>
    %1452 = vector.broadcast %1451 : f32 to vector<16x128xf32>
    %1453 = arith.mulf %1452, %1367 : vector<16x128xf32>
    %1454 = arith.addf %1450, %1453 : vector<16x128xf32>
    %c82_310 = arith.constant 82 : index
    %1455 = memref.load %arg1[%c82_310] : memref<137xf32, #tpu.memory_space<smem>>
    %1456 = vector.broadcast %1455 : f32 to vector<16x128xf32>
    %1457 = arith.mulf %1456, %1387 : vector<16x128xf32>
    %1458 = arith.addf %1454, %1457 : vector<16x128xf32>
    %c83_311 = arith.constant 83 : index
    %1459 = memref.load %arg1[%c83_311] : memref<137xf32, #tpu.memory_space<smem>>
    %1460 = vector.broadcast %1459 : f32 to vector<16x128xf32>
    %1461 = arith.mulf %1460, %1407 : vector<16x128xf32>
    %1462 = arith.addf %1458, %1461 : vector<16x128xf32>
    %c90_312 = arith.constant 90 : index
    %1463 = memref.load %arg1[%c90_312] : memref<137xf32, #tpu.memory_space<smem>>
    %1464 = vector.broadcast %1463 : f32 to vector<16x128xf32>
    %1465 = arith.addf %1462, %1464 : vector<16x128xf32>
    %cst_313 = arith.constant 0.000000e+00 : f32
    %1466 = vector.broadcast %cst_313 : f32 to vector<16x128xf32>
    %1467 = arith.maximumf %1465, %1466 : vector<16x128xf32>
    %c84_314 = arith.constant 84 : index
    %1468 = memref.load %arg1[%c84_314] : memref<137xf32, #tpu.memory_space<smem>>
    %1469 = vector.broadcast %1468 : f32 to vector<16x128xf32>
    %1470 = arith.mulf %1469, %1347 : vector<16x128xf32>
    %c85_315 = arith.constant 85 : index
    %1471 = memref.load %arg1[%c85_315] : memref<137xf32, #tpu.memory_space<smem>>
    %1472 = vector.broadcast %1471 : f32 to vector<16x128xf32>
    %1473 = arith.mulf %1472, %1367 : vector<16x128xf32>
    %1474 = arith.addf %1470, %1473 : vector<16x128xf32>
    %c86_316 = arith.constant 86 : index
    %1475 = memref.load %arg1[%c86_316] : memref<137xf32, #tpu.memory_space<smem>>
    %1476 = vector.broadcast %1475 : f32 to vector<16x128xf32>
    %1477 = arith.mulf %1476, %1387 : vector<16x128xf32>
    %1478 = arith.addf %1474, %1477 : vector<16x128xf32>
    %c87_317 = arith.constant 87 : index
    %1479 = memref.load %arg1[%c87_317] : memref<137xf32, #tpu.memory_space<smem>>
    %1480 = vector.broadcast %1479 : f32 to vector<16x128xf32>
    %1481 = arith.mulf %1480, %1407 : vector<16x128xf32>
    %1482 = arith.addf %1478, %1481 : vector<16x128xf32>
    %c91_318 = arith.constant 91 : index
    %1483 = memref.load %arg1[%c91_318] : memref<137xf32, #tpu.memory_space<smem>>
    %1484 = vector.broadcast %1483 : f32 to vector<16x128xf32>
    %1485 = arith.addf %1482, %1484 : vector<16x128xf32>
    %cst_319 = arith.constant 0.000000e+00 : f32
    %1486 = vector.broadcast %cst_319 : f32 to vector<16x128xf32>
    %1487 = arith.maximumf %1485, %1486 : vector<16x128xf32>
    %c92_320 = arith.constant 92 : index
    %1488 = memref.load %arg1[%c92_320] : memref<137xf32, #tpu.memory_space<smem>>
    %1489 = vector.broadcast %1488 : f32 to vector<16x128xf32>
    %1490 = arith.mulf %1489, %1427 : vector<16x128xf32>
    %c93_321 = arith.constant 93 : index
    %1491 = memref.load %arg1[%c93_321] : memref<137xf32, #tpu.memory_space<smem>>
    %1492 = vector.broadcast %1491 : f32 to vector<16x128xf32>
    %1493 = arith.mulf %1492, %1447 : vector<16x128xf32>
    %1494 = arith.addf %1490, %1493 : vector<16x128xf32>
    %c94_322 = arith.constant 94 : index
    %1495 = memref.load %arg1[%c94_322] : memref<137xf32, #tpu.memory_space<smem>>
    %1496 = vector.broadcast %1495 : f32 to vector<16x128xf32>
    %1497 = arith.mulf %1496, %1467 : vector<16x128xf32>
    %1498 = arith.addf %1494, %1497 : vector<16x128xf32>
    %c95_323 = arith.constant 95 : index
    %1499 = memref.load %arg1[%c95_323] : memref<137xf32, #tpu.memory_space<smem>>
    %1500 = vector.broadcast %1499 : f32 to vector<16x128xf32>
    %1501 = arith.mulf %1500, %1487 : vector<16x128xf32>
    %1502 = arith.addf %1498, %1501 : vector<16x128xf32>
    %c108_324 = arith.constant 108 : index
    %1503 = memref.load %arg1[%c108_324] : memref<137xf32, #tpu.memory_space<smem>>
    %1504 = vector.broadcast %1503 : f32 to vector<16x128xf32>
    %1505 = arith.addf %1502, %1504 : vector<16x128xf32>
    %cst_325 = arith.constant 0.000000e+00 : f32
    %1506 = vector.broadcast %cst_325 : f32 to vector<16x128xf32>
    %1507 = arith.maximumf %1505, %1506 : vector<16x128xf32>
    %c96_326 = arith.constant 96 : index
    %1508 = memref.load %arg1[%c96_326] : memref<137xf32, #tpu.memory_space<smem>>
    %1509 = vector.broadcast %1508 : f32 to vector<16x128xf32>
    %1510 = arith.mulf %1509, %1427 : vector<16x128xf32>
    %c97_327 = arith.constant 97 : index
    %1511 = memref.load %arg1[%c97_327] : memref<137xf32, #tpu.memory_space<smem>>
    %1512 = vector.broadcast %1511 : f32 to vector<16x128xf32>
    %1513 = arith.mulf %1512, %1447 : vector<16x128xf32>
    %1514 = arith.addf %1510, %1513 : vector<16x128xf32>
    %c98_328 = arith.constant 98 : index
    %1515 = memref.load %arg1[%c98_328] : memref<137xf32, #tpu.memory_space<smem>>
    %1516 = vector.broadcast %1515 : f32 to vector<16x128xf32>
    %1517 = arith.mulf %1516, %1467 : vector<16x128xf32>
    %1518 = arith.addf %1514, %1517 : vector<16x128xf32>
    %c99_329 = arith.constant 99 : index
    %1519 = memref.load %arg1[%c99_329] : memref<137xf32, #tpu.memory_space<smem>>
    %1520 = vector.broadcast %1519 : f32 to vector<16x128xf32>
    %1521 = arith.mulf %1520, %1487 : vector<16x128xf32>
    %1522 = arith.addf %1518, %1521 : vector<16x128xf32>
    %c109_330 = arith.constant 109 : index
    %1523 = memref.load %arg1[%c109_330] : memref<137xf32, #tpu.memory_space<smem>>
    %1524 = vector.broadcast %1523 : f32 to vector<16x128xf32>
    %1525 = arith.addf %1522, %1524 : vector<16x128xf32>
    %cst_331 = arith.constant 0.000000e+00 : f32
    %1526 = vector.broadcast %cst_331 : f32 to vector<16x128xf32>
    %1527 = arith.maximumf %1525, %1526 : vector<16x128xf32>
    %c100_332 = arith.constant 100 : index
    %1528 = memref.load %arg1[%c100_332] : memref<137xf32, #tpu.memory_space<smem>>
    %1529 = vector.broadcast %1528 : f32 to vector<16x128xf32>
    %1530 = arith.mulf %1529, %1427 : vector<16x128xf32>
    %c101_333 = arith.constant 101 : index
    %1531 = memref.load %arg1[%c101_333] : memref<137xf32, #tpu.memory_space<smem>>
    %1532 = vector.broadcast %1531 : f32 to vector<16x128xf32>
    %1533 = arith.mulf %1532, %1447 : vector<16x128xf32>
    %1534 = arith.addf %1530, %1533 : vector<16x128xf32>
    %c102_334 = arith.constant 102 : index
    %1535 = memref.load %arg1[%c102_334] : memref<137xf32, #tpu.memory_space<smem>>
    %1536 = vector.broadcast %1535 : f32 to vector<16x128xf32>
    %1537 = arith.mulf %1536, %1467 : vector<16x128xf32>
    %1538 = arith.addf %1534, %1537 : vector<16x128xf32>
    %c103_335 = arith.constant 103 : index
    %1539 = memref.load %arg1[%c103_335] : memref<137xf32, #tpu.memory_space<smem>>
    %1540 = vector.broadcast %1539 : f32 to vector<16x128xf32>
    %1541 = arith.mulf %1540, %1487 : vector<16x128xf32>
    %1542 = arith.addf %1538, %1541 : vector<16x128xf32>
    %c110_336 = arith.constant 110 : index
    %1543 = memref.load %arg1[%c110_336] : memref<137xf32, #tpu.memory_space<smem>>
    %1544 = vector.broadcast %1543 : f32 to vector<16x128xf32>
    %1545 = arith.addf %1542, %1544 : vector<16x128xf32>
    %cst_337 = arith.constant 0.000000e+00 : f32
    %1546 = vector.broadcast %cst_337 : f32 to vector<16x128xf32>
    %1547 = arith.maximumf %1545, %1546 : vector<16x128xf32>
    %c104_338 = arith.constant 104 : index
    %1548 = memref.load %arg1[%c104_338] : memref<137xf32, #tpu.memory_space<smem>>
    %1549 = vector.broadcast %1548 : f32 to vector<16x128xf32>
    %1550 = arith.mulf %1549, %1427 : vector<16x128xf32>
    %c105_339 = arith.constant 105 : index
    %1551 = memref.load %arg1[%c105_339] : memref<137xf32, #tpu.memory_space<smem>>
    %1552 = vector.broadcast %1551 : f32 to vector<16x128xf32>
    %1553 = arith.mulf %1552, %1447 : vector<16x128xf32>
    %1554 = arith.addf %1550, %1553 : vector<16x128xf32>
    %c106_340 = arith.constant 106 : index
    %1555 = memref.load %arg1[%c106_340] : memref<137xf32, #tpu.memory_space<smem>>
    %1556 = vector.broadcast %1555 : f32 to vector<16x128xf32>
    %1557 = arith.mulf %1556, %1467 : vector<16x128xf32>
    %1558 = arith.addf %1554, %1557 : vector<16x128xf32>
    %c107_341 = arith.constant 107 : index
    %1559 = memref.load %arg1[%c107_341] : memref<137xf32, #tpu.memory_space<smem>>
    %1560 = vector.broadcast %1559 : f32 to vector<16x128xf32>
    %1561 = arith.mulf %1560, %1487 : vector<16x128xf32>
    %1562 = arith.addf %1558, %1561 : vector<16x128xf32>
    %c111_342 = arith.constant 111 : index
    %1563 = memref.load %arg1[%c111_342] : memref<137xf32, #tpu.memory_space<smem>>
    %1564 = vector.broadcast %1563 : f32 to vector<16x128xf32>
    %1565 = arith.addf %1562, %1564 : vector<16x128xf32>
    %cst_343 = arith.constant 0.000000e+00 : f32
    %1566 = vector.broadcast %cst_343 : f32 to vector<16x128xf32>
    %1567 = arith.maximumf %1565, %1566 : vector<16x128xf32>
    %c112_344 = arith.constant 112 : index
    %1568 = memref.load %arg1[%c112_344] : memref<137xf32, #tpu.memory_space<smem>>
    %1569 = vector.broadcast %1568 : f32 to vector<16x128xf32>
    %1570 = arith.mulf %1569, %1507 : vector<16x128xf32>
    %c113_345 = arith.constant 113 : index
    %1571 = memref.load %arg1[%c113_345] : memref<137xf32, #tpu.memory_space<smem>>
    %1572 = vector.broadcast %1571 : f32 to vector<16x128xf32>
    %1573 = arith.mulf %1572, %1527 : vector<16x128xf32>
    %1574 = arith.addf %1570, %1573 : vector<16x128xf32>
    %c114_346 = arith.constant 114 : index
    %1575 = memref.load %arg1[%c114_346] : memref<137xf32, #tpu.memory_space<smem>>
    %1576 = vector.broadcast %1575 : f32 to vector<16x128xf32>
    %1577 = arith.mulf %1576, %1547 : vector<16x128xf32>
    %1578 = arith.addf %1574, %1577 : vector<16x128xf32>
    %c115_347 = arith.constant 115 : index
    %1579 = memref.load %arg1[%c115_347] : memref<137xf32, #tpu.memory_space<smem>>
    %1580 = vector.broadcast %1579 : f32 to vector<16x128xf32>
    %1581 = arith.mulf %1580, %1567 : vector<16x128xf32>
    %1582 = arith.addf %1578, %1581 : vector<16x128xf32>
    %c128_348 = arith.constant 128 : index
    %1583 = memref.load %arg1[%c128_348] : memref<137xf32, #tpu.memory_space<smem>>
    %1584 = vector.broadcast %1583 : f32 to vector<16x128xf32>
    %1585 = arith.addf %1582, %1584 : vector<16x128xf32>
    %cst_349 = arith.constant 0.000000e+00 : f32
    %1586 = vector.broadcast %cst_349 : f32 to vector<16x128xf32>
    %1587 = arith.maximumf %1585, %1586 : vector<16x128xf32>
    %c116_350 = arith.constant 116 : index
    %1588 = memref.load %arg1[%c116_350] : memref<137xf32, #tpu.memory_space<smem>>
    %1589 = vector.broadcast %1588 : f32 to vector<16x128xf32>
    %1590 = arith.mulf %1589, %1507 : vector<16x128xf32>
    %c117_351 = arith.constant 117 : index
    %1591 = memref.load %arg1[%c117_351] : memref<137xf32, #tpu.memory_space<smem>>
    %1592 = vector.broadcast %1591 : f32 to vector<16x128xf32>
    %1593 = arith.mulf %1592, %1527 : vector<16x128xf32>
    %1594 = arith.addf %1590, %1593 : vector<16x128xf32>
    %c118_352 = arith.constant 118 : index
    %1595 = memref.load %arg1[%c118_352] : memref<137xf32, #tpu.memory_space<smem>>
    %1596 = vector.broadcast %1595 : f32 to vector<16x128xf32>
    %1597 = arith.mulf %1596, %1547 : vector<16x128xf32>
    %1598 = arith.addf %1594, %1597 : vector<16x128xf32>
    %c119_353 = arith.constant 119 : index
    %1599 = memref.load %arg1[%c119_353] : memref<137xf32, #tpu.memory_space<smem>>
    %1600 = vector.broadcast %1599 : f32 to vector<16x128xf32>
    %1601 = arith.mulf %1600, %1567 : vector<16x128xf32>
    %1602 = arith.addf %1598, %1601 : vector<16x128xf32>
    %c129_354 = arith.constant 129 : index
    %1603 = memref.load %arg1[%c129_354] : memref<137xf32, #tpu.memory_space<smem>>
    %1604 = vector.broadcast %1603 : f32 to vector<16x128xf32>
    %1605 = arith.addf %1602, %1604 : vector<16x128xf32>
    %cst_355 = arith.constant 0.000000e+00 : f32
    %1606 = vector.broadcast %cst_355 : f32 to vector<16x128xf32>
    %1607 = arith.maximumf %1605, %1606 : vector<16x128xf32>
    %c120_356 = arith.constant 120 : index
    %1608 = memref.load %arg1[%c120_356] : memref<137xf32, #tpu.memory_space<smem>>
    %1609 = vector.broadcast %1608 : f32 to vector<16x128xf32>
    %1610 = arith.mulf %1609, %1507 : vector<16x128xf32>
    %c121_357 = arith.constant 121 : index
    %1611 = memref.load %arg1[%c121_357] : memref<137xf32, #tpu.memory_space<smem>>
    %1612 = vector.broadcast %1611 : f32 to vector<16x128xf32>
    %1613 = arith.mulf %1612, %1527 : vector<16x128xf32>
    %1614 = arith.addf %1610, %1613 : vector<16x128xf32>
    %c122_358 = arith.constant 122 : index
    %1615 = memref.load %arg1[%c122_358] : memref<137xf32, #tpu.memory_space<smem>>
    %1616 = vector.broadcast %1615 : f32 to vector<16x128xf32>
    %1617 = arith.mulf %1616, %1547 : vector<16x128xf32>
    %1618 = arith.addf %1614, %1617 : vector<16x128xf32>
    %c123_359 = arith.constant 123 : index
    %1619 = memref.load %arg1[%c123_359] : memref<137xf32, #tpu.memory_space<smem>>
    %1620 = vector.broadcast %1619 : f32 to vector<16x128xf32>
    %1621 = arith.mulf %1620, %1567 : vector<16x128xf32>
    %1622 = arith.addf %1618, %1621 : vector<16x128xf32>
    %c130_360 = arith.constant 130 : index
    %1623 = memref.load %arg1[%c130_360] : memref<137xf32, #tpu.memory_space<smem>>
    %1624 = vector.broadcast %1623 : f32 to vector<16x128xf32>
    %1625 = arith.addf %1622, %1624 : vector<16x128xf32>
    %cst_361 = arith.constant 0.000000e+00 : f32
    %1626 = vector.broadcast %cst_361 : f32 to vector<16x128xf32>
    %1627 = arith.maximumf %1625, %1626 : vector<16x128xf32>
    %c124_362 = arith.constant 124 : index
    %1628 = memref.load %arg1[%c124_362] : memref<137xf32, #tpu.memory_space<smem>>
    %1629 = vector.broadcast %1628 : f32 to vector<16x128xf32>
    %1630 = arith.mulf %1629, %1507 : vector<16x128xf32>
    %c125_363 = arith.constant 125 : index
    %1631 = memref.load %arg1[%c125_363] : memref<137xf32, #tpu.memory_space<smem>>
    %1632 = vector.broadcast %1631 : f32 to vector<16x128xf32>
    %1633 = arith.mulf %1632, %1527 : vector<16x128xf32>
    %1634 = arith.addf %1630, %1633 : vector<16x128xf32>
    %c126_364 = arith.constant 126 : index
    %1635 = memref.load %arg1[%c126_364] : memref<137xf32, #tpu.memory_space<smem>>
    %1636 = vector.broadcast %1635 : f32 to vector<16x128xf32>
    %1637 = arith.mulf %1636, %1547 : vector<16x128xf32>
    %1638 = arith.addf %1634, %1637 : vector<16x128xf32>
    %c127_365 = arith.constant 127 : index
    %1639 = memref.load %arg1[%c127_365] : memref<137xf32, #tpu.memory_space<smem>>
    %1640 = vector.broadcast %1639 : f32 to vector<16x128xf32>
    %1641 = arith.mulf %1640, %1567 : vector<16x128xf32>
    %1642 = arith.addf %1638, %1641 : vector<16x128xf32>
    %c131_366 = arith.constant 131 : index
    %1643 = memref.load %arg1[%c131_366] : memref<137xf32, #tpu.memory_space<smem>>
    %1644 = vector.broadcast %1643 : f32 to vector<16x128xf32>
    %1645 = arith.addf %1642, %1644 : vector<16x128xf32>
    %cst_367 = arith.constant 0.000000e+00 : f32
    %1646 = vector.broadcast %cst_367 : f32 to vector<16x128xf32>
    %1647 = arith.maximumf %1645, %1646 : vector<16x128xf32>
    %c132_368 = arith.constant 132 : index
    %1648 = memref.load %arg1[%c132_368] : memref<137xf32, #tpu.memory_space<smem>>
    %1649 = vector.broadcast %1648 : f32 to vector<16x128xf32>
    %1650 = arith.mulf %1649, %1587 : vector<16x128xf32>
    %c133_369 = arith.constant 133 : index
    %1651 = memref.load %arg1[%c133_369] : memref<137xf32, #tpu.memory_space<smem>>
    %1652 = vector.broadcast %1651 : f32 to vector<16x128xf32>
    %1653 = arith.mulf %1652, %1607 : vector<16x128xf32>
    %1654 = arith.addf %1650, %1653 : vector<16x128xf32>
    %c134_370 = arith.constant 134 : index
    %1655 = memref.load %arg1[%c134_370] : memref<137xf32, #tpu.memory_space<smem>>
    %1656 = vector.broadcast %1655 : f32 to vector<16x128xf32>
    %1657 = arith.mulf %1656, %1627 : vector<16x128xf32>
    %1658 = arith.addf %1654, %1657 : vector<16x128xf32>
    %c135_371 = arith.constant 135 : index
    %1659 = memref.load %arg1[%c135_371] : memref<137xf32, #tpu.memory_space<smem>>
    %1660 = vector.broadcast %1659 : f32 to vector<16x128xf32>
    %1661 = arith.mulf %1660, %1647 : vector<16x128xf32>
    %1662 = arith.addf %1658, %1661 : vector<16x128xf32>
    %c136_372 = arith.constant 136 : index
    %1663 = memref.load %arg1[%c136_372] : memref<137xf32, #tpu.memory_space<smem>>
    %1664 = vector.broadcast %1663 : f32 to vector<16x128xf32>
    %1665 = arith.addf %1662, %1664 : vector<16x128xf32>
    %1666 = arith.index_cast %1113 : i32 to index
    %c0_373 = arith.constant 0 : index
    %1667 = vector.load %arg3[%1666, %c0_373] : memref<64x128xf32, #tpu.memory_space<vmem>>, vector<16x128xf32>
    tpu.vector_store %arg3[%1666, %c0_373], %1665 {strides = array<i32>} : memref<64x128xf32, #tpu.memory_space<vmem>>, vector<16x128xf32>,
    %c3_i32 = arith.constant 3 : i32
    %c16_i32_374 = arith.constant 16 : i32
    %1668 = arith.muli %c3_i32, %c16_i32_374 : i32
    %1669 = tpu.assume_multiple %1668, 16 : i32
    %c0_375 = arith.constant 0 : index
    %1670 = arith.index_cast %1669 : i32 to index
    %c0_376 = arith.constant 0 : index
    %1671 = vector.load %arg2[%c0_375, %1670, %c0_376] : memref<2x64x128xf32, #tpu.memory_space<vmem>>, vector<1x16x128xf32>
    %1672 = vector.shape_cast %1671 : vector<1x16x128xf32> to vector<16x128xf32>
    %c1_377 = arith.constant 1 : index
    %1673 = arith.index_cast %1669 : i32 to index
    %c0_378 = arith.constant 0 : index
    %1674 = vector.load %arg2[%c1_377, %1673, %c0_378] : memref<2x64x128xf32, #tpu.memory_space<vmem>>, vector<1x16x128xf32>
    %1675 = vector.shape_cast %1674 : vector<1x16x128xf32> to vector<16x128xf32>
    %c0_379 = arith.constant 0 : index
    %1676 = memref.load %arg1[%c0_379] : memref<137xf32, #tpu.memory_space<smem>>
    %1677 = vector.broadcast %1676 : f32 to vector<16x128xf32>
    %1678 = arith.mulf %1677, %1672 : vector<16x128xf32>
    %c1_380 = arith.constant 1 : index
    %1679 = memref.load %arg1[%c1_380] : memref<137xf32, #tpu.memory_space<smem>>
    %1680 = vector.broadcast %1679 : f32 to vector<16x128xf32>
    %1681 = arith.mulf %1680, %1675 : vector<16x128xf32>
    %1682 = arith.addf %1678, %1681 : vector<16x128xf32>
    %c8_381 = arith.constant 8 : index
    %1683 = memref.load %arg1[%c8_381] : memref<137xf32, #tpu.memory_space<smem>>
    %1684 = vector.broadcast %1683 : f32 to vector<16x128xf32>
    %1685 = arith.addf %1682, %1684 : vector<16x128xf32>
    %cst_382 = arith.constant 0.000000e+00 : f32
    %1686 = vector.broadcast %cst_382 : f32 to vector<16x128xf32>
    %1687 = arith.maximumf %1685, %1686 : vector<16x128xf32>
    %c2_383 = arith.constant 2 : index
    %1688 = memref.load %arg1[%c2_383] : memref<137xf32, #tpu.memory_space<smem>>
    %1689 = vector.broadcast %1688 : f32 to vector<16x128xf32>
    %1690 = arith.mulf %1689, %1672 : vector<16x128xf32>
    %c3_384 = arith.constant 3 : index
    %1691 = memref.load %arg1[%c3_384] : memref<137xf32, #tpu.memory_space<smem>>
    %1692 = vector.broadcast %1691 : f32 to vector<16x128xf32>
    %1693 = arith.mulf %1692, %1675 : vector<16x128xf32>
    %1694 = arith.addf %1690, %1693 : vector<16x128xf32>
    %c9_385 = arith.constant 9 : index
    %1695 = memref.load %arg1[%c9_385] : memref<137xf32, #tpu.memory_space<smem>>
    %1696 = vector.broadcast %1695 : f32 to vector<16x128xf32>
    %1697 = arith.addf %1694, %1696 : vector<16x128xf32>
    %cst_386 = arith.constant 0.000000e+00 : f32
    %1698 = vector.broadcast %cst_386 : f32 to vector<16x128xf32>
    %1699 = arith.maximumf %1697, %1698 : vector<16x128xf32>
    %c4_387 = arith.constant 4 : index
    %1700 = memref.load %arg1[%c4_387] : memref<137xf32, #tpu.memory_space<smem>>
    %1701 = vector.broadcast %1700 : f32 to vector<16x128xf32>
    %1702 = arith.mulf %1701, %1672 : vector<16x128xf32>
    %c5_388 = arith.constant 5 : index
    %1703 = memref.load %arg1[%c5_388] : memref<137xf32, #tpu.memory_space<smem>>
    %1704 = vector.broadcast %1703 : f32 to vector<16x128xf32>
    %1705 = arith.mulf %1704, %1675 : vector<16x128xf32>
    %1706 = arith.addf %1702, %1705 : vector<16x128xf32>
    %c10_389 = arith.constant 10 : index
    %1707 = memref.load %arg1[%c10_389] : memref<137xf32, #tpu.memory_space<smem>>
    %1708 = vector.broadcast %1707 : f32 to vector<16x128xf32>
    %1709 = arith.addf %1706, %1708 : vector<16x128xf32>
    %cst_390 = arith.constant 0.000000e+00 : f32
    %1710 = vector.broadcast %cst_390 : f32 to vector<16x128xf32>
    %1711 = arith.maximumf %1709, %1710 : vector<16x128xf32>
    %c6_391 = arith.constant 6 : index
    %1712 = memref.load %arg1[%c6_391] : memref<137xf32, #tpu.memory_space<smem>>
    %1713 = vector.broadcast %1712 : f32 to vector<16x128xf32>
    %1714 = arith.mulf %1713, %1672 : vector<16x128xf32>
    %c7_392 = arith.constant 7 : index
    %1715 = memref.load %arg1[%c7_392] : memref<137xf32, #tpu.memory_space<smem>>
    %1716 = vector.broadcast %1715 : f32 to vector<16x128xf32>
    %1717 = arith.mulf %1716, %1675 : vector<16x128xf32>
    %1718 = arith.addf %1714, %1717 : vector<16x128xf32>
    %c11_393 = arith.constant 11 : index
    %1719 = memref.load %arg1[%c11_393] : memref<137xf32, #tpu.memory_space<smem>>
    %1720 = vector.broadcast %1719 : f32 to vector<16x128xf32>
    %1721 = arith.addf %1718, %1720 : vector<16x128xf32>
    %cst_394 = arith.constant 0.000000e+00 : f32
    %1722 = vector.broadcast %cst_394 : f32 to vector<16x128xf32>
    %1723 = arith.maximumf %1721, %1722 : vector<16x128xf32>
    %c12_395 = arith.constant 12 : index
    %1724 = memref.load %arg1[%c12_395] : memref<137xf32, #tpu.memory_space<smem>>
    %1725 = vector.broadcast %1724 : f32 to vector<16x128xf32>
    %1726 = arith.mulf %1725, %1687 : vector<16x128xf32>
    %c13_396 = arith.constant 13 : index
    %1727 = memref.load %arg1[%c13_396] : memref<137xf32, #tpu.memory_space<smem>>
    %1728 = vector.broadcast %1727 : f32 to vector<16x128xf32>
    %1729 = arith.mulf %1728, %1699 : vector<16x128xf32>
    %1730 = arith.addf %1726, %1729 : vector<16x128xf32>
    %c14_397 = arith.constant 14 : index
    %1731 = memref.load %arg1[%c14_397] : memref<137xf32, #tpu.memory_space<smem>>
    %1732 = vector.broadcast %1731 : f32 to vector<16x128xf32>
    %1733 = arith.mulf %1732, %1711 : vector<16x128xf32>
    %1734 = arith.addf %1730, %1733 : vector<16x128xf32>
    %c15_398 = arith.constant 15 : index
    %1735 = memref.load %arg1[%c15_398] : memref<137xf32, #tpu.memory_space<smem>>
    %1736 = vector.broadcast %1735 : f32 to vector<16x128xf32>
    %1737 = arith.mulf %1736, %1723 : vector<16x128xf32>
    %1738 = arith.addf %1734, %1737 : vector<16x128xf32>
    %c28_399 = arith.constant 28 : index
    %1739 = memref.load %arg1[%c28_399] : memref<137xf32, #tpu.memory_space<smem>>
    %1740 = vector.broadcast %1739 : f32 to vector<16x128xf32>
    %1741 = arith.addf %1738, %1740 : vector<16x128xf32>
    %cst_400 = arith.constant 0.000000e+00 : f32
    %1742 = vector.broadcast %cst_400 : f32 to vector<16x128xf32>
    %1743 = arith.maximumf %1741, %1742 : vector<16x128xf32>
    %c16_401 = arith.constant 16 : index
    %1744 = memref.load %arg1[%c16_401] : memref<137xf32, #tpu.memory_space<smem>>
    %1745 = vector.broadcast %1744 : f32 to vector<16x128xf32>
    %1746 = arith.mulf %1745, %1687 : vector<16x128xf32>
    %c17_402 = arith.constant 17 : index
    %1747 = memref.load %arg1[%c17_402] : memref<137xf32, #tpu.memory_space<smem>>
    %1748 = vector.broadcast %1747 : f32 to vector<16x128xf32>
    %1749 = arith.mulf %1748, %1699 : vector<16x128xf32>
    %1750 = arith.addf %1746, %1749 : vector<16x128xf32>
    %c18_403 = arith.constant 18 : index
    %1751 = memref.load %arg1[%c18_403] : memref<137xf32, #tpu.memory_space<smem>>
    %1752 = vector.broadcast %1751 : f32 to vector<16x128xf32>
    %1753 = arith.mulf %1752, %1711 : vector<16x128xf32>
    %1754 = arith.addf %1750, %1753 : vector<16x128xf32>
    %c19_404 = arith.constant 19 : index
    %1755 = memref.load %arg1[%c19_404] : memref<137xf32, #tpu.memory_space<smem>>
    %1756 = vector.broadcast %1755 : f32 to vector<16x128xf32>
    %1757 = arith.mulf %1756, %1723 : vector<16x128xf32>
    %1758 = arith.addf %1754, %1757 : vector<16x128xf32>
    %c29_405 = arith.constant 29 : index
    %1759 = memref.load %arg1[%c29_405] : memref<137xf32, #tpu.memory_space<smem>>
    %1760 = vector.broadcast %1759 : f32 to vector<16x128xf32>
    %1761 = arith.addf %1758, %1760 : vector<16x128xf32>
    %cst_406 = arith.constant 0.000000e+00 : f32
    %1762 = vector.broadcast %cst_406 : f32 to vector<16x128xf32>
    %1763 = arith.maximumf %1761, %1762 : vector<16x128xf32>
    %c20_407 = arith.constant 20 : index
    %1764 = memref.load %arg1[%c20_407] : memref<137xf32, #tpu.memory_space<smem>>
    %1765 = vector.broadcast %1764 : f32 to vector<16x128xf32>
    %1766 = arith.mulf %1765, %1687 : vector<16x128xf32>
    %c21_408 = arith.constant 21 : index
    %1767 = memref.load %arg1[%c21_408] : memref<137xf32, #tpu.memory_space<smem>>
    %1768 = vector.broadcast %1767 : f32 to vector<16x128xf32>
    %1769 = arith.mulf %1768, %1699 : vector<16x128xf32>
    %1770 = arith.addf %1766, %1769 : vector<16x128xf32>
    %c22_409 = arith.constant 22 : index
    %1771 = memref.load %arg1[%c22_409] : memref<137xf32, #tpu.memory_space<smem>>
    %1772 = vector.broadcast %1771 : f32 to vector<16x128xf32>
    %1773 = arith.mulf %1772, %1711 : vector<16x128xf32>
    %1774 = arith.addf %1770, %1773 : vector<16x128xf32>
    %c23_410 = arith.constant 23 : index
    %1775 = memref.load %arg1[%c23_410] : memref<137xf32, #tpu.memory_space<smem>>
    %1776 = vector.broadcast %1775 : f32 to vector<16x128xf32>
    %1777 = arith.mulf %1776, %1723 : vector<16x128xf32>
    %1778 = arith.addf %1774, %1777 : vector<16x128xf32>
    %c30_411 = arith.constant 30 : index
    %1779 = memref.load %arg1[%c30_411] : memref<137xf32, #tpu.memory_space<smem>>
    %1780 = vector.broadcast %1779 : f32 to vector<16x128xf32>
    %1781 = arith.addf %1778, %1780 : vector<16x128xf32>
    %cst_412 = arith.constant 0.000000e+00 : f32
    %1782 = vector.broadcast %cst_412 : f32 to vector<16x128xf32>
    %1783 = arith.maximumf %1781, %1782 : vector<16x128xf32>
    %c24_413 = arith.constant 24 : index
    %1784 = memref.load %arg1[%c24_413] : memref<137xf32, #tpu.memory_space<smem>>
    %1785 = vector.broadcast %1784 : f32 to vector<16x128xf32>
    %1786 = arith.mulf %1785, %1687 : vector<16x128xf32>
    %c25_414 = arith.constant 25 : index
    %1787 = memref.load %arg1[%c25_414] : memref<137xf32, #tpu.memory_space<smem>>
    %1788 = vector.broadcast %1787 : f32 to vector<16x128xf32>
    %1789 = arith.mulf %1788, %1699 : vector<16x128xf32>
    %1790 = arith.addf %1786, %1789 : vector<16x128xf32>
    %c26_415 = arith.constant 26 : index
    %1791 = memref.load %arg1[%c26_415] : memref<137xf32, #tpu.memory_space<smem>>
    %1792 = vector.broadcast %1791 : f32 to vector<16x128xf32>
    %1793 = arith.mulf %1792, %1711 : vector<16x128xf32>
    %1794 = arith.addf %1790, %1793 : vector<16x128xf32>
    %c27_416 = arith.constant 27 : index
    %1795 = memref.load %arg1[%c27_416] : memref<137xf32, #tpu.memory_space<smem>>
    %1796 = vector.broadcast %1795 : f32 to vector<16x128xf32>
    %1797 = arith.mulf %1796, %1723 : vector<16x128xf32>
    %1798 = arith.addf %1794, %1797 : vector<16x128xf32>
    %c31_417 = arith.constant 31 : index
    %1799 = memref.load %arg1[%c31_417] : memref<137xf32, #tpu.memory_space<smem>>
    %1800 = vector.broadcast %1799 : f32 to vector<16x128xf32>
    %1801 = arith.addf %1798, %1800 : vector<16x128xf32>
    %cst_418 = arith.constant 0.000000e+00 : f32
    %1802 = vector.broadcast %cst_418 : f32 to vector<16x128xf32>
    %1803 = arith.maximumf %1801, %1802 : vector<16x128xf32>
    %c32_419 = arith.constant 32 : index
    %1804 = memref.load %arg1[%c32_419] : memref<137xf32, #tpu.memory_space<smem>>
    %1805 = vector.broadcast %1804 : f32 to vector<16x128xf32>
    %1806 = arith.mulf %1805, %1743 : vector<16x128xf32>
    %c33_420 = arith.constant 33 : index
    %1807 = memref.load %arg1[%c33_420] : memref<137xf32, #tpu.memory_space<smem>>
    %1808 = vector.broadcast %1807 : f32 to vector<16x128xf32>
    %1809 = arith.mulf %1808, %1763 : vector<16x128xf32>
    %1810 = arith.addf %1806, %1809 : vector<16x128xf32>
    %c34_421 = arith.constant 34 : index
    %1811 = memref.load %arg1[%c34_421] : memref<137xf32, #tpu.memory_space<smem>>
    %1812 = vector.broadcast %1811 : f32 to vector<16x128xf32>
    %1813 = arith.mulf %1812, %1783 : vector<16x128xf32>
    %1814 = arith.addf %1810, %1813 : vector<16x128xf32>
    %c35_422 = arith.constant 35 : index
    %1815 = memref.load %arg1[%c35_422] : memref<137xf32, #tpu.memory_space<smem>>
    %1816 = vector.broadcast %1815 : f32 to vector<16x128xf32>
    %1817 = arith.mulf %1816, %1803 : vector<16x128xf32>
    %1818 = arith.addf %1814, %1817 : vector<16x128xf32>
    %c48_423 = arith.constant 48 : index
    %1819 = memref.load %arg1[%c48_423] : memref<137xf32, #tpu.memory_space<smem>>
    %1820 = vector.broadcast %1819 : f32 to vector<16x128xf32>
    %1821 = arith.addf %1818, %1820 : vector<16x128xf32>
    %cst_424 = arith.constant 0.000000e+00 : f32
    %1822 = vector.broadcast %cst_424 : f32 to vector<16x128xf32>
    %1823 = arith.maximumf %1821, %1822 : vector<16x128xf32>
    %c36_425 = arith.constant 36 : index
    %1824 = memref.load %arg1[%c36_425] : memref<137xf32, #tpu.memory_space<smem>>
    %1825 = vector.broadcast %1824 : f32 to vector<16x128xf32>
    %1826 = arith.mulf %1825, %1743 : vector<16x128xf32>
    %c37_426 = arith.constant 37 : index
    %1827 = memref.load %arg1[%c37_426] : memref<137xf32, #tpu.memory_space<smem>>
    %1828 = vector.broadcast %1827 : f32 to vector<16x128xf32>
    %1829 = arith.mulf %1828, %1763 : vector<16x128xf32>
    %1830 = arith.addf %1826, %1829 : vector<16x128xf32>
    %c38_427 = arith.constant 38 : index
    %1831 = memref.load %arg1[%c38_427] : memref<137xf32, #tpu.memory_space<smem>>
    %1832 = vector.broadcast %1831 : f32 to vector<16x128xf32>
    %1833 = arith.mulf %1832, %1783 : vector<16x128xf32>
    %1834 = arith.addf %1830, %1833 : vector<16x128xf32>
    %c39_428 = arith.constant 39 : index
    %1835 = memref.load %arg1[%c39_428] : memref<137xf32, #tpu.memory_space<smem>>
    %1836 = vector.broadcast %1835 : f32 to vector<16x128xf32>
    %1837 = arith.mulf %1836, %1803 : vector<16x128xf32>
    %1838 = arith.addf %1834, %1837 : vector<16x128xf32>
    %c49_429 = arith.constant 49 : index
    %1839 = memref.load %arg1[%c49_429] : memref<137xf32, #tpu.memory_space<smem>>
    %1840 = vector.broadcast %1839 : f32 to vector<16x128xf32>
    %1841 = arith.addf %1838, %1840 : vector<16x128xf32>
    %cst_430 = arith.constant 0.000000e+00 : f32
    %1842 = vector.broadcast %cst_430 : f32 to vector<16x128xf32>
    %1843 = arith.maximumf %1841, %1842 : vector<16x128xf32>
    %c40_431 = arith.constant 40 : index
    %1844 = memref.load %arg1[%c40_431] : memref<137xf32, #tpu.memory_space<smem>>
    %1845 = vector.broadcast %1844 : f32 to vector<16x128xf32>
    %1846 = arith.mulf %1845, %1743 : vector<16x128xf32>
    %c41_432 = arith.constant 41 : index
    %1847 = memref.load %arg1[%c41_432] : memref<137xf32, #tpu.memory_space<smem>>
    %1848 = vector.broadcast %1847 : f32 to vector<16x128xf32>
    %1849 = arith.mulf %1848, %1763 : vector<16x128xf32>
    %1850 = arith.addf %1846, %1849 : vector<16x128xf32>
    %c42_433 = arith.constant 42 : index
    %1851 = memref.load %arg1[%c42_433] : memref<137xf32, #tpu.memory_space<smem>>
    %1852 = vector.broadcast %1851 : f32 to vector<16x128xf32>
    %1853 = arith.mulf %1852, %1783 : vector<16x128xf32>
    %1854 = arith.addf %1850, %1853 : vector<16x128xf32>
    %c43_434 = arith.constant 43 : index
    %1855 = memref.load %arg1[%c43_434] : memref<137xf32, #tpu.memory_space<smem>>
    %1856 = vector.broadcast %1855 : f32 to vector<16x128xf32>
    %1857 = arith.mulf %1856, %1803 : vector<16x128xf32>
    %1858 = arith.addf %1854, %1857 : vector<16x128xf32>
    %c50_435 = arith.constant 50 : index
    %1859 = memref.load %arg1[%c50_435] : memref<137xf32, #tpu.memory_space<smem>>
    %1860 = vector.broadcast %1859 : f32 to vector<16x128xf32>
    %1861 = arith.addf %1858, %1860 : vector<16x128xf32>
    %cst_436 = arith.constant 0.000000e+00 : f32
    %1862 = vector.broadcast %cst_436 : f32 to vector<16x128xf32>
    %1863 = arith.maximumf %1861, %1862 : vector<16x128xf32>
    %c44_437 = arith.constant 44 : index
    %1864 = memref.load %arg1[%c44_437] : memref<137xf32, #tpu.memory_space<smem>>
    %1865 = vector.broadcast %1864 : f32 to vector<16x128xf32>
    %1866 = arith.mulf %1865, %1743 : vector<16x128xf32>
    %c45_438 = arith.constant 45 : index
    %1867 = memref.load %arg1[%c45_438] : memref<137xf32, #tpu.memory_space<smem>>
    %1868 = vector.broadcast %1867 : f32 to vector<16x128xf32>
    %1869 = arith.mulf %1868, %1763 : vector<16x128xf32>
    %1870 = arith.addf %1866, %1869 : vector<16x128xf32>
    %c46_439 = arith.constant 46 : index
    %1871 = memref.load %arg1[%c46_439] : memref<137xf32, #tpu.memory_space<smem>>
    %1872 = vector.broadcast %1871 : f32 to vector<16x128xf32>
    %1873 = arith.mulf %1872, %1783 : vector<16x128xf32>
    %1874 = arith.addf %1870, %1873 : vector<16x128xf32>
    %c47_440 = arith.constant 47 : index
    %1875 = memref.load %arg1[%c47_440] : memref<137xf32, #tpu.memory_space<smem>>
    %1876 = vector.broadcast %1875 : f32 to vector<16x128xf32>
    %1877 = arith.mulf %1876, %1803 : vector<16x128xf32>
    %1878 = arith.addf %1874, %1877 : vector<16x128xf32>
    %c51_441 = arith.constant 51 : index
    %1879 = memref.load %arg1[%c51_441] : memref<137xf32, #tpu.memory_space<smem>>
    %1880 = vector.broadcast %1879 : f32 to vector<16x128xf32>
    %1881 = arith.addf %1878, %1880 : vector<16x128xf32>
    %cst_442 = arith.constant 0.000000e+00 : f32
    %1882 = vector.broadcast %cst_442 : f32 to vector<16x128xf32>
    %1883 = arith.maximumf %1881, %1882 : vector<16x128xf32>
    %c52_443 = arith.constant 52 : index
    %1884 = memref.load %arg1[%c52_443] : memref<137xf32, #tpu.memory_space<smem>>
    %1885 = vector.broadcast %1884 : f32 to vector<16x128xf32>
    %1886 = arith.mulf %1885, %1823 : vector<16x128xf32>
    %c53_444 = arith.constant 53 : index
    %1887 = memref.load %arg1[%c53_444] : memref<137xf32, #tpu.memory_space<smem>>
    %1888 = vector.broadcast %1887 : f32 to vector<16x128xf32>
    %1889 = arith.mulf %1888, %1843 : vector<16x128xf32>
    %1890 = arith.addf %1886, %1889 : vector<16x128xf32>
    %c54_445 = arith.constant 54 : index
    %1891 = memref.load %arg1[%c54_445] : memref<137xf32, #tpu.memory_space<smem>>
    %1892 = vector.broadcast %1891 : f32 to vector<16x128xf32>
    %1893 = arith.mulf %1892, %1863 : vector<16x128xf32>
    %1894 = arith.addf %1890, %1893 : vector<16x128xf32>
    %c55_446 = arith.constant 55 : index
    %1895 = memref.load %arg1[%c55_446] : memref<137xf32, #tpu.memory_space<smem>>
    %1896 = vector.broadcast %1895 : f32 to vector<16x128xf32>
    %1897 = arith.mulf %1896, %1883 : vector<16x128xf32>
    %1898 = arith.addf %1894, %1897 : vector<16x128xf32>
    %c68_447 = arith.constant 68 : index
    %1899 = memref.load %arg1[%c68_447] : memref<137xf32, #tpu.memory_space<smem>>
    %1900 = vector.broadcast %1899 : f32 to vector<16x128xf32>
    %1901 = arith.addf %1898, %1900 : vector<16x128xf32>
    %cst_448 = arith.constant 0.000000e+00 : f32
    %1902 = vector.broadcast %cst_448 : f32 to vector<16x128xf32>
    %1903 = arith.maximumf %1901, %1902 : vector<16x128xf32>
    %c56_449 = arith.constant 56 : index
    %1904 = memref.load %arg1[%c56_449] : memref<137xf32, #tpu.memory_space<smem>>
    %1905 = vector.broadcast %1904 : f32 to vector<16x128xf32>
    %1906 = arith.mulf %1905, %1823 : vector<16x128xf32>
    %c57_450 = arith.constant 57 : index
    %1907 = memref.load %arg1[%c57_450] : memref<137xf32, #tpu.memory_space<smem>>
    %1908 = vector.broadcast %1907 : f32 to vector<16x128xf32>
    %1909 = arith.mulf %1908, %1843 : vector<16x128xf32>
    %1910 = arith.addf %1906, %1909 : vector<16x128xf32>
    %c58_451 = arith.constant 58 : index
    %1911 = memref.load %arg1[%c58_451] : memref<137xf32, #tpu.memory_space<smem>>
    %1912 = vector.broadcast %1911 : f32 to vector<16x128xf32>
    %1913 = arith.mulf %1912, %1863 : vector<16x128xf32>
    %1914 = arith.addf %1910, %1913 : vector<16x128xf32>
    %c59_452 = arith.constant 59 : index
    %1915 = memref.load %arg1[%c59_452] : memref<137xf32, #tpu.memory_space<smem>>
    %1916 = vector.broadcast %1915 : f32 to vector<16x128xf32>
    %1917 = arith.mulf %1916, %1883 : vector<16x128xf32>
    %1918 = arith.addf %1914, %1917 : vector<16x128xf32>
    %c69_453 = arith.constant 69 : index
    %1919 = memref.load %arg1[%c69_453] : memref<137xf32, #tpu.memory_space<smem>>
    %1920 = vector.broadcast %1919 : f32 to vector<16x128xf32>
    %1921 = arith.addf %1918, %1920 : vector<16x128xf32>
    %cst_454 = arith.constant 0.000000e+00 : f32
    %1922 = vector.broadcast %cst_454 : f32 to vector<16x128xf32>
    %1923 = arith.maximumf %1921, %1922 : vector<16x128xf32>
    %c60_455 = arith.constant 60 : index
    %1924 = memref.load %arg1[%c60_455] : memref<137xf32, #tpu.memory_space<smem>>
    %1925 = vector.broadcast %1924 : f32 to vector<16x128xf32>
    %1926 = arith.mulf %1925, %1823 : vector<16x128xf32>
    %c61_456 = arith.constant 61 : index
    %1927 = memref.load %arg1[%c61_456] : memref<137xf32, #tpu.memory_space<smem>>
    %1928 = vector.broadcast %1927 : f32 to vector<16x128xf32>
    %1929 = arith.mulf %1928, %1843 : vector<16x128xf32>
    %1930 = arith.addf %1926, %1929 : vector<16x128xf32>
    %c62_457 = arith.constant 62 : index
    %1931 = memref.load %arg1[%c62_457] : memref<137xf32, #tpu.memory_space<smem>>
    %1932 = vector.broadcast %1931 : f32 to vector<16x128xf32>
    %1933 = arith.mulf %1932, %1863 : vector<16x128xf32>
    %1934 = arith.addf %1930, %1933 : vector<16x128xf32>
    %c63_458 = arith.constant 63 : index
    %1935 = memref.load %arg1[%c63_458] : memref<137xf32, #tpu.memory_space<smem>>
    %1936 = vector.broadcast %1935 : f32 to vector<16x128xf32>
    %1937 = arith.mulf %1936, %1883 : vector<16x128xf32>
    %1938 = arith.addf %1934, %1937 : vector<16x128xf32>
    %c70_459 = arith.constant 70 : index
    %1939 = memref.load %arg1[%c70_459] : memref<137xf32, #tpu.memory_space<smem>>
    %1940 = vector.broadcast %1939 : f32 to vector<16x128xf32>
    %1941 = arith.addf %1938, %1940 : vector<16x128xf32>
    %cst_460 = arith.constant 0.000000e+00 : f32
    %1942 = vector.broadcast %cst_460 : f32 to vector<16x128xf32>
    %1943 = arith.maximumf %1941, %1942 : vector<16x128xf32>
    %c64_461 = arith.constant 64 : index
    %1944 = memref.load %arg1[%c64_461] : memref<137xf32, #tpu.memory_space<smem>>
    %1945 = vector.broadcast %1944 : f32 to vector<16x128xf32>
    %1946 = arith.mulf %1945, %1823 : vector<16x128xf32>
    %c65_462 = arith.constant 65 : index
    %1947 = memref.load %arg1[%c65_462] : memref<137xf32, #tpu.memory_space<smem>>
    %1948 = vector.broadcast %1947 : f32 to vector<16x128xf32>
    %1949 = arith.mulf %1948, %1843 : vector<16x128xf32>
    %1950 = arith.addf %1946, %1949 : vector<16x128xf32>
    %c66_463 = arith.constant 66 : index
    %1951 = memref.load %arg1[%c66_463] : memref<137xf32, #tpu.memory_space<smem>>
    %1952 = vector.broadcast %1951 : f32 to vector<16x128xf32>
    %1953 = arith.mulf %1952, %1863 : vector<16x128xf32>
    %1954 = arith.addf %1950, %1953 : vector<16x128xf32>
    %c67_464 = arith.constant 67 : index
    %1955 = memref.load %arg1[%c67_464] : memref<137xf32, #tpu.memory_space<smem>>
    %1956 = vector.broadcast %1955 : f32 to vector<16x128xf32>
    %1957 = arith.mulf %1956, %1883 : vector<16x128xf32>
    %1958 = arith.addf %1954, %1957 : vector<16x128xf32>
    %c71_465 = arith.constant 71 : index
    %1959 = memref.load %arg1[%c71_465] : memref<137xf32, #tpu.memory_space<smem>>
    %1960 = vector.broadcast %1959 : f32 to vector<16x128xf32>
    %1961 = arith.addf %1958, %1960 : vector<16x128xf32>
    %cst_466 = arith.constant 0.000000e+00 : f32
    %1962 = vector.broadcast %cst_466 : f32 to vector<16x128xf32>
    %1963 = arith.maximumf %1961, %1962 : vector<16x128xf32>
    %c72_467 = arith.constant 72 : index
    %1964 = memref.load %arg1[%c72_467] : memref<137xf32, #tpu.memory_space<smem>>
    %1965 = vector.broadcast %1964 : f32 to vector<16x128xf32>
    %1966 = arith.mulf %1965, %1903 : vector<16x128xf32>
    %c73_468 = arith.constant 73 : index
    %1967 = memref.load %arg1[%c73_468] : memref<137xf32, #tpu.memory_space<smem>>
    %1968 = vector.broadcast %1967 : f32 to vector<16x128xf32>
    %1969 = arith.mulf %1968, %1923 : vector<16x128xf32>
    %1970 = arith.addf %1966, %1969 : vector<16x128xf32>
    %c74_469 = arith.constant 74 : index
    %1971 = memref.load %arg1[%c74_469] : memref<137xf32, #tpu.memory_space<smem>>
    %1972 = vector.broadcast %1971 : f32 to vector<16x128xf32>
    %1973 = arith.mulf %1972, %1943 : vector<16x128xf32>
    %1974 = arith.addf %1970, %1973 : vector<16x128xf32>
    %c75_470 = arith.constant 75 : index
    %1975 = memref.load %arg1[%c75_470] : memref<137xf32, #tpu.memory_space<smem>>
    %1976 = vector.broadcast %1975 : f32 to vector<16x128xf32>
    %1977 = arith.mulf %1976, %1963 : vector<16x128xf32>
    %1978 = arith.addf %1974, %1977 : vector<16x128xf32>
    %c88_471 = arith.constant 88 : index
    %1979 = memref.load %arg1[%c88_471] : memref<137xf32, #tpu.memory_space<smem>>
    %1980 = vector.broadcast %1979 : f32 to vector<16x128xf32>
    %1981 = arith.addf %1978, %1980 : vector<16x128xf32>
    %cst_472 = arith.constant 0.000000e+00 : f32
    %1982 = vector.broadcast %cst_472 : f32 to vector<16x128xf32>
    %1983 = arith.maximumf %1981, %1982 : vector<16x128xf32>
    %c76_473 = arith.constant 76 : index
    %1984 = memref.load %arg1[%c76_473] : memref<137xf32, #tpu.memory_space<smem>>
    %1985 = vector.broadcast %1984 : f32 to vector<16x128xf32>
    %1986 = arith.mulf %1985, %1903 : vector<16x128xf32>
    %c77_474 = arith.constant 77 : index
    %1987 = memref.load %arg1[%c77_474] : memref<137xf32, #tpu.memory_space<smem>>
    %1988 = vector.broadcast %1987 : f32 to vector<16x128xf32>
    %1989 = arith.mulf %1988, %1923 : vector<16x128xf32>
    %1990 = arith.addf %1986, %1989 : vector<16x128xf32>
    %c78_475 = arith.constant 78 : index
    %1991 = memref.load %arg1[%c78_475] : memref<137xf32, #tpu.memory_space<smem>>
    %1992 = vector.broadcast %1991 : f32 to vector<16x128xf32>
    %1993 = arith.mulf %1992, %1943 : vector<16x128xf32>
    %1994 = arith.addf %1990, %1993 : vector<16x128xf32>
    %c79_476 = arith.constant 79 : index
    %1995 = memref.load %arg1[%c79_476] : memref<137xf32, #tpu.memory_space<smem>>
    %1996 = vector.broadcast %1995 : f32 to vector<16x128xf32>
    %1997 = arith.mulf %1996, %1963 : vector<16x128xf32>
    %1998 = arith.addf %1994, %1997 : vector<16x128xf32>
    %c89_477 = arith.constant 89 : index
    %1999 = memref.load %arg1[%c89_477] : memref<137xf32, #tpu.memory_space<smem>>
    %2000 = vector.broadcast %1999 : f32 to vector<16x128xf32>
    %2001 = arith.addf %1998, %2000 : vector<16x128xf32>
    %cst_478 = arith.constant 0.000000e+00 : f32
    %2002 = vector.broadcast %cst_478 : f32 to vector<16x128xf32>
    %2003 = arith.maximumf %2001, %2002 : vector<16x128xf32>
    %c80_479 = arith.constant 80 : index
    %2004 = memref.load %arg1[%c80_479] : memref<137xf32, #tpu.memory_space<smem>>
    %2005 = vector.broadcast %2004 : f32 to vector<16x128xf32>
    %2006 = arith.mulf %2005, %1903 : vector<16x128xf32>
    %c81_480 = arith.constant 81 : index
    %2007 = memref.load %arg1[%c81_480] : memref<137xf32, #tpu.memory_space<smem>>
    %2008 = vector.broadcast %2007 : f32 to vector<16x128xf32>
    %2009 = arith.mulf %2008, %1923 : vector<16x128xf32>
    %2010 = arith.addf %2006, %2009 : vector<16x128xf32>
    %c82_481 = arith.constant 82 : index
    %2011 = memref.load %arg1[%c82_481] : memref<137xf32, #tpu.memory_space<smem>>
    %2012 = vector.broadcast %2011 : f32 to vector<16x128xf32>
    %2013 = arith.mulf %2012, %1943 : vector<16x128xf32>
    %2014 = arith.addf %2010, %2013 : vector<16x128xf32>
    %c83_482 = arith.constant 83 : index
    %2015 = memref.load %arg1[%c83_482] : memref<137xf32, #tpu.memory_space<smem>>
    %2016 = vector.broadcast %2015 : f32 to vector<16x128xf32>
    %2017 = arith.mulf %2016, %1963 : vector<16x128xf32>
    %2018 = arith.addf %2014, %2017 : vector<16x128xf32>
    %c90_483 = arith.constant 90 : index
    %2019 = memref.load %arg1[%c90_483] : memref<137xf32, #tpu.memory_space<smem>>
    %2020 = vector.broadcast %2019 : f32 to vector<16x128xf32>
    %2021 = arith.addf %2018, %2020 : vector<16x128xf32>
    %cst_484 = arith.constant 0.000000e+00 : f32
    %2022 = vector.broadcast %cst_484 : f32 to vector<16x128xf32>
    %2023 = arith.maximumf %2021, %2022 : vector<16x128xf32>
    %c84_485 = arith.constant 84 : index
    %2024 = memref.load %arg1[%c84_485] : memref<137xf32, #tpu.memory_space<smem>>
    %2025 = vector.broadcast %2024 : f32 to vector<16x128xf32>
    %2026 = arith.mulf %2025, %1903 : vector<16x128xf32>
    %c85_486 = arith.constant 85 : index
    %2027 = memref.load %arg1[%c85_486] : memref<137xf32, #tpu.memory_space<smem>>
    %2028 = vector.broadcast %2027 : f32 to vector<16x128xf32>
    %2029 = arith.mulf %2028, %1923 : vector<16x128xf32>
    %2030 = arith.addf %2026, %2029 : vector<16x128xf32>
    %c86_487 = arith.constant 86 : index
    %2031 = memref.load %arg1[%c86_487] : memref<137xf32, #tpu.memory_space<smem>>
    %2032 = vector.broadcast %2031 : f32 to vector<16x128xf32>
    %2033 = arith.mulf %2032, %1943 : vector<16x128xf32>
    %2034 = arith.addf %2030, %2033 : vector<16x128xf32>
    %c87_488 = arith.constant 87 : index
    %2035 = memref.load %arg1[%c87_488] : memref<137xf32, #tpu.memory_space<smem>>
    %2036 = vector.broadcast %2035 : f32 to vector<16x128xf32>
    %2037 = arith.mulf %2036, %1963 : vector<16x128xf32>
    %2038 = arith.addf %2034, %2037 : vector<16x128xf32>
    %c91_489 = arith.constant 91 : index
    %2039 = memref.load %arg1[%c91_489] : memref<137xf32, #tpu.memory_space<smem>>
    %2040 = vector.broadcast %2039 : f32 to vector<16x128xf32>
    %2041 = arith.addf %2038, %2040 : vector<16x128xf32>
    %cst_490 = arith.constant 0.000000e+00 : f32
    %2042 = vector.broadcast %cst_490 : f32 to vector<16x128xf32>
    %2043 = arith.maximumf %2041, %2042 : vector<16x128xf32>
    %c92_491 = arith.constant 92 : index
    %2044 = memref.load %arg1[%c92_491] : memref<137xf32, #tpu.memory_space<smem>>
    %2045 = vector.broadcast %2044 : f32 to vector<16x128xf32>
    %2046 = arith.mulf %2045, %1983 : vector<16x128xf32>
    %c93_492 = arith.constant 93 : index
    %2047 = memref.load %arg1[%c93_492] : memref<137xf32, #tpu.memory_space<smem>>
    %2048 = vector.broadcast %2047 : f32 to vector<16x128xf32>
    %2049 = arith.mulf %2048, %2003 : vector<16x128xf32>
    %2050 = arith.addf %2046, %2049 : vector<16x128xf32>
    %c94_493 = arith.constant 94 : index
    %2051 = memref.load %arg1[%c94_493] : memref<137xf32, #tpu.memory_space<smem>>
    %2052 = vector.broadcast %2051 : f32 to vector<16x128xf32>
    %2053 = arith.mulf %2052, %2023 : vector<16x128xf32>
    %2054 = arith.addf %2050, %2053 : vector<16x128xf32>
    %c95_494 = arith.constant 95 : index
    %2055 = memref.load %arg1[%c95_494] : memref<137xf32, #tpu.memory_space<smem>>
    %2056 = vector.broadcast %2055 : f32 to vector<16x128xf32>
    %2057 = arith.mulf %2056, %2043 : vector<16x128xf32>
    %2058 = arith.addf %2054, %2057 : vector<16x128xf32>
    %c108_495 = arith.constant 108 : index
    %2059 = memref.load %arg1[%c108_495] : memref<137xf32, #tpu.memory_space<smem>>
    %2060 = vector.broadcast %2059 : f32 to vector<16x128xf32>
    %2061 = arith.addf %2058, %2060 : vector<16x128xf32>
    %cst_496 = arith.constant 0.000000e+00 : f32
    %2062 = vector.broadcast %cst_496 : f32 to vector<16x128xf32>
    %2063 = arith.maximumf %2061, %2062 : vector<16x128xf32>
    %c96_497 = arith.constant 96 : index
    %2064 = memref.load %arg1[%c96_497] : memref<137xf32, #tpu.memory_space<smem>>
    %2065 = vector.broadcast %2064 : f32 to vector<16x128xf32>
    %2066 = arith.mulf %2065, %1983 : vector<16x128xf32>
    %c97_498 = arith.constant 97 : index
    %2067 = memref.load %arg1[%c97_498] : memref<137xf32, #tpu.memory_space<smem>>
    %2068 = vector.broadcast %2067 : f32 to vector<16x128xf32>
    %2069 = arith.mulf %2068, %2003 : vector<16x128xf32>
    %2070 = arith.addf %2066, %2069 : vector<16x128xf32>
    %c98_499 = arith.constant 98 : index
    %2071 = memref.load %arg1[%c98_499] : memref<137xf32, #tpu.memory_space<smem>>
    %2072 = vector.broadcast %2071 : f32 to vector<16x128xf32>
    %2073 = arith.mulf %2072, %2023 : vector<16x128xf32>
    %2074 = arith.addf %2070, %2073 : vector<16x128xf32>
    %c99_500 = arith.constant 99 : index
    %2075 = memref.load %arg1[%c99_500] : memref<137xf32, #tpu.memory_space<smem>>
    %2076 = vector.broadcast %2075 : f32 to vector<16x128xf32>
    %2077 = arith.mulf %2076, %2043 : vector<16x128xf32>
    %2078 = arith.addf %2074, %2077 : vector<16x128xf32>
    %c109_501 = arith.constant 109 : index
    %2079 = memref.load %arg1[%c109_501] : memref<137xf32, #tpu.memory_space<smem>>
    %2080 = vector.broadcast %2079 : f32 to vector<16x128xf32>
    %2081 = arith.addf %2078, %2080 : vector<16x128xf32>
    %cst_502 = arith.constant 0.000000e+00 : f32
    %2082 = vector.broadcast %cst_502 : f32 to vector<16x128xf32>
    %2083 = arith.maximumf %2081, %2082 : vector<16x128xf32>
    %c100_503 = arith.constant 100 : index
    %2084 = memref.load %arg1[%c100_503] : memref<137xf32, #tpu.memory_space<smem>>
    %2085 = vector.broadcast %2084 : f32 to vector<16x128xf32>
    %2086 = arith.mulf %2085, %1983 : vector<16x128xf32>
    %c101_504 = arith.constant 101 : index
    %2087 = memref.load %arg1[%c101_504] : memref<137xf32, #tpu.memory_space<smem>>
    %2088 = vector.broadcast %2087 : f32 to vector<16x128xf32>
    %2089 = arith.mulf %2088, %2003 : vector<16x128xf32>
    %2090 = arith.addf %2086, %2089 : vector<16x128xf32>
    %c102_505 = arith.constant 102 : index
    %2091 = memref.load %arg1[%c102_505] : memref<137xf32, #tpu.memory_space<smem>>
    %2092 = vector.broadcast %2091 : f32 to vector<16x128xf32>
    %2093 = arith.mulf %2092, %2023 : vector<16x128xf32>
    %2094 = arith.addf %2090, %2093 : vector<16x128xf32>
    %c103_506 = arith.constant 103 : index
    %2095 = memref.load %arg1[%c103_506] : memref<137xf32, #tpu.memory_space<smem>>
    %2096 = vector.broadcast %2095 : f32 to vector<16x128xf32>
    %2097 = arith.mulf %2096, %2043 : vector<16x128xf32>
    %2098 = arith.addf %2094, %2097 : vector<16x128xf32>
    %c110_507 = arith.constant 110 : index
    %2099 = memref.load %arg1[%c110_507] : memref<137xf32, #tpu.memory_space<smem>>
    %2100 = vector.broadcast %2099 : f32 to vector<16x128xf32>
    %2101 = arith.addf %2098, %2100 : vector<16x128xf32>
    %cst_508 = arith.constant 0.000000e+00 : f32
    %2102 = vector.broadcast %cst_508 : f32 to vector<16x128xf32>
    %2103 = arith.maximumf %2101, %2102 : vector<16x128xf32>
    %c104_509 = arith.constant 104 : index
    %2104 = memref.load %arg1[%c104_509] : memref<137xf32, #tpu.memory_space<smem>>
    %2105 = vector.broadcast %2104 : f32 to vector<16x128xf32>
    %2106 = arith.mulf %2105, %1983 : vector<16x128xf32>
    %c105_510 = arith.constant 105 : index
    %2107 = memref.load %arg1[%c105_510] : memref<137xf32, #tpu.memory_space<smem>>
    %2108 = vector.broadcast %2107 : f32 to vector<16x128xf32>
    %2109 = arith.mulf %2108, %2003 : vector<16x128xf32>
    %2110 = arith.addf %2106, %2109 : vector<16x128xf32>
    %c106_511 = arith.constant 106 : index
    %2111 = memref.load %arg1[%c106_511] : memref<137xf32, #tpu.memory_space<smem>>
    %2112 = vector.broadcast %2111 : f32 to vector<16x128xf32>
    %2113 = arith.mulf %2112, %2023 : vector<16x128xf32>
    %2114 = arith.addf %2110, %2113 : vector<16x128xf32>
    %c107_512 = arith.constant 107 : index
    %2115 = memref.load %arg1[%c107_512] : memref<137xf32, #tpu.memory_space<smem>>
    %2116 = vector.broadcast %2115 : f32 to vector<16x128xf32>
    %2117 = arith.mulf %2116, %2043 : vector<16x128xf32>
    %2118 = arith.addf %2114, %2117 : vector<16x128xf32>
    %c111_513 = arith.constant 111 : index
    %2119 = memref.load %arg1[%c111_513] : memref<137xf32, #tpu.memory_space<smem>>
    %2120 = vector.broadcast %2119 : f32 to vector<16x128xf32>
    %2121 = arith.addf %2118, %2120 : vector<16x128xf32>
    %cst_514 = arith.constant 0.000000e+00 : f32
    %2122 = vector.broadcast %cst_514 : f32 to vector<16x128xf32>
    %2123 = arith.maximumf %2121, %2122 : vector<16x128xf32>
    %c112_515 = arith.constant 112 : index
    %2124 = memref.load %arg1[%c112_515] : memref<137xf32, #tpu.memory_space<smem>>
    %2125 = vector.broadcast %2124 : f32 to vector<16x128xf32>
    %2126 = arith.mulf %2125, %2063 : vector<16x128xf32>
    %c113_516 = arith.constant 113 : index
    %2127 = memref.load %arg1[%c113_516] : memref<137xf32, #tpu.memory_space<smem>>
    %2128 = vector.broadcast %2127 : f32 to vector<16x128xf32>
    %2129 = arith.mulf %2128, %2083 : vector<16x128xf32>
    %2130 = arith.addf %2126, %2129 : vector<16x128xf32>
    %c114_517 = arith.constant 114 : index
    %2131 = memref.load %arg1[%c114_517] : memref<137xf32, #tpu.memory_space<smem>>
    %2132 = vector.broadcast %2131 : f32 to vector<16x128xf32>
    %2133 = arith.mulf %2132, %2103 : vector<16x128xf32>
    %2134 = arith.addf %2130, %2133 : vector<16x128xf32>
    %c115_518 = arith.constant 115 : index
    %2135 = memref.load %arg1[%c115_518] : memref<137xf32, #tpu.memory_space<smem>>
    %2136 = vector.broadcast %2135 : f32 to vector<16x128xf32>
    %2137 = arith.mulf %2136, %2123 : vector<16x128xf32>
    %2138 = arith.addf %2134, %2137 : vector<16x128xf32>
    %c128_519 = arith.constant 128 : index
    %2139 = memref.load %arg1[%c128_519] : memref<137xf32, #tpu.memory_space<smem>>
    %2140 = vector.broadcast %2139 : f32 to vector<16x128xf32>
    %2141 = arith.addf %2138, %2140 : vector<16x128xf32>
    %cst_520 = arith.constant 0.000000e+00 : f32
    %2142 = vector.broadcast %cst_520 : f32 to vector<16x128xf32>
    %2143 = arith.maximumf %2141, %2142 : vector<16x128xf32>
    %c116_521 = arith.constant 116 : index
    %2144 = memref.load %arg1[%c116_521] : memref<137xf32, #tpu.memory_space<smem>>
    %2145 = vector.broadcast %2144 : f32 to vector<16x128xf32>
    %2146 = arith.mulf %2145, %2063 : vector<16x128xf32>
    %c117_522 = arith.constant 117 : index
    %2147 = memref.load %arg1[%c117_522] : memref<137xf32, #tpu.memory_space<smem>>
    %2148 = vector.broadcast %2147 : f32 to vector<16x128xf32>
    %2149 = arith.mulf %2148, %2083 : vector<16x128xf32>
    %2150 = arith.addf %2146, %2149 : vector<16x128xf32>
    %c118_523 = arith.constant 118 : index
    %2151 = memref.load %arg1[%c118_523] : memref<137xf32, #tpu.memory_space<smem>>
    %2152 = vector.broadcast %2151 : f32 to vector<16x128xf32>
    %2153 = arith.mulf %2152, %2103 : vector<16x128xf32>
    %2154 = arith.addf %2150, %2153 : vector<16x128xf32>
    %c119_524 = arith.constant 119 : index
    %2155 = memref.load %arg1[%c119_524] : memref<137xf32, #tpu.memory_space<smem>>
    %2156 = vector.broadcast %2155 : f32 to vector<16x128xf32>
    %2157 = arith.mulf %2156, %2123 : vector<16x128xf32>
    %2158 = arith.addf %2154, %2157 : vector<16x128xf32>
    %c129_525 = arith.constant 129 : index
    %2159 = memref.load %arg1[%c129_525] : memref<137xf32, #tpu.memory_space<smem>>
    %2160 = vector.broadcast %2159 : f32 to vector<16x128xf32>
    %2161 = arith.addf %2158, %2160 : vector<16x128xf32>
    %cst_526 = arith.constant 0.000000e+00 : f32
    %2162 = vector.broadcast %cst_526 : f32 to vector<16x128xf32>
    %2163 = arith.maximumf %2161, %2162 : vector<16x128xf32>
    %c120_527 = arith.constant 120 : index
    %2164 = memref.load %arg1[%c120_527] : memref<137xf32, #tpu.memory_space<smem>>
    %2165 = vector.broadcast %2164 : f32 to vector<16x128xf32>
    %2166 = arith.mulf %2165, %2063 : vector<16x128xf32>
    %c121_528 = arith.constant 121 : index
    %2167 = memref.load %arg1[%c121_528] : memref<137xf32, #tpu.memory_space<smem>>
    %2168 = vector.broadcast %2167 : f32 to vector<16x128xf32>
    %2169 = arith.mulf %2168, %2083 : vector<16x128xf32>
    %2170 = arith.addf %2166, %2169 : vector<16x128xf32>
    %c122_529 = arith.constant 122 : index
    %2171 = memref.load %arg1[%c122_529] : memref<137xf32, #tpu.memory_space<smem>>
    %2172 = vector.broadcast %2171 : f32 to vector<16x128xf32>
    %2173 = arith.mulf %2172, %2103 : vector<16x128xf32>
    %2174 = arith.addf %2170, %2173 : vector<16x128xf32>
    %c123_530 = arith.constant 123 : index
    %2175 = memref.load %arg1[%c123_530] : memref<137xf32, #tpu.memory_space<smem>>
    %2176 = vector.broadcast %2175 : f32 to vector<16x128xf32>
    %2177 = arith.mulf %2176, %2123 : vector<16x128xf32>
    %2178 = arith.addf %2174, %2177 : vector<16x128xf32>
    %c130_531 = arith.constant 130 : index
    %2179 = memref.load %arg1[%c130_531] : memref<137xf32, #tpu.memory_space<smem>>
    %2180 = vector.broadcast %2179 : f32 to vector<16x128xf32>
    %2181 = arith.addf %2178, %2180 : vector<16x128xf32>
    %cst_532 = arith.constant 0.000000e+00 : f32
    %2182 = vector.broadcast %cst_532 : f32 to vector<16x128xf32>
    %2183 = arith.maximumf %2181, %2182 : vector<16x128xf32>
    %c124_533 = arith.constant 124 : index
    %2184 = memref.load %arg1[%c124_533] : memref<137xf32, #tpu.memory_space<smem>>
    %2185 = vector.broadcast %2184 : f32 to vector<16x128xf32>
    %2186 = arith.mulf %2185, %2063 : vector<16x128xf32>
    %c125_534 = arith.constant 125 : index
    %2187 = memref.load %arg1[%c125_534] : memref<137xf32, #tpu.memory_space<smem>>
    %2188 = vector.broadcast %2187 : f32 to vector<16x128xf32>
    %2189 = arith.mulf %2188, %2083 : vector<16x128xf32>
    %2190 = arith.addf %2186, %2189 : vector<16x128xf32>
    %c126_535 = arith.constant 126 : index
    %2191 = memref.load %arg1[%c126_535] : memref<137xf32, #tpu.memory_space<smem>>
    %2192 = vector.broadcast %2191 : f32 to vector<16x128xf32>
    %2193 = arith.mulf %2192, %2103 : vector<16x128xf32>
    %2194 = arith.addf %2190, %2193 : vector<16x128xf32>
    %c127_536 = arith.constant 127 : index
    %2195 = memref.load %arg1[%c127_536] : memref<137xf32, #tpu.memory_space<smem>>
    %2196 = vector.broadcast %2195 : f32 to vector<16x128xf32>
    %2197 = arith.mulf %2196, %2123 : vector<16x128xf32>
    %2198 = arith.addf %2194, %2197 : vector<16x128xf32>
    %c131_537 = arith.constant 131 : index
    %2199 = memref.load %arg1[%c131_537] : memref<137xf32, #tpu.memory_space<smem>>
    %2200 = vector.broadcast %2199 : f32 to vector<16x128xf32>
    %2201 = arith.addf %2198, %2200 : vector<16x128xf32>
    %cst_538 = arith.constant 0.000000e+00 : f32
    %2202 = vector.broadcast %cst_538 : f32 to vector<16x128xf32>
    %2203 = arith.maximumf %2201, %2202 : vector<16x128xf32>
    %c132_539 = arith.constant 132 : index
    %2204 = memref.load %arg1[%c132_539] : memref<137xf32, #tpu.memory_space<smem>>
    %2205 = vector.broadcast %2204 : f32 to vector<16x128xf32>
    %2206 = arith.mulf %2205, %2143 : vector<16x128xf32>
    %c133_540 = arith.constant 133 : index
    %2207 = memref.load %arg1[%c133_540] : memref<137xf32, #tpu.memory_space<smem>>
    %2208 = vector.broadcast %2207 : f32 to vector<16x128xf32>
    %2209 = arith.mulf %2208, %2163 : vector<16x128xf32>
    %2210 = arith.addf %2206, %2209 : vector<16x128xf32>
    %c134_541 = arith.constant 134 : index
    %2211 = memref.load %arg1[%c134_541] : memref<137xf32, #tpu.memory_space<smem>>
    %2212 = vector.broadcast %2211 : f32 to vector<16x128xf32>
    %2213 = arith.mulf %2212, %2183 : vector<16x128xf32>
    %2214 = arith.addf %2210, %2213 : vector<16x128xf32>
    %c135_542 = arith.constant 135 : index
    %2215 = memref.load %arg1[%c135_542] : memref<137xf32, #tpu.memory_space<smem>>
    %2216 = vector.broadcast %2215 : f32 to vector<16x128xf32>
    %2217 = arith.mulf %2216, %2203 : vector<16x128xf32>
    %2218 = arith.addf %2214, %2217 : vector<16x128xf32>
    %c136_543 = arith.constant 136 : index
    %2219 = memref.load %arg1[%c136_543] : memref<137xf32, #tpu.memory_space<smem>>
    %2220 = vector.broadcast %2219 : f32 to vector<16x128xf32>
    %2221 = arith.addf %2218, %2220 : vector<16x128xf32>
    %2222 = arith.index_cast %1669 : i32 to index
    %c0_544 = arith.constant 0 : index
    %2223 = vector.load %arg3[%2222, %c0_544] : memref<64x128xf32, #tpu.memory_space<vmem>>, vector<16x128xf32>
    tpu.vector_store %arg3[%2222, %c0_544], %2221 {strides = array<i32>} : memref<64x128xf32, #tpu.memory_space<vmem>>, vector<16x128xf32>,
    %c4_i32 = arith.constant 4 : i32
    return
  }
  func.func @transform_0(%arg0: i32) -> i32 {
    %c0_i32 = arith.constant 0 : i32
    %c0_i32_0 = arith.constant 0 : i32
    return %c0_i32 : i32
  }
  func.func @transform_1(%arg0: i32) -> (i32, i32, i32) {
    %c0_i32 = arith.constant 0 : i32
    %c0_i32_0 = arith.constant 0 : i32
    %c0_i32_1 = arith.constant 0 : i32
    return %c0_i32, %arg0, %c0_i32_0 : i32, i32, i32
  }
  func.func @transform_2(%arg0: i32) -> (i32, i32) {
    %c0_i32 = arith.constant 0 : i32
    %c0_i32_0 = arith.constant 0 : i32
    return %arg0, %c0_i32 : i32, i32
  }
}

</mosaic_0001>

<llo_original>
// kernel: tpu_custom_call.1
$region0: #{tpu_custom_call.1}
  #allocation0 [shape = 'u32[]', space=smem, size = 0x4, offset = 0x4, fixed_abs, tag = 'smem constant byte address 0x4 - core index']
  #allocation1 [shape = 'u32[144,128]{1,0:T(1,128)}', space=vmem, size = 0x12000, scoped, tag = 'internal scratch']
  #allocation8 [shape = 's32[]', space=sflag, size = 0x4, offset = 0, fixed_abs, tag = 'sflag constant byte address 0x0 - dummy sync flag']
  %s0 = inlined_call_operand.hbm [shape: f32[137], index: 0, kind: input, shape index: {}]
  %s1 = inlined_call_operand.hbm [shape: f32[2,128,128], index: 1, kind: input, shape index: {}]
  %s2 = inlined_call_operand.hbm [shape: f32[128,128], index: 2, kind: output, shape index: {}]
  %s3 = sld [smem:[#allocation0]]
  $region49: #{tpu_custom_call.1} parent=0
    _
  %s5 = ssub.s32 1, %s3
  %s6 = scalar_select 0, %s5, %s3
  $region1: #{tpu_custom_call.1} parent=0
    #allocation2 [shape = 'u8[1024]{0}', space=smem, size = 0x400, scoped, tag = 'input window, operand 0, single buffered']
    #allocation3 [shape = 's32[2]{0}', space=sflag, size = 0x8, scoped, tag = 'scoped memory for tpu_custom_call.1']
    #allocation4 [shape = 's32[2]{0}', space=sflag, size = 0x8, scoped, tag = 'scoped memory for tpu_custom_call.1']
    #allocation5 [shape = 's32[2]{0}', space=sflag, size = 0x8, scoped, tag = 'scoped memory for tpu_custom_call.1']
    #allocation6 [shape = 'u8[131072]{0}', space=vmem, size = 0x20000, scoped, tag = 'input window, operand 1']
    #allocation7 [shape = 'u8[65536]{0}', space=vmem, size = 0x10000, scoped, tag = 'output window, operand 0']
    %7 = vsyncpa [#allocation5], 0
    %8 = vsyncpa [#allocation3], 0
    %s9 = scalar_lea.sflag [#allocation3], 1
    %10 = vsyncpa %s9, 0
    %11 = vsyncpa [#allocation4], 0
    %s12 = scalar_lea.sflag [#allocation4], 1
    %13 = vsyncpa %s12, 0
    loop: start=0, step=1, limit=4
    $region2: #{tpu_custom_call.1} parent=1 // loop_pre_header
      _
    $region3: #{tpu_custom_call.1} parent=1 // loop_header
      %s15 = sphi 0, %s19
      %p16 = scmp.ge.s32.totalorder %s15, 4
      %s23 = sphi 0, %s23
      %s25 = sphi 0, %s23
      %s26 = sphi 0, %s25
      %s40 = sphi 0, %s26
      %s46 = sphi 0, %s48
      %s49 = sphi 0, %s46
      %s50 = sphi 0, %s49
      %s66 = sphi 0, %s50
      %s72 = sphi 0, %s74
      %s75 = sphi 0, %s72
      %s76 = sphi 0, %s75
      %s92 = sphi 0, %s76
    $region4: #{tpu_custom_call.1} parent=1 // loop_header_branch
      %18 = sbr.rel (%p16) target = $region8
    $region5: #{tpu_custom_call.1} parent=1 // loop_body
      %s20 = ssub.s32 %s15, 1
      %s21 = ssub.s32 %s15, 2
      %s22 = sadd.s32 %s15, 1
      %s24 = sadd.s32 %s23, 1
      %p27 = scmp.eq.s32.totalorder %s15, 1
      %p28 = scmp.ne.s32.totalorder %s23, %s25
      %p29 = scmp.eq.s32.totalorder %s15, 0
      %p30 = por %p28, %p29
      %p31 = scmp.ne.s32.totalorder %s23, %s25
      %p32 = scmp.eq.s32.totalorder %s20, 1
      %p33 = por %p31, %p32
      %p34 = scmp.ne.s32.totalorder %s25, %s26
      %p35 = scmp.eq.s32.totalorder %s20, 0
      %p36 = por %p34, %p35
      %p37 = scmp.ne.s32.totalorder %s25, %s26
      %p38 = scmp.eq.s32.totalorder %s21, 1
      %p39 = por %p37, %p38
      %p41 = scmp.ne.s32.totalorder %s26, %s40
      %p42 = scmp.eq.s32.totalorder %s21, 0
      %p43 = por %p41, %p42
      %s44 = ssub.s32 %s15, %s22
      %p45 = scmp.eq.s32.totalorder %s44, 0
      %s47 = sadd.s32 %s46, 1
      %s48 = scalar_select %p45, %s46, %s47
      %p51 = pneg %p45
      %p52 = scmp.eq.s32.totalorder %s15, 1
      %p53 = por %p51, %p52
      %p54 = scmp.ne.s32.totalorder %s46, %s49
      %p55 = scmp.eq.s32.totalorder %s15, 0
      %p56 = por %p54, %p55
      %p57 = scmp.ne.s32.totalorder %s46, %s49
      %p58 = scmp.eq.s32.totalorder %s20, 1
      %p59 = por %p57, %p58
      %p60 = scmp.ne.s32.totalorder %s49, %s50
      %p61 = scmp.eq.s32.totalorder %s20, 0
      %p62 = por %p60, %p61
      %p63 = scmp.ne.s32.totalorder %s49, %s50
      %p64 = scmp.eq.s32.totalorder %s21, 1
      %p65 = por %p63, %p64
      %p67 = scmp.ne.s32.totalorder %s50, %s66
      %p68 = scmp.eq.s32.totalorder %s21, 0
      %p69 = por %p67, %p68
      %s70 = ssub.s32 %s15, %s22
      %p71 = scmp.eq.s32.totalorder %s70, 0
      %s73 = sadd.s32 %s72, 1
      %s74 = scalar_select %p71, %s72, %s73
      %p77 = pneg %p71
      %p78 = scmp.eq.s32.totalorder %s15, 1
      %p79 = por %p77, %p78
      %p80 = scmp.ne.s32.totalorder %s72, %s75
      %p81 = scmp.eq.s32.totalorder %s15, 0
      %p82 = por %p80, %p81
      %p83 = scmp.ne.s32.totalorder %s72, %s75
      %p84 = scmp.eq.s32.totalorder %s20, 1
      %p85 = por %p83, %p84
      %p86 = scmp.ne.s32.totalorder %s75, %s76
      %p87 = scmp.eq.s32.totalorder %s20, 0
      %p88 = por %p86, %p87
      %p89 = scmp.ne.s32.totalorder %s75, %s76
      %p90 = scmp.eq.s32.totalorder %s21, 1
      %p91 = por %p89, %p90
      %p93 = scmp.ne.s32.totalorder %s76, %s92
      %p94 = scmp.eq.s32.totalorder %s21, 0
      %p95 = por %p93, %p94
      %p96 = scmp.le.s32.totalorder 1, %s15
      %p97 = scmp.lt.s32.totalorder %s15, 3
      %p98 = pnand %p96, %p97
      %p99 = pneg %p98
      // Predicated region
      $region9: #{tpu_custom_call.1} parent=5 // pred_check
        _
      $region10: #{tpu_custom_call.1} parent=5 // pred_check_branch
        %101 = sbr.rel (%p98) target = $region12
      $region11: #{tpu_custom_call.1} parent=5 // pred_region
        %s102 = ssub.s32 %s15, 1
        // Predicated region
        $region13: #{tpu_custom_call.1} parent=11 // pred_check
          %p103 = pneg %p36
        $region14: #{tpu_custom_call.1} parent=11 // pred_check_branch
          %105 = sbr.rel (%p103) target = $region16
        $region15: #{tpu_custom_call.1} parent=11 // pred_region
          %s107 = ssub.s32 32, 32
          %108 = vsyncadd [#allocation5], %s107
          %111 = dma.hbm_to_smem %s0, 32, [#allocation2], [#allocation5]
        $region16: #{tpu_custom_call.1} parent=11 // pred_fallthru
          _
      $region12: #{tpu_custom_call.1} parent=5 // pred_fallthru
        _
      %p112 = scmp.lt.s32.totalorder %s15, 2
      // Predicated region
      $region17: #{tpu_custom_call.1} parent=5 // pred_check
        %p113 = pneg %p112
      $region18: #{tpu_custom_call.1} parent=5 // pred_check_branch
        %115 = sbr.rel (%p113) target = $region20
      $region19: #{tpu_custom_call.1} parent=5 // pred_region
        // Predicated region
        $region21: #{tpu_custom_call.1} parent=19 // pred_check
          %p116 = pneg %p56
        $region22: #{tpu_custom_call.1} parent=19 // pred_check_branch
          %118 = sbr.rel (%p116) target = $region24
        $region23: #{tpu_custom_call.1} parent=19 // pred_region
          #allocation9 [shape = 'u32[6]{0}', space=smem, size = 0x18, scoped, tag = 'DMA stride descriptor']
          %s119 = sand.u32 %s46, 1
          %s120 = scalar_lea.sflag [#allocation3], %s119
          %s121 = sand.u32 %s46, 1
          %s122 = smul.addr %s121, 128
          %s123 = scalar_lea.vmem [#allocation6], %s122
          %s124 = smul.u32 8, %s15
          %s126 = ssub.s32 2048, 2048
          %127 = vsyncadd %s120, %s126
          %s128 = smul.addr %s124, 128
          %s129 = scalar_lea.hbm %s1, %s128
          %s131 = sshll.u32 1, 14
          %s132 = sxor.u32 4294967295, %s131
          %s134 = sld [smem:[#allocation0]]
          %s135 = sadd.s32 2, %s134
          %s137 = sshll.u32 7, 26
          %s138 = sxor.u32 4294967295, %s137
          %s139 = sand.u32 0, %s138
          %s140 = sshll.u32 %s135, 26
          %s141 = sor.u32 %s139, %s140
          %s142 = sshll.u32 %s123, 4
          %s143 = int_to_ptr.vmem [resolvable:$true] %s142
          %149 = sst [smem:[#allocation9]] 2048
          %s150 = scalar_lea.smem [#allocation9], 1
          %151 = sst [smem:[%s150]] 1024
          %s152 = scalar_lea.smem [#allocation9], 2
          %153 = sst [smem:[%s152]] 8
          %s154 = scalar_lea.smem [#allocation9], 3
          %155 = sst [smem:[%s154]] 128
          %s156 = scalar_lea.smem [#allocation9], 4
          %157 = sst [smem:[%s156]] 128
          %s158 = scalar_lea.smem [#allocation9], 5
          %159 = sst [smem:[%s158]] 8
          %161 = dma.general %s129, 2048, %s143, %s120, 131072, [#allocation9], %s141, 0
        $region24: #{tpu_custom_call.1} parent=19 // pred_fallthru
          _
      $region20: #{tpu_custom_call.1} parent=5 // pred_fallthru
        _
      %p162 = scmp.le.s32.totalorder 1, %s15
      %p163 = scmp.lt.s32.totalorder %s15, 3
      %p164 = pnand %p162, %p163
      %p165 = pneg %p164
      // Predicated region
      $region25: #{tpu_custom_call.1} parent=5 // pred_check
        _
      $region26: #{tpu_custom_call.1} parent=5 // pred_check_branch
        %167 = sbr.rel (%p164) target = $region28
      $region27: #{tpu_custom_call.1} parent=5 // pred_region
        %s168 = ssub.s32 %s15, 1
        // Predicated region
        $region29: #{tpu_custom_call.1} parent=27 // pred_check
          %p169 = pneg %p36
        $region30: #{tpu_custom_call.1} parent=27 // pred_check_branch
          %171 = sbr.rel (%p169) target = $region32
        $region31: #{tpu_custom_call.1} parent=27 // pred_region
          %172 = dma.done [#allocation5], 32
        $region32: #{tpu_custom_call.1} parent=27 // pred_fallthru
          _
        %s173 = sand.u32 %s49, 1
        %s174 = scalar_lea.sflag [#allocation3], %s173
        %s175 = sand.u32 %s49, 1
        %s176 = smul.addr %s175, 128
        %s177 = scalar_lea.vmem [#allocation6], %s176
        // Predicated region
        $region33: #{tpu_custom_call.1} parent=27 // pred_check
          %p178 = pneg %p62
        $region34: #{tpu_custom_call.1} parent=27 // pred_check_branch
          %180 = sbr.rel (%p178) target = $region36
        $region35: #{tpu_custom_call.1} parent=27 // pred_region
          %181 = dma.done %s174, 2048
        $region36: #{tpu_custom_call.1} parent=27 // pred_fallthru
          _
        %182 = sfence
        %p183 = pneg %p36
        %p184 = pneg %p33
        %s185 = sand.u32 %s49, 1
        %s186 = scalar_lea.sflag [#allocation3], %s185
        %s187 = sand.u32 %s49, 1
        %s188 = smul.addr %s187, 128
        %s189 = scalar_lea.vmem [#allocation6], %s188
        %p190 = pneg %p62
        %p191 = pneg %p59
        %p192 = pneg %p88
        %p193 = pneg %p85
        %s194 = sand.u32 %s75, 1
        %s195 = scalar_lea.sflag [#allocation4], %s194
        %s196 = sand.u32 %s75, 1
        %s197 = smul.addr %s196, 64
        %s198 = scalar_lea.vmem [#allocation7], %s197
        %s199 = smul.u32 8, %s20
        %s200 = smul.u32 8, %s20
        %v201 = vld [vmem:[%s177] sm:$0xff]
        %v202 = vld [vmem:[%s177 + $0x8] sm:$0xff]
        %s203 = sadd.s32 0, 64
        %s204 = scalar_lea.vmem %s177, %s203 [#allocation6]
        %v205 = vld [vmem:[%s204] sm:$0xff]
        %v206 = vld [vmem:[%s204 + $0x8] sm:$0xff]
        %s207 = sld [smem:[#allocation2]]
        %v208 = vstv %s207
        %v209 = vmul.f32 %v208, %v201
        %v210 = vmul.f32 %v208, %v202
        %s211 = sld [smem:[#allocation2 + $0x1]]
        %v212 = vstv %s211
        %v213 = vmul.f32 %v212, %v205
        %v214 = vmul.f32 %v212, %v206
        %v215 = vadd.f32 %v209, %v213
        %v216 = vadd.f32 %v210, %v214
        %s217 = sld [smem:[#allocation2 + $0x8]]
        %v218 = vstv %s217
        %v219 = vadd.f32 %v215, %v218
        %v220 = vadd.f32 %v216, %v218
        %v221 = vmax.f32 %v219, 0.0
        %v222 = vmax.f32 %v220, 0.0
        %s223 = sld [smem:[#allocation2 + $0x2]]
        %v224 = vstv %s223
        %v225 = vmul.f32 %v224, %v201
        %v226 = vmul.f32 %v224, %v202
        %s227 = sld [smem:[#allocation2 + $0x3]]
        %v228 = vstv %s227
        %v229 = vmul.f32 %v228, %v205
        %v230 = vmul.f32 %v228, %v206
        %v231 = vadd.f32 %v225, %v229
        %v232 = vadd.f32 %v226, %v230
        %s233 = sld [smem:[#allocation2 + $0x9]]
        %v234 = vstv %s233
        %v235 = vadd.f32 %v231, %v234
        %v236 = vadd.f32 %v232, %v234
        %v237 = vmax.f32 %v235, 0.0
        %v238 = vmax.f32 %v236, 0.0
        %s239 = sld [smem:[#allocation2 + $0x4]]
        %v240 = vstv %s239
        %v241 = vmul.f32 %v240, %v201
        %v242 = vmul.f32 %v240, %v202
        %s243 = sld [smem:[#allocation2 + $0x5]]
        %v244 = vstv %s243
        %v245 = vmul.f32 %v244, %v205
        %v246 = vmul.f32 %v244, %v206
        %v247 = vadd.f32 %v241, %v245
        %v248 = vadd.f32 %v242, %v246
        %s249 = sld [smem:[#allocation2 + $0xa]]
        %v250 = vstv %s249
        %v251 = vadd.f32 %v247, %v250
        %v252 = vadd.f32 %v248, %v250
        %v253 = vmax.f32 %v251, 0.0
        %v254 = vmax.f32 %v252, 0.0
        %s255 = sld [smem:[#allocation2 + $0x6]]
        %v256 = vstv %s255
        %v257 = vmul.f32 %v256, %v201
        %v258 = vmul.f32 %v256, %v202
        %s259 = sld [smem:[#allocation2 + $0x7]]
        %v260 = vstv %s259
        %v261 = vmul.f32 %v260, %v205
        %v262 = vmul.f32 %v260, %v206
        %v263 = vadd.f32 %v257, %v261
        %v264 = vadd.f32 %v258, %v262
        %s265 = sld [smem:[#allocation2 + $0xb]]
        %v266 = vstv %s265
        %v267 = vadd.f32 %v263, %v266
        %v268 = vadd.f32 %v264, %v266
        %v269 = vmax.f32 %v267, 0.0
        %v270 = vmax.f32 %v268, 0.0
        %s271 = sld [smem:[#allocation2 + $0xc]]
        %v272 = vstv %s271
        %v273 = vmul.f32 %v272, %v221
        %v274 = vmul.f32 %v272, %v222
        %s275 = sld [smem:[#allocation2 + $0xd]]
        %v276 = vstv %s275
        %v277 = vmul.f32 %v276, %v237
        %v278 = vmul.f32 %v276, %v238
        %v279 = vadd.f32 %v273, %v277
        %v280 = vadd.f32 %v274, %v278
        %s281 = sld [smem:[#allocation2 + $0xe]]
        %v282 = vstv %s281
        %v283 = vmul.f32 %v282, %v253
        %v284 = vmul.f32 %v282, %v254
        %v285 = vadd.f32 %v279, %v283
        %v286 = vadd.f32 %v280, %v284
        %s287 = sld [smem:[#allocation2 + $0xf]]
        %v288 = vstv %s287
        %v289 = vmul.f32 %v288, %v269
        %v290 = vmul.f32 %v288, %v270
        %v291 = vadd.f32 %v285, %v289
        %v292 = vadd.f32 %v286, %v290
        %s293 = sld [smem:[#allocation2 + $0x1c]]
        %v294 = vstv %s293
        %v295 = vadd.f32 %v291, %v294
        %v296 = vadd.f32 %v292, %v294
        %v297 = vmax.f32 %v295, 0.0
        %v298 = vmax.f32 %v296, 0.0
        %s299 = sld [smem:[#allocation2 + $0x10]]
        %v300 = vstv %s299
        %v301 = vmul.f32 %v300, %v221
        %v302 = vmul.f32 %v300, %v222
        %s303 = sld [smem:[#allocation2 + $0x11]]
        %v304 = vstv %s303
        %v305 = vmul.f32 %v304, %v237
        %v306 = vmul.f32 %v304, %v238
        %v307 = vadd.f32 %v301, %v305
        %v308 = vadd.f32 %v302, %v306
        %s309 = sld [smem:[#allocation2 + $0x12]]
        %v310 = vstv %s309
        %v311 = vmul.f32 %v310, %v253
        %v312 = vmul.f32 %v310, %v254
        %v313 = vadd.f32 %v307, %v311
        %v314 = vadd.f32 %v308, %v312
        %s315 = sld [smem:[#allocation2 + $0x13]]
        %v316 = vstv %s315
        %v317 = vmul.f32 %v316, %v269
        %v318 = vmul.f32 %v316, %v270
        %v319 = vadd.f32 %v313, %v317
        %v320 = vadd.f32 %v314, %v318
        %s321 = sld [smem:[#allocation2 + $0x1d]]
        %v322 = vstv %s321
        %v323 = vadd.f32 %v319, %v322
        %v324 = vadd.f32 %v320, %v322
        %v325 = vmax.f32 %v323, 0.0
        %v326 = vmax.f32 %v324, 0.0
        %s327 = sld [smem:[#allocation2 + $0x14]]
        %v328 = vstv %s327
        %v329 = vmul.f32 %v328, %v221
        %v330 = vmul.f32 %v328, %v222
        %s331 = sld [smem:[#allocation2 + $0x15]]
        %v332 = vstv %s331
        %v333 = vmul.f32 %v332, %v237
        %v334 = vmul.f32 %v332, %v238
        %v335 = vadd.f32 %v329, %v333
        %v336 = vadd.f32 %v330, %v334
        %s337 = sld [smem:[#allocation2 + $0x16]]
        %v338 = vstv %s337
        %v339 = vmul.f32 %v338, %v253
        %v340 = vmul.f32 %v338, %v254
        %v341 = vadd.f32 %v335, %v339
        %v342 = vadd.f32 %v336, %v340
        %s343 = sld [smem:[#allocation2 + $0x17]]
        %v344 = vstv %s343
        %v345 = vmul.f32 %v344, %v269
        %v346 = vmul.f32 %v344, %v270
        %v347 = vadd.f32 %v341, %v345
        %v348 = vadd.f32 %v342, %v346
        %s349 = sld [smem:[#allocation2 + $0x1e]]
        %v350 = vstv %s349
        %v351 = vadd.f32 %v347, %v350
        %v352 = vadd.f32 %v348, %v350
        %v353 = vmax.f32 %v351, 0.0
        %v354 = vmax.f32 %v352, 0.0
        %s355 = sld [smem:[#allocation2 + $0x18]]
        %v356 = vstv %s355
        %v357 = vmul.f32 %v356, %v221
        %v358 = vmul.f32 %v356, %v222
        %s359 = sld [smem:[#allocation2 + $0x19]]
        %v360 = vstv %s359
        %v361 = vmul.f32 %v360, %v237
        %v362 = vmul.f32 %v360, %v238
        %v363 = vadd.f32 %v357, %v361
        %v364 = vadd.f32 %v358, %v362
        %s365 = sld [smem:[#allocation2 + $0x1a]]
        %v366 = vstv %s365
        %v367 = vmul.f32 %v366, %v253
        %v368 = vmul.f32 %v366, %v254
        %v369 = vadd.f32 %v363, %v367
        %v370 = vadd.f32 %v364, %v368
        %s371 = sld [smem:[#allocation2 + $0x1b]]
        %v372 = vstv %s371
        %v373 = vmul.f32 %v372, %v269
        %v374 = vmul.f32 %v372, %v270
        %v375 = vadd.f32 %v369, %v373
        %v376 = vadd.f32 %v370, %v374
        %s377 = sld [smem:[#allocation2 + $0x1f]]
        %v378 = vstv %s377
        %v379 = vadd.f32 %v375, %v378
        %v380 = vadd.f32 %v376, %v378
        %v381 = vmax.f32 %v379, 0.0
        %v382 = vmax.f32 %v380, 0.0
        %s383 = sld [smem:[#allocation2 + $0x20]]
        %v384 = vstv %s383
        %v385 = vmul.f32 %v384, %v297
        %v386 = vmul.f32 %v384, %v298
        %s387 = sld [smem:[#allocation2 + $0x21]]
        %v388 = vstv %s387
        %v389 = vmul.f32 %v388, %v325
        %v390 = vmul.f32 %v388, %v326
        %v391 = vadd.f32 %v385, %v389
        %v392 = vadd.f32 %v386, %v390
        %s393 = sld [smem:[#allocation2 + $0x22]]
        %v394 = vstv %s393
        %v395 = vmul.f32 %v394, %v353
        %v396 = vmul.f32 %v394, %v354
        %v397 = vadd.f32 %v391, %v395
        %v398 = vadd.f32 %v392, %v396
        %s399 = sld [smem:[#allocation2 + $0x23]]
        %v400 = vstv %s399
        %v401 = vmul.f32 %v400, %v381
        %v402 = vmul.f32 %v400, %v382
        %v403 = vadd.f32 %v397, %v401
        %v404 = vadd.f32 %v398, %v402
        %s405 = sld [smem:[#allocation2 + $0x30]]
        %v406 = vstv %s405
        %v407 = vadd.f32 %v403, %v406
        %v408 = vadd.f32 %v404, %v406
        %v409 = vmax.f32 %v407, 0.0
        %v410 = vmax.f32 %v408, 0.0
        %s411 = sld [smem:[#allocation2 + $0x24]]
        %v412 = vstv %s411
        %v413 = vmul.f32 %v412, %v297
        %v414 = vmul.f32 %v412, %v298
        %s415 = sld [smem:[#allocation2 + $0x25]]
        %v416 = vstv %s415
        %v417 = vmul.f32 %v416, %v325
        %v418 = vmul.f32 %v416, %v326
        %v419 = vadd.f32 %v413, %v417
        %v420 = vadd.f32 %v414, %v418
        %s421 = sld [smem:[#allocation2 + $0x26]]
        %v422 = vstv %s421
        %v423 = vmul.f32 %v422, %v353
        %v424 = vmul.f32 %v422, %v354
        %v425 = vadd.f32 %v419, %v423
        %v426 = vadd.f32 %v420, %v424
        %s427 = sld [smem:[#allocation2 + $0x27]]
        %v428 = vstv %s427
        %v429 = vmul.f32 %v428, %v381
        %v430 = vmul.f32 %v428, %v382
        %v431 = vadd.f32 %v425, %v429
        %v432 = vadd.f32 %v426, %v430
        %s433 = sld [smem:[#allocation2 + $0x31]]
        %v434 = vstv %s433
        %v435 = vadd.f32 %v431, %v434
        %v436 = vadd.f32 %v432, %v434
        %v437 = vmax.f32 %v435, 0.0
        %v438 = vmax.f32 %v436, 0.0
        %s439 = sld [smem:[#allocation2 + $0x28]]
        %v440 = vstv %s439
        %v441 = vmul.f32 %v440, %v297
        %v442 = vmul.f32 %v440, %v298
        %s443 = sld [smem:[#allocation2 + $0x29]]
        %v444 = vstv %s443
        %v445 = vmul.f32 %v444, %v325
        %v446 = vmul.f32 %v444, %v326
        %v447 = vadd.f32 %v441, %v445
        %v448 = vadd.f32 %v442, %v446
        %s449 = sld [smem:[#allocation2 + $0x2a]]
        %v450 = vstv %s449
        %v451 = vmul.f32 %v450, %v353
        %v452 = vmul.f32 %v450, %v354
        %v453 = vadd.f32 %v447, %v451
        %v454 = vadd.f32 %v448, %v452
        %s455 = sld [smem:[#allocation2 + $0x2b]]
        %v456 = vstv %s455
        %v457 = vmul.f32 %v456, %v381
        %v458 = vmul.f32 %v456, %v382
        %v459 = vadd.f32 %v453, %v457
        %v460 = vadd.f32 %v454, %v458
        %s461 = sld [smem:[#allocation2 + $0x32]]
        %v462 = vstv %s461
        %v463 = vadd.f32 %v459, %v462
        %v464 = vadd.f32 %v460, %v462
        %v465 = vmax.f32 %v463, 0.0
        %v466 = vmax.f32 %v464, 0.0
        %s467 = sld [smem:[#allocation2 + $0x2c]]
        %v468 = vstv %s467
        %v469 = vmul.f32 %v468, %v297
        %v470 = vmul.f32 %v468, %v298
        %s471 = sld [smem:[#allocation2 + $0x2d]]
        %v472 = vstv %s471
        %v473 = vmul.f32 %v472, %v325
        %v474 = vmul.f32 %v472, %v326
        %v475 = vadd.f32 %v469, %v473
        %v476 = vadd.f32 %v470, %v474
        %s477 = sld [smem:[#allocation2 + $0x2e]]
        %v478 = vstv %s477
        %v479 = vmul.f32 %v478, %v353
        %v480 = vmul.f32 %v478, %v354
        %v481 = vadd.f32 %v475, %v479
        %v482 = vadd.f32 %v476, %v480
        %s483 = sld [smem:[#allocation2 + $0x2f]]
        %v484 = vstv %s483
        %v485 = vmul.f32 %v484, %v381
        %v486 = vmul.f32 %v484, %v382
        %v487 = vadd.f32 %v481, %v485
        %v488 = vadd.f32 %v482, %v486
        %s489 = sld [smem:[#allocation2 + $0x33]]
        %v490 = vstv %s489
        %v491 = vadd.f32 %v487, %v490
        %v492 = vadd.f32 %v488, %v490
        %v493 = vmax.f32 %v491, 0.0
        %v494 = vmax.f32 %v492, 0.0
        %s495 = sld [smem:[#allocation2 + $0x34]]
        %v496 = vstv %s495
        %v497 = vmul.f32 %v496, %v409
        %v498 = vmul.f32 %v496, %v410
        %s499 = sld [smem:[#allocation2 + $0x35]]
        %v500 = vstv %s499
        %v501 = vmul.f32 %v500, %v437
        %v502 = vmul.f32 %v500, %v438
        %v503 = vadd.f32 %v497, %v501
        %v504 = vadd.f32 %v498, %v502
        %s505 = sld [smem:[#allocation2 + $0x36]]
        %v506 = vstv %s505
        %v507 = vmul.f32 %v506, %v465
        %v508 = vmul.f32 %v506, %v466
        %v509 = vadd.f32 %v503, %v507
        %v510 = vadd.f32 %v504, %v508
        %s511 = sld [smem:[#allocation2 + $0x37]]
        %v512 = vstv %s511
        %v513 = vmul.f32 %v512, %v493
        %v514 = vmul.f32 %v512, %v494
        %v515 = vadd.f32 %v509, %v513
        %v516 = vadd.f32 %v510, %v514
        %s517 = sld [smem:[#allocation2 + $0x44]]
        %v518 = vstv %s517
        %v519 = vadd.f32 %v515, %v518
        %v520 = vadd.f32 %v516, %v518
        %v521 = vmax.f32 %v519, 0.0
        %v522 = vmax.f32 %v520, 0.0
        %s523 = sld [smem:[#allocation2 + $0x38]]
        %v524 = vstv %s523
        %v525 = vmul.f32 %v524, %v409
        %v526 = vmul.f32 %v524, %v410
        %s527 = sld [smem:[#allocation2 + $0x39]]
        %v528 = vstv %s527
        %v529 = vmul.f32 %v528, %v437
        %v530 = vmul.f32 %v528, %v438
        %v531 = vadd.f32 %v525, %v529
        %v532 = vadd.f32 %v526, %v530
        %s533 = sld [smem:[#allocation2 + $0x3a]]
        %v534 = vstv %s533
        %v535 = vmul.f32 %v534, %v465
        %v536 = vmul.f32 %v534, %v466
        %v537 = vadd.f32 %v531, %v535
        %v538 = vadd.f32 %v532, %v536
        %s539 = sld [smem:[#allocation2 + $0x3b]]
        %v540 = vstv %s539
        %v541 = vmul.f32 %v540, %v493
        %v542 = vmul.f32 %v540, %v494
        %v543 = vadd.f32 %v537, %v541
        %v544 = vadd.f32 %v538, %v542
        %s545 = sld [smem:[#allocation2 + $0x45]]
        %v546 = vstv %s545
        %v547 = vadd.f32 %v543, %v546
        %v548 = vadd.f32 %v544, %v546
        %v549 = vmax.f32 %v547, 0.0
        %v550 = vmax.f32 %v548, 0.0
        %s551 = sld [smem:[#allocation2 + $0x3c]]
        %v552 = vstv %s551
        %v553 = vmul.f32 %v552, %v409
        %v554 = vmul.f32 %v552, %v410
        %s555 = sld [smem:[#allocation2 + $0x3d]]
        %v556 = vstv %s555
        %v557 = vmul.f32 %v556, %v437
        %v558 = vmul.f32 %v556, %v438
        %v559 = vadd.f32 %v553, %v557
        %v560 = vadd.f32 %v554, %v558
        %s561 = sld [smem:[#allocation2 + $0x3e]]
        %v562 = vstv %s561
        %v563 = vmul.f32 %v562, %v465
        %v564 = vmul.f32 %v562, %v466
        %v565 = vadd.f32 %v559, %v563
        %v566 = vadd.f32 %v560, %v564
        %s567 = sld [smem:[#allocation2 + $0x3f]]
        %v568 = vstv %s567
        %v569 = vmul.f32 %v568, %v493
        %v570 = vmul.f32 %v568, %v494
        %v571 = vadd.f32 %v565, %v569
        %v572 = vadd.f32 %v566, %v570
        %s573 = sld [smem:[#allocation2 + $0x46]]
        %v574 = vstv %s573
        %v575 = vadd.f32 %v571, %v574
        %v576 = vadd.f32 %v572, %v574
        %v577 = vmax.f32 %v575, 0.0
        %v578 = vmax.f32 %v576, 0.0
        %s579 = sld [smem:[#allocation2 + $0x40]]
        %v580 = vstv %s579
        %v581 = vmul.f32 %v580, %v409
        %v582 = vmul.f32 %v580, %v410
        %s583 = sld [smem:[#allocation2 + $0x41]]
        %v584 = vstv %s583
        %v585 = vmul.f32 %v584, %v437
        %v586 = vmul.f32 %v584, %v438
        %v587 = vadd.f32 %v581, %v585
        %v588 = vadd.f32 %v582, %v586
        %s589 = sld [smem:[#allocation2 + $0x42]]
        %v590 = vstv %s589
        %v591 = vmul.f32 %v590, %v465
        %v592 = vmul.f32 %v590, %v466
        %v593 = vadd.f32 %v587, %v591
        %v594 = vadd.f32 %v588, %v592
        %s595 = sld [smem:[#allocation2 + $0x43]]
        %v596 = vstv %s595
        %v597 = vmul.f32 %v596, %v493
        %v598 = vmul.f32 %v596, %v494
        %v599 = vadd.f32 %v593, %v597
        %v600 = vadd.f32 %v594, %v598
        %s601 = sld [smem:[#allocation2 + $0x47]]
        %v602 = vstv %s601
        %v603 = vadd.f32 %v599, %v602
        %v604 = vadd.f32 %v600, %v602
        %v605 = vmax.f32 %v603, 0.0
        %v606 = vmax.f32 %v604, 0.0
        %s607 = sld [smem:[#allocation2 + $0x48]]
        %v608 = vstv %s607
        %v609 = vmul.f32 %v608, %v521
        %v610 = vmul.f32 %v608, %v522
        %s611 = sld [smem:[#allocation2 + $0x49]]
        %v612 = vstv %s611
        %v613 = vmul.f32 %v612, %v549
        %v614 = vmul.f32 %v612, %v550
        %v615 = vadd.f32 %v609, %v613
        %v616 = vadd.f32 %v610, %v614
        %s617 = sld [smem:[#allocation2 + $0x4a]]
        %v618 = vstv %s617
        %v619 = vmul.f32 %v618, %v577
        %v620 = vmul.f32 %v618, %v578
        %v621 = vadd.f32 %v615, %v619
        %v622 = vadd.f32 %v616, %v620
        %s623 = sld [smem:[#allocation2 + $0x4b]]
        %v624 = vstv %s623
        %v625 = vmul.f32 %v624, %v605
        %v626 = vmul.f32 %v624, %v606
        %v627 = vadd.f32 %v621, %v625
        %v628 = vadd.f32 %v622, %v626
        %s629 = sld [smem:[#allocation2 + $0x58]]
        %v630 = vstv %s629
        %v631 = vadd.f32 %v627, %v630
        %v632 = vadd.f32 %v628, %v630
        %v633 = vmax.f32 %v631, 0.0
        %v634 = vmax.f32 %v632, 0.0
        %s635 = sld [smem:[#allocation2 + $0x4c]]
        %v636 = vstv %s635
        %v637 = vmul.f32 %v636, %v521
        %v638 = vmul.f32 %v636, %v522
        %s639 = sld [smem:[#allocation2 + $0x4d]]
        %v640 = vstv %s639
        %v641 = vmul.f32 %v640, %v549
        %v642 = vmul.f32 %v640, %v550
        %v643 = vadd.f32 %v637, %v641
        %v644 = vadd.f32 %v638, %v642
        %s645 = sld [smem:[#allocation2 + $0x4e]]
        %v646 = vstv %s645
        %v647 = vmul.f32 %v646, %v577
        %v648 = vmul.f32 %v646, %v578
        %v649 = vadd.f32 %v643, %v647
        %v650 = vadd.f32 %v644, %v648
        %s651 = sld [smem:[#allocation2 + $0x4f]]
        %v652 = vstv %s651
        %v653 = vmul.f32 %v652, %v605
        %v654 = vmul.f32 %v652, %v606
        %v655 = vadd.f32 %v649, %v653
        %v656 = vadd.f32 %v650, %v654
        %s657 = sld [smem:[#allocation2 + $0x59]]
        %v658 = vstv %s657
        %v659 = vadd.f32 %v655, %v658
        %v660 = vadd.f32 %v656, %v658
        %v661 = vmax.f32 %v659, 0.0
        %v662 = vmax.f32 %v660, 0.0
        %s663 = sld [smem:[#allocation2 + $0x50]]
        %v664 = vstv %s663
        %v665 = vmul.f32 %v664, %v521
        %v666 = vmul.f32 %v664, %v522
        %s667 = sld [smem:[#allocation2 + $0x51]]
        %v668 = vstv %s667
        %v669 = vmul.f32 %v668, %v549
        %v670 = vmul.f32 %v668, %v550
        %v671 = vadd.f32 %v665, %v669
        %v672 = vadd.f32 %v666, %v670
        %s673 = sld [smem:[#allocation2 + $0x52]]
        %v674 = vstv %s673
        %v675 = vmul.f32 %v674, %v577
        %v676 = vmul.f32 %v674, %v578
        %v677 = vadd.f32 %v671, %v675
        %v678 = vadd.f32 %v672, %v676
        %s679 = sld [smem:[#allocation2 + $0x53]]
        %v680 = vstv %s679
        %v681 = vmul.f32 %v680, %v605
        %v682 = vmul.f32 %v680, %v606
        %v683 = vadd.f32 %v677, %v681
        %v684 = vadd.f32 %v678, %v682
        %s685 = sld [smem:[#allocation2 + $0x5a]]
        %v686 = vstv %s685
        %v687 = vadd.f32 %v683, %v686
        %v688 = vadd.f32 %v684, %v686
        %v689 = vmax.f32 %v687, 0.0
        %v690 = vmax.f32 %v688, 0.0
        %s691 = sld [smem:[#allocation2 + $0x54]]
        %v692 = vstv %s691
        %v693 = vmul.f32 %v692, %v521
        %v694 = vmul.f32 %v692, %v522
        %s695 = sld [smem:[#allocation2 + $0x55]]
        %v696 = vstv %s695
        %v697 = vmul.f32 %v696, %v549
        %v698 = vmul.f32 %v696, %v550
        %v699 = vadd.f32 %v693, %v697
        %v700 = vadd.f32 %v694, %v698
        %s701 = sld [smem:[#allocation2 + $0x56]]
        %v702 = vstv %s701
        %v703 = vmul.f32 %v702, %v577
        %v704 = vmul.f32 %v702, %v578
        %v705 = vadd.f32 %v699, %v703
        %v706 = vadd.f32 %v700, %v704
        %s707 = sld [smem:[#allocation2 + $0x57]]
        %v708 = vstv %s707
        %v709 = vmul.f32 %v708, %v605
        %v710 = vmul.f32 %v708, %v606
        %v711 = vadd.f32 %v705, %v709
        %v712 = vadd.f32 %v706, %v710
        %s713 = sld [smem:[#allocation2 + $0x5b]]
        %v714 = vstv %s713
        %v715 = vadd.f32 %v711, %v714
        %v716 = vadd.f32 %v712, %v714
        %v717 = vmax.f32 %v715, 0.0
        %v718 = vmax.f32 %v716, 0.0
        %s719 = sld [smem:[#allocation2 + $0x5c]]
        %v720 = vstv %s719
        %v721 = vmul.f32 %v720, %v633
        %v722 = vmul.f32 %v720, %v634
        %s723 = sld [smem:[#allocation2 + $0x5d]]
        %v724 = vstv %s723
        %v725 = vmul.f32 %v724, %v661
        %v726 = vmul.f32 %v724, %v662
        %v727 = vadd.f32 %v721, %v725
        %v728 = vadd.f32 %v722, %v726
        %s729 = sld [smem:[#allocation2 + $0x5e]]
        %v730 = vstv %s729
        %v731 = vmul.f32 %v730, %v689
        %v732 = vmul.f32 %v730, %v690
        %v733 = vadd.f32 %v727, %v731
        %v734 = vadd.f32 %v728, %v732
        %s735 = sld [smem:[#allocation2 + $0x5f]]
        %v736 = vstv %s735
        %v737 = vmul.f32 %v736, %v717
        %v738 = vmul.f32 %v736, %v718
        %v739 = vadd.f32 %v733, %v737
        %v740 = vadd.f32 %v734, %v738
        %s741 = sld [smem:[#allocation2 + $0x6c]]
        %v742 = vstv %s741
        %v743 = vadd.f32 %v739, %v742
        %v744 = vadd.f32 %v740, %v742
        %v745 = vmax.f32 %v743, 0.0
        %v746 = vmax.f32 %v744, 0.0
        %s747 = sld [smem:[#allocation2 + $0x60]]
        %v748 = vstv %s747
        %v749 = vmul.f32 %v748, %v633
        %v750 = vmul.f32 %v748, %v634
        %s751 = sld [smem:[#allocation2 + $0x61]]
        %v752 = vstv %s751
        %v753 = vmul.f32 %v752, %v661
        %v754 = vmul.f32 %v752, %v662
        %v755 = vadd.f32 %v749, %v753
        %v756 = vadd.f32 %v750, %v754
        %s757 = sld [smem:[#allocation2 + $0x62]]
        %v758 = vstv %s757
        %v759 = vmul.f32 %v758, %v689
        %v760 = vmul.f32 %v758, %v690
        %v761 = vadd.f32 %v755, %v759
        %v762 = vadd.f32 %v756, %v760
        %s763 = sld [smem:[#allocation2 + $0x63]]
        %v764 = vstv %s763
        %v765 = vmul.f32 %v764, %v717
        %v766 = vmul.f32 %v764, %v718
        %v767 = vadd.f32 %v761, %v765
        %v768 = vadd.f32 %v762, %v766
        %s769 = sld [smem:[#allocation2 + $0x6d]]
        %v770 = vstv %s769
        %v771 = vadd.f32 %v767, %v770
        %v772 = vadd.f32 %v768, %v770
        %v773 = vmax.f32 %v771, 0.0
        %v774 = vmax.f32 %v772, 0.0
        %s775 = sld [smem:[#allocation2 + $0x64]]
        %v776 = vstv %s775
        %v777 = vmul.f32 %v776, %v633
        %v778 = vmul.f32 %v776, %v634
        %s779 = sld [smem:[#allocation2 + $0x65]]
        %v780 = vstv %s779
        %v781 = vmul.f32 %v780, %v661
        %v782 = vmul.f32 %v780, %v662
        %v783 = vadd.f32 %v777, %v781
        %v784 = vadd.f32 %v778, %v782
        %s785 = sld [smem:[#allocation2 + $0x66]]
        %v786 = vstv %s785
        %v787 = vmul.f32 %v786, %v689
        %v788 = vmul.f32 %v786, %v690
        %v789 = vadd.f32 %v783, %v787
        %v790 = vadd.f32 %v784, %v788
        %s791 = sld [smem:[#allocation2 + $0x67]]
        %v792 = vstv %s791
        %v793 = vmul.f32 %v792, %v717
        %v794 = vmul.f32 %v792, %v718
        %v795 = vadd.f32 %v789, %v793
        %v796 = vadd.f32 %v790, %v794
        %s797 = sld [smem:[#allocation2 + $0x6e]]
        %v798 = vstv %s797
        %v799 = vadd.f32 %v795, %v798
        %v800 = vadd.f32 %v796, %v798
        %v801 = vmax.f32 %v799, 0.0
        %v802 = vmax.f32 %v800, 0.0
        %s803 = sld [smem:[#allocation2 + $0x68]]
        %v804 = vstv %s803
        %v805 = vmul.f32 %v804, %v633
        %v806 = vmul.f32 %v804, %v634
        %s807 = sld [smem:[#allocation2 + $0x69]]
        %v808 = vstv %s807
        %v809 = vmul.f32 %v808, %v661
        %v810 = vmul.f32 %v808, %v662
        %v811 = vadd.f32 %v805, %v809
        %v812 = vadd.f32 %v806, %v810
        %s813 = sld [smem:[#allocation2 + $0x6a]]
        %v814 = vstv %s813
        %v815 = vmul.f32 %v814, %v689
        %v816 = vmul.f32 %v814, %v690
        %v817 = vadd.f32 %v811, %v815
        %v818 = vadd.f32 %v812, %v816
        %s819 = sld [smem:[#allocation2 + $0x6b]]
        %v820 = vstv %s819
        %v821 = vmul.f32 %v820, %v717
        %v822 = vmul.f32 %v820, %v718
        %v823 = vadd.f32 %v817, %v821
        %v824 = vadd.f32 %v818, %v822
        %s825 = sld [smem:[#allocation2 + $0x6f]]
        %v826 = vstv %s825
        %v827 = vadd.f32 %v823, %v826
        %v828 = vadd.f32 %v824, %v826
        %v829 = vmax.f32 %v827, 0.0
        %v830 = vmax.f32 %v828, 0.0
        %s831 = sld [smem:[#allocation2 + $0x70]]
        %v832 = vstv %s831
        %v833 = vmul.f32 %v832, %v745
        %v834 = vmul.f32 %v832, %v746
        %s835 = sld [smem:[#allocation2 + $0x71]]
        %v836 = vstv %s835
        %v837 = vmul.f32 %v836, %v773
        %v838 = vmul.f32 %v836, %v774
        %v839 = vadd.f32 %v833, %v837
        %v840 = vadd.f32 %v834, %v838
        %s841 = sld [smem:[#allocation2 + $0x72]]
        %v842 = vstv %s841
        %v843 = vmul.f32 %v842, %v801
        %v844 = vmul.f32 %v842, %v802
        %v845 = vadd.f32 %v839, %v843
        %v846 = vadd.f32 %v840, %v844
        %s847 = sld [smem:[#allocation2 + $0x73]]
        %v848 = vstv %s847
        %v849 = vmul.f32 %v848, %v829
        %v850 = vmul.f32 %v848, %v830
        %v851 = vadd.f32 %v845, %v849
        %v852 = vadd.f32 %v846, %v850
        %s853 = sld [smem:[#allocation2 + $0x80]]
        %v854 = vstv %s853
        %v855 = vadd.f32 %v851, %v854
        %v856 = vadd.f32 %v852, %v854
        %v857 = vmax.f32 %v855, 0.0
        %v858 = vmax.f32 %v856, 0.0
        %s859 = sld [smem:[#allocation2 + $0x74]]
        %v860 = vstv %s859
        %v861 = vmul.f32 %v860, %v745
        %v862 = vmul.f32 %v860, %v746
        %s863 = sld [smem:[#allocation2 + $0x75]]
        %v864 = vstv %s863
        %v865 = vmul.f32 %v864, %v773
        %v866 = vmul.f32 %v864, %v774
        %v867 = vadd.f32 %v861, %v865
        %v868 = vadd.f32 %v862, %v866
        %s869 = sld [smem:[#allocation2 + $0x76]]
        %v870 = vstv %s869
        %v871 = vmul.f32 %v870, %v801
        %v872 = vmul.f32 %v870, %v802
        %v873 = vadd.f32 %v867, %v871
        %v874 = vadd.f32 %v868, %v872
        %s875 = sld [smem:[#allocation2 + $0x77]]
        %v876 = vstv %s875
        %v877 = vmul.f32 %v876, %v829
        %v878 = vmul.f32 %v876, %v830
        %v879 = vadd.f32 %v873, %v877
        %v880 = vadd.f32 %v874, %v878
        %s881 = sld [smem:[#allocation2 + $0x81]]
        %v882 = vstv %s881
        %v883 = vadd.f32 %v879, %v882
        %v884 = vadd.f32 %v880, %v882
        %v885 = vmax.f32 %v883, 0.0
        %v886 = vmax.f32 %v884, 0.0
        %s887 = sld [smem:[#allocation2 + $0x78]]
        %v888 = vstv %s887
        %v889 = vmul.f32 %v888, %v745
        %v890 = vmul.f32 %v888, %v746
        %s891 = sld [smem:[#allocation2 + $0x79]]
        %v892 = vstv %s891
        %v893 = vmul.f32 %v892, %v773
        %v894 = vmul.f32 %v892, %v774
        %v895 = vadd.f32 %v889, %v893
        %v896 = vadd.f32 %v890, %v894
        %s897 = sld [smem:[#allocation2 + $0x7a]]
        %v898 = vstv %s897
        %v899 = vmul.f32 %v898, %v801
        %v900 = vmul.f32 %v898, %v802
        %v901 = vadd.f32 %v895, %v899
        %v902 = vadd.f32 %v896, %v900
        %s903 = sld [smem:[#allocation2 + $0x7b]]
        %v904 = vstv %s903
        %v905 = vmul.f32 %v904, %v829
        %v906 = vmul.f32 %v904, %v830
        %v907 = vadd.f32 %v901, %v905
        %v908 = vadd.f32 %v902, %v906
        %s909 = sld [smem:[#allocation2 + $0x82]]
        %v910 = vstv %s909
        %v911 = vadd.f32 %v907, %v910
        %v912 = vadd.f32 %v908, %v910
        %v913 = vmax.f32 %v911, 0.0
        %v914 = vmax.f32 %v912, 0.0
        %s915 = sld [smem:[#allocation2 + $0x7c]]
        %v916 = vstv %s915
        %v917 = vmul.f32 %v916, %v745
        %v918 = vmul.f32 %v916, %v746
        %s919 = sld [smem:[#allocation2 + $0x7d]]
        %v920 = vstv %s919
        %v921 = vmul.f32 %v920, %v773
        %v922 = vmul.f32 %v920, %v774
        %v923 = vadd.f32 %v917, %v921
        %v924 = vadd.f32 %v918, %v922
        %s925 = sld [smem:[#allocation2 + $0x7e]]
        %v926 = vstv %s925
        %v927 = vmul.f32 %v926, %v801
        %v928 = vmul.f32 %v926, %v802
        %v929 = vadd.f32 %v923, %v927
        %v930 = vadd.f32 %v924, %v928
        %s931 = sld [smem:[#allocation2 + $0x7f]]
        %v932 = vstv %s931
        %v933 = vmul.f32 %v932, %v829
        %v934 = vmul.f32 %v932, %v830
        %v935 = vadd.f32 %v929, %v933
        %v936 = vadd.f32 %v930, %v934
        %s937 = sld [smem:[#allocation2 + $0x83]]
        %v938 = vstv %s937
        %v939 = vadd.f32 %v935, %v938
        %v940 = vadd.f32 %v936, %v938
        %v941 = vmax.f32 %v939, 0.0
        %v942 = vmax.f32 %v940, 0.0
        %s943 = sld [smem:[#allocation2 + $0x84]]
        %v944 = vstv %s943
        %v945 = vmul.f32 %v944, %v857
        %v946 = vmul.f32 %v944, %v858
        %s947 = sld [smem:[#allocation2 + $0x85]]
        %v948 = vstv %s947
        %v949 = vmul.f32 %v948, %v885
        %v950 = vmul.f32 %v948, %v886
        %v951 = vadd.f32 %v945, %v949
        %v952 = vadd.f32 %v946, %v950
        %s953 = sld [smem:[#allocation2 + $0x86]]
        %v954 = vstv %s953
        %v955 = vmul.f32 %v954, %v913
        %v956 = vmul.f32 %v954, %v914
        %v957 = vadd.f32 %v951, %v955
        %v958 = vadd.f32 %v952, %v956
        %s959 = sld [smem:[#allocation2 + $0x87]]
        %v960 = vstv %s959
        %v961 = vmul.f32 %v960, %v941
        %v962 = vmul.f32 %v960, %v942
        %v963 = vadd.f32 %v957, %v961
        %v964 = vadd.f32 %v958, %v962
        %s965 = sld [smem:[#allocation2 + $0x88]]
        %v966 = vstv %s965
        %v967 = vadd.f32 %v963, %v966
        %v968 = vadd.f32 %v964, %v966
        %969 = vst [vmem:[%s198] sm:$0xff] %v967
        %970 = vst [vmem:[%s198 + $0x8] sm:$0xff] %v968
        %s971 = scalar_lea.vmem %s177, 16 [#allocation6]
        %v972 = vld [vmem:[%s971] sm:$0xff]
        %v973 = vld [vmem:[%s971 + $0x8] sm:$0xff]
        %s974 = sadd.s32 16, 64
        %s975 = scalar_lea.vmem %s177, %s974 [#allocation6]
        %v976 = vld [vmem:[%s975] sm:$0xff]
        %v977 = vld [vmem:[%s975 + $0x8] sm:$0xff]
        %s978 = sld [smem:[#allocation2]]
        %v979 = vstv %s978
        %v980 = vmul.f32 %v979, %v972
        %v981 = vmul.f32 %v979, %v973
        %s982 = sld [smem:[#allocation2 + $0x1]]
        %v983 = vstv %s982
        %v984 = vmul.f32 %v983, %v976
        %v985 = vmul.f32 %v983, %v977
        %v986 = vadd.f32 %v980, %v984
        %v987 = vadd.f32 %v981, %v985
        %s988 = sld [smem:[#allocation2 + $0x8]]
        %v989 = vstv %s988
        %v990 = vadd.f32 %v986, %v989
        %v991 = vadd.f32 %v987, %v989
        %v992 = vmax.f32 %v990, 0.0
        %v993 = vmax.f32 %v991, 0.0
        %s994 = sld [smem:[#allocation2 + $0x2]]
        %v995 = vstv %s994
        %v996 = vmul.f32 %v995, %v972
        %v997 = vmul.f32 %v995, %v973
        %s998 = sld [smem:[#allocation2 + $0x3]]
        %v999 = vstv %s998
        %v1000 = vmul.f32 %v999, %v976
        %v1001 = vmul.f32 %v999, %v977
        %v1002 = vadd.f32 %v996, %v1000
        %v1003 = vadd.f32 %v997, %v1001
        %s1004 = sld [smem:[#allocation2 + $0x9]]
        %v1005 = vstv %s1004
        %v1006 = vadd.f32 %v1002, %v1005
        %v1007 = vadd.f32 %v1003, %v1005
        %v1008 = vmax.f32 %v1006, 0.0
        %v1009 = vmax.f32 %v1007, 0.0
        %s1010 = sld [smem:[#allocation2 + $0x4]]
        %v1011 = vstv %s1010
        %v1012 = vmul.f32 %v1011, %v972
        %v1013 = vmul.f32 %v1011, %v973
        %s1014 = sld [smem:[#allocation2 + $0x5]]
        %v1015 = vstv %s1014
        %v1016 = vmul.f32 %v1015, %v976
        %v1017 = vmul.f32 %v1015, %v977
        %v1018 = vadd.f32 %v1012, %v1016
        %v1019 = vadd.f32 %v1013, %v1017
        %s1020 = sld [smem:[#allocation2 + $0xa]]
        %v1021 = vstv %s1020
        %v1022 = vadd.f32 %v1018, %v1021
        %v1023 = vadd.f32 %v1019, %v1021
        %v1024 = vmax.f32 %v1022, 0.0
        %v1025 = vmax.f32 %v1023, 0.0
        %s1026 = sld [smem:[#allocation2 + $0x6]]
        %v1027 = vstv %s1026
        %v1028 = vmul.f32 %v1027, %v972
        %v1029 = vmul.f32 %v1027, %v973
        %s1030 = sld [smem:[#allocation2 + $0x7]]
        %v1031 = vstv %s1030
        %v1032 = vmul.f32 %v1031, %v976
        %v1033 = vmul.f32 %v1031, %v977
        %v1034 = vadd.f32 %v1028, %v1032
        %v1035 = vadd.f32 %v1029, %v1033
        %s1036 = sld [smem:[#allocation2 + $0xb]]
        %v1037 = vstv %s1036
        %v1038 = vadd.f32 %v1034, %v1037
        %v1039 = vadd.f32 %v1035, %v1037
        %v1040 = vmax.f32 %v1038, 0.0
        %v1041 = vmax.f32 %v1039, 0.0
        %s1042 = sld [smem:[#allocation2 + $0xc]]
        %v1043 = vstv %s1042
        %v1044 = vmul.f32 %v1043, %v992
        %v1045 = vmul.f32 %v1043, %v993
        %s1046 = sld [smem:[#allocation2 + $0xd]]
        %v1047 = vstv %s1046
        %v1048 = vmul.f32 %v1047, %v1008
        %v1049 = vmul.f32 %v1047, %v1009
        %v1050 = vadd.f32 %v1044, %v1048
        %v1051 = vadd.f32 %v1045, %v1049
        %s1052 = sld [smem:[#allocation2 + $0xe]]
        %v1053 = vstv %s1052
        %v1054 = vmul.f32 %v1053, %v1024
        %v1055 = vmul.f32 %v1053, %v1025
        %v1056 = vadd.f32 %v1050, %v1054
        %v1057 = vadd.f32 %v1051, %v1055
        %s1058 = sld [smem:[#allocation2 + $0xf]]
        %v1059 = vstv %s1058
        %v1060 = vmul.f32 %v1059, %v1040
        %v1061 = vmul.f32 %v1059, %v1041
        %v1062 = vadd.f32 %v1056, %v1060
        %v1063 = vadd.f32 %v1057, %v1061
        %s1064 = sld [smem:[#allocation2 + $0x1c]]
        %v1065 = vstv %s1064
        %v1066 = vadd.f32 %v1062, %v1065
        %v1067 = vadd.f32 %v1063, %v1065
        %v1068 = vmax.f32 %v1066, 0.0
        %v1069 = vmax.f32 %v1067, 0.0
        %s1070 = sld [smem:[#allocation2 + $0x10]]
        %v1071 = vstv %s1070
        %v1072 = vmul.f32 %v1071, %v992
        %v1073 = vmul.f32 %v1071, %v993
        %s1074 = sld [smem:[#allocation2 + $0x11]]
        %v1075 = vstv %s1074
        %v1076 = vmul.f32 %v1075, %v1008
        %v1077 = vmul.f32 %v1075, %v1009
        %v1078 = vadd.f32 %v1072, %v1076
        %v1079 = vadd.f32 %v1073, %v1077
        %s1080 = sld [smem:[#allocation2 + $0x12]]
        %v1081 = vstv %s1080
        %v1082 = vmul.f32 %v1081, %v1024
        %v1083 = vmul.f32 %v1081, %v1025
        %v1084 = vadd.f32 %v1078, %v1082
        %v1085 = vadd.f32 %v1079, %v1083
        %s1086 = sld [smem:[#allocation2 + $0x13]]
        %v1087 = vstv %s1086
        %v1088 = vmul.f32 %v1087, %v1040
        %v1089 = vmul.f32 %v1087, %v1041
        %v1090 = vadd.f32 %v1084, %v1088
        %v1091 = vadd.f32 %v1085, %v1089
        %s1092 = sld [smem:[#allocation2 + $0x1d]]
        %v1093 = vstv %s1092
        %v1094 = vadd.f32 %v1090, %v1093
        %v1095 = vadd.f32 %v1091, %v1093
        %v1096 = vmax.f32 %v1094, 0.0
        %v1097 = vmax.f32 %v1095, 0.0
        %s1098 = sld [smem:[#allocation2 + $0x14]]
        %v1099 = vstv %s1098
        %v1100 = vmul.f32 %v1099, %v992
        %v1101 = vmul.f32 %v1099, %v993
        %s1102 = sld [smem:[#allocation2 + $0x15]]
        %v1103 = vstv %s1102
        %v1104 = vmul.f32 %v1103, %v1008
        %v1105 = vmul.f32 %v1103, %v1009
        %v1106 = vadd.f32 %v1100, %v1104
        %v1107 = vadd.f32 %v1101, %v1105
        %s1108 = sld [smem:[#allocation2 + $0x16]]
        %v1109 = vstv %s1108
        %v1110 = vmul.f32 %v1109, %v1024
        %v1111 = vmul.f32 %v1109, %v1025
        %v1112 = vadd.f32 %v1106, %v1110
        %v1113 = vadd.f32 %v1107, %v1111
        %s1114 = sld [smem:[#allocation2 + $0x17]]
        %v1115 = vstv %s1114
        %v1116 = vmul.f32 %v1115, %v1040
        %v1117 = vmul.f32 %v1115, %v1041
        %v1118 = vadd.f32 %v1112, %v1116
        %v1119 = vadd.f32 %v1113, %v1117
        %s1120 = sld [smem:[#allocation2 + $0x1e]]
        %v1121 = vstv %s1120
        %v1122 = vadd.f32 %v1118, %v1121
        %v1123 = vadd.f32 %v1119, %v1121
        %v1124 = vmax.f32 %v1122, 0.0
        %v1125 = vmax.f32 %v1123, 0.0
        %s1126 = sld [smem:[#allocation2 + $0x18]]
        %v1127 = vstv %s1126
        %v1128 = vmul.f32 %v1127, %v992
        %v1129 = vmul.f32 %v1127, %v993
        %s1130 = sld [smem:[#allocation2 + $0x19]]
        %v1131 = vstv %s1130
        %v1132 = vmul.f32 %v1131, %v1008
        %v1133 = vmul.f32 %v1131, %v1009
        %v1134 = vadd.f32 %v1128, %v1132
        %v1135 = vadd.f32 %v1129, %v1133
        %s1136 = sld [smem:[#allocation2 + $0x1a]]
        %v1137 = vstv %s1136
        %v1138 = vmul.f32 %v1137, %v1024
        %v1139 = vmul.f32 %v1137, %v1025
        %v1140 = vadd.f32 %v1134, %v1138
        %v1141 = vadd.f32 %v1135, %v1139
        %s1142 = sld [smem:[#allocation2 + $0x1b]]
        %v1143 = vstv %s1142
        %v1144 = vmul.f32 %v1143, %v1040
        %v1145 = vmul.f32 %v1143, %v1041
        %v1146 = vadd.f32 %v1140, %v1144
        %v1147 = vadd.f32 %v1141, %v1145
        %s1148 = sld [smem:[#allocation2 + $0x1f]]
        %v1149 = vstv %s1148
        %v1150 = vadd.f32 %v1146, %v1149
        %v1151 = vadd.f32 %v1147, %v1149
        %v1152 = vmax.f32 %v1150, 0.0
        %v1153 = vmax.f32 %v1151, 0.0
        %s1154 = sld [smem:[#allocation2 + $0x20]]
        %v1155 = vstv %s1154
        %v1156 = vmul.f32 %v1155, %v1068
        %v1157 = vmul.f32 %v1155, %v1069
        %s1158 = sld [smem:[#allocation2 + $0x21]]
        %v1159 = vstv %s1158
        %v1160 = vmul.f32 %v1159, %v1096
        %v1161 = vmul.f32 %v1159, %v1097
        %v1162 = vadd.f32 %v1156, %v1160
        %v1163 = vadd.f32 %v1157, %v1161
        %s1164 = sld [smem:[#allocation2 + $0x22]]
        %v1165 = vstv %s1164
        %v1166 = vmul.f32 %v1165, %v1124
        %v1167 = vmul.f32 %v1165, %v1125
        %v1168 = vadd.f32 %v1162, %v1166
        %v1169 = vadd.f32 %v1163, %v1167
        %s1170 = sld [smem:[#allocation2 + $0x23]]
        %v1171 = vstv %s1170
        %v1172 = vmul.f32 %v1171, %v1152
        %v1173 = vmul.f32 %v1171, %v1153
        %v1174 = vadd.f32 %v1168, %v1172
        %v1175 = vadd.f32 %v1169, %v1173
        %s1176 = sld [smem:[#allocation2 + $0x30]]
        %v1177 = vstv %s1176
        %v1178 = vadd.f32 %v1174, %v1177
        %v1179 = vadd.f32 %v1175, %v1177
        %v1180 = vmax.f32 %v1178, 0.0
        %v1181 = vmax.f32 %v1179, 0.0
        %s1182 = sld [smem:[#allocation2 + $0x24]]
        %v1183 = vstv %s1182
        %v1184 = vmul.f32 %v1183, %v1068
        %v1185 = vmul.f32 %v1183, %v1069
        %s1186 = sld [smem:[#allocation2 + $0x25]]
        %v1187 = vstv %s1186
        %v1188 = vmul.f32 %v1187, %v1096
        %v1189 = vmul.f32 %v1187, %v1097
        %v1190 = vadd.f32 %v1184, %v1188
        %v1191 = vadd.f32 %v1185, %v1189
        %s1192 = sld [smem:[#allocation2 + $0x26]]
        %v1193 = vstv %s1192
        %v1194 = vmul.f32 %v1193, %v1124
        %v1195 = vmul.f32 %v1193, %v1125
        %v1196 = vadd.f32 %v1190, %v1194
        %v1197 = vadd.f32 %v1191, %v1195
        %s1198 = sld [smem:[#allocation2 + $0x27]]
        %v1199 = vstv %s1198
        %v1200 = vmul.f32 %v1199, %v1152
        %v1201 = vmul.f32 %v1199, %v1153
        %v1202 = vadd.f32 %v1196, %v1200
        %v1203 = vadd.f32 %v1197, %v1201
        %s1204 = sld [smem:[#allocation2 + $0x31]]
        %v1205 = vstv %s1204
        %v1206 = vadd.f32 %v1202, %v1205
        %v1207 = vadd.f32 %v1203, %v1205
        %v1208 = vmax.f32 %v1206, 0.0
        %v1209 = vmax.f32 %v1207, 0.0
        %s1210 = sld [smem:[#allocation2 + $0x28]]
        %v1211 = vstv %s1210
        %v1212 = vmul.f32 %v1211, %v1068
        %v1213 = vmul.f32 %v1211, %v1069
        %s1214 = sld [smem:[#allocation2 + $0x29]]
        %v1215 = vstv %s1214
        %v1216 = vmul.f32 %v1215, %v1096
        %v1217 = vmul.f32 %v1215, %v1097
        %v1218 = vadd.f32 %v1212, %v1216
        %v1219 = vadd.f32 %v1213, %v1217
        %s1220 = sld [smem:[#allocation2 + $0x2a]]
        %v1221 = vstv %s1220
        %v1222 = vmul.f32 %v1221, %v1124
        %v1223 = vmul.f32 %v1221, %v1125
        %v1224 = vadd.f32 %v1218, %v1222
        %v1225 = vadd.f32 %v1219, %v1223
        %s1226 = sld [smem:[#allocation2 + $0x2b]]
        %v1227 = vstv %s1226
        %v1228 = vmul.f32 %v1227, %v1152
        %v1229 = vmul.f32 %v1227, %v1153
        %v1230 = vadd.f32 %v1224, %v1228
        %v1231 = vadd.f32 %v1225, %v1229
        %s1232 = sld [smem:[#allocation2 + $0x32]]
        %v1233 = vstv %s1232
        %v1234 = vadd.f32 %v1230, %v1233
        %v1235 = vadd.f32 %v1231, %v1233
        %v1236 = vmax.f32 %v1234, 0.0
        %v1237 = vmax.f32 %v1235, 0.0
        %s1238 = sld [smem:[#allocation2 + $0x2c]]
        %v1239 = vstv %s1238
        %v1240 = vmul.f32 %v1239, %v1068
        %v1241 = vmul.f32 %v1239, %v1069
        %s1242 = sld [smem:[#allocation2 + $0x2d]]
        %v1243 = vstv %s1242
        %v1244 = vmul.f32 %v1243, %v1096
        %v1245 = vmul.f32 %v1243, %v1097
        %v1246 = vadd.f32 %v1240, %v1244
        %v1247 = vadd.f32 %v1241, %v1245
        %s1248 = sld [smem:[#allocation2 + $0x2e]]
        %v1249 = vstv %s1248
        %v1250 = vmul.f32 %v1249, %v1124
        %v1251 = vmul.f32 %v1249, %v1125
        %v1252 = vadd.f32 %v1246, %v1250
        %v1253 = vadd.f32 %v1247, %v1251
        %s1254 = sld [smem:[#allocation2 + $0x2f]]
        %v1255 = vstv %s1254
        %v1256 = vmul.f32 %v1255, %v1152
        %v1257 = vmul.f32 %v1255, %v1153
        %v1258 = vadd.f32 %v1252, %v1256
        %v1259 = vadd.f32 %v1253, %v1257
        %s1260 = sld [smem:[#allocation2 + $0x33]]
        %v1261 = vstv %s1260
        %v1262 = vadd.f32 %v1258, %v1261
        %v1263 = vadd.f32 %v1259, %v1261
        %v1264 = vmax.f32 %v1262, 0.0
        %v1265 = vmax.f32 %v1263, 0.0
        %s1266 = sld [smem:[#allocation2 + $0x34]]
        %v1267 = vstv %s1266
        %v1268 = vmul.f32 %v1267, %v1180
        %v1269 = vmul.f32 %v1267, %v1181
        %s1270 = sld [smem:[#allocation2 + $0x35]]
        %v1271 = vstv %s1270
        %v1272 = vmul.f32 %v1271, %v1208
        %v1273 = vmul.f32 %v1271, %v1209
        %v1274 = vadd.f32 %v1268, %v1272
        %v1275 = vadd.f32 %v1269, %v1273
        %s1276 = sld [smem:[#allocation2 + $0x36]]
        %v1277 = vstv %s1276
        %v1278 = vmul.f32 %v1277, %v1236
        %v1279 = vmul.f32 %v1277, %v1237
        %v1280 = vadd.f32 %v1274, %v1278
        %v1281 = vadd.f32 %v1275, %v1279
        %s1282 = sld [smem:[#allocation2 + $0x37]]
        %v1283 = vstv %s1282
        %v1284 = vmul.f32 %v1283, %v1264
        %v1285 = vmul.f32 %v1283, %v1265
        %v1286 = vadd.f32 %v1280, %v1284
        %v1287 = vadd.f32 %v1281, %v1285
        %s1288 = sld [smem:[#allocation2 + $0x44]]
        %v1289 = vstv %s1288
        %v1290 = vadd.f32 %v1286, %v1289
        %v1291 = vadd.f32 %v1287, %v1289
        %v1292 = vmax.f32 %v1290, 0.0
        %v1293 = vmax.f32 %v1291, 0.0
        %s1294 = sld [smem:[#allocation2 + $0x38]]
        %v1295 = vstv %s1294
        %v1296 = vmul.f32 %v1295, %v1180
        %v1297 = vmul.f32 %v1295, %v1181
        %s1298 = sld [smem:[#allocation2 + $0x39]]
        %v1299 = vstv %s1298
        %v1300 = vmul.f32 %v1299, %v1208
        %v1301 = vmul.f32 %v1299, %v1209
        %v1302 = vadd.f32 %v1296, %v1300
        %v1303 = vadd.f32 %v1297, %v1301
        %s1304 = sld [smem:[#allocation2 + $0x3a]]
        %v1305 = vstv %s1304
        %v1306 = vmul.f32 %v1305, %v1236
        %v1307 = vmul.f32 %v1305, %v1237
        %v1308 = vadd.f32 %v1302, %v1306
        %v1309 = vadd.f32 %v1303, %v1307
        %s1310 = sld [smem:[#allocation2 + $0x3b]]
        %v1311 = vstv %s1310
        %v1312 = vmul.f32 %v1311, %v1264
        %v1313 = vmul.f32 %v1311, %v1265
        %v1314 = vadd.f32 %v1308, %v1312
        %v1315 = vadd.f32 %v1309, %v1313
        %s1316 = sld [smem:[#allocation2 + $0x45]]
        %v1317 = vstv %s1316
        %v1318 = vadd.f32 %v1314, %v1317
        %v1319 = vadd.f32 %v1315, %v1317
        %v1320 = vmax.f32 %v1318, 0.0
        %v1321 = vmax.f32 %v1319, 0.0
        %s1322 = sld [smem:[#allocation2 + $0x3c]]
        %v1323 = vstv %s1322
        %v1324 = vmul.f32 %v1323, %v1180
        %v1325 = vmul.f32 %v1323, %v1181
        %s1326 = sld [smem:[#allocation2 + $0x3d]]
        %v1327 = vstv %s1326
        %v1328 = vmul.f32 %v1327, %v1208
        %v1329 = vmul.f32 %v1327, %v1209
        %v1330 = vadd.f32 %v1324, %v1328
        %v1331 = vadd.f32 %v1325, %v1329
        %s1332 = sld [smem:[#allocation2 + $0x3e]]
        %v1333 = vstv %s1332
        %v1334 = vmul.f32 %v1333, %v1236
        %v1335 = vmul.f32 %v1333, %v1237
        %v1336 = vadd.f32 %v1330, %v1334
        %v1337 = vadd.f32 %v1331, %v1335
        %s1338 = sld [smem:[#allocation2 + $0x3f]]
        %v1339 = vstv %s1338
        %v1340 = vmul.f32 %v1339, %v1264
        %v1341 = vmul.f32 %v1339, %v1265
        %v1342 = vadd.f32 %v1336, %v1340
        %v1343 = vadd.f32 %v1337, %v1341
        %s1344 = sld [smem:[#allocation2 + $0x46]]
        %v1345 = vstv %s1344
        %v1346 = vadd.f32 %v1342, %v1345
        %v1347 = vadd.f32 %v1343, %v1345
        %v1348 = vmax.f32 %v1346, 0.0
        %v1349 = vmax.f32 %v1347, 0.0
        %s1350 = sld [smem:[#allocation2 + $0x40]]
        %v1351 = vstv %s1350
        %v1352 = vmul.f32 %v1351, %v1180
        %v1353 = vmul.f32 %v1351, %v1181
        %s1354 = sld [smem:[#allocation2 + $0x41]]
        %v1355 = vstv %s1354
        %v1356 = vmul.f32 %v1355, %v1208
        %v1357 = vmul.f32 %v1355, %v1209
        %v1358 = vadd.f32 %v1352, %v1356
        %v1359 = vadd.f32 %v1353, %v1357
        %s1360 = sld [smem:[#allocation2 + $0x42]]
        %v1361 = vstv %s1360
        %v1362 = vmul.f32 %v1361, %v1236
        %v1363 = vmul.f32 %v1361, %v1237
        %v1364 = vadd.f32 %v1358, %v1362
        %v1365 = vadd.f32 %v1359, %v1363
        %s1366 = sld [smem:[#allocation2 + $0x43]]
        %v1367 = vstv %s1366
        %v1368 = vmul.f32 %v1367, %v1264
        %v1369 = vmul.f32 %v1367, %v1265
        %v1370 = vadd.f32 %v1364, %v1368
        %v1371 = vadd.f32 %v1365, %v1369
        %s1372 = sld [smem:[#allocation2 + $0x47]]
        %v1373 = vstv %s1372
        %v1374 = vadd.f32 %v1370, %v1373
        %v1375 = vadd.f32 %v1371, %v1373
        %v1376 = vmax.f32 %v1374, 0.0
        %v1377 = vmax.f32 %v1375, 0.0
        %s1378 = sld [smem:[#allocation2 + $0x48]]
        %v1379 = vstv %s1378
        %v1380 = vmul.f32 %v1379, %v1292
        %v1381 = vmul.f32 %v1379, %v1293
        %s1382 = sld [smem:[#allocation2 + $0x49]]
        %v1383 = vstv %s1382
        %v1384 = vmul.f32 %v1383, %v1320
        %v1385 = vmul.f32 %v1383, %v1321
        %v1386 = vadd.f32 %v1380, %v1384
        %v1387 = vadd.f32 %v1381, %v1385
        %s1388 = sld [smem:[#allocation2 + $0x4a]]
        %v1389 = vstv %s1388
        %v1390 = vmul.f32 %v1389, %v1348
        %v1391 = vmul.f32 %v1389, %v1349
        %v1392 = vadd.f32 %v1386, %v1390
        %v1393 = vadd.f32 %v1387, %v1391
        %s1394 = sld [smem:[#allocation2 + $0x4b]]
        %v1395 = vstv %s1394
        %v1396 = vmul.f32 %v1395, %v1376
        %v1397 = vmul.f32 %v1395, %v1377
        %v1398 = vadd.f32 %v1392, %v1396
        %v1399 = vadd.f32 %v1393, %v1397
        %s1400 = sld [smem:[#allocation2 + $0x58]]
        %v1401 = vstv %s1400
        %v1402 = vadd.f32 %v1398, %v1401
        %v1403 = vadd.f32 %v1399, %v1401
        %v1404 = vmax.f32 %v1402, 0.0
        %v1405 = vmax.f32 %v1403, 0.0
        %s1406 = sld [smem:[#allocation2 + $0x4c]]
        %v1407 = vstv %s1406
        %v1408 = vmul.f32 %v1407, %v1292
        %v1409 = vmul.f32 %v1407, %v1293
        %s1410 = sld [smem:[#allocation2 + $0x4d]]
        %v1411 = vstv %s1410
        %v1412 = vmul.f32 %v1411, %v1320
        %v1413 = vmul.f32 %v1411, %v1321
        %v1414 = vadd.f32 %v1408, %v1412
        %v1415 = vadd.f32 %v1409, %v1413
        %s1416 = sld [smem:[#allocation2 + $0x4e]]
        %v1417 = vstv %s1416
        %v1418 = vmul.f32 %v1417, %v1348
        %v1419 = vmul.f32 %v1417, %v1349
        %v1420 = vadd.f32 %v1414, %v1418
        %v1421 = vadd.f32 %v1415, %v1419
        %s1422 = sld [smem:[#allocation2 + $0x4f]]
        %v1423 = vstv %s1422
        %v1424 = vmul.f32 %v1423, %v1376
        %v1425 = vmul.f32 %v1423, %v1377
        %v1426 = vadd.f32 %v1420, %v1424
        %v1427 = vadd.f32 %v1421, %v1425
        %s1428 = sld [smem:[#allocation2 + $0x59]]
        %v1429 = vstv %s1428
        %v1430 = vadd.f32 %v1426, %v1429
        %v1431 = vadd.f32 %v1427, %v1429
        %v1432 = vmax.f32 %v1430, 0.0
        %v1433 = vmax.f32 %v1431, 0.0
        %s1434 = sld [smem:[#allocation2 + $0x50]]
        %v1435 = vstv %s1434
        %v1436 = vmul.f32 %v1435, %v1292
        %v1437 = vmul.f32 %v1435, %v1293
        %s1438 = sld [smem:[#allocation2 + $0x51]]
        %v1439 = vstv %s1438
        %v1440 = vmul.f32 %v1439, %v1320
        %v1441 = vmul.f32 %v1439, %v1321
        %v1442 = vadd.f32 %v1436, %v1440
        %v1443 = vadd.f32 %v1437, %v1441
        %s1444 = sld [smem:[#allocation2 + $0x52]]
        %v1445 = vstv %s1444
        %v1446 = vmul.f32 %v1445, %v1348
        %v1447 = vmul.f32 %v1445, %v1349
        %v1448 = vadd.f32 %v1442, %v1446
        %v1449 = vadd.f32 %v1443, %v1447
        %s1450 = sld [smem:[#allocation2 + $0x53]]
        %v1451 = vstv %s1450
        %v1452 = vmul.f32 %v1451, %v1376
        %v1453 = vmul.f32 %v1451, %v1377
        %v1454 = vadd.f32 %v1448, %v1452
        %v1455 = vadd.f32 %v1449, %v1453
        %s1456 = sld [smem:[#allocation2 + $0x5a]]
        %v1457 = vstv %s1456
        %v1458 = vadd.f32 %v1454, %v1457
        %v1459 = vadd.f32 %v1455, %v1457
        %v1460 = vmax.f32 %v1458, 0.0
        %v1461 = vmax.f32 %v1459, 0.0
        %s1462 = sld [smem:[#allocation2 + $0x54]]
        %v1463 = vstv %s1462
        %v1464 = vmul.f32 %v1463, %v1292
        %v1465 = vmul.f32 %v1463, %v1293
        %s1466 = sld [smem:[#allocation2 + $0x55]]
        %v1467 = vstv %s1466
        %v1468 = vmul.f32 %v1467, %v1320
        %v1469 = vmul.f32 %v1467, %v1321
        %v1470 = vadd.f32 %v1464, %v1468
        %v1471 = vadd.f32 %v1465, %v1469
        %s1472 = sld [smem:[#allocation2 + $0x56]]
        %v1473 = vstv %s1472
        %v1474 = vmul.f32 %v1473, %v1348
        %v1475 = vmul.f32 %v1473, %v1349
        %v1476 = vadd.f32 %v1470, %v1474
        %v1477 = vadd.f32 %v1471, %v1475
        %s1478 = sld [smem:[#allocation2 + $0x57]]
        %v1479 = vstv %s1478
        %v1480 = vmul.f32 %v1479, %v1376
        %v1481 = vmul.f32 %v1479, %v1377
        %v1482 = vadd.f32 %v1476, %v1480
        %v1483 = vadd.f32 %v1477, %v1481
        %s1484 = sld [smem:[#allocation2 + $0x5b]]
        %v1485 = vstv %s1484
        %v1486 = vadd.f32 %v1482, %v1485
        %v1487 = vadd.f32 %v1483, %v1485
        %v1488 = vmax.f32 %v1486, 0.0
        %v1489 = vmax.f32 %v1487, 0.0
        %s1490 = sld [smem:[#allocation2 + $0x5c]]
        %v1491 = vstv %s1490
        %v1492 = vmul.f32 %v1491, %v1404
        %v1493 = vmul.f32 %v1491, %v1405
        %s1494 = sld [smem:[#allocation2 + $0x5d]]
        %v1495 = vstv %s1494
        %v1496 = vmul.f32 %v1495, %v1432
        %v1497 = vmul.f32 %v1495, %v1433
        %v1498 = vadd.f32 %v1492, %v1496
        %v1499 = vadd.f32 %v1493, %v1497
        %s1500 = sld [smem:[#allocation2 + $0x5e]]
        %v1501 = vstv %s1500
        %v1502 = vmul.f32 %v1501, %v1460
        %v1503 = vmul.f32 %v1501, %v1461
        %v1504 = vadd.f32 %v1498, %v1502
        %v1505 = vadd.f32 %v1499, %v1503
        %s1506 = sld [smem:[#allocation2 + $0x5f]]
        %v1507 = vstv %s1506
        %v1508 = vmul.f32 %v1507, %v1488
        %v1509 = vmul.f32 %v1507, %v1489
        %v1510 = vadd.f32 %v1504, %v1508
        %v1511 = vadd.f32 %v1505, %v1509
        %s1512 = sld [smem:[#allocation2 + $0x6c]]
        %v1513 = vstv %s1512
        %v1514 = vadd.f32 %v1510, %v1513
        %v1515 = vadd.f32 %v1511, %v1513
        %v1516 = vmax.f32 %v1514, 0.0
        %v1517 = vmax.f32 %v1515, 0.0
        %s1518 = sld [smem:[#allocation2 + $0x60]]
        %v1519 = vstv %s1518
        %v1520 = vmul.f32 %v1519, %v1404
        %v1521 = vmul.f32 %v1519, %v1405
        %s1522 = sld [smem:[#allocation2 + $0x61]]
        %v1523 = vstv %s1522
        %v1524 = vmul.f32 %v1523, %v1432
        %v1525 = vmul.f32 %v1523, %v1433
        %v1526 = vadd.f32 %v1520, %v1524
        %v1527 = vadd.f32 %v1521, %v1525
        %s1528 = sld [smem:[#allocation2 + $0x62]]
        %v1529 = vstv %s1528
        %v1530 = vmul.f32 %v1529, %v1460
        %v1531 = vmul.f32 %v1529, %v1461
        %v1532 = vadd.f32 %v1526, %v1530
        %v1533 = vadd.f32 %v1527, %v1531
        %s1534 = sld [smem:[#allocation2 + $0x63]]
        %v1535 = vstv %s1534
        %v1536 = vmul.f32 %v1535, %v1488
        %v1537 = vmul.f32 %v1535, %v1489
        %v1538 = vadd.f32 %v1532, %v1536
        %v1539 = vadd.f32 %v1533, %v1537
        %s1540 = sld [smem:[#allocation2 + $0x6d]]
        %v1541 = vstv %s1540
        %v1542 = vadd.f32 %v1538, %v1541
        %v1543 = vadd.f32 %v1539, %v1541
        %v1544 = vmax.f32 %v1542, 0.0
        %v1545 = vmax.f32 %v1543, 0.0
        %s1546 = sld [smem:[#allocation2 + $0x64]]
        %v1547 = vstv %s1546
        %v1548 = vmul.f32 %v1547, %v1404
        %v1549 = vmul.f32 %v1547, %v1405
        %s1550 = sld [smem:[#allocation2 + $0x65]]
        %v1551 = vstv %s1550
        %v1552 = vmul.f32 %v1551, %v1432
        %v1553 = vmul.f32 %v1551, %v1433
        %v1554 = vadd.f32 %v1548, %v1552
        %v1555 = vadd.f32 %v1549, %v1553
        %s1556 = sld [smem:[#allocation2 + $0x66]]
        %v1557 = vstv %s1556
        %v1558 = vmul.f32 %v1557, %v1460
        %v1559 = vmul.f32 %v1557, %v1461
        %v1560 = vadd.f32 %v1554, %v1558
        %v1561 = vadd.f32 %v1555, %v1559
        %s1562 = sld [smem:[#allocation2 + $0x67]]
        %v1563 = vstv %s1562
        %v1564 = vmul.f32 %v1563, %v1488
        %v1565 = vmul.f32 %v1563, %v1489
        %v1566 = vadd.f32 %v1560, %v1564
        %v1567 = vadd.f32 %v1561, %v1565
        %s1568 = sld [smem:[#allocation2 + $0x6e]]
        %v1569 = vstv %s1568
        %v1570 = vadd.f32 %v1566, %v1569
        %v1571 = vadd.f32 %v1567, %v1569
        %v1572 = vmax.f32 %v1570, 0.0
        %v1573 = vmax.f32 %v1571, 0.0
        %s1574 = sld [smem:[#allocation2 + $0x68]]
        %v1575 = vstv %s1574
        %v1576 = vmul.f32 %v1575, %v1404
        %v1577 = vmul.f32 %v1575, %v1405
        %s1578 = sld [smem:[#allocation2 + $0x69]]
        %v1579 = vstv %s1578
        %v1580 = vmul.f32 %v1579, %v1432
        %v1581 = vmul.f32 %v1579, %v1433
        %v1582 = vadd.f32 %v1576, %v1580
        %v1583 = vadd.f32 %v1577, %v1581
        %s1584 = sld [smem:[#allocation2 + $0x6a]]
        %v1585 = vstv %s1584
        %v1586 = vmul.f32 %v1585, %v1460
        %v1587 = vmul.f32 %v1585, %v1461
        %v1588 = vadd.f32 %v1582, %v1586
        %v1589 = vadd.f32 %v1583, %v1587
        %s1590 = sld [smem:[#allocation2 + $0x6b]]
        %v1591 = vstv %s1590
        %v1592 = vmul.f32 %v1591, %v1488
        %v1593 = vmul.f32 %v1591, %v1489
        %v1594 = vadd.f32 %v1588, %v1592
        %v1595 = vadd.f32 %v1589, %v1593
        %s1596 = sld [smem:[#allocation2 + $0x6f]]
        %v1597 = vstv %s1596
        %v1598 = vadd.f32 %v1594, %v1597
        %v1599 = vadd.f32 %v1595, %v1597
        %v1600 = vmax.f32 %v1598, 0.0
        %v1601 = vmax.f32 %v1599, 0.0
        %s1602 = sld [smem:[#allocation2 + $0x70]]
        %v1603 = vstv %s1602
        %v1604 = vmul.f32 %v1603, %v1516
        %v1605 = vmul.f32 %v1603, %v1517
        %s1606 = sld [smem:[#allocation2 + $0x71]]
        %v1607 = vstv %s1606
        %v1608 = vmul.f32 %v1607, %v1544
        %v1609 = vmul.f32 %v1607, %v1545
        %v1610 = vadd.f32 %v1604, %v1608
        %v1611 = vadd.f32 %v1605, %v1609
        %s1612 = sld [smem:[#allocation2 + $0x72]]
        %v1613 = vstv %s1612
        %v1614 = vmul.f32 %v1613, %v1572
        %v1615 = vmul.f32 %v1613, %v1573
        %v1616 = vadd.f32 %v1610, %v1614
        %v1617 = vadd.f32 %v1611, %v1615
        %s1618 = sld [smem:[#allocation2 + $0x73]]
        %v1619 = vstv %s1618
        %v1620 = vmul.f32 %v1619, %v1600
        %v1621 = vmul.f32 %v1619, %v1601
        %v1622 = vadd.f32 %v1616, %v1620
        %v1623 = vadd.f32 %v1617, %v1621
        %s1624 = sld [smem:[#allocation2 + $0x80]]
        %v1625 = vstv %s1624
        %v1626 = vadd.f32 %v1622, %v1625
        %v1627 = vadd.f32 %v1623, %v1625
        %v1628 = vmax.f32 %v1626, 0.0
        %v1629 = vmax.f32 %v1627, 0.0
        %s1630 = sld [smem:[#allocation2 + $0x74]]
        %v1631 = vstv %s1630
        %v1632 = vmul.f32 %v1631, %v1516
        %v1633 = vmul.f32 %v1631, %v1517
        %s1634 = sld [smem:[#allocation2 + $0x75]]
        %v1635 = vstv %s1634
        %v1636 = vmul.f32 %v1635, %v1544
        %v1637 = vmul.f32 %v1635, %v1545
        %v1638 = vadd.f32 %v1632, %v1636
        %v1639 = vadd.f32 %v1633, %v1637
        %s1640 = sld [smem:[#allocation2 + $0x76]]
        %v1641 = vstv %s1640
        %v1642 = vmul.f32 %v1641, %v1572
        %v1643 = vmul.f32 %v1641, %v1573
        %v1644 = vadd.f32 %v1638, %v1642
        %v1645 = vadd.f32 %v1639, %v1643
        %s1646 = sld [smem:[#allocation2 + $0x77]]
        %v1647 = vstv %s1646
        %v1648 = vmul.f32 %v1647, %v1600
        %v1649 = vmul.f32 %v1647, %v1601
        %v1650 = vadd.f32 %v1644, %v1648
        %v1651 = vadd.f32 %v1645, %v1649
        %s1652 = sld [smem:[#allocation2 + $0x81]]
        %v1653 = vstv %s1652
        %v1654 = vadd.f32 %v1650, %v1653
        %v1655 = vadd.f32 %v1651, %v1653
        %v1656 = vmax.f32 %v1654, 0.0
        %v1657 = vmax.f32 %v1655, 0.0
        %s1658 = sld [smem:[#allocation2 + $0x78]]
        %v1659 = vstv %s1658
        %v1660 = vmul.f32 %v1659, %v1516
        %v1661 = vmul.f32 %v1659, %v1517
        %s1662 = sld [smem:[#allocation2 + $0x79]]
        %v1663 = vstv %s1662
        %v1664 = vmul.f32 %v1663, %v1544
        %v1665 = vmul.f32 %v1663, %v1545
        %v1666 = vadd.f32 %v1660, %v1664
        %v1667 = vadd.f32 %v1661, %v1665
        %s1668 = sld [smem:[#allocation2 + $0x7a]]
        %v1669 = vstv %s1668
        %v1670 = vmul.f32 %v1669, %v1572
        %v1671 = vmul.f32 %v1669, %v1573
        %v1672 = vadd.f32 %v1666, %v1670
        %v1673 = vadd.f32 %v1667, %v1671
        %s1674 = sld [smem:[#allocation2 + $0x7b]]
        %v1675 = vstv %s1674
        %v1676 = vmul.f32 %v1675, %v1600
        %v1677 = vmul.f32 %v1675, %v1601
        %v1678 = vadd.f32 %v1672, %v1676
        %v1679 = vadd.f32 %v1673, %v1677
        %s1680 = sld [smem:[#allocation2 + $0x82]]
        %v1681 = vstv %s1680
        %v1682 = vadd.f32 %v1678, %v1681
        %v1683 = vadd.f32 %v1679, %v1681
        %v1684 = vmax.f32 %v1682, 0.0
        %v1685 = vmax.f32 %v1683, 0.0
        %s1686 = sld [smem:[#allocation2 + $0x7c]]
        %v1687 = vstv %s1686
        %v1688 = vmul.f32 %v1687, %v1516
        %v1689 = vmul.f32 %v1687, %v1517
        %s1690 = sld [smem:[#allocation2 + $0x7d]]
        %v1691 = vstv %s1690
        %v1692 = vmul.f32 %v1691, %v1544
        %v1693 = vmul.f32 %v1691, %v1545
        %v1694 = vadd.f32 %v1688, %v1692
        %v1695 = vadd.f32 %v1689, %v1693
        %s1696 = sld [smem:[#allocation2 + $0x7e]]
        %v1697 = vstv %s1696
        %v1698 = vmul.f32 %v1697, %v1572
        %v1699 = vmul.f32 %v1697, %v1573
        %v1700 = vadd.f32 %v1694, %v1698
        %v1701 = vadd.f32 %v1695, %v1699
        %s1702 = sld [smem:[#allocation2 + $0x7f]]
        %v1703 = vstv %s1702
        %v1704 = vmul.f32 %v1703, %v1600
        %v1705 = vmul.f32 %v1703, %v1601
        %v1706 = vadd.f32 %v1700, %v1704
        %v1707 = vadd.f32 %v1701, %v1705
        %s1708 = sld [smem:[#allocation2 + $0x83]]
        %v1709 = vstv %s1708
        %v1710 = vadd.f32 %v1706, %v1709
        %v1711 = vadd.f32 %v1707, %v1709
        %v1712 = vmax.f32 %v1710, 0.0
        %v1713 = vmax.f32 %v1711, 0.0
        %s1714 = sld [smem:[#allocation2 + $0x84]]
        %v1715 = vstv %s1714
        %v1716 = vmul.f32 %v1715, %v1628
        %v1717 = vmul.f32 %v1715, %v1629
        %s1718 = sld [smem:[#allocation2 + $0x85]]
        %v1719 = vstv %s1718
        %v1720 = vmul.f32 %v1719, %v1656
        %v1721 = vmul.f32 %v1719, %v1657
        %v1722 = vadd.f32 %v1716, %v1720
        %v1723 = vadd.f32 %v1717, %v1721
        %s1724 = sld [smem:[#allocation2 + $0x86]]
        %v1725 = vstv %s1724
        %v1726 = vmul.f32 %v1725, %v1684
        %v1727 = vmul.f32 %v1725, %v1685
        %v1728 = vadd.f32 %v1722, %v1726
        %v1729 = vadd.f32 %v1723, %v1727
        %s1730 = sld [smem:[#allocation2 + $0x87]]
        %v1731 = vstv %s1730
        %v1732 = vmul.f32 %v1731, %v1712
        %v1733 = vmul.f32 %v1731, %v1713
        %v1734 = vadd.f32 %v1728, %v1732
        %v1735 = vadd.f32 %v1729, %v1733
        %s1736 = sld [smem:[#allocation2 + $0x88]]
        %v1737 = vstv %s1736
        %v1738 = vadd.f32 %v1734, %v1737
        %v1739 = vadd.f32 %v1735, %v1737
        %s1740 = scalar_lea.vmem %s198, 16 [#allocation7]
        %1741 = vst [vmem:[%s1740] sm:$0xff] %v1738
        %1742 = vst [vmem:[%s1740 + $0x8] sm:$0xff] %v1739
        %s1743 = scalar_lea.vmem %s177, 32 [#allocation6]
        %v1744 = vld [vmem:[%s1743] sm:$0xff]
        %v1745 = vld [vmem:[%s1743 + $0x8] sm:$0xff]
        %s1746 = sadd.s32 32, 64
        %s1747 = scalar_lea.vmem %s177, %s1746 [#allocation6]
        %v1748 = vld [vmem:[%s1747] sm:$0xff]
        %v1749 = vld [vmem:[%s1747 + $0x8] sm:$0xff]
        %s1750 = sld [smem:[#allocation2]]
        %v1751 = vstv %s1750
        %v1752 = vmul.f32 %v1751, %v1744
        %v1753 = vmul.f32 %v1751, %v1745
        %s1754 = sld [smem:[#allocation2 + $0x1]]
        %v1755 = vstv %s1754
        %v1756 = vmul.f32 %v1755, %v1748
        %v1757 = vmul.f32 %v1755, %v1749
        %v1758 = vadd.f32 %v1752, %v1756
        %v1759 = vadd.f32 %v1753, %v1757
        %s1760 = sld [smem:[#allocation2 + $0x8]]
        %v1761 = vstv %s1760
        %v1762 = vadd.f32 %v1758, %v1761
        %v1763 = vadd.f32 %v1759, %v1761
        %v1764 = vmax.f32 %v1762, 0.0
        %v1765 = vmax.f32 %v1763, 0.0
        %s1766 = sld [smem:[#allocation2 + $0x2]]
        %v1767 = vstv %s1766
        %v1768 = vmul.f32 %v1767, %v1744
        %v1769 = vmul.f32 %v1767, %v1745
        %s1770 = sld [smem:[#allocation2 + $0x3]]
        %v1771 = vstv %s1770
        %v1772 = vmul.f32 %v1771, %v1748
        %v1773 = vmul.f32 %v1771, %v1749
        %v1774 = vadd.f32 %v1768, %v1772
        %v1775 = vadd.f32 %v1769, %v1773
        %s1776 = sld [smem:[#allocation2 + $0x9]]
        %v1777 = vstv %s1776
        %v1778 = vadd.f32 %v1774, %v1777
        %v1779 = vadd.f32 %v1775, %v1777
        %v1780 = vmax.f32 %v1778, 0.0
        %v1781 = vmax.f32 %v1779, 0.0
        %s1782 = sld [smem:[#allocation2 + $0x4]]
        %v1783 = vstv %s1782
        %v1784 = vmul.f32 %v1783, %v1744
        %v1785 = vmul.f32 %v1783, %v1745
        %s1786 = sld [smem:[#allocation2 + $0x5]]
        %v1787 = vstv %s1786
        %v1788 = vmul.f32 %v1787, %v1748
        %v1789 = vmul.f32 %v1787, %v1749
        %v1790 = vadd.f32 %v1784, %v1788
        %v1791 = vadd.f32 %v1785, %v1789
        %s1792 = sld [smem:[#allocation2 + $0xa]]
        %v1793 = vstv %s1792
        %v1794 = vadd.f32 %v1790, %v1793
        %v1795 = vadd.f32 %v1791, %v1793
        %v1796 = vmax.f32 %v1794, 0.0
        %v1797 = vmax.f32 %v1795, 0.0
        %s1798 = sld [smem:[#allocation2 + $0x6]]
        %v1799 = vstv %s1798
        %v1800 = vmul.f32 %v1799, %v1744
        %v1801 = vmul.f32 %v1799, %v1745
        %s1802 = sld [smem:[#allocation2 + $0x7]]
        %v1803 = vstv %s1802
        %v1804 = vmul.f32 %v1803, %v1748
        %v1805 = vmul.f32 %v1803, %v1749
        %v1806 = vadd.f32 %v1800, %v1804
        %v1807 = vadd.f32 %v1801, %v1805
        %s1808 = sld [smem:[#allocation2 + $0xb]]
        %v1809 = vstv %s1808
        %v1810 = vadd.f32 %v1806, %v1809
        %v1811 = vadd.f32 %v1807, %v1809
        %v1812 = vmax.f32 %v1810, 0.0
        %v1813 = vmax.f32 %v1811, 0.0
        %s1814 = sld [smem:[#allocation2 + $0xc]]
        %v1815 = vstv %s1814
        %v1816 = vmul.f32 %v1815, %v1764
        %v1817 = vmul.f32 %v1815, %v1765
        %s1818 = sld [smem:[#allocation2 + $0xd]]
        %v1819 = vstv %s1818
        %v1820 = vmul.f32 %v1819, %v1780
        %v1821 = vmul.f32 %v1819, %v1781
        %v1822 = vadd.f32 %v1816, %v1820
        %v1823 = vadd.f32 %v1817, %v1821
        %s1824 = sld [smem:[#allocation2 + $0xe]]
        %v1825 = vstv %s1824
        %v1826 = vmul.f32 %v1825, %v1796
        %v1827 = vmul.f32 %v1825, %v1797
        %v1828 = vadd.f32 %v1822, %v1826
        %v1829 = vadd.f32 %v1823, %v1827
        %s1830 = sld [smem:[#allocation2 + $0xf]]
        %v1831 = vstv %s1830
        %v1832 = vmul.f32 %v1831, %v1812
        %v1833 = vmul.f32 %v1831, %v1813
        %v1834 = vadd.f32 %v1828, %v1832
        %v1835 = vadd.f32 %v1829, %v1833
        %s1836 = sld [smem:[#allocation2 + $0x1c]]
        %v1837 = vstv %s1836
        %v1838 = vadd.f32 %v1834, %v1837
        %v1839 = vadd.f32 %v1835, %v1837
        %v1840 = vmax.f32 %v1838, 0.0
        %v1841 = vmax.f32 %v1839, 0.0
        %s1842 = sld [smem:[#allocation2 + $0x10]]
        %v1843 = vstv %s1842
        %v1844 = vmul.f32 %v1843, %v1764
        %v1845 = vmul.f32 %v1843, %v1765
        %s1846 = sld [smem:[#allocation2 + $0x11]]
        %v1847 = vstv %s1846
        %v1848 = vmul.f32 %v1847, %v1780
        %v1849 = vmul.f32 %v1847, %v1781
        %v1850 = vadd.f32 %v1844, %v1848
        %v1851 = vadd.f32 %v1845, %v1849
        %s1852 = sld [smem:[#allocation2 + $0x12]]
        %v1853 = vstv %s1852
        %v1854 = vmul.f32 %v1853, %v1796
        %v1855 = vmul.f32 %v1853, %v1797
        %v1856 = vadd.f32 %v1850, %v1854
        %v1857 = vadd.f32 %v1851, %v1855
        %s1858 = sld [smem:[#allocation2 + $0x13]]
        %v1859 = vstv %s1858
        %v1860 = vmul.f32 %v1859, %v1812
        %v1861 = vmul.f32 %v1859, %v1813
        %v1862 = vadd.f32 %v1856, %v1860
        %v1863 = vadd.f32 %v1857, %v1861
        %s1864 = sld [smem:[#allocation2 + $0x1d]]
        %v1865 = vstv %s1864
        %v1866 = vadd.f32 %v1862, %v1865
        %v1867 = vadd.f32 %v1863, %v1865
        %v1868 = vmax.f32 %v1866, 0.0
        %v1869 = vmax.f32 %v1867, 0.0
        %s1870 = sld [smem:[#allocation2 + $0x14]]
        %v1871 = vstv %s1870
        %v1872 = vmul.f32 %v1871, %v1764
        %v1873 = vmul.f32 %v1871, %v1765
        %s1874 = sld [smem:[#allocation2 + $0x15]]
        %v1875 = vstv %s1874
        %v1876 = vmul.f32 %v1875, %v1780
        %v1877 = vmul.f32 %v1875, %v1781
        %v1878 = vadd.f32 %v1872, %v1876
        %v1879 = vadd.f32 %v1873, %v1877
        %s1880 = sld [smem:[#allocation2 + $0x16]]
        %v1881 = vstv %s1880
        %v1882 = vmul.f32 %v1881, %v1796
        %v1883 = vmul.f32 %v1881, %v1797
        %v1884 = vadd.f32 %v1878, %v1882
        %v1885 = vadd.f32 %v1879, %v1883
        %s1886 = sld [smem:[#allocation2 + $0x17]]
        %v1887 = vstv %s1886
        %v1888 = vmul.f32 %v1887, %v1812
        %v1889 = vmul.f32 %v1887, %v1813
        %v1890 = vadd.f32 %v1884, %v1888
        %v1891 = vadd.f32 %v1885, %v1889
        %s1892 = sld [smem:[#allocation2 + $0x1e]]
        %v1893 = vstv %s1892
        %v1894 = vadd.f32 %v1890, %v1893
        %v1895 = vadd.f32 %v1891, %v1893
        %v1896 = vmax.f32 %v1894, 0.0
        %v1897 = vmax.f32 %v1895, 0.0
        %s1898 = sld [smem:[#allocation2 + $0x18]]
        %v1899 = vstv %s1898
        %v1900 = vmul.f32 %v1899, %v1764
        %v1901 = vmul.f32 %v1899, %v1765
        %s1902 = sld [smem:[#allocation2 + $0x19]]
        %v1903 = vstv %s1902
        %v1904 = vmul.f32 %v1903, %v1780
        %v1905 = vmul.f32 %v1903, %v1781
        %v1906 = vadd.f32 %v1900, %v1904
        %v1907 = vadd.f32 %v1901, %v1905
        %s1908 = sld [smem:[#allocation2 + $0x1a]]
        %v1909 = vstv %s1908
        %v1910 = vmul.f32 %v1909, %v1796
        %v1911 = vmul.f32 %v1909, %v1797
        %v1912 = vadd.f32 %v1906, %v1910
        %v1913 = vadd.f32 %v1907, %v1911
        %s1914 = sld [smem:[#allocation2 + $0x1b]]
        %v1915 = vstv %s1914
        %v1916 = vmul.f32 %v1915, %v1812
        %v1917 = vmul.f32 %v1915, %v1813
        %v1918 = vadd.f32 %v1912, %v1916
        %v1919 = vadd.f32 %v1913, %v1917
        %s1920 = sld [smem:[#allocation2 + $0x1f]]
        %v1921 = vstv %s1920
        %v1922 = vadd.f32 %v1918, %v1921
        %v1923 = vadd.f32 %v1919, %v1921
        %v1924 = vmax.f32 %v1922, 0.0
        %v1925 = vmax.f32 %v1923, 0.0
        %s1926 = sld [smem:[#allocation2 + $0x20]]
        %v1927 = vstv %s1926
        %v1928 = vmul.f32 %v1927, %v1840
        %v1929 = vmul.f32 %v1927, %v1841
        %s1930 = sld [smem:[#allocation2 + $0x21]]
        %v1931 = vstv %s1930
        %v1932 = vmul.f32 %v1931, %v1868
        %v1933 = vmul.f32 %v1931, %v1869
        %v1934 = vadd.f32 %v1928, %v1932
        %v1935 = vadd.f32 %v1929, %v1933
        %s1936 = sld [smem:[#allocation2 + $0x22]]
        %v1937 = vstv %s1936
        %v1938 = vmul.f32 %v1937, %v1896
        %v1939 = vmul.f32 %v1937, %v1897
        %v1940 = vadd.f32 %v1934, %v1938
        %v1941 = vadd.f32 %v1935, %v1939
        %s1942 = sld [smem:[#allocation2 + $0x23]]
        %v1943 = vstv %s1942
        %v1944 = vmul.f32 %v1943, %v1924
        %v1945 = vmul.f32 %v1943, %v1925
        %v1946 = vadd.f32 %v1940, %v1944
        %v1947 = vadd.f32 %v1941, %v1945
        %s1948 = sld [smem:[#allocation2 + $0x30]]
        %v1949 = vstv %s1948
        %v1950 = vadd.f32 %v1946, %v1949
        %v1951 = vadd.f32 %v1947, %v1949
        %v1952 = vmax.f32 %v1950, 0.0
        %v1953 = vmax.f32 %v1951, 0.0
        %s1954 = sld [smem:[#allocation2 + $0x24]]
        %v1955 = vstv %s1954
        %v1956 = vmul.f32 %v1955, %v1840
        %v1957 = vmul.f32 %v1955, %v1841
        %s1958 = sld [smem:[#allocation2 + $0x25]]
        %v1959 = vstv %s1958
        %v1960 = vmul.f32 %v1959, %v1868
        %v1961 = vmul.f32 %v1959, %v1869
        %v1962 = vadd.f32 %v1956, %v1960
        %v1963 = vadd.f32 %v1957, %v1961
        %s1964 = sld [smem:[#allocation2 + $0x26]]
        %v1965 = vstv %s1964
        %v1966 = vmul.f32 %v1965, %v1896
        %v1967 = vmul.f32 %v1965, %v1897
        %v1968 = vadd.f32 %v1962, %v1966
        %v1969 = vadd.f32 %v1963, %v1967
        %s1970 = sld [smem:[#allocation2 + $0x27]]
        %v1971 = vstv %s1970
        %v1972 = vmul.f32 %v1971, %v1924
        %v1973 = vmul.f32 %v1971, %v1925
        %v1974 = vadd.f32 %v1968, %v1972
        %v1975 = vadd.f32 %v1969, %v1973
        %s1976 = sld [smem:[#allocation2 + $0x31]]
        %v1977 = vstv %s1976
        %v1978 = vadd.f32 %v1974, %v1977
        %v1979 = vadd.f32 %v1975, %v1977
        %v1980 = vmax.f32 %v1978, 0.0
        %v1981 = vmax.f32 %v1979, 0.0
        %s1982 = sld [smem:[#allocation2 + $0x28]]
        %v1983 = vstv %s1982
        %v1984 = vmul.f32 %v1983, %v1840
        %v1985 = vmul.f32 %v1983, %v1841
        %s1986 = sld [smem:[#allocation2 + $0x29]]
        %v1987 = vstv %s1986
        %v1988 = vmul.f32 %v1987, %v1868
        %v1989 = vmul.f32 %v1987, %v1869
        %v1990 = vadd.f32 %v1984, %v1988
        %v1991 = vadd.f32 %v1985, %v1989
        %s1992 = sld [smem:[#allocation2 + $0x2a]]
        %v1993 = vstv %s1992
        %v1994 = vmul.f32 %v1993, %v1896
        %v1995 = vmul.f32 %v1993, %v1897
        %v1996 = vadd.f32 %v1990, %v1994
        %v1997 = vadd.f32 %v1991, %v1995
        %s1998 = sld [smem:[#allocation2 + $0x2b]]
        %v1999 = vstv %s1998
        %v2000 = vmul.f32 %v1999, %v1924
        %v2001 = vmul.f32 %v1999, %v1925
        %v2002 = vadd.f32 %v1996, %v2000
        %v2003 = vadd.f32 %v1997, %v2001
        %s2004 = sld [smem:[#allocation2 + $0x32]]
        %v2005 = vstv %s2004
        %v2006 = vadd.f32 %v2002, %v2005
        %v2007 = vadd.f32 %v2003, %v2005
        %v2008 = vmax.f32 %v2006, 0.0
        %v2009 = vmax.f32 %v2007, 0.0
        %s2010 = sld [smem:[#allocation2 + $0x2c]]
        %v2011 = vstv %s2010
        %v2012 = vmul.f32 %v2011, %v1840
        %v2013 = vmul.f32 %v2011, %v1841
        %s2014 = sld [smem:[#allocation2 + $0x2d]]
        %v2015 = vstv %s2014
        %v2016 = vmul.f32 %v2015, %v1868
        %v2017 = vmul.f32 %v2015, %v1869
        %v2018 = vadd.f32 %v2012, %v2016
        %v2019 = vadd.f32 %v2013, %v2017
        %s2020 = sld [smem:[#allocation2 + $0x2e]]
        %v2021 = vstv %s2020
        %v2022 = vmul.f32 %v2021, %v1896
        %v2023 = vmul.f32 %v2021, %v1897
        %v2024 = vadd.f32 %v2018, %v2022
        %v2025 = vadd.f32 %v2019, %v2023
        %s2026 = sld [smem:[#allocation2 + $0x2f]]
        %v2027 = vstv %s2026
        %v2028 = vmul.f32 %v2027, %v1924
        %v2029 = vmul.f32 %v2027, %v1925
        %v2030 = vadd.f32 %v2024, %v2028
        %v2031 = vadd.f32 %v2025, %v2029
        %s2032 = sld [smem:[#allocation2 + $0x33]]
        %v2033 = vstv %s2032
        %v2034 = vadd.f32 %v2030, %v2033
        %v2035 = vadd.f32 %v2031, %v2033
        %v2036 = vmax.f32 %v2034, 0.0
        %v2037 = vmax.f32 %v2035, 0.0
        %s2038 = sld [smem:[#allocation2 + $0x34]]
        %v2039 = vstv %s2038
        %v2040 = vmul.f32 %v2039, %v1952
        %v2041 = vmul.f32 %v2039, %v1953
        %s2042 = sld [smem:[#allocation2 + $0x35]]
        %v2043 = vstv %s2042
        %v2044 = vmul.f32 %v2043, %v1980
        %v2045 = vmul.f32 %v2043, %v1981
        %v2046 = vadd.f32 %v2040, %v2044
        %v2047 = vadd.f32 %v2041, %v2045
        %s2048 = sld [smem:[#allocation2 + $0x36]]
        %v2049 = vstv %s2048
        %v2050 = vmul.f32 %v2049, %v2008
        %v2051 = vmul.f32 %v2049, %v2009
        %v2052 = vadd.f32 %v2046, %v2050
        %v2053 = vadd.f32 %v2047, %v2051
        %s2054 = sld [smem:[#allocation2 + $0x37]]
        %v2055 = vstv %s2054
        %v2056 = vmul.f32 %v2055, %v2036
        %v2057 = vmul.f32 %v2055, %v2037
        %v2058 = vadd.f32 %v2052, %v2056
        %v2059 = vadd.f32 %v2053, %v2057
        %s2060 = sld [smem:[#allocation2 + $0x44]]
        %v2061 = vstv %s2060
        %v2062 = vadd.f32 %v2058, %v2061
        %v2063 = vadd.f32 %v2059, %v2061
        %v2064 = vmax.f32 %v2062, 0.0
        %v2065 = vmax.f32 %v2063, 0.0
        %s2066 = sld [smem:[#allocation2 + $0x38]]
        %v2067 = vstv %s2066
        %v2068 = vmul.f32 %v2067, %v1952
        %v2069 = vmul.f32 %v2067, %v1953
        %s2070 = sld [smem:[#allocation2 + $0x39]]
        %v2071 = vstv %s2070
        %v2072 = vmul.f32 %v2071, %v1980
        %v2073 = vmul.f32 %v2071, %v1981
        %v2074 = vadd.f32 %v2068, %v2072
        %v2075 = vadd.f32 %v2069, %v2073
        %s2076 = sld [smem:[#allocation2 + $0x3a]]
        %v2077 = vstv %s2076
        %v2078 = vmul.f32 %v2077, %v2008
        %v2079 = vmul.f32 %v2077, %v2009
        %v2080 = vadd.f32 %v2074, %v2078
        %v2081 = vadd.f32 %v2075, %v2079
        %s2082 = sld [smem:[#allocation2 + $0x3b]]
        %v2083 = vstv %s2082
        %v2084 = vmul.f32 %v2083, %v2036
        %v2085 = vmul.f32 %v2083, %v2037
        %v2086 = vadd.f32 %v2080, %v2084
        %v2087 = vadd.f32 %v2081, %v2085
        %s2088 = sld [smem:[#allocation2 + $0x45]]
        %v2089 = vstv %s2088
        %v2090 = vadd.f32 %v2086, %v2089
        %v2091 = vadd.f32 %v2087, %v2089
        %v2092 = vmax.f32 %v2090, 0.0
        %v2093 = vmax.f32 %v2091, 0.0
        %s2094 = sld [smem:[#allocation2 + $0x3c]]
        %v2095 = vstv %s2094
        %v2096 = vmul.f32 %v2095, %v1952
        %v2097 = vmul.f32 %v2095, %v1953
        %s2098 = sld [smem:[#allocation2 + $0x3d]]
        %v2099 = vstv %s2098
        %v2100 = vmul.f32 %v2099, %v1980
        %v2101 = vmul.f32 %v2099, %v1981
        %v2102 = vadd.f32 %v2096, %v2100
        %v2103 = vadd.f32 %v2097, %v2101
        %s2104 = sld [smem:[#allocation2 + $0x3e]]
        %v2105 = vstv %s2104
        %v2106 = vmul.f32 %v2105, %v2008
        %v2107 = vmul.f32 %v2105, %v2009
        %v2108 = vadd.f32 %v2102, %v2106
        %v2109 = vadd.f32 %v2103, %v2107
        %s2110 = sld [smem:[#allocation2 + $0x3f]]
        %v2111 = vstv %s2110
        %v2112 = vmul.f32 %v2111, %v2036
        %v2113 = vmul.f32 %v2111, %v2037
        %v2114 = vadd.f32 %v2108, %v2112
        %v2115 = vadd.f32 %v2109, %v2113
        %s2116 = sld [smem:[#allocation2 + $0x46]]
        %v2117 = vstv %s2116
        %v2118 = vadd.f32 %v2114, %v2117
        %v2119 = vadd.f32 %v2115, %v2117
        %v2120 = vmax.f32 %v2118, 0.0
        %v2121 = vmax.f32 %v2119, 0.0
        %s2122 = sld [smem:[#allocation2 + $0x40]]
        %v2123 = vstv %s2122
        %v2124 = vmul.f32 %v2123, %v1952
        %v2125 = vmul.f32 %v2123, %v1953
        %s2126 = sld [smem:[#allocation2 + $0x41]]
        %v2127 = vstv %s2126
        %v2128 = vmul.f32 %v2127, %v1980
        %v2129 = vmul.f32 %v2127, %v1981
        %v2130 = vadd.f32 %v2124, %v2128
        %v2131 = vadd.f32 %v2125, %v2129
        %s2132 = sld [smem:[#allocation2 + $0x42]]
        %v2133 = vstv %s2132
        %v2134 = vmul.f32 %v2133, %v2008
        %v2135 = vmul.f32 %v2133, %v2009
        %v2136 = vadd.f32 %v2130, %v2134
        %v2137 = vadd.f32 %v2131, %v2135
        %s2138 = sld [smem:[#allocation2 + $0x43]]
        %v2139 = vstv %s2138
        %v2140 = vmul.f32 %v2139, %v2036
        %v2141 = vmul.f32 %v2139, %v2037
        %v2142 = vadd.f32 %v2136, %v2140
        %v2143 = vadd.f32 %v2137, %v2141
        %s2144 = sld [smem:[#allocation2 + $0x47]]
        %v2145 = vstv %s2144
        %v2146 = vadd.f32 %v2142, %v2145
        %v2147 = vadd.f32 %v2143, %v2145
        %v2148 = vmax.f32 %v2146, 0.0
        %v2149 = vmax.f32 %v2147, 0.0
        %s2150 = sld [smem:[#allocation2 + $0x48]]
        %v2151 = vstv %s2150
        %v2152 = vmul.f32 %v2151, %v2064
        %v2153 = vmul.f32 %v2151, %v2065
        %s2154 = sld [smem:[#allocation2 + $0x49]]
        %v2155 = vstv %s2154
        %v2156 = vmul.f32 %v2155, %v2092
        %v2157 = vmul.f32 %v2155, %v2093
        %v2158 = vadd.f32 %v2152, %v2156
        %v2159 = vadd.f32 %v2153, %v2157
        %s2160 = sld [smem:[#allocation2 + $0x4a]]
        %v2161 = vstv %s2160
        %v2162 = vmul.f32 %v2161, %v2120
        %v2163 = vmul.f32 %v2161, %v2121
        %v2164 = vadd.f32 %v2158, %v2162
        %v2165 = vadd.f32 %v2159, %v2163
        %s2166 = sld [smem:[#allocation2 + $0x4b]]
        %v2167 = vstv %s2166
        %v2168 = vmul.f32 %v2167, %v2148
        %v2169 = vmul.f32 %v2167, %v2149
        %v2170 = vadd.f32 %v2164, %v2168
        %v2171 = vadd.f32 %v2165, %v2169
        %s2172 = sld [smem:[#allocation2 + $0x58]]
        %v2173 = vstv %s2172
        %v2174 = vadd.f32 %v2170, %v2173
        %v2175 = vadd.f32 %v2171, %v2173
        %v2176 = vmax.f32 %v2174, 0.0
        %v2177 = vmax.f32 %v2175, 0.0
        %s2178 = sld [smem:[#allocation2 + $0x4c]]
        %v2179 = vstv %s2178
        %v2180 = vmul.f32 %v2179, %v2064
        %v2181 = vmul.f32 %v2179, %v2065
        %s2182 = sld [smem:[#allocation2 + $0x4d]]
        %v2183 = vstv %s2182
        %v2184 = vmul.f32 %v2183, %v2092
        %v2185 = vmul.f32 %v2183, %v2093
        %v2186 = vadd.f32 %v2180, %v2184
        %v2187 = vadd.f32 %v2181, %v2185
        %s2188 = sld [smem:[#allocation2 + $0x4e]]
        %v2189 = vstv %s2188
        %v2190 = vmul.f32 %v2189, %v2120
        %v2191 = vmul.f32 %v2189, %v2121
        %v2192 = vadd.f32 %v2186, %v2190
        %v2193 = vadd.f32 %v2187, %v2191
        %s2194 = sld [smem:[#allocation2 + $0x4f]]
        %v2195 = vstv %s2194
        %v2196 = vmul.f32 %v2195, %v2148
        %v2197 = vmul.f32 %v2195, %v2149
        %v2198 = vadd.f32 %v2192, %v2196
        %v2199 = vadd.f32 %v2193, %v2197
        %s2200 = sld [smem:[#allocation2 + $0x59]]
        %v2201 = vstv %s2200
        %v2202 = vadd.f32 %v2198, %v2201
        %v2203 = vadd.f32 %v2199, %v2201
        %v2204 = vmax.f32 %v2202, 0.0
        %v2205 = vmax.f32 %v2203, 0.0
        %s2206 = sld [smem:[#allocation2 + $0x50]]
        %v2207 = vstv %s2206
        %v2208 = vmul.f32 %v2207, %v2064
        %v2209 = vmul.f32 %v2207, %v2065
        %s2210 = sld [smem:[#allocation2 + $0x51]]
        %v2211 = vstv %s2210
        %v2212 = vmul.f32 %v2211, %v2092
        %v2213 = vmul.f32 %v2211, %v2093
        %v2214 = vadd.f32 %v2208, %v2212
        %v2215 = vadd.f32 %v2209, %v2213
        %s2216 = sld [smem:[#allocation2 + $0x52]]
        %v2217 = vstv %s2216
        %v2218 = vmul.f32 %v2217, %v2120
        %v2219 = vmul.f32 %v2217, %v2121
        %v2220 = vadd.f32 %v2214, %v2218
        %v2221 = vadd.f32 %v2215, %v2219
        %s2222 = sld [smem:[#allocation2 + $0x53]]
        %v2223 = vstv %s2222
        %v2224 = vmul.f32 %v2223, %v2148
        %v2225 = vmul.f32 %v2223, %v2149
        %v2226 = vadd.f32 %v2220, %v2224
        %v2227 = vadd.f32 %v2221, %v2225
        %s2228 = sld [smem:[#allocation2 + $0x5a]]
        %v2229 = vstv %s2228
        %v2230 = vadd.f32 %v2226, %v2229
        %v2231 = vadd.f32 %v2227, %v2229
        %v2232 = vmax.f32 %v2230, 0.0
        %v2233 = vmax.f32 %v2231, 0.0
        %s2234 = sld [smem:[#allocation2 + $0x54]]
        %v2235 = vstv %s2234
        %v2236 = vmul.f32 %v2235, %v2064
        %v2237 = vmul.f32 %v2235, %v2065
        %s2238 = sld [smem:[#allocation2 + $0x55]]
        %v2239 = vstv %s2238
        %v2240 = vmul.f32 %v2239, %v2092
        %v2241 = vmul.f32 %v2239, %v2093
        %v2242 = vadd.f32 %v2236, %v2240
        %v2243 = vadd.f32 %v2237, %v2241
        %s2244 = sld [smem:[#allocation2 + $0x56]]
        %v2245 = vstv %s2244
        %v2246 = vmul.f32 %v2245, %v2120
        %v2247 = vmul.f32 %v2245, %v2121
        %v2248 = vadd.f32 %v2242, %v2246
        %v2249 = vadd.f32 %v2243, %v2247
        %s2250 = sld [smem:[#allocation2 + $0x57]]
        %v2251 = vstv %s2250
        %v2252 = vmul.f32 %v2251, %v2148
        %v2253 = vmul.f32 %v2251, %v2149
        %v2254 = vadd.f32 %v2248, %v2252
        %v2255 = vadd.f32 %v2249, %v2253
        %s2256 = sld [smem:[#allocation2 + $0x5b]]
        %v2257 = vstv %s2256
        %v2258 = vadd.f32 %v2254, %v2257
        %v2259 = vadd.f32 %v2255, %v2257
        %v2260 = vmax.f32 %v2258, 0.0
        %v2261 = vmax.f32 %v2259, 0.0
        %s2262 = sld [smem:[#allocation2 + $0x5c]]
        %v2263 = vstv %s2262
        %v2264 = vmul.f32 %v2263, %v2176
        %v2265 = vmul.f32 %v2263, %v2177
        %s2266 = sld [smem:[#allocation2 + $0x5d]]
        %v2267 = vstv %s2266
        %v2268 = vmul.f32 %v2267, %v2204
        %v2269 = vmul.f32 %v2267, %v2205
        %v2270 = vadd.f32 %v2264, %v2268
        %v2271 = vadd.f32 %v2265, %v2269
        %s2272 = sld [smem:[#allocation2 + $0x5e]]
        %v2273 = vstv %s2272
        %v2274 = vmul.f32 %v2273, %v2232
        %v2275 = vmul.f32 %v2273, %v2233
        %v2276 = vadd.f32 %v2270, %v2274
        %v2277 = vadd.f32 %v2271, %v2275
        %s2278 = sld [smem:[#allocation2 + $0x5f]]
        %v2279 = vstv %s2278
        %v2280 = vmul.f32 %v2279, %v2260
        %v2281 = vmul.f32 %v2279, %v2261
        %v2282 = vadd.f32 %v2276, %v2280
        %v2283 = vadd.f32 %v2277, %v2281
        %s2284 = sld [smem:[#allocation2 + $0x6c]]
        %v2285 = vstv %s2284
        %v2286 = vadd.f32 %v2282, %v2285
        %v2287 = vadd.f32 %v2283, %v2285
        %v2288 = vmax.f32 %v2286, 0.0
        %v2289 = vmax.f32 %v2287, 0.0
        %s2290 = sld [smem:[#allocation2 + $0x60]]
        %v2291 = vstv %s2290
        %v2292 = vmul.f32 %v2291, %v2176
        %v2293 = vmul.f32 %v2291, %v2177
        %s2294 = sld [smem:[#allocation2 + $0x61]]
        %v2295 = vstv %s2294
        %v2296 = vmul.f32 %v2295, %v2204
        %v2297 = vmul.f32 %v2295, %v2205
        %v2298 = vadd.f32 %v2292, %v2296
        %v2299 = vadd.f32 %v2293, %v2297
        %s2300 = sld [smem:[#allocation2 + $0x62]]
        %v2301 = vstv %s2300
        %v2302 = vmul.f32 %v2301, %v2232
        %v2303 = vmul.f32 %v2301, %v2233
        %v2304 = vadd.f32 %v2298, %v2302
        %v2305 = vadd.f32 %v2299, %v2303
        %s2306 = sld [smem:[#allocation2 + $0x63]]
        %v2307 = vstv %s2306
        %v2308 = vmul.f32 %v2307, %v2260
        %v2309 = vmul.f32 %v2307, %v2261
        %v2310 = vadd.f32 %v2304, %v2308
        %v2311 = vadd.f32 %v2305, %v2309
        %s2312 = sld [smem:[#allocation2 + $0x6d]]
        %v2313 = vstv %s2312
        %v2314 = vadd.f32 %v2310, %v2313
        %v2315 = vadd.f32 %v2311, %v2313
        %v2316 = vmax.f32 %v2314, 0.0
        %v2317 = vmax.f32 %v2315, 0.0
        %s2318 = sld [smem:[#allocation2 + $0x64]]
        %v2319 = vstv %s2318
        %v2320 = vmul.f32 %v2319, %v2176
        %v2321 = vmul.f32 %v2319, %v2177
        %s2322 = sld [smem:[#allocation2 + $0x65]]
        %v2323 = vstv %s2322
        %v2324 = vmul.f32 %v2323, %v2204
        %v2325 = vmul.f32 %v2323, %v2205
        %v2326 = vadd.f32 %v2320, %v2324
        %v2327 = vadd.f32 %v2321, %v2325
        %s2328 = sld [smem:[#allocation2 + $0x66]]
        %v2329 = vstv %s2328
        %v2330 = vmul.f32 %v2329, %v2232
        %v2331 = vmul.f32 %v2329, %v2233
        %v2332 = vadd.f32 %v2326, %v2330
        %v2333 = vadd.f32 %v2327, %v2331
        %s2334 = sld [smem:[#allocation2 + $0x67]]
        %v2335 = vstv %s2334
        %v2336 = vmul.f32 %v2335, %v2260
        %v2337 = vmul.f32 %v2335, %v2261
        %v2338 = vadd.f32 %v2332, %v2336
        %v2339 = vadd.f32 %v2333, %v2337
        %s2340 = sld [smem:[#allocation2 + $0x6e]]
        %v2341 = vstv %s2340
        %v2342 = vadd.f32 %v2338, %v2341
        %v2343 = vadd.f32 %v2339, %v2341
        %v2344 = vmax.f32 %v2342, 0.0
        %v2345 = vmax.f32 %v2343, 0.0
        %s2346 = sld [smem:[#allocation2 + $0x68]]
        %v2347 = vstv %s2346
        %v2348 = vmul.f32 %v2347, %v2176
        %v2349 = vmul.f32 %v2347, %v2177
        %s2350 = sld [smem:[#allocation2 + $0x69]]
        %v2351 = vstv %s2350
        %v2352 = vmul.f32 %v2351, %v2204
        %v2353 = vmul.f32 %v2351, %v2205
        %v2354 = vadd.f32 %v2348, %v2352
        %v2355 = vadd.f32 %v2349, %v2353
        %s2356 = sld [smem:[#allocation2 + $0x6a]]
        %v2357 = vstv %s2356
        %v2358 = vmul.f32 %v2357, %v2232
        %v2359 = vmul.f32 %v2357, %v2233
        %v2360 = vadd.f32 %v2354, %v2358
        %v2361 = vadd.f32 %v2355, %v2359
        %s2362 = sld [smem:[#allocation2 + $0x6b]]
        %v2363 = vstv %s2362
        %v2364 = vmul.f32 %v2363, %v2260
        %v2365 = vmul.f32 %v2363, %v2261
        %v2366 = vadd.f32 %v2360, %v2364
        %v2367 = vadd.f32 %v2361, %v2365
        %s2368 = sld [smem:[#allocation2 + $0x6f]]
        %v2369 = vstv %s2368
        %v2370 = vadd.f32 %v2366, %v2369
        %v2371 = vadd.f32 %v2367, %v2369
        %v2372 = vmax.f32 %v2370, 0.0
        %v2373 = vmax.f32 %v2371, 0.0
        %s2374 = sld [smem:[#allocation2 + $0x70]]
        %v2375 = vstv %s2374
        %v2376 = vmul.f32 %v2375, %v2288
        %v2377 = vmul.f32 %v2375, %v2289
        %s2378 = sld [smem:[#allocation2 + $0x71]]
        %v2379 = vstv %s2378
        %v2380 = vmul.f32 %v2379, %v2316
        %v2381 = vmul.f32 %v2379, %v2317
        %v2382 = vadd.f32 %v2376, %v2380
        %v2383 = vadd.f32 %v2377, %v2381
        %s2384 = sld [smem:[#allocation2 + $0x72]]
        %v2385 = vstv %s2384
        %v2386 = vmul.f32 %v2385, %v2344
        %v2387 = vmul.f32 %v2385, %v2345
        %v2388 = vadd.f32 %v2382, %v2386
        %v2389 = vadd.f32 %v2383, %v2387
        %s2390 = sld [smem:[#allocation2 + $0x73]]
        %v2391 = vstv %s2390
        %v2392 = vmul.f32 %v2391, %v2372
        %v2393 = vmul.f32 %v2391, %v2373
        %v2394 = vadd.f32 %v2388, %v2392
        %v2395 = vadd.f32 %v2389, %v2393
        %s2396 = sld [smem:[#allocation2 + $0x80]]
        %v2397 = vstv %s2396
        %v2398 = vadd.f32 %v2394, %v2397
        %v2399 = vadd.f32 %v2395, %v2397
        %v2400 = vmax.f32 %v2398, 0.0
        %v2401 = vmax.f32 %v2399, 0.0
        %s2402 = sld [smem:[#allocation2 + $0x74]]
        %v2403 = vstv %s2402
        %v2404 = vmul.f32 %v2403, %v2288
        %v2405 = vmul.f32 %v2403, %v2289
        %s2406 = sld [smem:[#allocation2 + $0x75]]
        %v2407 = vstv %s2406
        %v2408 = vmul.f32 %v2407, %v2316
        %v2409 = vmul.f32 %v2407, %v2317
        %v2410 = vadd.f32 %v2404, %v2408
        %v2411 = vadd.f32 %v2405, %v2409
        %s2412 = sld [smem:[#allocation2 + $0x76]]
        %v2413 = vstv %s2412
        %v2414 = vmul.f32 %v2413, %v2344
        %v2415 = vmul.f32 %v2413, %v2345
        %v2416 = vadd.f32 %v2410, %v2414
        %v2417 = vadd.f32 %v2411, %v2415
        %s2418 = sld [smem:[#allocation2 + $0x77]]
        %v2419 = vstv %s2418
        %v2420 = vmul.f32 %v2419, %v2372
        %v2421 = vmul.f32 %v2419, %v2373
        %v2422 = vadd.f32 %v2416, %v2420
        %v2423 = vadd.f32 %v2417, %v2421
        %s2424 = sld [smem:[#allocation2 + $0x81]]
        %v2425 = vstv %s2424
        %v2426 = vadd.f32 %v2422, %v2425
        %v2427 = vadd.f32 %v2423, %v2425
        %v2428 = vmax.f32 %v2426, 0.0
        %v2429 = vmax.f32 %v2427, 0.0
        %s2430 = sld [smem:[#allocation2 + $0x78]]
        %v2431 = vstv %s2430
        %v2432 = vmul.f32 %v2431, %v2288
        %v2433 = vmul.f32 %v2431, %v2289
        %s2434 = sld [smem:[#allocation2 + $0x79]]
        %v2435 = vstv %s2434
        %v2436 = vmul.f32 %v2435, %v2316
        %v2437 = vmul.f32 %v2435, %v2317
        %v2438 = vadd.f32 %v2432, %v2436
        %v2439 = vadd.f32 %v2433, %v2437
        %s2440 = sld [smem:[#allocation2 + $0x7a]]
        %v2441 = vstv %s2440
        %v2442 = vmul.f32 %v2441, %v2344
        %v2443 = vmul.f32 %v2441, %v2345
        %v2444 = vadd.f32 %v2438, %v2442
        %v2445 = vadd.f32 %v2439, %v2443
        %s2446 = sld [smem:[#allocation2 + $0x7b]]
        %v2447 = vstv %s2446
        %v2448 = vmul.f32 %v2447, %v2372
        %v2449 = vmul.f32 %v2447, %v2373
        %v2450 = vadd.f32 %v2444, %v2448
        %v2451 = vadd.f32 %v2445, %v2449
        %s2452 = sld [smem:[#allocation2 + $0x82]]
        %v2453 = vstv %s2452
        %v2454 = vadd.f32 %v2450, %v2453
        %v2455 = vadd.f32 %v2451, %v2453
        %v2456 = vmax.f32 %v2454, 0.0
        %v2457 = vmax.f32 %v2455, 0.0
        %s2458 = sld [smem:[#allocation2 + $0x7c]]
        %v2459 = vstv %s2458
        %v2460 = vmul.f32 %v2459, %v2288
        %v2461 = vmul.f32 %v2459, %v2289
        %s2462 = sld [smem:[#allocation2 + $0x7d]]
        %v2463 = vstv %s2462
        %v2464 = vmul.f32 %v2463, %v2316
        %v2465 = vmul.f32 %v2463, %v2317
        %v2466 = vadd.f32 %v2460, %v2464
        %v2467 = vadd.f32 %v2461, %v2465
        %s2468 = sld [smem:[#allocation2 + $0x7e]]
        %v2469 = vstv %s2468
        %v2470 = vmul.f32 %v2469, %v2344
        %v2471 = vmul.f32 %v2469, %v2345
        %v2472 = vadd.f32 %v2466, %v2470
        %v2473 = vadd.f32 %v2467, %v2471
        %s2474 = sld [smem:[#allocation2 + $0x7f]]
        %v2475 = vstv %s2474
        %v2476 = vmul.f32 %v2475, %v2372
        %v2477 = vmul.f32 %v2475, %v2373
        %v2478 = vadd.f32 %v2472, %v2476
        %v2479 = vadd.f32 %v2473, %v2477
        %s2480 = sld [smem:[#allocation2 + $0x83]]
        %v2481 = vstv %s2480
        %v2482 = vadd.f32 %v2478, %v2481
        %v2483 = vadd.f32 %v2479, %v2481
        %v2484 = vmax.f32 %v2482, 0.0
        %v2485 = vmax.f32 %v2483, 0.0
        %s2486 = sld [smem:[#allocation2 + $0x84]]
        %v2487 = vstv %s2486
        %v2488 = vmul.f32 %v2487, %v2400
        %v2489 = vmul.f32 %v2487, %v2401
        %s2490 = sld [smem:[#allocation2 + $0x85]]
        %v2491 = vstv %s2490
        %v2492 = vmul.f32 %v2491, %v2428
        %v2493 = vmul.f32 %v2491, %v2429
        %v2494 = vadd.f32 %v2488, %v2492
        %v2495 = vadd.f32 %v2489, %v2493
        %s2496 = sld [smem:[#allocation2 + $0x86]]
        %v2497 = vstv %s2496
        %v2498 = vmul.f32 %v2497, %v2456
        %v2499 = vmul.f32 %v2497, %v2457
        %v2500 = vadd.f32 %v2494, %v2498
        %v2501 = vadd.f32 %v2495, %v2499
        %s2502 = sld [smem:[#allocation2 + $0x87]]
        %v2503 = vstv %s2502
        %v2504 = vmul.f32 %v2503, %v2484
        %v2505 = vmul.f32 %v2503, %v2485
        %v2506 = vadd.f32 %v2500, %v2504
        %v2507 = vadd.f32 %v2501, %v2505
        %s2508 = sld [smem:[#allocation2 + $0x88]]
        %v2509 = vstv %s2508
        %v2510 = vadd.f32 %v2506, %v2509
        %v2511 = vadd.f32 %v2507, %v2509
        %s2512 = scalar_lea.vmem %s198, 32 [#allocation7]
        %2513 = vst [vmem:[%s2512] sm:$0xff] %v2510
        %2514 = vst [vmem:[%s2512 + $0x8] sm:$0xff] %v2511
        %s2515 = scalar_lea.vmem %s177, 48 [#allocation6]
        %v2516 = vld [vmem:[%s2515] sm:$0xff]
        %v2517 = vld [vmem:[%s2515 + $0x8] sm:$0xff]
        %s2518 = sadd.s32 48, 64
        %s2519 = scalar_lea.vmem %s177, %s2518 [#allocation6]
        %v2520 = vld [vmem:[%s2519] sm:$0xff]
        %v2521 = vld [vmem:[%s2519 + $0x8] sm:$0xff]
        %s2522 = sld [smem:[#allocation2]]
        %v2523 = vstv %s2522
        %v2524 = vmul.f32 %v2523, %v2516
        %v2525 = vmul.f32 %v2523, %v2517
        %s2526 = sld [smem:[#allocation2 + $0x1]]
        %v2527 = vstv %s2526
        %v2528 = vmul.f32 %v2527, %v2520
        %v2529 = vmul.f32 %v2527, %v2521
        %v2530 = vadd.f32 %v2524, %v2528
        %v2531 = vadd.f32 %v2525, %v2529
        %s2532 = sld [smem:[#allocation2 + $0x8]]
        %v2533 = vstv %s2532
        %v2534 = vadd.f32 %v2530, %v2533
        %v2535 = vadd.f32 %v2531, %v2533
        %v2536 = vmax.f32 %v2534, 0.0
        %v2537 = vmax.f32 %v2535, 0.0
        %s2538 = sld [smem:[#allocation2 + $0x2]]
        %v2539 = vstv %s2538
        %v2540 = vmul.f32 %v2539, %v2516
        %v2541 = vmul.f32 %v2539, %v2517
        %s2542 = sld [smem:[#allocation2 + $0x3]]
        %v2543 = vstv %s2542
        %v2544 = vmul.f32 %v2543, %v2520
        %v2545 = vmul.f32 %v2543, %v2521
        %v2546 = vadd.f32 %v2540, %v2544
        %v2547 = vadd.f32 %v2541, %v2545
        %s2548 = sld [smem:[#allocation2 + $0x9]]
        %v2549 = vstv %s2548
        %v2550 = vadd.f32 %v2546, %v2549
        %v2551 = vadd.f32 %v2547, %v2549
        %v2552 = vmax.f32 %v2550, 0.0
        %v2553 = vmax.f32 %v2551, 0.0
        %s2554 = sld [smem:[#allocation2 + $0x4]]
        %v2555 = vstv %s2554
        %v2556 = vmul.f32 %v2555, %v2516
        %v2557 = vmul.f32 %v2555, %v2517
        %s2558 = sld [smem:[#allocation2 + $0x5]]
        %v2559 = vstv %s2558
        %v2560 = vmul.f32 %v2559, %v2520
        %v2561 = vmul.f32 %v2559, %v2521
        %v2562 = vadd.f32 %v2556, %v2560
        %v2563 = vadd.f32 %v2557, %v2561
        %s2564 = sld [smem:[#allocation2 + $0xa]]
        %v2565 = vstv %s2564
        %v2566 = vadd.f32 %v2562, %v2565
        %v2567 = vadd.f32 %v2563, %v2565
        %v2568 = vmax.f32 %v2566, 0.0
        %v2569 = vmax.f32 %v2567, 0.0
        %s2570 = sld [smem:[#allocation2 + $0x6]]
        %v2571 = vstv %s2570
        %v2572 = vmul.f32 %v2571, %v2516
        %v2573 = vmul.f32 %v2571, %v2517
        %s2574 = sld [smem:[#allocation2 + $0x7]]
        %v2575 = vstv %s2574
        %v2576 = vmul.f32 %v2575, %v2520
        %v2577 = vmul.f32 %v2575, %v2521
        %v2578 = vadd.f32 %v2572, %v2576
        %v2579 = vadd.f32 %v2573, %v2577
        %s2580 = sld [smem:[#allocation2 + $0xb]]
        %v2581 = vstv %s2580
        %v2582 = vadd.f32 %v2578, %v2581
        %v2583 = vadd.f32 %v2579, %v2581
        %v2584 = vmax.f32 %v2582, 0.0
        %v2585 = vmax.f32 %v2583, 0.0
        %s2586 = sld [smem:[#allocation2 + $0xc]]
        %v2587 = vstv %s2586
        %v2588 = vmul.f32 %v2587, %v2536
        %v2589 = vmul.f32 %v2587, %v2537
        %s2590 = sld [smem:[#allocation2 + $0xd]]
        %v2591 = vstv %s2590
        %v2592 = vmul.f32 %v2591, %v2552
        %v2593 = vmul.f32 %v2591, %v2553
        %v2594 = vadd.f32 %v2588, %v2592
        %v2595 = vadd.f32 %v2589, %v2593
        %s2596 = sld [smem:[#allocation2 + $0xe]]
        %v2597 = vstv %s2596
        %v2598 = vmul.f32 %v2597, %v2568
        %v2599 = vmul.f32 %v2597, %v2569
        %v2600 = vadd.f32 %v2594, %v2598
        %v2601 = vadd.f32 %v2595, %v2599
        %s2602 = sld [smem:[#allocation2 + $0xf]]
        %v2603 = vstv %s2602
        %v2604 = vmul.f32 %v2603, %v2584
        %v2605 = vmul.f32 %v2603, %v2585
        %v2606 = vadd.f32 %v2600, %v2604
        %v2607 = vadd.f32 %v2601, %v2605
        %s2608 = sld [smem:[#allocation2 + $0x1c]]
        %v2609 = vstv %s2608
        %v2610 = vadd.f32 %v2606, %v2609
        %v2611 = vadd.f32 %v2607, %v2609
        %v2612 = vmax.f32 %v2610, 0.0
        %v2613 = vmax.f32 %v2611, 0.0
        %s2614 = sld [smem:[#allocation2 + $0x10]]
        %v2615 = vstv %s2614
        %v2616 = vmul.f32 %v2615, %v2536
        %v2617 = vmul.f32 %v2615, %v2537
        %s2618 = sld [smem:[#allocation2 + $0x11]]
        %v2619 = vstv %s2618
        %v2620 = vmul.f32 %v2619, %v2552
        %v2621 = vmul.f32 %v2619, %v2553
        %v2622 = vadd.f32 %v2616, %v2620
        %v2623 = vadd.f32 %v2617, %v2621
        %s2624 = sld [smem:[#allocation2 + $0x12]]
        %v2625 = vstv %s2624
        %v2626 = vmul.f32 %v2625, %v2568
        %v2627 = vmul.f32 %v2625, %v2569
        %v2628 = vadd.f32 %v2622, %v2626
        %v2629 = vadd.f32 %v2623, %v2627
        %s2630 = sld [smem:[#allocation2 + $0x13]]
        %v2631 = vstv %s2630
        %v2632 = vmul.f32 %v2631, %v2584
        %v2633 = vmul.f32 %v2631, %v2585
        %v2634 = vadd.f32 %v2628, %v2632
        %v2635 = vadd.f32 %v2629, %v2633
        %s2636 = sld [smem:[#allocation2 + $0x1d]]
        %v2637 = vstv %s2636
        %v2638 = vadd.f32 %v2634, %v2637
        %v2639 = vadd.f32 %v2635, %v2637
        %v2640 = vmax.f32 %v2638, 0.0
        %v2641 = vmax.f32 %v2639, 0.0
        %s2642 = sld [smem:[#allocation2 + $0x14]]
        %v2643 = vstv %s2642
        %v2644 = vmul.f32 %v2643, %v2536
        %v2645 = vmul.f32 %v2643, %v2537
        %s2646 = sld [smem:[#allocation2 + $0x15]]
        %v2647 = vstv %s2646
        %v2648 = vmul.f32 %v2647, %v2552
        %v2649 = vmul.f32 %v2647, %v2553
        %v2650 = vadd.f32 %v2644, %v2648
        %v2651 = vadd.f32 %v2645, %v2649
        %s2652 = sld [smem:[#allocation2 + $0x16]]
        %v2653 = vstv %s2652
        %v2654 = vmul.f32 %v2653, %v2568
        %v2655 = vmul.f32 %v2653, %v2569
        %v2656 = vadd.f32 %v2650, %v2654
        %v2657 = vadd.f32 %v2651, %v2655
        %s2658 = sld [smem:[#allocation2 + $0x17]]
        %v2659 = vstv %s2658
        %v2660 = vmul.f32 %v2659, %v2584
        %v2661 = vmul.f32 %v2659, %v2585
        %v2662 = vadd.f32 %v2656, %v2660
        %v2663 = vadd.f32 %v2657, %v2661
        %s2664 = sld [smem:[#allocation2 + $0x1e]]
        %v2665 = vstv %s2664
        %v2666 = vadd.f32 %v2662, %v2665
        %v2667 = vadd.f32 %v2663, %v2665
        %v2668 = vmax.f32 %v2666, 0.0
        %v2669 = vmax.f32 %v2667, 0.0
        %s2670 = sld [smem:[#allocation2 + $0x18]]
        %v2671 = vstv %s2670
        %v2672 = vmul.f32 %v2671, %v2536
        %v2673 = vmul.f32 %v2671, %v2537
        %s2674 = sld [smem:[#allocation2 + $0x19]]
        %v2675 = vstv %s2674
        %v2676 = vmul.f32 %v2675, %v2552
        %v2677 = vmul.f32 %v2675, %v2553
        %v2678 = vadd.f32 %v2672, %v2676
        %v2679 = vadd.f32 %v2673, %v2677
        %s2680 = sld [smem:[#allocation2 + $0x1a]]
        %v2681 = vstv %s2680
        %v2682 = vmul.f32 %v2681, %v2568
        %v2683 = vmul.f32 %v2681, %v2569
        %v2684 = vadd.f32 %v2678, %v2682
        %v2685 = vadd.f32 %v2679, %v2683
        %s2686 = sld [smem:[#allocation2 + $0x1b]]
        %v2687 = vstv %s2686
        %v2688 = vmul.f32 %v2687, %v2584
        %v2689 = vmul.f32 %v2687, %v2585
        %v2690 = vadd.f32 %v2684, %v2688
        %v2691 = vadd.f32 %v2685, %v2689
        %s2692 = sld [smem:[#allocation2 + $0x1f]]
        %v2693 = vstv %s2692
        %v2694 = vadd.f32 %v2690, %v2693
        %v2695 = vadd.f32 %v2691, %v2693
        %v2696 = vmax.f32 %v2694, 0.0
        %v2697 = vmax.f32 %v2695, 0.0
        %s2698 = sld [smem:[#allocation2 + $0x20]]
        %v2699 = vstv %s2698
        %v2700 = vmul.f32 %v2699, %v2612
        %v2701 = vmul.f32 %v2699, %v2613
        %s2702 = sld [smem:[#allocation2 + $0x21]]
        %v2703 = vstv %s2702
        %v2704 = vmul.f32 %v2703, %v2640
        %v2705 = vmul.f32 %v2703, %v2641
        %v2706 = vadd.f32 %v2700, %v2704
        %v2707 = vadd.f32 %v2701, %v2705
        %s2708 = sld [smem:[#allocation2 + $0x22]]
        %v2709 = vstv %s2708
        %v2710 = vmul.f32 %v2709, %v2668
        %v2711 = vmul.f32 %v2709, %v2669
        %v2712 = vadd.f32 %v2706, %v2710
        %v2713 = vadd.f32 %v2707, %v2711
        %s2714 = sld [smem:[#allocation2 + $0x23]]
        %v2715 = vstv %s2714
        %v2716 = vmul.f32 %v2715, %v2696
        %v2717 = vmul.f32 %v2715, %v2697
        %v2718 = vadd.f32 %v2712, %v2716
        %v2719 = vadd.f32 %v2713, %v2717
        %s2720 = sld [smem:[#allocation2 + $0x30]]
        %v2721 = vstv %s2720
        %v2722 = vadd.f32 %v2718, %v2721
        %v2723 = vadd.f32 %v2719, %v2721
        %v2724 = vmax.f32 %v2722, 0.0
        %v2725 = vmax.f32 %v2723, 0.0
        %s2726 = sld [smem:[#allocation2 + $0x24]]
        %v2727 = vstv %s2726
        %v2728 = vmul.f32 %v2727, %v2612
        %v2729 = vmul.f32 %v2727, %v2613
        %s2730 = sld [smem:[#allocation2 + $0x25]]
        %v2731 = vstv %s2730
        %v2732 = vmul.f32 %v2731, %v2640
        %v2733 = vmul.f32 %v2731, %v2641
        %v2734 = vadd.f32 %v2728, %v2732
        %v2735 = vadd.f32 %v2729, %v2733
        %s2736 = sld [smem:[#allocation2 + $0x26]]
        %v2737 = vstv %s2736
        %v2738 = vmul.f32 %v2737, %v2668
        %v2739 = vmul.f32 %v2737, %v2669
        %v2740 = vadd.f32 %v2734, %v2738
        %v2741 = vadd.f32 %v2735, %v2739
        %s2742 = sld [smem:[#allocation2 + $0x27]]
        %v2743 = vstv %s2742
        %v2744 = vmul.f32 %v2743, %v2696
        %v2745 = vmul.f32 %v2743, %v2697
        %v2746 = vadd.f32 %v2740, %v2744
        %v2747 = vadd.f32 %v2741, %v2745
        %s2748 = sld [smem:[#allocation2 + $0x31]]
        %v2749 = vstv %s2748
        %v2750 = vadd.f32 %v2746, %v2749
        %v2751 = vadd.f32 %v2747, %v2749
        %v2752 = vmax.f32 %v2750, 0.0
        %v2753 = vmax.f32 %v2751, 0.0
        %s2754 = sld [smem:[#allocation2 + $0x28]]
        %v2755 = vstv %s2754
        %v2756 = vmul.f32 %v2755, %v2612
        %v2757 = vmul.f32 %v2755, %v2613
        %s2758 = sld [smem:[#allocation2 + $0x29]]
        %v2759 = vstv %s2758
        %v2760 = vmul.f32 %v2759, %v2640
        %v2761 = vmul.f32 %v2759, %v2641
        %v2762 = vadd.f32 %v2756, %v2760
        %v2763 = vadd.f32 %v2757, %v2761
        %s2764 = sld [smem:[#allocation2 + $0x2a]]
        %v2765 = vstv %s2764
        %v2766 = vmul.f32 %v2765, %v2668
        %v2767 = vmul.f32 %v2765, %v2669
        %v2768 = vadd.f32 %v2762, %v2766
        %v2769 = vadd.f32 %v2763, %v2767
        %s2770 = sld [smem:[#allocation2 + $0x2b]]
        %v2771 = vstv %s2770
        %v2772 = vmul.f32 %v2771, %v2696
        %v2773 = vmul.f32 %v2771, %v2697
        %v2774 = vadd.f32 %v2768, %v2772
        %v2775 = vadd.f32 %v2769, %v2773
        %s2776 = sld [smem:[#allocation2 + $0x32]]
        %v2777 = vstv %s2776
        %v2778 = vadd.f32 %v2774, %v2777
        %v2779 = vadd.f32 %v2775, %v2777
        %v2780 = vmax.f32 %v2778, 0.0
        %v2781 = vmax.f32 %v2779, 0.0
        %s2782 = sld [smem:[#allocation2 + $0x2c]]
        %v2783 = vstv %s2782
        %v2784 = vmul.f32 %v2783, %v2612
        %v2785 = vmul.f32 %v2783, %v2613
        %s2786 = sld [smem:[#allocation2 + $0x2d]]
        %v2787 = vstv %s2786
        %v2788 = vmul.f32 %v2787, %v2640
        %v2789 = vmul.f32 %v2787, %v2641
        %v2790 = vadd.f32 %v2784, %v2788
        %v2791 = vadd.f32 %v2785, %v2789
        %s2792 = sld [smem:[#allocation2 + $0x2e]]
        %v2793 = vstv %s2792
        %v2794 = vmul.f32 %v2793, %v2668
        %v2795 = vmul.f32 %v2793, %v2669
        %v2796 = vadd.f32 %v2790, %v2794
        %v2797 = vadd.f32 %v2791, %v2795
        %s2798 = sld [smem:[#allocation2 + $0x2f]]
        %v2799 = vstv %s2798
        %v2800 = vmul.f32 %v2799, %v2696
        %v2801 = vmul.f32 %v2799, %v2697
        %v2802 = vadd.f32 %v2796, %v2800
        %v2803 = vadd.f32 %v2797, %v2801
        %s2804 = sld [smem:[#allocation2 + $0x33]]
        %v2805 = vstv %s2804
        %v2806 = vadd.f32 %v2802, %v2805
        %v2807 = vadd.f32 %v2803, %v2805
        %v2808 = vmax.f32 %v2806, 0.0
        %v2809 = vmax.f32 %v2807, 0.0
        %s2810 = sld [smem:[#allocation2 + $0x34]]
        %v2811 = vstv %s2810
        %v2812 = vmul.f32 %v2811, %v2724
        %v2813 = vmul.f32 %v2811, %v2725
        %s2814 = sld [smem:[#allocation2 + $0x35]]
        %v2815 = vstv %s2814
        %v2816 = vmul.f32 %v2815, %v2752
        %v2817 = vmul.f32 %v2815, %v2753
        %v2818 = vadd.f32 %v2812, %v2816
        %v2819 = vadd.f32 %v2813, %v2817
        %s2820 = sld [smem:[#allocation2 + $0x36]]
        %v2821 = vstv %s2820
        %v2822 = vmul.f32 %v2821, %v2780
        %v2823 = vmul.f32 %v2821, %v2781
        %v2824 = vadd.f32 %v2818, %v2822
        %v2825 = vadd.f32 %v2819, %v2823
        %s2826 = sld [smem:[#allocation2 + $0x37]]
        %v2827 = vstv %s2826
        %v2828 = vmul.f32 %v2827, %v2808
        %v2829 = vmul.f32 %v2827, %v2809
        %v2830 = vadd.f32 %v2824, %v2828
        %v2831 = vadd.f32 %v2825, %v2829
        %s2832 = sld [smem:[#allocation2 + $0x44]]
        %v2833 = vstv %s2832
        %v2834 = vadd.f32 %v2830, %v2833
        %v2835 = vadd.f32 %v2831, %v2833
        %v2836 = vmax.f32 %v2834, 0.0
        %v2837 = vmax.f32 %v2835, 0.0
        %s2838 = sld [smem:[#allocation2 + $0x38]]
        %v2839 = vstv %s2838
        %v2840 = vmul.f32 %v2839, %v2724
        %v2841 = vmul.f32 %v2839, %v2725
        %s2842 = sld [smem:[#allocation2 + $0x39]]
        %v2843 = vstv %s2842
        %v2844 = vmul.f32 %v2843, %v2752
        %v2845 = vmul.f32 %v2843, %v2753
        %v2846 = vadd.f32 %v2840, %v2844
        %v2847 = vadd.f32 %v2841, %v2845
        %s2848 = sld [smem:[#allocation2 + $0x3a]]
        %v2849 = vstv %s2848
        %v2850 = vmul.f32 %v2849, %v2780
        %v2851 = vmul.f32 %v2849, %v2781
        %v2852 = vadd.f32 %v2846, %v2850
        %v2853 = vadd.f32 %v2847, %v2851
        %s2854 = sld [smem:[#allocation2 + $0x3b]]
        %v2855 = vstv %s2854
        %v2856 = vmul.f32 %v2855, %v2808
        %v2857 = vmul.f32 %v2855, %v2809
        %v2858 = vadd.f32 %v2852, %v2856
        %v2859 = vadd.f32 %v2853, %v2857
        %s2860 = sld [smem:[#allocation2 + $0x45]]
        %v2861 = vstv %s2860
        %v2862 = vadd.f32 %v2858, %v2861
        %v2863 = vadd.f32 %v2859, %v2861
        %v2864 = vmax.f32 %v2862, 0.0
        %v2865 = vmax.f32 %v2863, 0.0
        %s2866 = sld [smem:[#allocation2 + $0x3c]]
        %v2867 = vstv %s2866
        %v2868 = vmul.f32 %v2867, %v2724
        %v2869 = vmul.f32 %v2867, %v2725
        %s2870 = sld [smem:[#allocation2 + $0x3d]]
        %v2871 = vstv %s2870
        %v2872 = vmul.f32 %v2871, %v2752
        %v2873 = vmul.f32 %v2871, %v2753
        %v2874 = vadd.f32 %v2868, %v2872
        %v2875 = vadd.f32 %v2869, %v2873
        %s2876 = sld [smem:[#allocation2 + $0x3e]]
        %v2877 = vstv %s2876
        %v2878 = vmul.f32 %v2877, %v2780
        %v2879 = vmul.f32 %v2877, %v2781
        %v2880 = vadd.f32 %v2874, %v2878
        %v2881 = vadd.f32 %v2875, %v2879
        %s2882 = sld [smem:[#allocation2 + $0x3f]]
        %v2883 = vstv %s2882
        %v2884 = vmul.f32 %v2883, %v2808
        %v2885 = vmul.f32 %v2883, %v2809
        %v2886 = vadd.f32 %v2880, %v2884
        %v2887 = vadd.f32 %v2881, %v2885
        %s2888 = sld [smem:[#allocation2 + $0x46]]
        %v2889 = vstv %s2888
        %v2890 = vadd.f32 %v2886, %v2889
        %v2891 = vadd.f32 %v2887, %v2889
        %v2892 = vmax.f32 %v2890, 0.0
        %v2893 = vmax.f32 %v2891, 0.0
        %s2894 = sld [smem:[#allocation2 + $0x40]]
        %v2895 = vstv %s2894
        %v2896 = vmul.f32 %v2895, %v2724
        %v2897 = vmul.f32 %v2895, %v2725
        %s2898 = sld [smem:[#allocation2 + $0x41]]
        %v2899 = vstv %s2898
        %v2900 = vmul.f32 %v2899, %v2752
        %v2901 = vmul.f32 %v2899, %v2753
        %v2902 = vadd.f32 %v2896, %v2900
        %v2903 = vadd.f32 %v2897, %v2901
        %s2904 = sld [smem:[#allocation2 + $0x42]]
        %v2905 = vstv %s2904
        %v2906 = vmul.f32 %v2905, %v2780
        %v2907 = vmul.f32 %v2905, %v2781
        %v2908 = vadd.f32 %v2902, %v2906
        %v2909 = vadd.f32 %v2903, %v2907
        %s2910 = sld [smem:[#allocation2 + $0x43]]
        %v2911 = vstv %s2910
        %v2912 = vmul.f32 %v2911, %v2808
        %v2913 = vmul.f32 %v2911, %v2809
        %v2914 = vadd.f32 %v2908, %v2912
        %v2915 = vadd.f32 %v2909, %v2913
        %s2916 = sld [smem:[#allocation2 + $0x47]]
        %v2917 = vstv %s2916
        %v2918 = vadd.f32 %v2914, %v2917
        %v2919 = vadd.f32 %v2915, %v2917
        %v2920 = vmax.f32 %v2918, 0.0
        %v2921 = vmax.f32 %v2919, 0.0
        %s2922 = sld [smem:[#allocation2 + $0x48]]
        %v2923 = vstv %s2922
        %v2924 = vmul.f32 %v2923, %v2836
        %v2925 = vmul.f32 %v2923, %v2837
        %s2926 = sld [smem:[#allocation2 + $0x49]]
        %v2927 = vstv %s2926
        %v2928 = vmul.f32 %v2927, %v2864
        %v2929 = vmul.f32 %v2927, %v2865
        %v2930 = vadd.f32 %v2924, %v2928
        %v2931 = vadd.f32 %v2925, %v2929
        %s2932 = sld [smem:[#allocation2 + $0x4a]]
        %v2933 = vstv %s2932
        %v2934 = vmul.f32 %v2933, %v2892
        %v2935 = vmul.f32 %v2933, %v2893
        %v2936 = vadd.f32 %v2930, %v2934
        %v2937 = vadd.f32 %v2931, %v2935
        %s2938 = sld [smem:[#allocation2 + $0x4b]]
        %v2939 = vstv %s2938
        %v2940 = vmul.f32 %v2939, %v2920
        %v2941 = vmul.f32 %v2939, %v2921
        %v2942 = vadd.f32 %v2936, %v2940
        %v2943 = vadd.f32 %v2937, %v2941
        %s2944 = sld [smem:[#allocation2 + $0x58]]
        %v2945 = vstv %s2944
        %v2946 = vadd.f32 %v2942, %v2945
        %v2947 = vadd.f32 %v2943, %v2945
        %v2948 = vmax.f32 %v2946, 0.0
        %v2949 = vmax.f32 %v2947, 0.0
        %s2950 = sld [smem:[#allocation2 + $0x4c]]
        %v2951 = vstv %s2950
        %v2952 = vmul.f32 %v2951, %v2836
        %v2953 = vmul.f32 %v2951, %v2837
        %s2954 = sld [smem:[#allocation2 + $0x4d]]
        %v2955 = vstv %s2954
        %v2956 = vmul.f32 %v2955, %v2864
        %v2957 = vmul.f32 %v2955, %v2865
        %v2958 = vadd.f32 %v2952, %v2956
        %v2959 = vadd.f32 %v2953, %v2957
        %s2960 = sld [smem:[#allocation2 + $0x4e]]
        %v2961 = vstv %s2960
        %v2962 = vmul.f32 %v2961, %v2892
        %v2963 = vmul.f32 %v2961, %v2893
        %v2964 = vadd.f32 %v2958, %v2962
        %v2965 = vadd.f32 %v2959, %v2963
        %s2966 = sld [smem:[#allocation2 + $0x4f]]
        %v2967 = vstv %s2966
        %v2968 = vmul.f32 %v2967, %v2920
        %v2969 = vmul.f32 %v2967, %v2921
        %v2970 = vadd.f32 %v2964, %v2968
        %v2971 = vadd.f32 %v2965, %v2969
        %s2972 = sld [smem:[#allocation2 + $0x59]]
        %v2973 = vstv %s2972
        %v2974 = vadd.f32 %v2970, %v2973
        %v2975 = vadd.f32 %v2971, %v2973
        %v2976 = vmax.f32 %v2974, 0.0
        %v2977 = vmax.f32 %v2975, 0.0
        %s2978 = sld [smem:[#allocation2 + $0x50]]
        %v2979 = vstv %s2978
        %v2980 = vmul.f32 %v2979, %v2836
        %v2981 = vmul.f32 %v2979, %v2837
        %s2982 = sld [smem:[#allocation2 + $0x51]]
        %v2983 = vstv %s2982
        %v2984 = vmul.f32 %v2983, %v2864
        %v2985 = vmul.f32 %v2983, %v2865
        %v2986 = vadd.f32 %v2980, %v2984
        %v2987 = vadd.f32 %v2981, %v2985
        %s2988 = sld [smem:[#allocation2 + $0x52]]
        %v2989 = vstv %s2988
        %v2990 = vmul.f32 %v2989, %v2892
        %v2991 = vmul.f32 %v2989, %v2893
        %v2992 = vadd.f32 %v2986, %v2990
        %v2993 = vadd.f32 %v2987, %v2991
        %s2994 = sld [smem:[#allocation2 + $0x53]]
        %v2995 = vstv %s2994
        %v2996 = vmul.f32 %v2995, %v2920
        %v2997 = vmul.f32 %v2995, %v2921
        %v2998 = vadd.f32 %v2992, %v2996
        %v2999 = vadd.f32 %v2993, %v2997
        %s3000 = sld [smem:[#allocation2 + $0x5a]]
        %v3001 = vstv %s3000
        %v3002 = vadd.f32 %v2998, %v3001
        %v3003 = vadd.f32 %v2999, %v3001
        %v3004 = vmax.f32 %v3002, 0.0
        %v3005 = vmax.f32 %v3003, 0.0
        %s3006 = sld [smem:[#allocation2 + $0x54]]
        %v3007 = vstv %s3006
        %v3008 = vmul.f32 %v3007, %v2836
        %v3009 = vmul.f32 %v3007, %v2837
        %s3010 = sld [smem:[#allocation2 + $0x55]]
        %v3011 = vstv %s3010
        %v3012 = vmul.f32 %v3011, %v2864
        %v3013 = vmul.f32 %v3011, %v2865
        %v3014 = vadd.f32 %v3008, %v3012
        %v3015 = vadd.f32 %v3009, %v3013
        %s3016 = sld [smem:[#allocation2 + $0x56]]
        %v3017 = vstv %s3016
        %v3018 = vmul.f32 %v3017, %v2892
        %v3019 = vmul.f32 %v3017, %v2893
        %v3020 = vadd.f32 %v3014, %v3018
        %v3021 = vadd.f32 %v3015, %v3019
        %s3022 = sld [smem:[#allocation2 + $0x57]]
        %v3023 = vstv %s3022
        %v3024 = vmul.f32 %v3023, %v2920
        %v3025 = vmul.f32 %v3023, %v2921
        %v3026 = vadd.f32 %v3020, %v3024
        %v3027 = vadd.f32 %v3021, %v3025
        %s3028 = sld [smem:[#allocation2 + $0x5b]]
        %v3029 = vstv %s3028
        %v3030 = vadd.f32 %v3026, %v3029
        %v3031 = vadd.f32 %v3027, %v3029
        %v3032 = vmax.f32 %v3030, 0.0
        %v3033 = vmax.f32 %v3031, 0.0
        %s3034 = sld [smem:[#allocation2 + $0x5c]]
        %v3035 = vstv %s3034
        %v3036 = vmul.f32 %v3035, %v2948
        %v3037 = vmul.f32 %v3035, %v2949
        %s3038 = sld [smem:[#allocation2 + $0x5d]]
        %v3039 = vstv %s3038
        %v3040 = vmul.f32 %v3039, %v2976
        %v3041 = vmul.f32 %v3039, %v2977
        %v3042 = vadd.f32 %v3036, %v3040
        %v3043 = vadd.f32 %v3037, %v3041
        %s3044 = sld [smem:[#allocation2 + $0x5e]]
        %v3045 = vstv %s3044
        %v3046 = vmul.f32 %v3045, %v3004
        %v3047 = vmul.f32 %v3045, %v3005
        %v3048 = vadd.f32 %v3042, %v3046
        %v3049 = vadd.f32 %v3043, %v3047
        %s3050 = sld [smem:[#allocation2 + $0x5f]]
        %v3051 = vstv %s3050
        %v3052 = vmul.f32 %v3051, %v3032
        %v3053 = vmul.f32 %v3051, %v3033
        %v3054 = vadd.f32 %v3048, %v3052
        %v3055 = vadd.f32 %v3049, %v3053
        %s3056 = sld [smem:[#allocation2 + $0x6c]]
        %v3057 = vstv %s3056
        %v3058 = vadd.f32 %v3054, %v3057
        %v3059 = vadd.f32 %v3055, %v3057
        %v3060 = vmax.f32 %v3058, 0.0
        %v3061 = vmax.f32 %v3059, 0.0
        %s3062 = sld [smem:[#allocation2 + $0x60]]
        %v3063 = vstv %s3062
        %v3064 = vmul.f32 %v3063, %v2948
        %v3065 = vmul.f32 %v3063, %v2949
        %s3066 = sld [smem:[#allocation2 + $0x61]]
        %v3067 = vstv %s3066
        %v3068 = vmul.f32 %v3067, %v2976
        %v3069 = vmul.f32 %v3067, %v2977
        %v3070 = vadd.f32 %v3064, %v3068
        %v3071 = vadd.f32 %v3065, %v3069
        %s3072 = sld [smem:[#allocation2 + $0x62]]
        %v3073 = vstv %s3072
        %v3074 = vmul.f32 %v3073, %v3004
        %v3075 = vmul.f32 %v3073, %v3005
        %v3076 = vadd.f32 %v3070, %v3074
        %v3077 = vadd.f32 %v3071, %v3075
        %s3078 = sld [smem:[#allocation2 + $0x63]]
        %v3079 = vstv %s3078
        %v3080 = vmul.f32 %v3079, %v3032
        %v3081 = vmul.f32 %v3079, %v3033
        %v3082 = vadd.f32 %v3076, %v3080
        %v3083 = vadd.f32 %v3077, %v3081
        %s3084 = sld [smem:[#allocation2 + $0x6d]]
        %v3085 = vstv %s3084
        %v3086 = vadd.f32 %v3082, %v3085
        %v3087 = vadd.f32 %v3083, %v3085
        %v3088 = vmax.f32 %v3086, 0.0
        %v3089 = vmax.f32 %v3087, 0.0
        %s3090 = sld [smem:[#allocation2 + $0x64]]
        %v3091 = vstv %s3090
        %v3092 = vmul.f32 %v3091, %v2948
        %v3093 = vmul.f32 %v3091, %v2949
        %s3094 = sld [smem:[#allocation2 + $0x65]]
        %v3095 = vstv %s3094
        %v3096 = vmul.f32 %v3095, %v2976
        %v3097 = vmul.f32 %v3095, %v2977
        %v3098 = vadd.f32 %v3092, %v3096
        %v3099 = vadd.f32 %v3093, %v3097
        %s3100 = sld [smem:[#allocation2 + $0x66]]
        %v3101 = vstv %s3100
        %v3102 = vmul.f32 %v3101, %v3004
        %v3103 = vmul.f32 %v3101, %v3005
        %v3104 = vadd.f32 %v3098, %v3102
        %v3105 = vadd.f32 %v3099, %v3103
        %s3106 = sld [smem:[#allocation2 + $0x67]]
        %v3107 = vstv %s3106
        %v3108 = vmul.f32 %v3107, %v3032
        %v3109 = vmul.f32 %v3107, %v3033
        %v3110 = vadd.f32 %v3104, %v3108
        %v3111 = vadd.f32 %v3105, %v3109
        %s3112 = sld [smem:[#allocation2 + $0x6e]]
        %v3113 = vstv %s3112
        %v3114 = vadd.f32 %v3110, %v3113
        %v3115 = vadd.f32 %v3111, %v3113
        %v3116 = vmax.f32 %v3114, 0.0
        %v3117 = vmax.f32 %v3115, 0.0
        %s3118 = sld [smem:[#allocation2 + $0x68]]
        %v3119 = vstv %s3118
        %v3120 = vmul.f32 %v3119, %v2948
        %v3121 = vmul.f32 %v3119, %v2949
        %s3122 = sld [smem:[#allocation2 + $0x69]]
        %v3123 = vstv %s3122
        %v3124 = vmul.f32 %v3123, %v2976
        %v3125 = vmul.f32 %v3123, %v2977
        %v3126 = vadd.f32 %v3120, %v3124
        %v3127 = vadd.f32 %v3121, %v3125
        %s3128 = sld [smem:[#allocation2 + $0x6a]]
        %v3129 = vstv %s3128
        %v3130 = vmul.f32 %v3129, %v3004
        %v3131 = vmul.f32 %v3129, %v3005
        %v3132 = vadd.f32 %v3126, %v3130
        %v3133 = vadd.f32 %v3127, %v3131
        %s3134 = sld [smem:[#allocation2 + $0x6b]]
        %v3135 = vstv %s3134
        %v3136 = vmul.f32 %v3135, %v3032
        %v3137 = vmul.f32 %v3135, %v3033
        %v3138 = vadd.f32 %v3132, %v3136
        %v3139 = vadd.f32 %v3133, %v3137
        %s3140 = sld [smem:[#allocation2 + $0x6f]]
        %v3141 = vstv %s3140
        %v3142 = vadd.f32 %v3138, %v3141
        %v3143 = vadd.f32 %v3139, %v3141
        %v3144 = vmax.f32 %v3142, 0.0
        %v3145 = vmax.f32 %v3143, 0.0
        %s3146 = sld [smem:[#allocation2 + $0x70]]
        %v3147 = vstv %s3146
        %v3148 = vmul.f32 %v3147, %v3060
        %v3149 = vmul.f32 %v3147, %v3061
        %s3150 = sld [smem:[#allocation2 + $0x71]]
        %v3151 = vstv %s3150
        %v3152 = vmul.f32 %v3151, %v3088
        %v3153 = vmul.f32 %v3151, %v3089
        %v3154 = vadd.f32 %v3148, %v3152
        %v3155 = vadd.f32 %v3149, %v3153
        %s3156 = sld [smem:[#allocation2 + $0x72]]
        %v3157 = vstv %s3156
        %v3158 = vmul.f32 %v3157, %v3116
        %v3159 = vmul.f32 %v3157, %v3117
        %v3160 = vadd.f32 %v3154, %v3158
        %v3161 = vadd.f32 %v3155, %v3159
        %s3162 = sld [smem:[#allocation2 + $0x73]]
        %v3163 = vstv %s3162
        %v3164 = vmul.f32 %v3163, %v3144
        %v3165 = vmul.f32 %v3163, %v3145
        %v3166 = vadd.f32 %v3160, %v3164
        %v3167 = vadd.f32 %v3161, %v3165
        %s3168 = sld [smem:[#allocation2 + $0x80]]
        %v3169 = vstv %s3168
        %v3170 = vadd.f32 %v3166, %v3169
        %v3171 = vadd.f32 %v3167, %v3169
        %v3172 = vmax.f32 %v3170, 0.0
        %v3173 = vmax.f32 %v3171, 0.0
        %s3174 = sld [smem:[#allocation2 + $0x74]]
        %v3175 = vstv %s3174
        %v3176 = vmul.f32 %v3175, %v3060
        %v3177 = vmul.f32 %v3175, %v3061
        %s3178 = sld [smem:[#allocation2 + $0x75]]
        %v3179 = vstv %s3178
        %v3180 = vmul.f32 %v3179, %v3088
        %v3181 = vmul.f32 %v3179, %v3089
        %v3182 = vadd.f32 %v3176, %v3180
        %v3183 = vadd.f32 %v3177, %v3181
        %s3184 = sld [smem:[#allocation2 + $0x76]]
        %v3185 = vstv %s3184
        %v3186 = vmul.f32 %v3185, %v3116
        %v3187 = vmul.f32 %v3185, %v3117
        %v3188 = vadd.f32 %v3182, %v3186
        %v3189 = vadd.f32 %v3183, %v3187
        %s3190 = sld [smem:[#allocation2 + $0x77]]
        %v3191 = vstv %s3190
        %v3192 = vmul.f32 %v3191, %v3144
        %v3193 = vmul.f32 %v3191, %v3145
        %v3194 = vadd.f32 %v3188, %v3192
        %v3195 = vadd.f32 %v3189, %v3193
        %s3196 = sld [smem:[#allocation2 + $0x81]]
        %v3197 = vstv %s3196
        %v3198 = vadd.f32 %v3194, %v3197
        %v3199 = vadd.f32 %v3195, %v3197
        %v3200 = vmax.f32 %v3198, 0.0
        %v3201 = vmax.f32 %v3199, 0.0
        %s3202 = sld [smem:[#allocation2 + $0x78]]
        %v3203 = vstv %s3202
        %v3204 = vmul.f32 %v3203, %v3060
        %v3205 = vmul.f32 %v3203, %v3061
        %s3206 = sld [smem:[#allocation2 + $0x79]]
        %v3207 = vstv %s3206
        %v3208 = vmul.f32 %v3207, %v3088
        %v3209 = vmul.f32 %v3207, %v3089
        %v3210 = vadd.f32 %v3204, %v3208
        %v3211 = vadd.f32 %v3205, %v3209
        %s3212 = sld [smem:[#allocation2 + $0x7a]]
        %v3213 = vstv %s3212
        %v3214 = vmul.f32 %v3213, %v3116
        %v3215 = vmul.f32 %v3213, %v3117
        %v3216 = vadd.f32 %v3210, %v3214
        %v3217 = vadd.f32 %v3211, %v3215
        %s3218 = sld [smem:[#allocation2 + $0x7b]]
        %v3219 = vstv %s3218
        %v3220 = vmul.f32 %v3219, %v3144
        %v3221 = vmul.f32 %v3219, %v3145
        %v3222 = vadd.f32 %v3216, %v3220
        %v3223 = vadd.f32 %v3217, %v3221
        %s3224 = sld [smem:[#allocation2 + $0x82]]
        %v3225 = vstv %s3224
        %v3226 = vadd.f32 %v3222, %v3225
        %v3227 = vadd.f32 %v3223, %v3225
        %v3228 = vmax.f32 %v3226, 0.0
        %v3229 = vmax.f32 %v3227, 0.0
        %s3230 = sld [smem:[#allocation2 + $0x7c]]
        %v3231 = vstv %s3230
        %v3232 = vmul.f32 %v3231, %v3060
        %v3233 = vmul.f32 %v3231, %v3061
        %s3234 = sld [smem:[#allocation2 + $0x7d]]
        %v3235 = vstv %s3234
        %v3236 = vmul.f32 %v3235, %v3088
        %v3237 = vmul.f32 %v3235, %v3089
        %v3238 = vadd.f32 %v3232, %v3236
        %v3239 = vadd.f32 %v3233, %v3237
        %s3240 = sld [smem:[#allocation2 + $0x7e]]
        %v3241 = vstv %s3240
        %v3242 = vmul.f32 %v3241, %v3116
        %v3243 = vmul.f32 %v3241, %v3117
        %v3244 = vadd.f32 %v3238, %v3242
        %v3245 = vadd.f32 %v3239, %v3243
        %s3246 = sld [smem:[#allocation2 + $0x7f]]
        %v3247 = vstv %s3246
        %v3248 = vmul.f32 %v3247, %v3144
        %v3249 = vmul.f32 %v3247, %v3145
        %v3250 = vadd.f32 %v3244, %v3248
        %v3251 = vadd.f32 %v3245, %v3249
        %s3252 = sld [smem:[#allocation2 + $0x83]]
        %v3253 = vstv %s3252
        %v3254 = vadd.f32 %v3250, %v3253
        %v3255 = vadd.f32 %v3251, %v3253
        %v3256 = vmax.f32 %v3254, 0.0
        %v3257 = vmax.f32 %v3255, 0.0
        %s3258 = sld [smem:[#allocation2 + $0x84]]
        %v3259 = vstv %s3258
        %v3260 = vmul.f32 %v3259, %v3172
        %v3261 = vmul.f32 %v3259, %v3173
        %s3262 = sld [smem:[#allocation2 + $0x85]]
        %v3263 = vstv %s3262
        %v3264 = vmul.f32 %v3263, %v3200
        %v3265 = vmul.f32 %v3263, %v3201
        %v3266 = vadd.f32 %v3260, %v3264
        %v3267 = vadd.f32 %v3261, %v3265
        %s3268 = sld [smem:[#allocation2 + $0x86]]
        %v3269 = vstv %s3268
        %v3270 = vmul.f32 %v3269, %v3228
        %v3271 = vmul.f32 %v3269, %v3229
        %v3272 = vadd.f32 %v3266, %v3270
        %v3273 = vadd.f32 %v3267, %v3271
        %s3274 = sld [smem:[#allocation2 + $0x87]]
        %v3275 = vstv %s3274
        %v3276 = vmul.f32 %v3275, %v3256
        %v3277 = vmul.f32 %v3275, %v3257
        %v3278 = vadd.f32 %v3272, %v3276
        %v3279 = vadd.f32 %v3273, %v3277
        %s3280 = sld [smem:[#allocation2 + $0x88]]
        %v3281 = vstv %s3280
        %v3282 = vadd.f32 %v3278, %v3281
        %v3283 = vadd.f32 %v3279, %v3281
        %s3284 = scalar_lea.vmem %s198, 48 [#allocation7]
        %3285 = vst [vmem:[%s3284] sm:$0xff] %v3282
        %3286 = vst [vmem:[%s3284 + $0x8] sm:$0xff] %v3283
        %s3287 = sand.u32 %s75, 1
        %s3288 = scalar_lea.sflag [#allocation4], %s3287
        %s3289 = sand.u32 %s75, 1
        %s3290 = smul.addr %s3289, 64
        %s3291 = scalar_lea.vmem [#allocation7], %s3290
        // Predicated region
        $region37: #{tpu_custom_call.1} parent=27 // pred_check
          %p3292 = pneg %p85
        $region38: #{tpu_custom_call.1} parent=27 // pred_check_branch
          %3294 = sbr.rel (%p3292) target = $region40
        $region39: #{tpu_custom_call.1} parent=27 // pred_region
          %s3295 = smul.u32 8, %s20
          %s3297 = ssub.s32 1024, 1024
          %3298 = vsyncadd %s3288, %s3297
          %s3299 = smul.addr %s3295, 128
          %s3300 = scalar_lea.hbm %s2, %s3299
          %s3301 = sshll.u32 %s3291, 4
          %s3302 = int_to_ptr.vmem [resolvable:$true] %s3301
          %3307 = dma.vmem_to_hbm [thread:$0]  %s3302, 1024, %s3300, %s3288, 128, 128, 8
        $region40: #{tpu_custom_call.1} parent=27 // pred_fallthru
          _
      $region28: #{tpu_custom_call.1} parent=5 // pred_fallthru
        _
      %p3308 = scmp.le.s32.totalorder 2, %s15
      // Predicated region
      $region41: #{tpu_custom_call.1} parent=5 // pred_check
        %p3309 = pneg %p3308
      $region42: #{tpu_custom_call.1} parent=5 // pred_check_branch
        %3311 = sbr.rel (%p3309) target = $region44
      $region43: #{tpu_custom_call.1} parent=5 // pred_region
        %s3312 = ssub.s32 %s15, 2
        // Predicated region
        $region45: #{tpu_custom_call.1} parent=43 // pred_check
          %p3313 = pneg %p91
        $region46: #{tpu_custom_call.1} parent=43 // pred_check_branch
          %3315 = sbr.rel (%p3313) target = $region48
        $region47: #{tpu_custom_call.1} parent=43 // pred_region
          %s3316 = sand.u32 %s76, 1
          %s3317 = scalar_lea.sflag [#allocation4], %s3316
          %s3318 = sand.u32 %s76, 1
          %s3319 = smul.addr %s3318, 64
          %s3320 = scalar_lea.vmem [#allocation7], %s3319
          %3321 = dma.done %s3317, 1024
        $region48: #{tpu_custom_call.1} parent=43 // pred_fallthru
          _
      $region44: #{tpu_custom_call.1} parent=5 // pred_fallthru
        _
    $region6: #{tpu_custom_call.1} parent=1 // loop_footer
      %s19 = sadd.s32 1, %s15
    $region7: #{tpu_custom_call.1} parent=1 // loop_footer_branch
      %14 = sbr.rel target = $region3
    $region8: #{tpu_custom_call.1} parent=1 // loop_exit
      _
    %3322 = vsyncpa [#allocation3], 1
    %s3323 = scalar_lea.sflag [#allocation3], 1
    %3324 = vsyncpa %s3323, 1
    %3325 = vsyncpa [#allocation4], 1
    %s3326 = scalar_lea.sflag [#allocation4], 1
    %3327 = vsyncpa %s3326, 1
    %3328 = vsyncpa [#allocation5], 1
    %s3329 = scalar_lea.sflag [#allocation5], 1
    %3330 = vsyncpa %s3329, 1

</llo_original>
